<compile_context>
chip_gen: v6e
topology: v6e:2x2x1
jax: 0.10.0
libtpu: 0.0.40
codegen_flags: <defaults>
</compile_context>

<pallas_src>
import functools

import jax
import jax.numpy as jnp
from jax import lax
from jax.experimental import pallas as pl
from jax.experimental.pallas import tpu as pltpu

_SQRT_HALF = 0.7071067811865476


def _recip(x):
    """EUP approximate reciprocal + one Newton-Raphson refinement.

    Cheaper than an exact f32 divide (which lowers to the full refine
    sequence) while keeping relative error well below 1e-6.
    """
    r = pl.reciprocal(x, approx=True)
    return r * (2.0 - x * r)


def _gelu_exact(x):
    """erf-based GELU matching torch.nn.GELU() (default, approximate='none').

    erf uses the Abramowitz-Stegun 7.1.26 polynomial (|abs err| <= 1.5e-7)
    since lax.erf has no guaranteed Mosaic lowering.  Only exp / recip / mul /
    add / where are used, so it lowers cleanly (EUP + VPU).
    """
    z = x * _SQRT_HALF
    a = jnp.abs(z)
    sgn = jnp.where(z >= 0.0, 1.0, -1.0)
    t = _recip(1.0 + 0.3275911 * a)
    poly = t * (0.254829592 + t * (-0.284496736 + t * (1.421413741
             + t * (-1.453152027 + t * 1.061405429))))
    erf = sgn * (1.0 - poly * jnp.exp(-a * a))
    return 0.5 * x * (1.0 + erf)


def _sigmoid(g):
    """sigmoid via the EUP tanh identity: stable and divide-free."""
    return 0.5 + 0.5 * jnp.tanh(0.5 * g)


def _spatial_attn_kernel(x_ref,
                         wp1_ref, bp1_ref,      # proj_1 (C,C), (C,)
                         w0_ref, b0_ref,        # conv0 depthwise (C,k0*k0), (C,)
                         w1_ref, b1_ref,        # conv_spatial depthwise (C,k1*k1), (C,)
                         wf_ref, bf_ref,        # conv1 f-half (C,C), (C,)
                         wg_ref, bg_ref,        # conv1 g-half (C,C), (C,)
                         wp2_ref, bp2_ref,      # proj_2 (C,C), (C,)
                         o_ref,
                         a0_ref, a1_ref,        # padded VMEM scratch
                         *, H, W, C, k0, k1, dil, p0, p1):
    f32 = jnp.float32
    H0p, W0p = H + 2 * p0, W + 2 * p0
    H1p, W1p = H + 2 * p1, W + 2 * p1

    # ---- zero only the halo borders of the padded scratch; the interiors ----
    # ---- are fully overwritten every step (per-core safe on v7x megacore) ---
    a0_ref[:, 0:p0, :] = jnp.zeros((C, p0, W0p), f32)
    a0_ref[:, p0 + H:H0p, :] = jnp.zeros((C, p0, W0p), f32)
    a0_ref[:, p0:p0 + H, 0:p0] = jnp.zeros((C, H, p0), f32)
    a0_ref[:, p0:p0 + H, p0 + W:W0p] = jnp.zeros((C, H, p0), f32)

    a1_ref[:, 0:p1, :] = jnp.zeros((C, p1, W1p), f32)
    a1_ref[:, p1 + H:H1p, :] = jnp.zeros((C, p1, W1p), f32)
    a1_ref[:, p1:p1 + H, 0:p1] = jnp.zeros((C, H, p1), f32)
    a1_ref[:, p1:p1 + H, p1 + W:W1p] = jnp.zeros((C, H, p1), f32)

    # ---- proj_1 (1x1 conv) + exact GELU -> interior of conv0's padded input --
    # xs is only used in this stage (dead afterwards -> no cross-stage liveness)
    xs = [x_ref[0, c].astype(f32) for c in range(C)]          # C x (H, W)
    for co in range(C):
        acc = xs[0] * wp1_ref[co, 0]
        for ci in range(1, C):
            acc = acc + xs[ci] * wp1_ref[co, ci]
        acc = acc + bp1_ref[co]
        a0_ref[co, p0:p0 + H, p0:p0 + W] = _gelu_exact(acc)

    # ---- LKA conv0: depthwise k0 x k0 ---------------------------------------
    # One lane-aligned full-width load per (channel, kh); kw taps are static
    # in-register lane slices (XLU) + scalar-broadcast FMAs (VPU).
    for c in range(C):
        acc = jnp.zeros((H, W), f32)
        for kh in range(k0):
            rows = a0_ref[c, kh:kh + H, :]                     # (H, W0p)
            for kw in range(k0):
                acc = acc + rows[:, kw:kw + W] * w0_ref[c, kh * k0 + kw]
        a1_ref[c, p1:p1 + H, p1:p1 + W] = acc + b0_ref[c]

    # ---- LKA conv_spatial: depthwise dilated k1 x k1 ------------------------
    attn = []
    for c in range(C):
        acc = jnp.zeros((H, W), f32)
        for kh in range(k1):
            rows = a1_ref[c, kh * dil:kh * dil + H, :]         # (H, W1p)
            for kw in range(k1):
                acc = acc + (rows[:, kw * dil:kw * dil + W]
                             * w1_ref[c, kh * k1 + kw])
        attn.append(acc + b1_ref[c])

    # ---- LKA conv1 (1x1, C -> 2C) as separate f / g halves + sigmoid gate ---
    lka = []
    for co in range(C):
        f = attn[0] * wf_ref[co, 0]
        g = attn[0] * wg_ref[co, 0]
        for ci in range(1, C):
            f = f + attn[ci] * wf_ref[co, ci]
            g = g + attn[ci] * wg_ref[co, ci]
        f = f + bf_ref[co]
        g = g + bg_ref[co]
        lka.append(f * _sigmoid(g))

    # ---- proj_2 (1x1 conv) + residual shortcut (re-read x_ref) --------------
    for co in range(C):
        acc = lka[0] * wp2_ref[co, 0]
        for ci in range(1, C):
            acc = acc + lka[ci] * wp2_ref[co, ci]
        acc = acc + bp2_ref[co] + x_ref[0, co].astype(f32)
        o_ref[0, co] = acc.astype(o_ref.dtype)


def spatial_attention_pallas(x, params, *, kernel_size=21, dilation=3):
    """x: (N, C, H, W) float32 (NCHW, like PyTorch). Returns (N, C, H, W)."""
    N, C, H, W = x.shape
    d_k = 2 * dilation - 1
    d_p = (d_k - 1) // 2
    dd_k = kernel_size // dilation + (kernel_size // dilation % 2 - 1)
    dd_p = dilation * (dd_k - 1) // 2

    wp1, bp1, w0, b0, w1, b1, w2, b2, wp2, bp2 = params
    f32 = jnp.float32

    # PyTorch weight shapes -> flat scalar tables for SMEM.
    wp1_s = wp1[:, :, 0, 0].astype(f32)                       # (C, C) [out, in]
    w0_s = w0[:, 0, :, :].reshape(C, d_k * d_k).astype(f32)   # (C, k0*k0)
    w1_s = w1[:, 0, :, :].reshape(C, dd_k * dd_k).astype(f32)  # (C, k1*k1)
    wf_s = w2[:C, :, 0, 0].astype(f32)                        # (C, C)
    wg_s = w2[C:, :, 0, 0].astype(f32)                        # (C, C)
    wp2_s = wp2[:, :, 0, 0].astype(f32)                       # (C, C)
    bf_s = b2[:C].astype(f32)
    bg_s = b2[C:].astype(f32)

    smem = pl.BlockSpec(memory_space=pltpu.MemorySpace.SMEM)
    kernel = functools.partial(
        _spatial_attn_kernel, H=H, W=W, C=C,
        k0=d_k, k1=dd_k, dil=dilation, p0=d_p, p1=dd_p)

    # Advisory cost hint so XLA can schedule surrounding ops around the kernel.
    taps = d_k * d_k + dd_k * dd_k
    flops = int(N * H * W * (8 * C * C + 2 * C * taps + 8 * C))
    transcendentals = int(3 * N * H * W * C)
    param_bytes = int(sum(int(p.size) for p in params)) * 4
    bytes_accessed = int(x.size) * 4 * 2 + param_bytes

    out = pl.pallas_call(
        kernel,
        out_shape=jax.ShapeDtypeStruct((N, C, H, W), x.dtype),
        grid_spec=pltpu.PrefetchScalarGridSpec(
            num_scalar_prefetch=0,
            grid=(N,),
            in_specs=[
                pl.BlockSpec((1, C, H, W), lambda n: (n, 0, 0, 0)),
                smem, smem,              # proj_1
                smem, smem,              # conv0
                smem, smem,              # conv_spatial
                smem, smem, smem, smem,  # conv1 f / g halves
                smem, smem,              # proj_2
            ],
            out_specs=pl.BlockSpec((1, C, H, W), lambda n: (n, 0, 0, 0)),
            scratch_shapes=[
                pltpu.VMEM((C, H + 2 * d_p, W + 2 * d_p), f32),    # conv0 in
                pltpu.VMEM((C, H + 2 * dd_p, W + 2 * dd_p), f32),  # conv_spatial in
            ]),
        compiler_params=pltpu.CompilerParams(
            dimension_semantics=("parallel",),   # v7x: shard batch on 2 TCs
            vmem_limit_bytes=32 * 1024 * 1024),  # also covers v5e's 16 MiB default
        cost_estimate=pl.CostEstimate(
            flops=flops, transcendentals=transcendentals,
            bytes_accessed=bytes_accessed),
    )(x, wp1_s, bp1.astype(f32), w0_s, b0.astype(f32), w1_s, b1.astype(f32),
      wf_s, bf_s, wg_s, bg_s, wp2_s, bp2.astype(f32))
    return out


def init_params(key, dim, *, kernel_size=21, dilation=3):
    """Deterministic synthetic parameters in PyTorch shapes."""
    d_k = 2 * dilation - 1
    dd_k = kernel_size // dilation + (kernel_size // dilation % 2 - 1)
    ks = jax.random.split(key, 10)
    wp1 = 0.5 * jax.random.normal(ks[0], (dim, dim, 1, 1), jnp.float32)
    bp1 = 0.1 * jax.random.normal(ks[1], (dim,), jnp.float32)
    w0 = 0.1 * jax.random.normal(ks[2], (dim, 1, d_k, d_k), jnp.float32)
    b0 = 0.1 * jax.random.normal(ks[3], (dim,), jnp.float32)
    w1 = 0.1 * jax.random.normal(ks[4], (dim, 1, dd_k, dd_k), jnp.float32)
    b1 = 0.1 * jax.random.normal(ks[5], (dim,), jnp.float32)
    w2 = 0.1 * jax.random.normal(ks[6], (2 * dim, dim, 1, 1), jnp.float32)
    b2 = 0.1 * jax.random.normal(ks[7], (2 * dim,), jnp.float32)
    wp2 = 0.5 * jax.random.normal(ks[8], (dim, dim, 1, 1), jnp.float32)
    bp2 = 0.1 * jax.random.normal(ks[9], (dim,), jnp.float32)
    return (wp1, bp1, w0, b0, w1, b1, w2, b2, wp2, bp2)


def reference(x, params, *, kernel_size=21, dilation=3):
    """Pure-JAX reference matching the PyTorch SpatialAttention forward."""
    wp1, bp1, w0, b0, w1, b1, w2, b2, wp2, bp2 = params
    dim = x.shape[1]
    d_k = 2 * dilation - 1
    d_p = (d_k - 1) // 2
    dd_k = kernel_size // dilation + (kernel_size // dilation % 2 - 1)
    dd_p = dilation * (dd_k - 1) // 2
    dn = ('NCHW', 'OIHW', 'NCHW')

    h = lax.conv_general_dilated(x, wp1, (1, 1), [(0, 0)] * 2,
                                 dimension_numbers=dn)
    h = h + bp1[None, :, None, None]
    h = jax.nn.gelu(h, approximate=False)            # exact erf GELU (nn.GELU)
    a = lax.conv_general_dilated(h, w0, (1, 1), [(d_p, d_p)] * 2,
                                 feature_group_count=dim, dimension_numbers=dn)
    a = a + b0[None, :, None, None]
    a = lax.conv_general_dilated(a, w1, (1, 1), [(dd_p, dd_p)] * 2,
                                 rhs_dilation=(dilation, dilation),
                                 feature_group_count=dim, dimension_numbers=dn)
    a = a + b1[None, :, None, None]
    fg = lax.conv_general_dilated(a, w2, (1, 1), [(0, 0)] * 2,
                                  dimension_numbers=dn)
    fg = fg + b2[None, :, None, None]
    f, g = fg[:, :dim], fg[:, dim:]
    lka = jax.nn.sigmoid(g) * f
    y = lax.conv_general_dilated(lka, wp2, (1, 1), [(0, 0)] * 2,
                                 dimension_numbers=dn)
    y = y + bp2[None, :, None, None]
    return y + x


if __name__ == "__main__":
    d_model, kernel_size, dilation = 4, 21, 3
    N, H, W = 2, 16, 16

    key = jax.random.PRNGKey(0)
    kx, kp = jax.random.split(key)
    x = jax.random.normal(kx, (N, d_model, H, W), jnp.float32)
    params = init_params(kp, d_model, kernel_size=kernel_size,
                         dilation=dilation)

    out = spatial_attention_pallas(x, params, kernel_size=kernel_size,
                                   dilation=dilation)
    out = jax.block_until_ready(out)

    ref = reference(x, params, kernel_size=kernel_size, dilation=dilation)
    assert out.shape == (N, d_model, H, W)
    err = float(jnp.max(jnp.abs(out - ref)))
    assert jnp.allclose(out, ref, rtol=1e-4, atol=1e-4), err
    print("KERNEL_OK")
</pallas_src>

<mosaic_0001>
module attributes {stable_mosaic.version = 11 : i64} {
  func.func @_spatial_attn_kernel(%arg0: i32, %arg1: memref<1x4x16x16xf32, #tpu.memory_space<vmem>>, %arg2: memref<4x4xf32, #tpu.memory_space<smem>>, %arg3: memref<4xf32, #tpu.memory_space<smem>>, %arg4: memref<4x25xf32, #tpu.memory_space<smem>>, %arg5: memref<4xf32, #tpu.memory_space<smem>>, %arg6: memref<4x49xf32, #tpu.memory_space<smem>>, %arg7: memref<4xf32, #tpu.memory_space<smem>>, %arg8: memref<4x4xf32, #tpu.memory_space<smem>>, %arg9: memref<4xf32, #tpu.memory_space<smem>>, %arg10: memref<4x4xf32, #tpu.memory_space<smem>>, %arg11: memref<4xf32, #tpu.memory_space<smem>>, %arg12: memref<4x4xf32, #tpu.memory_space<smem>>, %arg13: memref<4xf32, #tpu.memory_space<smem>>, %arg14: memref<1x4x16x16xf32, #tpu.memory_space<vmem>>, %arg15: memref<4x20x20xf32, #tpu.memory_space<vmem>>, %arg16: memref<4x34x34xf32, #tpu.memory_space<vmem>>) attributes {dimension_semantics = [#tpu.dimension_semantics<parallel>], iteration_bounds = array<i64: 2>, scalar_prefetch = 0 : i64, scratch_operands = 2 : i64, tpu.core_type = #tpu.core_type<tc>, window_params = [{transform_indices = @transform_0, window_bounds = array<i64: 1, 4, 16, 16>}, {transform_indices = @transform_1, window_bounds = array<i64: 4, 4>}, {transform_indices = @transform_2, window_bounds = array<i64: 4>}, {transform_indices = @transform_3, window_bounds = array<i64: 4, 25>}, {transform_indices = @transform_4, window_bounds = array<i64: 4>}, {transform_indices = @transform_5, window_bounds = array<i64: 4, 49>}, {transform_indices = @transform_6, window_bounds = array<i64: 4>}, {transform_indices = @transform_7, window_bounds = array<i64: 4, 4>}, {transform_indices = @transform_8, window_bounds = array<i64: 4>}, {transform_indices = @transform_9, window_bounds = array<i64: 4, 4>}, {transform_indices = @transform_10, window_bounds = array<i64: 4>}, {transform_indices = @transform_11, window_bounds = array<i64: 4, 4>}, {transform_indices = @transform_12, window_bounds = array<i64: 4>}, {transform_indices = @transform_13, window_bounds = array<i64: 1, 4, 16, 16>}]} {
    %cst = arith.constant 0.000000e+00 : f32
    %0 = vector.broadcast %cst : f32 to vector<4x2x20xf32>
    %c0 = arith.constant 0 : index
    %c0_0 = arith.constant 0 : index
    %c0_1 = arith.constant 0 : index
    %1 = vector.load %arg15[%c0, %c0_0, %c0_1] : memref<4x20x20xf32, #tpu.memory_space<vmem>>, vector<4x2x20xf32>
    tpu.vector_store %arg15[%c0, %c0_0, %c0_1], %0 {strides = array<i32>} : memref<4x20x20xf32, #tpu.memory_space<vmem>>, vector<4x2x20xf32>,
    %cst_2 = arith.constant 0.000000e+00 : f32
    %2 = vector.broadcast %cst_2 : f32 to vector<4x2x20xf32>
    %c0_3 = arith.constant 0 : index
    %c18 = arith.constant 18 : index
    %c0_4 = arith.constant 0 : index
    %3 = vector.load %arg15[%c0_3, %c18, %c0_4] : memref<4x20x20xf32, #tpu.memory_space<vmem>>, vector<4x2x20xf32>
    tpu.vector_store %arg15[%c0_3, %c18, %c0_4], %2 {strides = array<i32>} : memref<4x20x20xf32, #tpu.memory_space<vmem>>, vector<4x2x20xf32>,
    %cst_5 = arith.constant 0.000000e+00 : f32
    %4 = vector.broadcast %cst_5 : f32 to vector<4x16x2xf32>
    %c0_6 = arith.constant 0 : index
    %c2 = arith.constant 2 : index
    %c0_7 = arith.constant 0 : index
    %5 = vector.load %arg15[%c0_6, %c2, %c0_7] : memref<4x20x20xf32, #tpu.memory_space<vmem>>, vector<4x16x2xf32>
    tpu.vector_store %arg15[%c0_6, %c2, %c0_7], %4 {strides = array<i32>} : memref<4x20x20xf32, #tpu.memory_space<vmem>>, vector<4x16x2xf32>,
    %cst_8 = arith.constant 0.000000e+00 : f32
    %6 = vector.broadcast %cst_8 : f32 to vector<4x16x2xf32>
    %c0_9 = arith.constant 0 : index
    %c2_10 = arith.constant 2 : index
    %c18_11 = arith.constant 18 : index
    %7 = vector.load %arg15[%c0_9, %c2_10, %c18_11] : memref<4x20x20xf32, #tpu.memory_space<vmem>>, vector<4x16x2xf32>
    tpu.vector_store %arg15[%c0_9, %c2_10, %c18_11], %6 {strides = array<i32>} : memref<4x20x20xf32, #tpu.memory_space<vmem>>, vector<4x16x2xf32>,
    %cst_12 = arith.constant 0.000000e+00 : f32
    %8 = vector.broadcast %cst_12 : f32 to vector<4x9x34xf32>
    %c0_13 = arith.constant 0 : index
    %c0_14 = arith.constant 0 : index
    %c0_15 = arith.constant 0 : index
    %9 = vector.load %arg16[%c0_13, %c0_14, %c0_15] : memref<4x34x34xf32, #tpu.memory_space<vmem>>, vector<4x9x34xf32>
    tpu.vector_store %arg16[%c0_13, %c0_14, %c0_15], %8 {strides = array<i32>} : memref<4x34x34xf32, #tpu.memory_space<vmem>>, vector<4x9x34xf32>,
    %cst_16 = arith.constant 0.000000e+00 : f32
    %10 = vector.broadcast %cst_16 : f32 to vector<4x9x34xf32>
    %c0_17 = arith.constant 0 : index
    %c25 = arith.constant 25 : index
    %c0_18 = arith.constant 0 : index
    %11 = vector.load %arg16[%c0_17, %c25, %c0_18] : memref<4x34x34xf32, #tpu.memory_space<vmem>>, vector<4x9x34xf32>
    tpu.vector_store %arg16[%c0_17, %c25, %c0_18], %10 {strides = array<i32>} : memref<4x34x34xf32, #tpu.memory_space<vmem>>, vector<4x9x34xf32>,
    %cst_19 = arith.constant 0.000000e+00 : f32
    %12 = vector.broadcast %cst_19 : f32 to vector<4x16x9xf32>
    %c0_20 = arith.constant 0 : index
    %c9 = arith.constant 9 : index
    %c0_21 = arith.constant 0 : index
    %13 = vector.load %arg16[%c0_20, %c9, %c0_21] : memref<4x34x34xf32, #tpu.memory_space<vmem>>, vector<4x16x9xf32>
    tpu.vector_store %arg16[%c0_20, %c9, %c0_21], %12 {strides = array<i32>} : memref<4x34x34xf32, #tpu.memory_space<vmem>>, vector<4x16x9xf32>,
    %cst_22 = arith.constant 0.000000e+00 : f32
    %14 = vector.broadcast %cst_22 : f32 to vector<4x16x9xf32>
    %c0_23 = arith.constant 0 : index
    %c9_24 = arith.constant 9 : index
    %c25_25 = arith.constant 25 : index
    %15 = vector.load %arg16[%c0_23, %c9_24, %c25_25] : memref<4x34x34xf32, #tpu.memory_space<vmem>>, vector<4x16x9xf32>
    tpu.vector_store %arg16[%c0_23, %c9_24, %c25_25], %14 {strides = array<i32>} : memref<4x34x34xf32, #tpu.memory_space<vmem>>, vector<4x16x9xf32>,
    %c0_26 = arith.constant 0 : index
    %c0_27 = arith.constant 0 : index
    %c0_28 = arith.constant 0 : index
    %c0_29 = arith.constant 0 : index
    %16 = vector.load %arg1[%c0_26, %c0_27, %c0_28, %c0_29] : memref<1x4x16x16xf32, #tpu.memory_space<vmem>>, vector<1x1x16x16xf32>
    %17 = vector.shape_cast %16 : vector<1x1x16x16xf32> to vector<16x16xf32>
    %c0_30 = arith.constant 0 : index
    %c1 = arith.constant 1 : index
    %c0_31 = arith.constant 0 : index
    %c0_32 = arith.constant 0 : index
    %18 = vector.load %arg1[%c0_30, %c1, %c0_31, %c0_32] : memref<1x4x16x16xf32, #tpu.memory_space<vmem>>, vector<1x1x16x16xf32>
    %19 = vector.shape_cast %18 : vector<1x1x16x16xf32> to vector<16x16xf32>
    %c0_33 = arith.constant 0 : index
    %c2_34 = arith.constant 2 : index
    %c0_35 = arith.constant 0 : index
    %c0_36 = arith.constant 0 : index
    %20 = vector.load %arg1[%c0_33, %c2_34, %c0_35, %c0_36] : memref<1x4x16x16xf32, #tpu.memory_space<vmem>>, vector<1x1x16x16xf32>
    %21 = vector.shape_cast %20 : vector<1x1x16x16xf32> to vector<16x16xf32>
    %c0_37 = arith.constant 0 : index
    %c3 = arith.constant 3 : index
    %c0_38 = arith.constant 0 : index
    %c0_39 = arith.constant 0 : index
    %22 = vector.load %arg1[%c0_37, %c3, %c0_38, %c0_39] : memref<1x4x16x16xf32, #tpu.memory_space<vmem>>, vector<1x1x16x16xf32>
    %23 = vector.shape_cast %22 : vector<1x1x16x16xf32> to vector<16x16xf32>
    %c0_40 = arith.constant 0 : index
    %c0_41 = arith.constant 0 : index
    %24 = memref.load %arg2[%c0_40, %c0_41] : memref<4x4xf32, #tpu.memory_space<smem>>
    %25 = vector.broadcast %24 : f32 to vector<16x16xf32>
    %26 = arith.mulf %17, %25 : vector<16x16xf32>
    %c0_42 = arith.constant 0 : index
    %c1_43 = arith.constant 1 : index
    %27 = memref.load %arg2[%c0_42, %c1_43] : memref<4x4xf32, #tpu.memory_space<smem>>
    %28 = vector.broadcast %27 : f32 to vector<16x16xf32>
    %29 = arith.mulf %19, %28 : vector<16x16xf32>
    %30 = arith.addf %26, %29 : vector<16x16xf32>
    %c0_44 = arith.constant 0 : index
    %c2_45 = arith.constant 2 : index
    %31 = memref.load %arg2[%c0_44, %c2_45] : memref<4x4xf32, #tpu.memory_space<smem>>
    %32 = vector.broadcast %31 : f32 to vector<16x16xf32>
    %33 = arith.mulf %21, %32 : vector<16x16xf32>
    %34 = arith.addf %30, %33 : vector<16x16xf32>
    %c0_46 = arith.constant 0 : index
    %c3_47 = arith.constant 3 : index
    %35 = memref.load %arg2[%c0_46, %c3_47] : memref<4x4xf32, #tpu.memory_space<smem>>
    %36 = vector.broadcast %35 : f32 to vector<16x16xf32>
    %37 = arith.mulf %23, %36 : vector<16x16xf32>
    %38 = arith.addf %34, %37 : vector<16x16xf32>
    %c0_48 = arith.constant 0 : index
    %39 = memref.load %arg3[%c0_48] : memref<4xf32, #tpu.memory_space<smem>>
    %40 = vector.broadcast %39 : f32 to vector<16x16xf32>
    %41 = arith.addf %38, %40 : vector<16x16xf32>
    %cst_49 = arith.constant 0.707106769 : f32
    %42 = vector.broadcast %cst_49 : f32 to vector<16x16xf32>
    %43 = arith.mulf %41, %42 : vector<16x16xf32>
    %44 = math.absf %43 : vector<16x16xf32>
    %cst_50 = arith.constant 0.000000e+00 : f32
    %45 = vector.broadcast %cst_50 : f32 to vector<16x16xf32>
    %46 = arith.cmpf oge, %43, %45 : vector<16x16xf32>
    %cst_51 = arith.constant 1.000000e+00 : f32
    %cst_52 = arith.constant -1.000000e+00 : f32
    %47 = vector.broadcast %cst_51 : f32 to vector<16x16xf32>
    %48 = vector.broadcast %cst_52 : f32 to vector<16x16xf32>
    %49 = arith.select %46, %47, %48 : vector<16x16xi1>, vector<16x16xf32>
    %cst_53 = arith.constant 0.327591091 : f32
    %50 = vector.broadcast %cst_53 : f32 to vector<16x16xf32>
    %51 = arith.mulf %50, %44 : vector<16x16xf32>
    %cst_54 = arith.constant 1.000000e+00 : f32
    %52 = vector.broadcast %cst_54 : f32 to vector<16x16xf32>
    %53 = arith.addf %52, %51 : vector<16x16xf32>
    %54 = tpu.reciprocal %53 {approx = true} : vector<16x16xf32> -> vector<16x16xf32>
    %55 = arith.mulf %53, %54 : vector<16x16xf32>
    %cst_55 = arith.constant 2.000000e+00 : f32
    %56 = vector.broadcast %cst_55 : f32 to vector<16x16xf32>
    %57 = arith.subf %56, %55 : vector<16x16xf32>
    %58 = arith.mulf %54, %57 : vector<16x16xf32>
    %cst_56 = arith.constant 1.06140542 : f32
    %59 = vector.broadcast %cst_56 : f32 to vector<16x16xf32>
    %60 = arith.mulf %58, %59 : vector<16x16xf32>
    %cst_57 = arith.constant -1.45315206 : f32
    %61 = vector.broadcast %cst_57 : f32 to vector<16x16xf32>
    %62 = arith.addf %61, %60 : vector<16x16xf32>
    %63 = arith.mulf %58, %62 : vector<16x16xf32>
    %cst_58 = arith.constant 1.42141378 : f32
    %64 = vector.broadcast %cst_58 : f32 to vector<16x16xf32>
    %65 = arith.addf %64, %63 : vector<16x16xf32>
    %66 = arith.mulf %58, %65 : vector<16x16xf32>
    %cst_59 = arith.constant -0.284496725 : f32
    %67 = vector.broadcast %cst_59 : f32 to vector<16x16xf32>
    %68 = arith.addf %67, %66 : vector<16x16xf32>
    %69 = arith.mulf %58, %68 : vector<16x16xf32>
    %cst_60 = arith.constant 0.254829586 : f32
    %70 = vector.broadcast %cst_60 : f32 to vector<16x16xf32>
    %71 = arith.addf %70, %69 : vector<16x16xf32>
    %72 = arith.mulf %58, %71 : vector<16x16xf32>
    %cst_61 = arith.constant 0.000000e+00 : f32
    %73 = vector.broadcast %cst_61 : f32 to vector<16x16xf32>
    %74 = arith.subf %73, %44 : vector<16x16xf32>
    %75 = arith.mulf %74, %44 : vector<16x16xf32>
    %76 = math.exp %75 : vector<16x16xf32>
    %77 = arith.mulf %72, %76 : vector<16x16xf32>
    %cst_62 = arith.constant 1.000000e+00 : f32
    %78 = vector.broadcast %cst_62 : f32 to vector<16x16xf32>
    %79 = arith.subf %78, %77 : vector<16x16xf32>
    %80 = arith.mulf %49, %79 : vector<16x16xf32>
    %cst_63 = arith.constant 5.000000e-01 : f32
    %81 = vector.broadcast %cst_63 : f32 to vector<16x16xf32>
    %82 = arith.mulf %81, %41 : vector<16x16xf32>
    %cst_64 = arith.constant 1.000000e+00 : f32
    %83 = vector.broadcast %cst_64 : f32 to vector<16x16xf32>
    %84 = arith.addf %83, %80 : vector<16x16xf32>
    %85 = arith.mulf %82, %84 : vector<16x16xf32>
    %c0_65 = arith.constant 0 : index
    %c2_66 = arith.constant 2 : index
    %c2_67 = arith.constant 2 : index
    %86 = vector.load %arg15[%c0_65, %c2_66, %c2_67] : memref<4x20x20xf32, #tpu.memory_space<vmem>>, vector<1x16x16xf32>
    %87 = vector.shape_cast %86 : vector<1x16x16xf32> to vector<16x16xf32>
    %88 = vector.shape_cast %85 : vector<16x16xf32> to vector<1x16x16xf32>
    tpu.vector_store %arg15[%c0_65, %c2_66, %c2_67], %88 {strides = array<i32>} : memref<4x20x20xf32, #tpu.memory_space<vmem>>, vector<1x16x16xf32>,
    %c1_68 = arith.constant 1 : index
    %c0_69 = arith.constant 0 : index
    %89 = memref.load %arg2[%c1_68, %c0_69] : memref<4x4xf32, #tpu.memory_space<smem>>
    %90 = vector.broadcast %89 : f32 to vector<16x16xf32>
    %91 = arith.mulf %17, %90 : vector<16x16xf32>
    %c1_70 = arith.constant 1 : index
    %c1_71 = arith.constant 1 : index
    %92 = memref.load %arg2[%c1_70, %c1_71] : memref<4x4xf32, #tpu.memory_space<smem>>
    %93 = vector.broadcast %92 : f32 to vector<16x16xf32>
    %94 = arith.mulf %19, %93 : vector<16x16xf32>
    %95 = arith.addf %91, %94 : vector<16x16xf32>
    %c1_72 = arith.constant 1 : index
    %c2_73 = arith.constant 2 : index
    %96 = memref.load %arg2[%c1_72, %c2_73] : memref<4x4xf32, #tpu.memory_space<smem>>
    %97 = vector.broadcast %96 : f32 to vector<16x16xf32>
    %98 = arith.mulf %21, %97 : vector<16x16xf32>
    %99 = arith.addf %95, %98 : vector<16x16xf32>
    %c1_74 = arith.constant 1 : index
    %c3_75 = arith.constant 3 : index
    %100 = memref.load %arg2[%c1_74, %c3_75] : memref<4x4xf32, #tpu.memory_space<smem>>
    %101 = vector.broadcast %100 : f32 to vector<16x16xf32>
    %102 = arith.mulf %23, %101 : vector<16x16xf32>
    %103 = arith.addf %99, %102 : vector<16x16xf32>
    %c1_76 = arith.constant 1 : index
    %104 = memref.load %arg3[%c1_76] : memref<4xf32, #tpu.memory_space<smem>>
    %105 = vector.broadcast %104 : f32 to vector<16x16xf32>
    %106 = arith.addf %103, %105 : vector<16x16xf32>
    %cst_77 = arith.constant 0.707106769 : f32
    %107 = vector.broadcast %cst_77 : f32 to vector<16x16xf32>
    %108 = arith.mulf %106, %107 : vector<16x16xf32>
    %109 = math.absf %108 : vector<16x16xf32>
    %cst_78 = arith.constant 0.000000e+00 : f32
    %110 = vector.broadcast %cst_78 : f32 to vector<16x16xf32>
    %111 = arith.cmpf oge, %108, %110 : vector<16x16xf32>
    %cst_79 = arith.constant 1.000000e+00 : f32
    %cst_80 = arith.constant -1.000000e+00 : f32
    %112 = vector.broadcast %cst_79 : f32 to vector<16x16xf32>
    %113 = vector.broadcast %cst_80 : f32 to vector<16x16xf32>
    %114 = arith.select %111, %112, %113 : vector<16x16xi1>, vector<16x16xf32>
    %cst_81 = arith.constant 0.327591091 : f32
    %115 = vector.broadcast %cst_81 : f32 to vector<16x16xf32>
    %116 = arith.mulf %115, %109 : vector<16x16xf32>
    %cst_82 = arith.constant 1.000000e+00 : f32
    %117 = vector.broadcast %cst_82 : f32 to vector<16x16xf32>
    %118 = arith.addf %117, %116 : vector<16x16xf32>
    %119 = tpu.reciprocal %118 {approx = true} : vector<16x16xf32> -> vector<16x16xf32>
    %120 = arith.mulf %118, %119 : vector<16x16xf32>
    %cst_83 = arith.constant 2.000000e+00 : f32
    %121 = vector.broadcast %cst_83 : f32 to vector<16x16xf32>
    %122 = arith.subf %121, %120 : vector<16x16xf32>
    %123 = arith.mulf %119, %122 : vector<16x16xf32>
    %cst_84 = arith.constant 1.06140542 : f32
    %124 = vector.broadcast %cst_84 : f32 to vector<16x16xf32>
    %125 = arith.mulf %123, %124 : vector<16x16xf32>
    %cst_85 = arith.constant -1.45315206 : f32
    %126 = vector.broadcast %cst_85 : f32 to vector<16x16xf32>
    %127 = arith.addf %126, %125 : vector<16x16xf32>
    %128 = arith.mulf %123, %127 : vector<16x16xf32>
    %cst_86 = arith.constant 1.42141378 : f32
    %129 = vector.broadcast %cst_86 : f32 to vector<16x16xf32>
    %130 = arith.addf %129, %128 : vector<16x16xf32>
    %131 = arith.mulf %123, %130 : vector<16x16xf32>
    %cst_87 = arith.constant -0.284496725 : f32
    %132 = vector.broadcast %cst_87 : f32 to vector<16x16xf32>
    %133 = arith.addf %132, %131 : vector<16x16xf32>
    %134 = arith.mulf %123, %133 : vector<16x16xf32>
    %cst_88 = arith.constant 0.254829586 : f32
    %135 = vector.broadcast %cst_88 : f32 to vector<16x16xf32>
    %136 = arith.addf %135, %134 : vector<16x16xf32>
    %137 = arith.mulf %123, %136 : vector<16x16xf32>
    %cst_89 = arith.constant 0.000000e+00 : f32
    %138 = vector.broadcast %cst_89 : f32 to vector<16x16xf32>
    %139 = arith.subf %138, %109 : vector<16x16xf32>
    %140 = arith.mulf %139, %109 : vector<16x16xf32>
    %141 = math.exp %140 : vector<16x16xf32>
    %142 = arith.mulf %137, %141 : vector<16x16xf32>
    %cst_90 = arith.constant 1.000000e+00 : f32
    %143 = vector.broadcast %cst_90 : f32 to vector<16x16xf32>
    %144 = arith.subf %143, %142 : vector<16x16xf32>
    %145 = arith.mulf %114, %144 : vector<16x16xf32>
    %cst_91 = arith.constant 5.000000e-01 : f32
    %146 = vector.broadcast %cst_91 : f32 to vector<16x16xf32>
    %147 = arith.mulf %146, %106 : vector<16x16xf32>
    %cst_92 = arith.constant 1.000000e+00 : f32
    %148 = vector.broadcast %cst_92 : f32 to vector<16x16xf32>
    %149 = arith.addf %148, %145 : vector<16x16xf32>
    %150 = arith.mulf %147, %149 : vector<16x16xf32>
    %c1_93 = arith.constant 1 : index
    %c2_94 = arith.constant 2 : index
    %c2_95 = arith.constant 2 : index
    %151 = vector.load %arg15[%c1_93, %c2_94, %c2_95] : memref<4x20x20xf32, #tpu.memory_space<vmem>>, vector<1x16x16xf32>
    %152 = vector.shape_cast %151 : vector<1x16x16xf32> to vector<16x16xf32>
    %153 = vector.shape_cast %150 : vector<16x16xf32> to vector<1x16x16xf32>
    tpu.vector_store %arg15[%c1_93, %c2_94, %c2_95], %153 {strides = array<i32>} : memref<4x20x20xf32, #tpu.memory_space<vmem>>, vector<1x16x16xf32>,
    %c2_96 = arith.constant 2 : index
    %c0_97 = arith.constant 0 : index
    %154 = memref.load %arg2[%c2_96, %c0_97] : memref<4x4xf32, #tpu.memory_space<smem>>
    %155 = vector.broadcast %154 : f32 to vector<16x16xf32>
    %156 = arith.mulf %17, %155 : vector<16x16xf32>
    %c2_98 = arith.constant 2 : index
    %c1_99 = arith.constant 1 : index
    %157 = memref.load %arg2[%c2_98, %c1_99] : memref<4x4xf32, #tpu.memory_space<smem>>
    %158 = vector.broadcast %157 : f32 to vector<16x16xf32>
    %159 = arith.mulf %19, %158 : vector<16x16xf32>
    %160 = arith.addf %156, %159 : vector<16x16xf32>
    %c2_100 = arith.constant 2 : index
    %c2_101 = arith.constant 2 : index
    %161 = memref.load %arg2[%c2_100, %c2_101] : memref<4x4xf32, #tpu.memory_space<smem>>
    %162 = vector.broadcast %161 : f32 to vector<16x16xf32>
    %163 = arith.mulf %21, %162 : vector<16x16xf32>
    %164 = arith.addf %160, %163 : vector<16x16xf32>
    %c2_102 = arith.constant 2 : index
    %c3_103 = arith.constant 3 : index
    %165 = memref.load %arg2[%c2_102, %c3_103] : memref<4x4xf32, #tpu.memory_space<smem>>
    %166 = vector.broadcast %165 : f32 to vector<16x16xf32>
    %167 = arith.mulf %23, %166 : vector<16x16xf32>
    %168 = arith.addf %164, %167 : vector<16x16xf32>
    %c2_104 = arith.constant 2 : index
    %169 = memref.load %arg3[%c2_104] : memref<4xf32, #tpu.memory_space<smem>>
    %170 = vector.broadcast %169 : f32 to vector<16x16xf32>
    %171 = arith.addf %168, %170 : vector<16x16xf32>
    %cst_105 = arith.constant 0.707106769 : f32
    %172 = vector.broadcast %cst_105 : f32 to vector<16x16xf32>
    %173 = arith.mulf %171, %172 : vector<16x16xf32>
    %174 = math.absf %173 : vector<16x16xf32>
    %cst_106 = arith.constant 0.000000e+00 : f32
    %175 = vector.broadcast %cst_106 : f32 to vector<16x16xf32>
    %176 = arith.cmpf oge, %173, %175 : vector<16x16xf32>
    %cst_107 = arith.constant 1.000000e+00 : f32
    %cst_108 = arith.constant -1.000000e+00 : f32
    %177 = vector.broadcast %cst_107 : f32 to vector<16x16xf32>
    %178 = vector.broadcast %cst_108 : f32 to vector<16x16xf32>
    %179 = arith.select %176, %177, %178 : vector<16x16xi1>, vector<16x16xf32>
    %cst_109 = arith.constant 0.327591091 : f32
    %180 = vector.broadcast %cst_109 : f32 to vector<16x16xf32>
    %181 = arith.mulf %180, %174 : vector<16x16xf32>
    %cst_110 = arith.constant 1.000000e+00 : f32
    %182 = vector.broadcast %cst_110 : f32 to vector<16x16xf32>
    %183 = arith.addf %182, %181 : vector<16x16xf32>
    %184 = tpu.reciprocal %183 {approx = true} : vector<16x16xf32> -> vector<16x16xf32>
    %185 = arith.mulf %183, %184 : vector<16x16xf32>
    %cst_111 = arith.constant 2.000000e+00 : f32
    %186 = vector.broadcast %cst_111 : f32 to vector<16x16xf32>
    %187 = arith.subf %186, %185 : vector<16x16xf32>
    %188 = arith.mulf %184, %187 : vector<16x16xf32>
    %cst_112 = arith.constant 1.06140542 : f32
    %189 = vector.broadcast %cst_112 : f32 to vector<16x16xf32>
    %190 = arith.mulf %188, %189 : vector<16x16xf32>
    %cst_113 = arith.constant -1.45315206 : f32
    %191 = vector.broadcast %cst_113 : f32 to vector<16x16xf32>
    %192 = arith.addf %191, %190 : vector<16x16xf32>
    %193 = arith.mulf %188, %192 : vector<16x16xf32>
    %cst_114 = arith.constant 1.42141378 : f32
    %194 = vector.broadcast %cst_114 : f32 to vector<16x16xf32>
    %195 = arith.addf %194, %193 : vector<16x16xf32>
    %196 = arith.mulf %188, %195 : vector<16x16xf32>
    %cst_115 = arith.constant -0.284496725 : f32
    %197 = vector.broadcast %cst_115 : f32 to vector<16x16xf32>
    %198 = arith.addf %197, %196 : vector<16x16xf32>
    %199 = arith.mulf %188, %198 : vector<16x16xf32>
    %cst_116 = arith.constant 0.254829586 : f32
    %200 = vector.broadcast %cst_116 : f32 to vector<16x16xf32>
    %201 = arith.addf %200, %199 : vector<16x16xf32>
    %202 = arith.mulf %188, %201 : vector<16x16xf32>
    %cst_117 = arith.constant 0.000000e+00 : f32
    %203 = vector.broadcast %cst_117 : f32 to vector<16x16xf32>
    %204 = arith.subf %203, %174 : vector<16x16xf32>
    %205 = arith.mulf %204, %174 : vector<16x16xf32>
    %206 = math.exp %205 : vector<16x16xf32>
    %207 = arith.mulf %202, %206 : vector<16x16xf32>
    %cst_118 = arith.constant 1.000000e+00 : f32
    %208 = vector.broadcast %cst_118 : f32 to vector<16x16xf32>
    %209 = arith.subf %208, %207 : vector<16x16xf32>
    %210 = arith.mulf %179, %209 : vector<16x16xf32>
    %cst_119 = arith.constant 5.000000e-01 : f32
    %211 = vector.broadcast %cst_119 : f32 to vector<16x16xf32>
    %212 = arith.mulf %211, %171 : vector<16x16xf32>
    %cst_120 = arith.constant 1.000000e+00 : f32
    %213 = vector.broadcast %cst_120 : f32 to vector<16x16xf32>
    %214 = arith.addf %213, %210 : vector<16x16xf32>
    %215 = arith.mulf %212, %214 : vector<16x16xf32>
    %c2_121 = arith.constant 2 : index
    %c2_122 = arith.constant 2 : index
    %c2_123 = arith.constant 2 : index
    %216 = vector.load %arg15[%c2_121, %c2_122, %c2_123] : memref<4x20x20xf32, #tpu.memory_space<vmem>>, vector<1x16x16xf32>
    %217 = vector.shape_cast %216 : vector<1x16x16xf32> to vector<16x16xf32>
    %218 = vector.shape_cast %215 : vector<16x16xf32> to vector<1x16x16xf32>
    tpu.vector_store %arg15[%c2_121, %c2_122, %c2_123], %218 {strides = array<i32>} : memref<4x20x20xf32, #tpu.memory_space<vmem>>, vector<1x16x16xf32>,
    %c3_124 = arith.constant 3 : index
    %c0_125 = arith.constant 0 : index
    %219 = memref.load %arg2[%c3_124, %c0_125] : memref<4x4xf32, #tpu.memory_space<smem>>
    %220 = vector.broadcast %219 : f32 to vector<16x16xf32>
    %221 = arith.mulf %17, %220 : vector<16x16xf32>
    %c3_126 = arith.constant 3 : index
    %c1_127 = arith.constant 1 : index
    %222 = memref.load %arg2[%c3_126, %c1_127] : memref<4x4xf32, #tpu.memory_space<smem>>
    %223 = vector.broadcast %222 : f32 to vector<16x16xf32>
    %224 = arith.mulf %19, %223 : vector<16x16xf32>
    %225 = arith.addf %221, %224 : vector<16x16xf32>
    %c3_128 = arith.constant 3 : index
    %c2_129 = arith.constant 2 : index
    %226 = memref.load %arg2[%c3_128, %c2_129] : memref<4x4xf32, #tpu.memory_space<smem>>
    %227 = vector.broadcast %226 : f32 to vector<16x16xf32>
    %228 = arith.mulf %21, %227 : vector<16x16xf32>
    %229 = arith.addf %225, %228 : vector<16x16xf32>
    %c3_130 = arith.constant 3 : index
    %c3_131 = arith.constant 3 : index
    %230 = memref.load %arg2[%c3_130, %c3_131] : memref<4x4xf32, #tpu.memory_space<smem>>
    %231 = vector.broadcast %230 : f32 to vector<16x16xf32>
    %232 = arith.mulf %23, %231 : vector<16x16xf32>
    %233 = arith.addf %229, %232 : vector<16x16xf32>
    %c3_132 = arith.constant 3 : index
    %234 = memref.load %arg3[%c3_132] : memref<4xf32, #tpu.memory_space<smem>>
    %235 = vector.broadcast %234 : f32 to vector<16x16xf32>
    %236 = arith.addf %233, %235 : vector<16x16xf32>
    %cst_133 = arith.constant 0.707106769 : f32
    %237 = vector.broadcast %cst_133 : f32 to vector<16x16xf32>
    %238 = arith.mulf %236, %237 : vector<16x16xf32>
    %239 = math.absf %238 : vector<16x16xf32>
    %cst_134 = arith.constant 0.000000e+00 : f32
    %240 = vector.broadcast %cst_134 : f32 to vector<16x16xf32>
    %241 = arith.cmpf oge, %238, %240 : vector<16x16xf32>
    %cst_135 = arith.constant 1.000000e+00 : f32
    %cst_136 = arith.constant -1.000000e+00 : f32
    %242 = vector.broadcast %cst_135 : f32 to vector<16x16xf32>
    %243 = vector.broadcast %cst_136 : f32 to vector<16x16xf32>
    %244 = arith.select %241, %242, %243 : vector<16x16xi1>, vector<16x16xf32>
    %cst_137 = arith.constant 0.327591091 : f32
    %245 = vector.broadcast %cst_137 : f32 to vector<16x16xf32>
    %246 = arith.mulf %245, %239 : vector<16x16xf32>
    %cst_138 = arith.constant 1.000000e+00 : f32
    %247 = vector.broadcast %cst_138 : f32 to vector<16x16xf32>
    %248 = arith.addf %247, %246 : vector<16x16xf32>
    %249 = tpu.reciprocal %248 {approx = true} : vector<16x16xf32> -> vector<16x16xf32>
    %250 = arith.mulf %248, %249 : vector<16x16xf32>
    %cst_139 = arith.constant 2.000000e+00 : f32
    %251 = vector.broadcast %cst_139 : f32 to vector<16x16xf32>
    %252 = arith.subf %251, %250 : vector<16x16xf32>
    %253 = arith.mulf %249, %252 : vector<16x16xf32>
    %cst_140 = arith.constant 1.06140542 : f32
    %254 = vector.broadcast %cst_140 : f32 to vector<16x16xf32>
    %255 = arith.mulf %253, %254 : vector<16x16xf32>
    %cst_141 = arith.constant -1.45315206 : f32
    %256 = vector.broadcast %cst_141 : f32 to vector<16x16xf32>
    %257 = arith.addf %256, %255 : vector<16x16xf32>
    %258 = arith.mulf %253, %257 : vector<16x16xf32>
    %cst_142 = arith.constant 1.42141378 : f32
    %259 = vector.broadcast %cst_142 : f32 to vector<16x16xf32>
    %260 = arith.addf %259, %258 : vector<16x16xf32>
    %261 = arith.mulf %253, %260 : vector<16x16xf32>
    %cst_143 = arith.constant -0.284496725 : f32
    %262 = vector.broadcast %cst_143 : f32 to vector<16x16xf32>
    %263 = arith.addf %262, %261 : vector<16x16xf32>
    %264 = arith.mulf %253, %263 : vector<16x16xf32>
    %cst_144 = arith.constant 0.254829586 : f32
    %265 = vector.broadcast %cst_144 : f32 to vector<16x16xf32>
    %266 = arith.addf %265, %264 : vector<16x16xf32>
    %267 = arith.mulf %253, %266 : vector<16x16xf32>
    %cst_145 = arith.constant 0.000000e+00 : f32
    %268 = vector.broadcast %cst_145 : f32 to vector<16x16xf32>
    %269 = arith.subf %268, %239 : vector<16x16xf32>
    %270 = arith.mulf %269, %239 : vector<16x16xf32>
    %271 = math.exp %270 : vector<16x16xf32>
    %272 = arith.mulf %267, %271 : vector<16x16xf32>
    %cst_146 = arith.constant 1.000000e+00 : f32
    %273 = vector.broadcast %cst_146 : f32 to vector<16x16xf32>
    %274 = arith.subf %273, %272 : vector<16x16xf32>
    %275 = arith.mulf %244, %274 : vector<16x16xf32>
    %cst_147 = arith.constant 5.000000e-01 : f32
    %276 = vector.broadcast %cst_147 : f32 to vector<16x16xf32>
    %277 = arith.mulf %276, %236 : vector<16x16xf32>
    %cst_148 = arith.constant 1.000000e+00 : f32
    %278 = vector.broadcast %cst_148 : f32 to vector<16x16xf32>
    %279 = arith.addf %278, %275 : vector<16x16xf32>
    %280 = arith.mulf %277, %279 : vector<16x16xf32>
    %c3_149 = arith.constant 3 : index
    %c2_150 = arith.constant 2 : index
    %c2_151 = arith.constant 2 : index
    %281 = vector.load %arg15[%c3_149, %c2_150, %c2_151] : memref<4x20x20xf32, #tpu.memory_space<vmem>>, vector<1x16x16xf32>
    %282 = vector.shape_cast %281 : vector<1x16x16xf32> to vector<16x16xf32>
    %283 = vector.shape_cast %280 : vector<16x16xf32> to vector<1x16x16xf32>
    tpu.vector_store %arg15[%c3_149, %c2_150, %c2_151], %283 {strides = array<i32>} : memref<4x20x20xf32, #tpu.memory_space<vmem>>, vector<1x16x16xf32>,
    %cst_152 = arith.constant 0.000000e+00 : f32
    %284 = vector.broadcast %cst_152 : f32 to vector<16x16xf32>
    %c0_153 = arith.constant 0 : index
    %c0_154 = arith.constant 0 : index
    %c0_155 = arith.constant 0 : index
    %285 = vector.load %arg15[%c0_153, %c0_154, %c0_155] : memref<4x20x20xf32, #tpu.memory_space<vmem>>, vector<1x16x20xf32>
    %286 = vector.shape_cast %285 : vector<1x16x20xf32> to vector<16x20xf32>
    %287 = vector.extract_strided_slice %286 {offsets = [0, 0], sizes = [16, 16], strides = [1, 1]} : vector<16x20xf32> to vector<16x16xf32>
    %c0_156 = arith.constant 0 : index
    %c0_157 = arith.constant 0 : index
    %288 = memref.load %arg4[%c0_156, %c0_157] : memref<4x25xf32, #tpu.memory_space<smem>>
    %289 = vector.broadcast %288 : f32 to vector<16x16xf32>
    %290 = arith.mulf %287, %289 : vector<16x16xf32>
    %291 = arith.addf %284, %290 : vector<16x16xf32>
    %292 = vector.extract_strided_slice %286 {offsets = [0, 1], sizes = [16, 16], strides = [1, 1]} : vector<16x20xf32> to vector<16x16xf32>
    %c0_158 = arith.constant 0 : index
    %c1_159 = arith.constant 1 : index
    %293 = memref.load %arg4[%c0_158, %c1_159] : memref<4x25xf32, #tpu.memory_space<smem>>
    %294 = vector.broadcast %293 : f32 to vector<16x16xf32>
    %295 = arith.mulf %292, %294 : vector<16x16xf32>
    %296 = arith.addf %291, %295 : vector<16x16xf32>
    %297 = vector.extract_strided_slice %286 {offsets = [0, 2], sizes = [16, 16], strides = [1, 1]} : vector<16x20xf32> to vector<16x16xf32>
    %c0_160 = arith.constant 0 : index
    %c2_161 = arith.constant 2 : index
    %298 = memref.load %arg4[%c0_160, %c2_161] : memref<4x25xf32, #tpu.memory_space<smem>>
    %299 = vector.broadcast %298 : f32 to vector<16x16xf32>
    %300 = arith.mulf %297, %299 : vector<16x16xf32>
    %301 = arith.addf %296, %300 : vector<16x16xf32>
    %302 = vector.extract_strided_slice %286 {offsets = [0, 3], sizes = [16, 16], strides = [1, 1]} : vector<16x20xf32> to vector<16x16xf32>
    %c0_162 = arith.constant 0 : index
    %c3_163 = arith.constant 3 : index
    %303 = memref.load %arg4[%c0_162, %c3_163] : memref<4x25xf32, #tpu.memory_space<smem>>
    %304 = vector.broadcast %303 : f32 to vector<16x16xf32>
    %305 = arith.mulf %302, %304 : vector<16x16xf32>
    %306 = arith.addf %301, %305 : vector<16x16xf32>
    %307 = vector.extract_strided_slice %286 {offsets = [0, 4], sizes = [16, 16], strides = [1, 1]} : vector<16x20xf32> to vector<16x16xf32>
    %c0_164 = arith.constant 0 : index
    %c4 = arith.constant 4 : index
    %308 = memref.load %arg4[%c0_164, %c4] : memref<4x25xf32, #tpu.memory_space<smem>>
    %309 = vector.broadcast %308 : f32 to vector<16x16xf32>
    %310 = arith.mulf %307, %309 : vector<16x16xf32>
    %311 = arith.addf %306, %310 : vector<16x16xf32>
    %c0_165 = arith.constant 0 : index
    %c1_166 = arith.constant 1 : index
    %c0_167 = arith.constant 0 : index
    %312 = vector.load %arg15[%c0_165, %c1_166, %c0_167] : memref<4x20x20xf32, #tpu.memory_space<vmem>>, vector<1x16x20xf32>
    %313 = vector.shape_cast %312 : vector<1x16x20xf32> to vector<16x20xf32>
    %314 = vector.extract_strided_slice %313 {offsets = [0, 0], sizes = [16, 16], strides = [1, 1]} : vector<16x20xf32> to vector<16x16xf32>
    %c0_168 = arith.constant 0 : index
    %c5 = arith.constant 5 : index
    %315 = memref.load %arg4[%c0_168, %c5] : memref<4x25xf32, #tpu.memory_space<smem>>
    %316 = vector.broadcast %315 : f32 to vector<16x16xf32>
    %317 = arith.mulf %314, %316 : vector<16x16xf32>
    %318 = arith.addf %311, %317 : vector<16x16xf32>
    %319 = vector.extract_strided_slice %313 {offsets = [0, 1], sizes = [16, 16], strides = [1, 1]} : vector<16x20xf32> to vector<16x16xf32>
    %c0_169 = arith.constant 0 : index
    %c6 = arith.constant 6 : index
    %320 = memref.load %arg4[%c0_169, %c6] : memref<4x25xf32, #tpu.memory_space<smem>>
    %321 = vector.broadcast %320 : f32 to vector<16x16xf32>
    %322 = arith.mulf %319, %321 : vector<16x16xf32>
    %323 = arith.addf %318, %322 : vector<16x16xf32>
    %324 = vector.extract_strided_slice %313 {offsets = [0, 2], sizes = [16, 16], strides = [1, 1]} : vector<16x20xf32> to vector<16x16xf32>
    %c0_170 = arith.constant 0 : index
    %c7 = arith.constant 7 : index
    %325 = memref.load %arg4[%c0_170, %c7] : memref<4x25xf32, #tpu.memory_space<smem>>
    %326 = vector.broadcast %325 : f32 to vector<16x16xf32>
    %327 = arith.mulf %324, %326 : vector<16x16xf32>
    %328 = arith.addf %323, %327 : vector<16x16xf32>
    %329 = vector.extract_strided_slice %313 {offsets = [0, 3], sizes = [16, 16], strides = [1, 1]} : vector<16x20xf32> to vector<16x16xf32>
    %c0_171 = arith.constant 0 : index
    %c8 = arith.constant 8 : index
    %330 = memref.load %arg4[%c0_171, %c8] : memref<4x25xf32, #tpu.memory_space<smem>>
    %331 = vector.broadcast %330 : f32 to vector<16x16xf32>
    %332 = arith.mulf %329, %331 : vector<16x16xf32>
    %333 = arith.addf %328, %332 : vector<16x16xf32>
    %334 = vector.extract_strided_slice %313 {offsets = [0, 4], sizes = [16, 16], strides = [1, 1]} : vector<16x20xf32> to vector<16x16xf32>
    %c0_172 = arith.constant 0 : index
    %c9_173 = arith.constant 9 : index
    %335 = memref.load %arg4[%c0_172, %c9_173] : memref<4x25xf32, #tpu.memory_space<smem>>
    %336 = vector.broadcast %335 : f32 to vector<16x16xf32>
    %337 = arith.mulf %334, %336 : vector<16x16xf32>
    %338 = arith.addf %333, %337 : vector<16x16xf32>
    %c0_174 = arith.constant 0 : index
    %c2_175 = arith.constant 2 : index
    %c0_176 = arith.constant 0 : index
    %339 = vector.load %arg15[%c0_174, %c2_175, %c0_176] : memref<4x20x20xf32, #tpu.memory_space<vmem>>, vector<1x16x20xf32>
    %340 = vector.shape_cast %339 : vector<1x16x20xf32> to vector<16x20xf32>
    %341 = vector.extract_strided_slice %340 {offsets = [0, 0], sizes = [16, 16], strides = [1, 1]} : vector<16x20xf32> to vector<16x16xf32>
    %c0_177 = arith.constant 0 : index
    %c10 = arith.constant 10 : index
    %342 = memref.load %arg4[%c0_177, %c10] : memref<4x25xf32, #tpu.memory_space<smem>>
    %343 = vector.broadcast %342 : f32 to vector<16x16xf32>
    %344 = arith.mulf %341, %343 : vector<16x16xf32>
    %345 = arith.addf %338, %344 : vector<16x16xf32>
    %346 = vector.extract_strided_slice %340 {offsets = [0, 1], sizes = [16, 16], strides = [1, 1]} : vector<16x20xf32> to vector<16x16xf32>
    %c0_178 = arith.constant 0 : index
    %c11 = arith.constant 11 : index
    %347 = memref.load %arg4[%c0_178, %c11] : memref<4x25xf32, #tpu.memory_space<smem>>
    %348 = vector.broadcast %347 : f32 to vector<16x16xf32>
    %349 = arith.mulf %346, %348 : vector<16x16xf32>
    %350 = arith.addf %345, %349 : vector<16x16xf32>
    %351 = vector.extract_strided_slice %340 {offsets = [0, 2], sizes = [16, 16], strides = [1, 1]} : vector<16x20xf32> to vector<16x16xf32>
    %c0_179 = arith.constant 0 : index
    %c12 = arith.constant 12 : index
    %352 = memref.load %arg4[%c0_179, %c12] : memref<4x25xf32, #tpu.memory_space<smem>>
    %353 = vector.broadcast %352 : f32 to vector<16x16xf32>
    %354 = arith.mulf %351, %353 : vector<16x16xf32>
    %355 = arith.addf %350, %354 : vector<16x16xf32>
    %356 = vector.extract_strided_slice %340 {offsets = [0, 3], sizes = [16, 16], strides = [1, 1]} : vector<16x20xf32> to vector<16x16xf32>
    %c0_180 = arith.constant 0 : index
    %c13 = arith.constant 13 : index
    %357 = memref.load %arg4[%c0_180, %c13] : memref<4x25xf32, #tpu.memory_space<smem>>
    %358 = vector.broadcast %357 : f32 to vector<16x16xf32>
    %359 = arith.mulf %356, %358 : vector<16x16xf32>
    %360 = arith.addf %355, %359 : vector<16x16xf32>
    %361 = vector.extract_strided_slice %340 {offsets = [0, 4], sizes = [16, 16], strides = [1, 1]} : vector<16x20xf32> to vector<16x16xf32>
    %c0_181 = arith.constant 0 : index
    %c14 = arith.constant 14 : index
    %362 = memref.load %arg4[%c0_181, %c14] : memref<4x25xf32, #tpu.memory_space<smem>>
    %363 = vector.broadcast %362 : f32 to vector<16x16xf32>
    %364 = arith.mulf %361, %363 : vector<16x16xf32>
    %365 = arith.addf %360, %364 : vector<16x16xf32>
    %c0_182 = arith.constant 0 : index
    %c3_183 = arith.constant 3 : index
    %c0_184 = arith.constant 0 : index
    %366 = vector.load %arg15[%c0_182, %c3_183, %c0_184] : memref<4x20x20xf32, #tpu.memory_space<vmem>>, vector<1x16x20xf32>
    %367 = vector.shape_cast %366 : vector<1x16x20xf32> to vector<16x20xf32>
    %368 = vector.extract_strided_slice %367 {offsets = [0, 0], sizes = [16, 16], strides = [1, 1]} : vector<16x20xf32> to vector<16x16xf32>
    %c0_185 = arith.constant 0 : index
    %c15 = arith.constant 15 : index
    %369 = memref.load %arg4[%c0_185, %c15] : memref<4x25xf32, #tpu.memory_space<smem>>
    %370 = vector.broadcast %369 : f32 to vector<16x16xf32>
    %371 = arith.mulf %368, %370 : vector<16x16xf32>
    %372 = arith.addf %365, %371 : vector<16x16xf32>
    %373 = vector.extract_strided_slice %367 {offsets = [0, 1], sizes = [16, 16], strides = [1, 1]} : vector<16x20xf32> to vector<16x16xf32>
    %c0_186 = arith.constant 0 : index
    %c16 = arith.constant 16 : index
    %374 = memref.load %arg4[%c0_186, %c16] : memref<4x25xf32, #tpu.memory_space<smem>>
    %375 = vector.broadcast %374 : f32 to vector<16x16xf32>
    %376 = arith.mulf %373, %375 : vector<16x16xf32>
    %377 = arith.addf %372, %376 : vector<16x16xf32>
    %378 = vector.extract_strided_slice %367 {offsets = [0, 2], sizes = [16, 16], strides = [1, 1]} : vector<16x20xf32> to vector<16x16xf32>
    %c0_187 = arith.constant 0 : index
    %c17 = arith.constant 17 : index
    %379 = memref.load %arg4[%c0_187, %c17] : memref<4x25xf32, #tpu.memory_space<smem>>
    %380 = vector.broadcast %379 : f32 to vector<16x16xf32>
    %381 = arith.mulf %378, %380 : vector<16x16xf32>
    %382 = arith.addf %377, %381 : vector<16x16xf32>
    %383 = vector.extract_strided_slice %367 {offsets = [0, 3], sizes = [16, 16], strides = [1, 1]} : vector<16x20xf32> to vector<16x16xf32>
    %c0_188 = arith.constant 0 : index
    %c18_189 = arith.constant 18 : index
    %384 = memref.load %arg4[%c0_188, %c18_189] : memref<4x25xf32, #tpu.memory_space<smem>>
    %385 = vector.broadcast %384 : f32 to vector<16x16xf32>
    %386 = arith.mulf %383, %385 : vector<16x16xf32>
    %387 = arith.addf %382, %386 : vector<16x16xf32>
    %388 = vector.extract_strided_slice %367 {offsets = [0, 4], sizes = [16, 16], strides = [1, 1]} : vector<16x20xf32> to vector<16x16xf32>
    %c0_190 = arith.constant 0 : index
    %c19 = arith.constant 19 : index
    %389 = memref.load %arg4[%c0_190, %c19] : memref<4x25xf32, #tpu.memory_space<smem>>
    %390 = vector.broadcast %389 : f32 to vector<16x16xf32>
    %391 = arith.mulf %388, %390 : vector<16x16xf32>
    %392 = arith.addf %387, %391 : vector<16x16xf32>
    %c0_191 = arith.constant 0 : index
    %c4_192 = arith.constant 4 : index
    %c0_193 = arith.constant 0 : index
    %393 = vector.load %arg15[%c0_191, %c4_192, %c0_193] : memref<4x20x20xf32, #tpu.memory_space<vmem>>, vector<1x16x20xf32>
    %394 = vector.shape_cast %393 : vector<1x16x20xf32> to vector<16x20xf32>
    %395 = vector.extract_strided_slice %394 {offsets = [0, 0], sizes = [16, 16], strides = [1, 1]} : vector<16x20xf32> to vector<16x16xf32>
    %c0_194 = arith.constant 0 : index
    %c20 = arith.constant 20 : index
    %396 = memref.load %arg4[%c0_194, %c20] : memref<4x25xf32, #tpu.memory_space<smem>>
    %397 = vector.broadcast %396 : f32 to vector<16x16xf32>
    %398 = arith.mulf %395, %397 : vector<16x16xf32>
    %399 = arith.addf %392, %398 : vector<16x16xf32>
    %400 = vector.extract_strided_slice %394 {offsets = [0, 1], sizes = [16, 16], strides = [1, 1]} : vector<16x20xf32> to vector<16x16xf32>
    %c0_195 = arith.constant 0 : index
    %c21 = arith.constant 21 : index
    %401 = memref.load %arg4[%c0_195, %c21] : memref<4x25xf32, #tpu.memory_space<smem>>
    %402 = vector.broadcast %401 : f32 to vector<16x16xf32>
    %403 = arith.mulf %400, %402 : vector<16x16xf32>
    %404 = arith.addf %399, %403 : vector<16x16xf32>
    %405 = vector.extract_strided_slice %394 {offsets = [0, 2], sizes = [16, 16], strides = [1, 1]} : vector<16x20xf32> to vector<16x16xf32>
    %c0_196 = arith.constant 0 : index
    %c22 = arith.constant 22 : index
    %406 = memref.load %arg4[%c0_196, %c22] : memref<4x25xf32, #tpu.memory_space<smem>>
    %407 = vector.broadcast %406 : f32 to vector<16x16xf32>
    %408 = arith.mulf %405, %407 : vector<16x16xf32>
    %409 = arith.addf %404, %408 : vector<16x16xf32>
    %410 = vector.extract_strided_slice %394 {offsets = [0, 3], sizes = [16, 16], strides = [1, 1]} : vector<16x20xf32> to vector<16x16xf32>
    %c0_197 = arith.constant 0 : index
    %c23 = arith.constant 23 : index
    %411 = memref.load %arg4[%c0_197, %c23] : memref<4x25xf32, #tpu.memory_space<smem>>
    %412 = vector.broadcast %411 : f32 to vector<16x16xf32>
    %413 = arith.mulf %410, %412 : vector<16x16xf32>
    %414 = arith.addf %409, %413 : vector<16x16xf32>
    %415 = vector.extract_strided_slice %394 {offsets = [0, 4], sizes = [16, 16], strides = [1, 1]} : vector<16x20xf32> to vector<16x16xf32>
    %c0_198 = arith.constant 0 : index
    %c24 = arith.constant 24 : index
    %416 = memref.load %arg4[%c0_198, %c24] : memref<4x25xf32, #tpu.memory_space<smem>>
    %417 = vector.broadcast %416 : f32 to vector<16x16xf32>
    %418 = arith.mulf %415, %417 : vector<16x16xf32>
    %419 = arith.addf %414, %418 : vector<16x16xf32>
    %c0_199 = arith.constant 0 : index
    %420 = memref.load %arg5[%c0_199] : memref<4xf32, #tpu.memory_space<smem>>
    %421 = vector.broadcast %420 : f32 to vector<16x16xf32>
    %422 = arith.addf %419, %421 : vector<16x16xf32>
    %c0_200 = arith.constant 0 : index
    %c9_201 = arith.constant 9 : index
    %c9_202 = arith.constant 9 : index
    %423 = vector.load %arg16[%c0_200, %c9_201, %c9_202] : memref<4x34x34xf32, #tpu.memory_space<vmem>>, vector<1x16x16xf32>
    %424 = vector.shape_cast %423 : vector<1x16x16xf32> to vector<16x16xf32>
    %425 = vector.shape_cast %422 : vector<16x16xf32> to vector<1x16x16xf32>
    tpu.vector_store %arg16[%c0_200, %c9_201, %c9_202], %425 {strides = array<i32>} : memref<4x34x34xf32, #tpu.memory_space<vmem>>, vector<1x16x16xf32>,
    %cst_203 = arith.constant 0.000000e+00 : f32
    %426 = vector.broadcast %cst_203 : f32 to vector<16x16xf32>
    %c1_204 = arith.constant 1 : index
    %c0_205 = arith.constant 0 : index
    %c0_206 = arith.constant 0 : index
    %427 = vector.load %arg15[%c1_204, %c0_205, %c0_206] : memref<4x20x20xf32, #tpu.memory_space<vmem>>, vector<1x16x20xf32>
    %428 = vector.shape_cast %427 : vector<1x16x20xf32> to vector<16x20xf32>
    %429 = vector.extract_strided_slice %428 {offsets = [0, 0], sizes = [16, 16], strides = [1, 1]} : vector<16x20xf32> to vector<16x16xf32>
    %c1_207 = arith.constant 1 : index
    %c0_208 = arith.constant 0 : index
    %430 = memref.load %arg4[%c1_207, %c0_208] : memref<4x25xf32, #tpu.memory_space<smem>>
    %431 = vector.broadcast %430 : f32 to vector<16x16xf32>
    %432 = arith.mulf %429, %431 : vector<16x16xf32>
    %433 = arith.addf %426, %432 : vector<16x16xf32>
    %434 = vector.extract_strided_slice %428 {offsets = [0, 1], sizes = [16, 16], strides = [1, 1]} : vector<16x20xf32> to vector<16x16xf32>
    %c1_209 = arith.constant 1 : index
    %c1_210 = arith.constant 1 : index
    %435 = memref.load %arg4[%c1_209, %c1_210] : memref<4x25xf32, #tpu.memory_space<smem>>
    %436 = vector.broadcast %435 : f32 to vector<16x16xf32>
    %437 = arith.mulf %434, %436 : vector<16x16xf32>
    %438 = arith.addf %433, %437 : vector<16x16xf32>
    %439 = vector.extract_strided_slice %428 {offsets = [0, 2], sizes = [16, 16], strides = [1, 1]} : vector<16x20xf32> to vector<16x16xf32>
    %c1_211 = arith.constant 1 : index
    %c2_212 = arith.constant 2 : index
    %440 = memref.load %arg4[%c1_211, %c2_212] : memref<4x25xf32, #tpu.memory_space<smem>>
    %441 = vector.broadcast %440 : f32 to vector<16x16xf32>
    %442 = arith.mulf %439, %441 : vector<16x16xf32>
    %443 = arith.addf %438, %442 : vector<16x16xf32>
    %444 = vector.extract_strided_slice %428 {offsets = [0, 3], sizes = [16, 16], strides = [1, 1]} : vector<16x20xf32> to vector<16x16xf32>
    %c1_213 = arith.constant 1 : index
    %c3_214 = arith.constant 3 : index
    %445 = memref.load %arg4[%c1_213, %c3_214] : memref<4x25xf32, #tpu.memory_space<smem>>
    %446 = vector.broadcast %445 : f32 to vector<16x16xf32>
    %447 = arith.mulf %444, %446 : vector<16x16xf32>
    %448 = arith.addf %443, %447 : vector<16x16xf32>
    %449 = vector.extract_strided_slice %428 {offsets = [0, 4], sizes = [16, 16], strides = [1, 1]} : vector<16x20xf32> to vector<16x16xf32>
    %c1_215 = arith.constant 1 : index
    %c4_216 = arith.constant 4 : index
    %450 = memref.load %arg4[%c1_215, %c4_216] : memref<4x25xf32, #tpu.memory_space<smem>>
    %451 = vector.broadcast %450 : f32 to vector<16x16xf32>
    %452 = arith.mulf %449, %451 : vector<16x16xf32>
    %453 = arith.addf %448, %452 : vector<16x16xf32>
    %c1_217 = arith.constant 1 : index
    %c1_218 = arith.constant 1 : index
    %c0_219 = arith.constant 0 : index
    %454 = vector.load %arg15[%c1_217, %c1_218, %c0_219] : memref<4x20x20xf32, #tpu.memory_space<vmem>>, vector<1x16x20xf32>
    %455 = vector.shape_cast %454 : vector<1x16x20xf32> to vector<16x20xf32>
    %456 = vector.extract_strided_slice %455 {offsets = [0, 0], sizes = [16, 16], strides = [1, 1]} : vector<16x20xf32> to vector<16x16xf32>
    %c1_220 = arith.constant 1 : index
    %c5_221 = arith.constant 5 : index
    %457 = memref.load %arg4[%c1_220, %c5_221] : memref<4x25xf32, #tpu.memory_space<smem>>
    %458 = vector.broadcast %457 : f32 to vector<16x16xf32>
    %459 = arith.mulf %456, %458 : vector<16x16xf32>
    %460 = arith.addf %453, %459 : vector<16x16xf32>
    %461 = vector.extract_strided_slice %455 {offsets = [0, 1], sizes = [16, 16], strides = [1, 1]} : vector<16x20xf32> to vector<16x16xf32>
    %c1_222 = arith.constant 1 : index
    %c6_223 = arith.constant 6 : index
    %462 = memref.load %arg4[%c1_222, %c6_223] : memref<4x25xf32, #tpu.memory_space<smem>>
    %463 = vector.broadcast %462 : f32 to vector<16x16xf32>
    %464 = arith.mulf %461, %463 : vector<16x16xf32>
    %465 = arith.addf %460, %464 : vector<16x16xf32>
    %466 = vector.extract_strided_slice %455 {offsets = [0, 2], sizes = [16, 16], strides = [1, 1]} : vector<16x20xf32> to vector<16x16xf32>
    %c1_224 = arith.constant 1 : index
    %c7_225 = arith.constant 7 : index
    %467 = memref.load %arg4[%c1_224, %c7_225] : memref<4x25xf32, #tpu.memory_space<smem>>
    %468 = vector.broadcast %467 : f32 to vector<16x16xf32>
    %469 = arith.mulf %466, %468 : vector<16x16xf32>
    %470 = arith.addf %465, %469 : vector<16x16xf32>
    %471 = vector.extract_strided_slice %455 {offsets = [0, 3], sizes = [16, 16], strides = [1, 1]} : vector<16x20xf32> to vector<16x16xf32>
    %c1_226 = arith.constant 1 : index
    %c8_227 = arith.constant 8 : index
    %472 = memref.load %arg4[%c1_226, %c8_227] : memref<4x25xf32, #tpu.memory_space<smem>>
    %473 = vector.broadcast %472 : f32 to vector<16x16xf32>
    %474 = arith.mulf %471, %473 : vector<16x16xf32>
    %475 = arith.addf %470, %474 : vector<16x16xf32>
    %476 = vector.extract_strided_slice %455 {offsets = [0, 4], sizes = [16, 16], strides = [1, 1]} : vector<16x20xf32> to vector<16x16xf32>
    %c1_228 = arith.constant 1 : index
    %c9_229 = arith.constant 9 : index
    %477 = memref.load %arg4[%c1_228, %c9_229] : memref<4x25xf32, #tpu.memory_space<smem>>
    %478 = vector.broadcast %477 : f32 to vector<16x16xf32>
    %479 = arith.mulf %476, %478 : vector<16x16xf32>
    %480 = arith.addf %475, %479 : vector<16x16xf32>
    %c1_230 = arith.constant 1 : index
    %c2_231 = arith.constant 2 : index
    %c0_232 = arith.constant 0 : index
    %481 = vector.load %arg15[%c1_230, %c2_231, %c0_232] : memref<4x20x20xf32, #tpu.memory_space<vmem>>, vector<1x16x20xf32>
    %482 = vector.shape_cast %481 : vector<1x16x20xf32> to vector<16x20xf32>
    %483 = vector.extract_strided_slice %482 {offsets = [0, 0], sizes = [16, 16], strides = [1, 1]} : vector<16x20xf32> to vector<16x16xf32>
    %c1_233 = arith.constant 1 : index
    %c10_234 = arith.constant 10 : index
    %484 = memref.load %arg4[%c1_233, %c10_234] : memref<4x25xf32, #tpu.memory_space<smem>>
    %485 = vector.broadcast %484 : f32 to vector<16x16xf32>
    %486 = arith.mulf %483, %485 : vector<16x16xf32>
    %487 = arith.addf %480, %486 : vector<16x16xf32>
    %488 = vector.extract_strided_slice %482 {offsets = [0, 1], sizes = [16, 16], strides = [1, 1]} : vector<16x20xf32> to vector<16x16xf32>
    %c1_235 = arith.constant 1 : index
    %c11_236 = arith.constant 11 : index
    %489 = memref.load %arg4[%c1_235, %c11_236] : memref<4x25xf32, #tpu.memory_space<smem>>
    %490 = vector.broadcast %489 : f32 to vector<16x16xf32>
    %491 = arith.mulf %488, %490 : vector<16x16xf32>
    %492 = arith.addf %487, %491 : vector<16x16xf32>
    %493 = vector.extract_strided_slice %482 {offsets = [0, 2], sizes = [16, 16], strides = [1, 1]} : vector<16x20xf32> to vector<16x16xf32>
    %c1_237 = arith.constant 1 : index
    %c12_238 = arith.constant 12 : index
    %494 = memref.load %arg4[%c1_237, %c12_238] : memref<4x25xf32, #tpu.memory_space<smem>>
    %495 = vector.broadcast %494 : f32 to vector<16x16xf32>
    %496 = arith.mulf %493, %495 : vector<16x16xf32>
    %497 = arith.addf %492, %496 : vector<16x16xf32>
    %498 = vector.extract_strided_slice %482 {offsets = [0, 3], sizes = [16, 16], strides = [1, 1]} : vector<16x20xf32> to vector<16x16xf32>
    %c1_239 = arith.constant 1 : index
    %c13_240 = arith.constant 13 : index
    %499 = memref.load %arg4[%c1_239, %c13_240] : memref<4x25xf32, #tpu.memory_space<smem>>
    %500 = vector.broadcast %499 : f32 to vector<16x16xf32>
    %501 = arith.mulf %498, %500 : vector<16x16xf32>
    %502 = arith.addf %497, %501 : vector<16x16xf32>
    %503 = vector.extract_strided_slice %482 {offsets = [0, 4], sizes = [16, 16], strides = [1, 1]} : vector<16x20xf32> to vector<16x16xf32>
    %c1_241 = arith.constant 1 : index
    %c14_242 = arith.constant 14 : index
    %504 = memref.load %arg4[%c1_241, %c14_242] : memref<4x25xf32, #tpu.memory_space<smem>>
    %505 = vector.broadcast %504 : f32 to vector<16x16xf32>
    %506 = arith.mulf %503, %505 : vector<16x16xf32>
    %507 = arith.addf %502, %506 : vector<16x16xf32>
    %c1_243 = arith.constant 1 : index
    %c3_244 = arith.constant 3 : index
    %c0_245 = arith.constant 0 : index
    %508 = vector.load %arg15[%c1_243, %c3_244, %c0_245] : memref<4x20x20xf32, #tpu.memory_space<vmem>>, vector<1x16x20xf32>
    %509 = vector.shape_cast %508 : vector<1x16x20xf32> to vector<16x20xf32>
    %510 = vector.extract_strided_slice %509 {offsets = [0, 0], sizes = [16, 16], strides = [1, 1]} : vector<16x20xf32> to vector<16x16xf32>
    %c1_246 = arith.constant 1 : index
    %c15_247 = arith.constant 15 : index
    %511 = memref.load %arg4[%c1_246, %c15_247] : memref<4x25xf32, #tpu.memory_space<smem>>
    %512 = vector.broadcast %511 : f32 to vector<16x16xf32>
    %513 = arith.mulf %510, %512 : vector<16x16xf32>
    %514 = arith.addf %507, %513 : vector<16x16xf32>
    %515 = vector.extract_strided_slice %509 {offsets = [0, 1], sizes = [16, 16], strides = [1, 1]} : vector<16x20xf32> to vector<16x16xf32>
    %c1_248 = arith.constant 1 : index
    %c16_249 = arith.constant 16 : index
    %516 = memref.load %arg4[%c1_248, %c16_249] : memref<4x25xf32, #tpu.memory_space<smem>>
    %517 = vector.broadcast %516 : f32 to vector<16x16xf32>
    %518 = arith.mulf %515, %517 : vector<16x16xf32>
    %519 = arith.addf %514, %518 : vector<16x16xf32>
    %520 = vector.extract_strided_slice %509 {offsets = [0, 2], sizes = [16, 16], strides = [1, 1]} : vector<16x20xf32> to vector<16x16xf32>
    %c1_250 = arith.constant 1 : index
    %c17_251 = arith.constant 17 : index
    %521 = memref.load %arg4[%c1_250, %c17_251] : memref<4x25xf32, #tpu.memory_space<smem>>
    %522 = vector.broadcast %521 : f32 to vector<16x16xf32>
    %523 = arith.mulf %520, %522 : vector<16x16xf32>
    %524 = arith.addf %519, %523 : vector<16x16xf32>
    %525 = vector.extract_strided_slice %509 {offsets = [0, 3], sizes = [16, 16], strides = [1, 1]} : vector<16x20xf32> to vector<16x16xf32>
    %c1_252 = arith.constant 1 : index
    %c18_253 = arith.constant 18 : index
    %526 = memref.load %arg4[%c1_252, %c18_253] : memref<4x25xf32, #tpu.memory_space<smem>>
    %527 = vector.broadcast %526 : f32 to vector<16x16xf32>
    %528 = arith.mulf %525, %527 : vector<16x16xf32>
    %529 = arith.addf %524, %528 : vector<16x16xf32>
    %530 = vector.extract_strided_slice %509 {offsets = [0, 4], sizes = [16, 16], strides = [1, 1]} : vector<16x20xf32> to vector<16x16xf32>
    %c1_254 = arith.constant 1 : index
    %c19_255 = arith.constant 19 : index
    %531 = memref.load %arg4[%c1_254, %c19_255] : memref<4x25xf32, #tpu.memory_space<smem>>
    %532 = vector.broadcast %531 : f32 to vector<16x16xf32>
    %533 = arith.mulf %530, %532 : vector<16x16xf32>
    %534 = arith.addf %529, %533 : vector<16x16xf32>
    %c1_256 = arith.constant 1 : index
    %c4_257 = arith.constant 4 : index
    %c0_258 = arith.constant 0 : index
    %535 = vector.load %arg15[%c1_256, %c4_257, %c0_258] : memref<4x20x20xf32, #tpu.memory_space<vmem>>, vector<1x16x20xf32>
    %536 = vector.shape_cast %535 : vector<1x16x20xf32> to vector<16x20xf32>
    %537 = vector.extract_strided_slice %536 {offsets = [0, 0], sizes = [16, 16], strides = [1, 1]} : vector<16x20xf32> to vector<16x16xf32>
    %c1_259 = arith.constant 1 : index
    %c20_260 = arith.constant 20 : index
    %538 = memref.load %arg4[%c1_259, %c20_260] : memref<4x25xf32, #tpu.memory_space<smem>>
    %539 = vector.broadcast %538 : f32 to vector<16x16xf32>
    %540 = arith.mulf %537, %539 : vector<16x16xf32>
    %541 = arith.addf %534, %540 : vector<16x16xf32>
    %542 = vector.extract_strided_slice %536 {offsets = [0, 1], sizes = [16, 16], strides = [1, 1]} : vector<16x20xf32> to vector<16x16xf32>
    %c1_261 = arith.constant 1 : index
    %c21_262 = arith.constant 21 : index
    %543 = memref.load %arg4[%c1_261, %c21_262] : memref<4x25xf32, #tpu.memory_space<smem>>
    %544 = vector.broadcast %543 : f32 to vector<16x16xf32>
    %545 = arith.mulf %542, %544 : vector<16x16xf32>
    %546 = arith.addf %541, %545 : vector<16x16xf32>
    %547 = vector.extract_strided_slice %536 {offsets = [0, 2], sizes = [16, 16], strides = [1, 1]} : vector<16x20xf32> to vector<16x16xf32>
    %c1_263 = arith.constant 1 : index
    %c22_264 = arith.constant 22 : index
    %548 = memref.load %arg4[%c1_263, %c22_264] : memref<4x25xf32, #tpu.memory_space<smem>>
    %549 = vector.broadcast %548 : f32 to vector<16x16xf32>
    %550 = arith.mulf %547, %549 : vector<16x16xf32>
    %551 = arith.addf %546, %550 : vector<16x16xf32>
    %552 = vector.extract_strided_slice %536 {offsets = [0, 3], sizes = [16, 16], strides = [1, 1]} : vector<16x20xf32> to vector<16x16xf32>
    %c1_265 = arith.constant 1 : index
    %c23_266 = arith.constant 23 : index
    %553 = memref.load %arg4[%c1_265, %c23_266] : memref<4x25xf32, #tpu.memory_space<smem>>
    %554 = vector.broadcast %553 : f32 to vector<16x16xf32>
    %555 = arith.mulf %552, %554 : vector<16x16xf32>
    %556 = arith.addf %551, %555 : vector<16x16xf32>
    %557 = vector.extract_strided_slice %536 {offsets = [0, 4], sizes = [16, 16], strides = [1, 1]} : vector<16x20xf32> to vector<16x16xf32>
    %c1_267 = arith.constant 1 : index
    %c24_268 = arith.constant 24 : index
    %558 = memref.load %arg4[%c1_267, %c24_268] : memref<4x25xf32, #tpu.memory_space<smem>>
    %559 = vector.broadcast %558 : f32 to vector<16x16xf32>
    %560 = arith.mulf %557, %559 : vector<16x16xf32>
    %561 = arith.addf %556, %560 : vector<16x16xf32>
    %c1_269 = arith.constant 1 : index
    %562 = memref.load %arg5[%c1_269] : memref<4xf32, #tpu.memory_space<smem>>
    %563 = vector.broadcast %562 : f32 to vector<16x16xf32>
    %564 = arith.addf %561, %563 : vector<16x16xf32>
    %c1_270 = arith.constant 1 : index
    %c9_271 = arith.constant 9 : index
    %c9_272 = arith.constant 9 : index
    %565 = vector.load %arg16[%c1_270, %c9_271, %c9_272] : memref<4x34x34xf32, #tpu.memory_space<vmem>>, vector<1x16x16xf32>
    %566 = vector.shape_cast %565 : vector<1x16x16xf32> to vector<16x16xf32>
    %567 = vector.shape_cast %564 : vector<16x16xf32> to vector<1x16x16xf32>
    tpu.vector_store %arg16[%c1_270, %c9_271, %c9_272], %567 {strides = array<i32>} : memref<4x34x34xf32, #tpu.memory_space<vmem>>, vector<1x16x16xf32>,
    %cst_273 = arith.constant 0.000000e+00 : f32
    %568 = vector.broadcast %cst_273 : f32 to vector<16x16xf32>
    %c2_274 = arith.constant 2 : index
    %c0_275 = arith.constant 0 : index
    %c0_276 = arith.constant 0 : index
    %569 = vector.load %arg15[%c2_274, %c0_275, %c0_276] : memref<4x20x20xf32, #tpu.memory_space<vmem>>, vector<1x16x20xf32>
    %570 = vector.shape_cast %569 : vector<1x16x20xf32> to vector<16x20xf32>
    %571 = vector.extract_strided_slice %570 {offsets = [0, 0], sizes = [16, 16], strides = [1, 1]} : vector<16x20xf32> to vector<16x16xf32>
    %c2_277 = arith.constant 2 : index
    %c0_278 = arith.constant 0 : index
    %572 = memref.load %arg4[%c2_277, %c0_278] : memref<4x25xf32, #tpu.memory_space<smem>>
    %573 = vector.broadcast %572 : f32 to vector<16x16xf32>
    %574 = arith.mulf %571, %573 : vector<16x16xf32>
    %575 = arith.addf %568, %574 : vector<16x16xf32>
    %576 = vector.extract_strided_slice %570 {offsets = [0, 1], sizes = [16, 16], strides = [1, 1]} : vector<16x20xf32> to vector<16x16xf32>
    %c2_279 = arith.constant 2 : index
    %c1_280 = arith.constant 1 : index
    %577 = memref.load %arg4[%c2_279, %c1_280] : memref<4x25xf32, #tpu.memory_space<smem>>
    %578 = vector.broadcast %577 : f32 to vector<16x16xf32>
    %579 = arith.mulf %576, %578 : vector<16x16xf32>
    %580 = arith.addf %575, %579 : vector<16x16xf32>
    %581 = vector.extract_strided_slice %570 {offsets = [0, 2], sizes = [16, 16], strides = [1, 1]} : vector<16x20xf32> to vector<16x16xf32>
    %c2_281 = arith.constant 2 : index
    %c2_282 = arith.constant 2 : index
    %582 = memref.load %arg4[%c2_281, %c2_282] : memref<4x25xf32, #tpu.memory_space<smem>>
    %583 = vector.broadcast %582 : f32 to vector<16x16xf32>
    %584 = arith.mulf %581, %583 : vector<16x16xf32>
    %585 = arith.addf %580, %584 : vector<16x16xf32>
    %586 = vector.extract_strided_slice %570 {offsets = [0, 3], sizes = [16, 16], strides = [1, 1]} : vector<16x20xf32> to vector<16x16xf32>
    %c2_283 = arith.constant 2 : index
    %c3_284 = arith.constant 3 : index
    %587 = memref.load %arg4[%c2_283, %c3_284] : memref<4x25xf32, #tpu.memory_space<smem>>
    %588 = vector.broadcast %587 : f32 to vector<16x16xf32>
    %589 = arith.mulf %586, %588 : vector<16x16xf32>
    %590 = arith.addf %585, %589 : vector<16x16xf32>
    %591 = vector.extract_strided_slice %570 {offsets = [0, 4], sizes = [16, 16], strides = [1, 1]} : vector<16x20xf32> to vector<16x16xf32>
    %c2_285 = arith.constant 2 : index
    %c4_286 = arith.constant 4 : index
    %592 = memref.load %arg4[%c2_285, %c4_286] : memref<4x25xf32, #tpu.memory_space<smem>>
    %593 = vector.broadcast %592 : f32 to vector<16x16xf32>
    %594 = arith.mulf %591, %593 : vector<16x16xf32>
    %595 = arith.addf %590, %594 : vector<16x16xf32>
    %c2_287 = arith.constant 2 : index
    %c1_288 = arith.constant 1 : index
    %c0_289 = arith.constant 0 : index
    %596 = vector.load %arg15[%c2_287, %c1_288, %c0_289] : memref<4x20x20xf32, #tpu.memory_space<vmem>>, vector<1x16x20xf32>
    %597 = vector.shape_cast %596 : vector<1x16x20xf32> to vector<16x20xf32>
    %598 = vector.extract_strided_slice %597 {offsets = [0, 0], sizes = [16, 16], strides = [1, 1]} : vector<16x20xf32> to vector<16x16xf32>
    %c2_290 = arith.constant 2 : index
    %c5_291 = arith.constant 5 : index
    %599 = memref.load %arg4[%c2_290, %c5_291] : memref<4x25xf32, #tpu.memory_space<smem>>
    %600 = vector.broadcast %599 : f32 to vector<16x16xf32>
    %601 = arith.mulf %598, %600 : vector<16x16xf32>
    %602 = arith.addf %595, %601 : vector<16x16xf32>
    %603 = vector.extract_strided_slice %597 {offsets = [0, 1], sizes = [16, 16], strides = [1, 1]} : vector<16x20xf32> to vector<16x16xf32>
    %c2_292 = arith.constant 2 : index
    %c6_293 = arith.constant 6 : index
    %604 = memref.load %arg4[%c2_292, %c6_293] : memref<4x25xf32, #tpu.memory_space<smem>>
    %605 = vector.broadcast %604 : f32 to vector<16x16xf32>
    %606 = arith.mulf %603, %605 : vector<16x16xf32>
    %607 = arith.addf %602, %606 : vector<16x16xf32>
    %608 = vector.extract_strided_slice %597 {offsets = [0, 2], sizes = [16, 16], strides = [1, 1]} : vector<16x20xf32> to vector<16x16xf32>
    %c2_294 = arith.constant 2 : index
    %c7_295 = arith.constant 7 : index
    %609 = memref.load %arg4[%c2_294, %c7_295] : memref<4x25xf32, #tpu.memory_space<smem>>
    %610 = vector.broadcast %609 : f32 to vector<16x16xf32>
    %611 = arith.mulf %608, %610 : vector<16x16xf32>
    %612 = arith.addf %607, %611 : vector<16x16xf32>
    %613 = vector.extract_strided_slice %597 {offsets = [0, 3], sizes = [16, 16], strides = [1, 1]} : vector<16x20xf32> to vector<16x16xf32>
    %c2_296 = arith.constant 2 : index
    %c8_297 = arith.constant 8 : index
    %614 = memref.load %arg4[%c2_296, %c8_297] : memref<4x25xf32, #tpu.memory_space<smem>>
    %615 = vector.broadcast %614 : f32 to vector<16x16xf32>
    %616 = arith.mulf %613, %615 : vector<16x16xf32>
    %617 = arith.addf %612, %616 : vector<16x16xf32>
    %618 = vector.extract_strided_slice %597 {offsets = [0, 4], sizes = [16, 16], strides = [1, 1]} : vector<16x20xf32> to vector<16x16xf32>
    %c2_298 = arith.constant 2 : index
    %c9_299 = arith.constant 9 : index
    %619 = memref.load %arg4[%c2_298, %c9_299] : memref<4x25xf32, #tpu.memory_space<smem>>
    %620 = vector.broadcast %619 : f32 to vector<16x16xf32>
    %621 = arith.mulf %618, %620 : vector<16x16xf32>
    %622 = arith.addf %617, %621 : vector<16x16xf32>
    %c2_300 = arith.constant 2 : index
    %c2_301 = arith.constant 2 : index
    %c0_302 = arith.constant 0 : index
    %623 = vector.load %arg15[%c2_300, %c2_301, %c0_302] : memref<4x20x20xf32, #tpu.memory_space<vmem>>, vector<1x16x20xf32>
    %624 = vector.shape_cast %623 : vector<1x16x20xf32> to vector<16x20xf32>
    %625 = vector.extract_strided_slice %624 {offsets = [0, 0], sizes = [16, 16], strides = [1, 1]} : vector<16x20xf32> to vector<16x16xf32>
    %c2_303 = arith.constant 2 : index
    %c10_304 = arith.constant 10 : index
    %626 = memref.load %arg4[%c2_303, %c10_304] : memref<4x25xf32, #tpu.memory_space<smem>>
    %627 = vector.broadcast %626 : f32 to vector<16x16xf32>
    %628 = arith.mulf %625, %627 : vector<16x16xf32>
    %629 = arith.addf %622, %628 : vector<16x16xf32>
    %630 = vector.extract_strided_slice %624 {offsets = [0, 1], sizes = [16, 16], strides = [1, 1]} : vector<16x20xf32> to vector<16x16xf32>
    %c2_305 = arith.constant 2 : index
    %c11_306 = arith.constant 11 : index
    %631 = memref.load %arg4[%c2_305, %c11_306] : memref<4x25xf32, #tpu.memory_space<smem>>
    %632 = vector.broadcast %631 : f32 to vector<16x16xf32>
    %633 = arith.mulf %630, %632 : vector<16x16xf32>
    %634 = arith.addf %629, %633 : vector<16x16xf32>
    %635 = vector.extract_strided_slice %624 {offsets = [0, 2], sizes = [16, 16], strides = [1, 1]} : vector<16x20xf32> to vector<16x16xf32>
    %c2_307 = arith.constant 2 : index
    %c12_308 = arith.constant 12 : index
    %636 = memref.load %arg4[%c2_307, %c12_308] : memref<4x25xf32, #tpu.memory_space<smem>>
    %637 = vector.broadcast %636 : f32 to vector<16x16xf32>
    %638 = arith.mulf %635, %637 : vector<16x16xf32>
    %639 = arith.addf %634, %638 : vector<16x16xf32>
    %640 = vector.extract_strided_slice %624 {offsets = [0, 3], sizes = [16, 16], strides = [1, 1]} : vector<16x20xf32> to vector<16x16xf32>
    %c2_309 = arith.constant 2 : index
    %c13_310 = arith.constant 13 : index
    %641 = memref.load %arg4[%c2_309, %c13_310] : memref<4x25xf32, #tpu.memory_space<smem>>
    %642 = vector.broadcast %641 : f32 to vector<16x16xf32>
    %643 = arith.mulf %640, %642 : vector<16x16xf32>
    %644 = arith.addf %639, %643 : vector<16x16xf32>
    %645 = vector.extract_strided_slice %624 {offsets = [0, 4], sizes = [16, 16], strides = [1, 1]} : vector<16x20xf32> to vector<16x16xf32>
    %c2_311 = arith.constant 2 : index
    %c14_312 = arith.constant 14 : index
    %646 = memref.load %arg4[%c2_311, %c14_312] : memref<4x25xf32, #tpu.memory_space<smem>>
    %647 = vector.broadcast %646 : f32 to vector<16x16xf32>
    %648 = arith.mulf %645, %647 : vector<16x16xf32>
    %649 = arith.addf %644, %648 : vector<16x16xf32>
    %c2_313 = arith.constant 2 : index
    %c3_314 = arith.constant 3 : index
    %c0_315 = arith.constant 0 : index
    %650 = vector.load %arg15[%c2_313, %c3_314, %c0_315] : memref<4x20x20xf32, #tpu.memory_space<vmem>>, vector<1x16x20xf32>
    %651 = vector.shape_cast %650 : vector<1x16x20xf32> to vector<16x20xf32>
    %652 = vector.extract_strided_slice %651 {offsets = [0, 0], sizes = [16, 16], strides = [1, 1]} : vector<16x20xf32> to vector<16x16xf32>
    %c2_316 = arith.constant 2 : index
    %c15_317 = arith.constant 15 : index
    %653 = memref.load %arg4[%c2_316, %c15_317] : memref<4x25xf32, #tpu.memory_space<smem>>
    %654 = vector.broadcast %653 : f32 to vector<16x16xf32>
    %655 = arith.mulf %652, %654 : vector<16x16xf32>
    %656 = arith.addf %649, %655 : vector<16x16xf32>
    %657 = vector.extract_strided_slice %651 {offsets = [0, 1], sizes = [16, 16], strides = [1, 1]} : vector<16x20xf32> to vector<16x16xf32>
    %c2_318 = arith.constant 2 : index
    %c16_319 = arith.constant 16 : index
    %658 = memref.load %arg4[%c2_318, %c16_319] : memref<4x25xf32, #tpu.memory_space<smem>>
    %659 = vector.broadcast %658 : f32 to vector<16x16xf32>
    %660 = arith.mulf %657, %659 : vector<16x16xf32>
    %661 = arith.addf %656, %660 : vector<16x16xf32>
    %662 = vector.extract_strided_slice %651 {offsets = [0, 2], sizes = [16, 16], strides = [1, 1]} : vector<16x20xf32> to vector<16x16xf32>
    %c2_320 = arith.constant 2 : index
    %c17_321 = arith.constant 17 : index
    %663 = memref.load %arg4[%c2_320, %c17_321] : memref<4x25xf32, #tpu.memory_space<smem>>
    %664 = vector.broadcast %663 : f32 to vector<16x16xf32>
    %665 = arith.mulf %662, %664 : vector<16x16xf32>
    %666 = arith.addf %661, %665 : vector<16x16xf32>
    %667 = vector.extract_strided_slice %651 {offsets = [0, 3], sizes = [16, 16], strides = [1, 1]} : vector<16x20xf32> to vector<16x16xf32>
    %c2_322 = arith.constant 2 : index
    %c18_323 = arith.constant 18 : index
    %668 = memref.load %arg4[%c2_322, %c18_323] : memref<4x25xf32, #tpu.memory_space<smem>>
    %669 = vector.broadcast %668 : f32 to vector<16x16xf32>
    %670 = arith.mulf %667, %669 : vector<16x16xf32>
    %671 = arith.addf %666, %670 : vector<16x16xf32>
    %672 = vector.extract_strided_slice %651 {offsets = [0, 4], sizes = [16, 16], strides = [1, 1]} : vector<16x20xf32> to vector<16x16xf32>
    %c2_324 = arith.constant 2 : index
    %c19_325 = arith.constant 19 : index
    %673 = memref.load %arg4[%c2_324, %c19_325] : memref<4x25xf32, #tpu.memory_space<smem>>
    %674 = vector.broadcast %673 : f32 to vector<16x16xf32>
    %675 = arith.mulf %672, %674 : vector<16x16xf32>
    %676 = arith.addf %671, %675 : vector<16x16xf32>
    %c2_326 = arith.constant 2 : index
    %c4_327 = arith.constant 4 : index
    %c0_328 = arith.constant 0 : index
    %677 = vector.load %arg15[%c2_326, %c4_327, %c0_328] : memref<4x20x20xf32, #tpu.memory_space<vmem>>, vector<1x16x20xf32>
    %678 = vector.shape_cast %677 : vector<1x16x20xf32> to vector<16x20xf32>
    %679 = vector.extract_strided_slice %678 {offsets = [0, 0], sizes = [16, 16], strides = [1, 1]} : vector<16x20xf32> to vector<16x16xf32>
    %c2_329 = arith.constant 2 : index
    %c20_330 = arith.constant 20 : index
    %680 = memref.load %arg4[%c2_329, %c20_330] : memref<4x25xf32, #tpu.memory_space<smem>>
    %681 = vector.broadcast %680 : f32 to vector<16x16xf32>
    %682 = arith.mulf %679, %681 : vector<16x16xf32>
    %683 = arith.addf %676, %682 : vector<16x16xf32>
    %684 = vector.extract_strided_slice %678 {offsets = [0, 1], sizes = [16, 16], strides = [1, 1]} : vector<16x20xf32> to vector<16x16xf32>
    %c2_331 = arith.constant 2 : index
    %c21_332 = arith.constant 21 : index
    %685 = memref.load %arg4[%c2_331, %c21_332] : memref<4x25xf32, #tpu.memory_space<smem>>
    %686 = vector.broadcast %685 : f32 to vector<16x16xf32>
    %687 = arith.mulf %684, %686 : vector<16x16xf32>
    %688 = arith.addf %683, %687 : vector<16x16xf32>
    %689 = vector.extract_strided_slice %678 {offsets = [0, 2], sizes = [16, 16], strides = [1, 1]} : vector<16x20xf32> to vector<16x16xf32>
    %c2_333 = arith.constant 2 : index
    %c22_334 = arith.constant 22 : index
    %690 = memref.load %arg4[%c2_333, %c22_334] : memref<4x25xf32, #tpu.memory_space<smem>>
    %691 = vector.broadcast %690 : f32 to vector<16x16xf32>
    %692 = arith.mulf %689, %691 : vector<16x16xf32>
    %693 = arith.addf %688, %692 : vector<16x16xf32>
    %694 = vector.extract_strided_slice %678 {offsets = [0, 3], sizes = [16, 16], strides = [1, 1]} : vector<16x20xf32> to vector<16x16xf32>
    %c2_335 = arith.constant 2 : index
    %c23_336 = arith.constant 23 : index
    %695 = memref.load %arg4[%c2_335, %c23_336] : memref<4x25xf32, #tpu.memory_space<smem>>
    %696 = vector.broadcast %695 : f32 to vector<16x16xf32>
    %697 = arith.mulf %694, %696 : vector<16x16xf32>
    %698 = arith.addf %693, %697 : vector<16x16xf32>
    %699 = vector.extract_strided_slice %678 {offsets = [0, 4], sizes = [16, 16], strides = [1, 1]} : vector<16x20xf32> to vector<16x16xf32>
    %c2_337 = arith.constant 2 : index
    %c24_338 = arith.constant 24 : index
    %700 = memref.load %arg4[%c2_337, %c24_338] : memref<4x25xf32, #tpu.memory_space<smem>>
    %701 = vector.broadcast %700 : f32 to vector<16x16xf32>
    %702 = arith.mulf %699, %701 : vector<16x16xf32>
    %703 = arith.addf %698, %702 : vector<16x16xf32>
    %c2_339 = arith.constant 2 : index
    %704 = memref.load %arg5[%c2_339] : memref<4xf32, #tpu.memory_space<smem>>
    %705 = vector.broadcast %704 : f32 to vector<16x16xf32>
    %706 = arith.addf %703, %705 : vector<16x16xf32>
    %c2_340 = arith.constant 2 : index
    %c9_341 = arith.constant 9 : index
    %c9_342 = arith.constant 9 : index
    %707 = vector.load %arg16[%c2_340, %c9_341, %c9_342] : memref<4x34x34xf32, #tpu.memory_space<vmem>>, vector<1x16x16xf32>
    %708 = vector.shape_cast %707 : vector<1x16x16xf32> to vector<16x16xf32>
    %709 = vector.shape_cast %706 : vector<16x16xf32> to vector<1x16x16xf32>
    tpu.vector_store %arg16[%c2_340, %c9_341, %c9_342], %709 {strides = array<i32>} : memref<4x34x34xf32, #tpu.memory_space<vmem>>, vector<1x16x16xf32>,
    %cst_343 = arith.constant 0.000000e+00 : f32
    %710 = vector.broadcast %cst_343 : f32 to vector<16x16xf32>
    %c3_344 = arith.constant 3 : index
    %c0_345 = arith.constant 0 : index
    %c0_346 = arith.constant 0 : index
    %711 = vector.load %arg15[%c3_344, %c0_345, %c0_346] : memref<4x20x20xf32, #tpu.memory_space<vmem>>, vector<1x16x20xf32>
    %712 = vector.shape_cast %711 : vector<1x16x20xf32> to vector<16x20xf32>
    %713 = vector.extract_strided_slice %712 {offsets = [0, 0], sizes = [16, 16], strides = [1, 1]} : vector<16x20xf32> to vector<16x16xf32>
    %c3_347 = arith.constant 3 : index
    %c0_348 = arith.constant 0 : index
    %714 = memref.load %arg4[%c3_347, %c0_348] : memref<4x25xf32, #tpu.memory_space<smem>>
    %715 = vector.broadcast %714 : f32 to vector<16x16xf32>
    %716 = arith.mulf %713, %715 : vector<16x16xf32>
    %717 = arith.addf %710, %716 : vector<16x16xf32>
    %718 = vector.extract_strided_slice %712 {offsets = [0, 1], sizes = [16, 16], strides = [1, 1]} : vector<16x20xf32> to vector<16x16xf32>
    %c3_349 = arith.constant 3 : index
    %c1_350 = arith.constant 1 : index
    %719 = memref.load %arg4[%c3_349, %c1_350] : memref<4x25xf32, #tpu.memory_space<smem>>
    %720 = vector.broadcast %719 : f32 to vector<16x16xf32>
    %721 = arith.mulf %718, %720 : vector<16x16xf32>
    %722 = arith.addf %717, %721 : vector<16x16xf32>
    %723 = vector.extract_strided_slice %712 {offsets = [0, 2], sizes = [16, 16], strides = [1, 1]} : vector<16x20xf32> to vector<16x16xf32>
    %c3_351 = arith.constant 3 : index
    %c2_352 = arith.constant 2 : index
    %724 = memref.load %arg4[%c3_351, %c2_352] : memref<4x25xf32, #tpu.memory_space<smem>>
    %725 = vector.broadcast %724 : f32 to vector<16x16xf32>
    %726 = arith.mulf %723, %725 : vector<16x16xf32>
    %727 = arith.addf %722, %726 : vector<16x16xf32>
    %728 = vector.extract_strided_slice %712 {offsets = [0, 3], sizes = [16, 16], strides = [1, 1]} : vector<16x20xf32> to vector<16x16xf32>
    %c3_353 = arith.constant 3 : index
    %c3_354 = arith.constant 3 : index
    %729 = memref.load %arg4[%c3_353, %c3_354] : memref<4x25xf32, #tpu.memory_space<smem>>
    %730 = vector.broadcast %729 : f32 to vector<16x16xf32>
    %731 = arith.mulf %728, %730 : vector<16x16xf32>
    %732 = arith.addf %727, %731 : vector<16x16xf32>
    %733 = vector.extract_strided_slice %712 {offsets = [0, 4], sizes = [16, 16], strides = [1, 1]} : vector<16x20xf32> to vector<16x16xf32>
    %c3_355 = arith.constant 3 : index
    %c4_356 = arith.constant 4 : index
    %734 = memref.load %arg4[%c3_355, %c4_356] : memref<4x25xf32, #tpu.memory_space<smem>>
    %735 = vector.broadcast %734 : f32 to vector<16x16xf32>
    %736 = arith.mulf %733, %735 : vector<16x16xf32>
    %737 = arith.addf %732, %736 : vector<16x16xf32>
    %c3_357 = arith.constant 3 : index
    %c1_358 = arith.constant 1 : index
    %c0_359 = arith.constant 0 : index
    %738 = vector.load %arg15[%c3_357, %c1_358, %c0_359] : memref<4x20x20xf32, #tpu.memory_space<vmem>>, vector<1x16x20xf32>
    %739 = vector.shape_cast %738 : vector<1x16x20xf32> to vector<16x20xf32>
    %740 = vector.extract_strided_slice %739 {offsets = [0, 0], sizes = [16, 16], strides = [1, 1]} : vector<16x20xf32> to vector<16x16xf32>
    %c3_360 = arith.constant 3 : index
    %c5_361 = arith.constant 5 : index
    %741 = memref.load %arg4[%c3_360, %c5_361] : memref<4x25xf32, #tpu.memory_space<smem>>
    %742 = vector.broadcast %741 : f32 to vector<16x16xf32>
    %743 = arith.mulf %740, %742 : vector<16x16xf32>
    %744 = arith.addf %737, %743 : vector<16x16xf32>
    %745 = vector.extract_strided_slice %739 {offsets = [0, 1], sizes = [16, 16], strides = [1, 1]} : vector<16x20xf32> to vector<16x16xf32>
    %c3_362 = arith.constant 3 : index
    %c6_363 = arith.constant 6 : index
    %746 = memref.load %arg4[%c3_362, %c6_363] : memref<4x25xf32, #tpu.memory_space<smem>>
    %747 = vector.broadcast %746 : f32 to vector<16x16xf32>
    %748 = arith.mulf %745, %747 : vector<16x16xf32>
    %749 = arith.addf %744, %748 : vector<16x16xf32>
    %750 = vector.extract_strided_slice %739 {offsets = [0, 2], sizes = [16, 16], strides = [1, 1]} : vector<16x20xf32> to vector<16x16xf32>
    %c3_364 = arith.constant 3 : index
    %c7_365 = arith.constant 7 : index
    %751 = memref.load %arg4[%c3_364, %c7_365] : memref<4x25xf32, #tpu.memory_space<smem>>
    %752 = vector.broadcast %751 : f32 to vector<16x16xf32>
    %753 = arith.mulf %750, %752 : vector<16x16xf32>
    %754 = arith.addf %749, %753 : vector<16x16xf32>
    %755 = vector.extract_strided_slice %739 {offsets = [0, 3], sizes = [16, 16], strides = [1, 1]} : vector<16x20xf32> to vector<16x16xf32>
    %c3_366 = arith.constant 3 : index
    %c8_367 = arith.constant 8 : index
    %756 = memref.load %arg4[%c3_366, %c8_367] : memref<4x25xf32, #tpu.memory_space<smem>>
    %757 = vector.broadcast %756 : f32 to vector<16x16xf32>
    %758 = arith.mulf %755, %757 : vector<16x16xf32>
    %759 = arith.addf %754, %758 : vector<16x16xf32>
    %760 = vector.extract_strided_slice %739 {offsets = [0, 4], sizes = [16, 16], strides = [1, 1]} : vector<16x20xf32> to vector<16x16xf32>
    %c3_368 = arith.constant 3 : index
    %c9_369 = arith.constant 9 : index
    %761 = memref.load %arg4[%c3_368, %c9_369] : memref<4x25xf32, #tpu.memory_space<smem>>
    %762 = vector.broadcast %761 : f32 to vector<16x16xf32>
    %763 = arith.mulf %760, %762 : vector<16x16xf32>
    %764 = arith.addf %759, %763 : vector<16x16xf32>
    %c3_370 = arith.constant 3 : index
    %c2_371 = arith.constant 2 : index
    %c0_372 = arith.constant 0 : index
    %765 = vector.load %arg15[%c3_370, %c2_371, %c0_372] : memref<4x20x20xf32, #tpu.memory_space<vmem>>, vector<1x16x20xf32>
    %766 = vector.shape_cast %765 : vector<1x16x20xf32> to vector<16x20xf32>
    %767 = vector.extract_strided_slice %766 {offsets = [0, 0], sizes = [16, 16], strides = [1, 1]} : vector<16x20xf32> to vector<16x16xf32>
    %c3_373 = arith.constant 3 : index
    %c10_374 = arith.constant 10 : index
    %768 = memref.load %arg4[%c3_373, %c10_374] : memref<4x25xf32, #tpu.memory_space<smem>>
    %769 = vector.broadcast %768 : f32 to vector<16x16xf32>
    %770 = arith.mulf %767, %769 : vector<16x16xf32>
    %771 = arith.addf %764, %770 : vector<16x16xf32>
    %772 = vector.extract_strided_slice %766 {offsets = [0, 1], sizes = [16, 16], strides = [1, 1]} : vector<16x20xf32> to vector<16x16xf32>
    %c3_375 = arith.constant 3 : index
    %c11_376 = arith.constant 11 : index
    %773 = memref.load %arg4[%c3_375, %c11_376] : memref<4x25xf32, #tpu.memory_space<smem>>
    %774 = vector.broadcast %773 : f32 to vector<16x16xf32>
    %775 = arith.mulf %772, %774 : vector<16x16xf32>
    %776 = arith.addf %771, %775 : vector<16x16xf32>
    %777 = vector.extract_strided_slice %766 {offsets = [0, 2], sizes = [16, 16], strides = [1, 1]} : vector<16x20xf32> to vector<16x16xf32>
    %c3_377 = arith.constant 3 : index
    %c12_378 = arith.constant 12 : index
    %778 = memref.load %arg4[%c3_377, %c12_378] : memref<4x25xf32, #tpu.memory_space<smem>>
    %779 = vector.broadcast %778 : f32 to vector<16x16xf32>
    %780 = arith.mulf %777, %779 : vector<16x16xf32>
    %781 = arith.addf %776, %780 : vector<16x16xf32>
    %782 = vector.extract_strided_slice %766 {offsets = [0, 3], sizes = [16, 16], strides = [1, 1]} : vector<16x20xf32> to vector<16x16xf32>
    %c3_379 = arith.constant 3 : index
    %c13_380 = arith.constant 13 : index
    %783 = memref.load %arg4[%c3_379, %c13_380] : memref<4x25xf32, #tpu.memory_space<smem>>
    %784 = vector.broadcast %783 : f32 to vector<16x16xf32>
    %785 = arith.mulf %782, %784 : vector<16x16xf32>
    %786 = arith.addf %781, %785 : vector<16x16xf32>
    %787 = vector.extract_strided_slice %766 {offsets = [0, 4], sizes = [16, 16], strides = [1, 1]} : vector<16x20xf32> to vector<16x16xf32>
    %c3_381 = arith.constant 3 : index
    %c14_382 = arith.constant 14 : index
    %788 = memref.load %arg4[%c3_381, %c14_382] : memref<4x25xf32, #tpu.memory_space<smem>>
    %789 = vector.broadcast %788 : f32 to vector<16x16xf32>
    %790 = arith.mulf %787, %789 : vector<16x16xf32>
    %791 = arith.addf %786, %790 : vector<16x16xf32>
    %c3_383 = arith.constant 3 : index
    %c3_384 = arith.constant 3 : index
    %c0_385 = arith.constant 0 : index
    %792 = vector.load %arg15[%c3_383, %c3_384, %c0_385] : memref<4x20x20xf32, #tpu.memory_space<vmem>>, vector<1x16x20xf32>
    %793 = vector.shape_cast %792 : vector<1x16x20xf32> to vector<16x20xf32>
    %794 = vector.extract_strided_slice %793 {offsets = [0, 0], sizes = [16, 16], strides = [1, 1]} : vector<16x20xf32> to vector<16x16xf32>
    %c3_386 = arith.constant 3 : index
    %c15_387 = arith.constant 15 : index
    %795 = memref.load %arg4[%c3_386, %c15_387] : memref<4x25xf32, #tpu.memory_space<smem>>
    %796 = vector.broadcast %795 : f32 to vector<16x16xf32>
    %797 = arith.mulf %794, %796 : vector<16x16xf32>
    %798 = arith.addf %791, %797 : vector<16x16xf32>
    %799 = vector.extract_strided_slice %793 {offsets = [0, 1], sizes = [16, 16], strides = [1, 1]} : vector<16x20xf32> to vector<16x16xf32>
    %c3_388 = arith.constant 3 : index
    %c16_389 = arith.constant 16 : index
    %800 = memref.load %arg4[%c3_388, %c16_389] : memref<4x25xf32, #tpu.memory_space<smem>>
    %801 = vector.broadcast %800 : f32 to vector<16x16xf32>
    %802 = arith.mulf %799, %801 : vector<16x16xf32>
    %803 = arith.addf %798, %802 : vector<16x16xf32>
    %804 = vector.extract_strided_slice %793 {offsets = [0, 2], sizes = [16, 16], strides = [1, 1]} : vector<16x20xf32> to vector<16x16xf32>
    %c3_390 = arith.constant 3 : index
    %c17_391 = arith.constant 17 : index
    %805 = memref.load %arg4[%c3_390, %c17_391] : memref<4x25xf32, #tpu.memory_space<smem>>
    %806 = vector.broadcast %805 : f32 to vector<16x16xf32>
    %807 = arith.mulf %804, %806 : vector<16x16xf32>
    %808 = arith.addf %803, %807 : vector<16x16xf32>
    %809 = vector.extract_strided_slice %793 {offsets = [0, 3], sizes = [16, 16], strides = [1, 1]} : vector<16x20xf32> to vector<16x16xf32>
    %c3_392 = arith.constant 3 : index
    %c18_393 = arith.constant 18 : index
    %810 = memref.load %arg4[%c3_392, %c18_393] : memref<4x25xf32, #tpu.memory_space<smem>>
    %811 = vector.broadcast %810 : f32 to vector<16x16xf32>
    %812 = arith.mulf %809, %811 : vector<16x16xf32>
    %813 = arith.addf %808, %812 : vector<16x16xf32>
    %814 = vector.extract_strided_slice %793 {offsets = [0, 4], sizes = [16, 16], strides = [1, 1]} : vector<16x20xf32> to vector<16x16xf32>
    %c3_394 = arith.constant 3 : index
    %c19_395 = arith.constant 19 : index
    %815 = memref.load %arg4[%c3_394, %c19_395] : memref<4x25xf32, #tpu.memory_space<smem>>
    %816 = vector.broadcast %815 : f32 to vector<16x16xf32>
    %817 = arith.mulf %814, %816 : vector<16x16xf32>
    %818 = arith.addf %813, %817 : vector<16x16xf32>
    %c3_396 = arith.constant 3 : index
    %c4_397 = arith.constant 4 : index
    %c0_398 = arith.constant 0 : index
    %819 = vector.load %arg15[%c3_396, %c4_397, %c0_398] : memref<4x20x20xf32, #tpu.memory_space<vmem>>, vector<1x16x20xf32>
    %820 = vector.shape_cast %819 : vector<1x16x20xf32> to vector<16x20xf32>
    %821 = vector.extract_strided_slice %820 {offsets = [0, 0], sizes = [16, 16], strides = [1, 1]} : vector<16x20xf32> to vector<16x16xf32>
    %c3_399 = arith.constant 3 : index
    %c20_400 = arith.constant 20 : index
    %822 = memref.load %arg4[%c3_399, %c20_400] : memref<4x25xf32, #tpu.memory_space<smem>>
    %823 = vector.broadcast %822 : f32 to vector<16x16xf32>
    %824 = arith.mulf %821, %823 : vector<16x16xf32>
    %825 = arith.addf %818, %824 : vector<16x16xf32>
    %826 = vector.extract_strided_slice %820 {offsets = [0, 1], sizes = [16, 16], strides = [1, 1]} : vector<16x20xf32> to vector<16x16xf32>
    %c3_401 = arith.constant 3 : index
    %c21_402 = arith.constant 21 : index
    %827 = memref.load %arg4[%c3_401, %c21_402] : memref<4x25xf32, #tpu.memory_space<smem>>
    %828 = vector.broadcast %827 : f32 to vector<16x16xf32>
    %829 = arith.mulf %826, %828 : vector<16x16xf32>
    %830 = arith.addf %825, %829 : vector<16x16xf32>
    %831 = vector.extract_strided_slice %820 {offsets = [0, 2], sizes = [16, 16], strides = [1, 1]} : vector<16x20xf32> to vector<16x16xf32>
    %c3_403 = arith.constant 3 : index
    %c22_404 = arith.constant 22 : index
    %832 = memref.load %arg4[%c3_403, %c22_404] : memref<4x25xf32, #tpu.memory_space<smem>>
    %833 = vector.broadcast %832 : f32 to vector<16x16xf32>
    %834 = arith.mulf %831, %833 : vector<16x16xf32>
    %835 = arith.addf %830, %834 : vector<16x16xf32>
    %836 = vector.extract_strided_slice %820 {offsets = [0, 3], sizes = [16, 16], strides = [1, 1]} : vector<16x20xf32> to vector<16x16xf32>
    %c3_405 = arith.constant 3 : index
    %c23_406 = arith.constant 23 : index
    %837 = memref.load %arg4[%c3_405, %c23_406] : memref<4x25xf32, #tpu.memory_space<smem>>
    %838 = vector.broadcast %837 : f32 to vector<16x16xf32>
    %839 = arith.mulf %836, %838 : vector<16x16xf32>
    %840 = arith.addf %835, %839 : vector<16x16xf32>
    %841 = vector.extract_strided_slice %820 {offsets = [0, 4], sizes = [16, 16], strides = [1, 1]} : vector<16x20xf32> to vector<16x16xf32>
    %c3_407 = arith.constant 3 : index
    %c24_408 = arith.constant 24 : index
    %842 = memref.load %arg4[%c3_407, %c24_408] : memref<4x25xf32, #tpu.memory_space<smem>>
    %843 = vector.broadcast %842 : f32 to vector<16x16xf32>
    %844 = arith.mulf %841, %843 : vector<16x16xf32>
    %845 = arith.addf %840, %844 : vector<16x16xf32>
    %c3_409 = arith.constant 3 : index
    %846 = memref.load %arg5[%c3_409] : memref<4xf32, #tpu.memory_space<smem>>
    %847 = vector.broadcast %846 : f32 to vector<16x16xf32>
    %848 = arith.addf %845, %847 : vector<16x16xf32>
    %c3_410 = arith.constant 3 : index
    %c9_411 = arith.constant 9 : index
    %c9_412 = arith.constant 9 : index
    %849 = vector.load %arg16[%c3_410, %c9_411, %c9_412] : memref<4x34x34xf32, #tpu.memory_space<vmem>>, vector<1x16x16xf32>
    %850 = vector.shape_cast %849 : vector<1x16x16xf32> to vector<16x16xf32>
    %851 = vector.shape_cast %848 : vector<16x16xf32> to vector<1x16x16xf32>
    tpu.vector_store %arg16[%c3_410, %c9_411, %c9_412], %851 {strides = array<i32>} : memref<4x34x34xf32, #tpu.memory_space<vmem>>, vector<1x16x16xf32>,
    %cst_413 = arith.constant 0.000000e+00 : f32
    %852 = vector.broadcast %cst_413 : f32 to vector<16x16xf32>
    %c0_414 = arith.constant 0 : index
    %c0_415 = arith.constant 0 : index
    %c0_416 = arith.constant 0 : index
    %853 = vector.load %arg16[%c0_414, %c0_415, %c0_416] : memref<4x34x34xf32, #tpu.memory_space<vmem>>, vector<1x16x34xf32>
    %854 = vector.shape_cast %853 : vector<1x16x34xf32> to vector<16x34xf32>
    %855 = vector.extract_strided_slice %854 {offsets = [0, 0], sizes = [16, 16], strides = [1, 1]} : vector<16x34xf32> to vector<16x16xf32>
    %c0_417 = arith.constant 0 : index
    %c0_418 = arith.constant 0 : index
    %856 = memref.load %arg6[%c0_417, %c0_418] : memref<4x49xf32, #tpu.memory_space<smem>>
    %857 = vector.broadcast %856 : f32 to vector<16x16xf32>
    %858 = arith.mulf %855, %857 : vector<16x16xf32>
    %859 = arith.addf %852, %858 : vector<16x16xf32>
    %860 = vector.extract_strided_slice %854 {offsets = [0, 3], sizes = [16, 16], strides = [1, 1]} : vector<16x34xf32> to vector<16x16xf32>
    %c0_419 = arith.constant 0 : index
    %c1_420 = arith.constant 1 : index
    %861 = memref.load %arg6[%c0_419, %c1_420] : memref<4x49xf32, #tpu.memory_space<smem>>
    %862 = vector.broadcast %861 : f32 to vector<16x16xf32>
    %863 = arith.mulf %860, %862 : vector<16x16xf32>
    %864 = arith.addf %859, %863 : vector<16x16xf32>
    %865 = vector.extract_strided_slice %854 {offsets = [0, 6], sizes = [16, 16], strides = [1, 1]} : vector<16x34xf32> to vector<16x16xf32>
    %c0_421 = arith.constant 0 : index
    %c2_422 = arith.constant 2 : index
    %866 = memref.load %arg6[%c0_421, %c2_422] : memref<4x49xf32, #tpu.memory_space<smem>>
    %867 = vector.broadcast %866 : f32 to vector<16x16xf32>
    %868 = arith.mulf %865, %867 : vector<16x16xf32>
    %869 = arith.addf %864, %868 : vector<16x16xf32>
    %870 = vector.extract_strided_slice %854 {offsets = [0, 9], sizes = [16, 16], strides = [1, 1]} : vector<16x34xf32> to vector<16x16xf32>
    %c0_423 = arith.constant 0 : index
    %c3_424 = arith.constant 3 : index
    %871 = memref.load %arg6[%c0_423, %c3_424] : memref<4x49xf32, #tpu.memory_space<smem>>
    %872 = vector.broadcast %871 : f32 to vector<16x16xf32>
    %873 = arith.mulf %870, %872 : vector<16x16xf32>
    %874 = arith.addf %869, %873 : vector<16x16xf32>
    %875 = vector.extract_strided_slice %854 {offsets = [0, 12], sizes = [16, 16], strides = [1, 1]} : vector<16x34xf32> to vector<16x16xf32>
    %c0_425 = arith.constant 0 : index
    %c4_426 = arith.constant 4 : index
    %876 = memref.load %arg6[%c0_425, %c4_426] : memref<4x49xf32, #tpu.memory_space<smem>>
    %877 = vector.broadcast %876 : f32 to vector<16x16xf32>
    %878 = arith.mulf %875, %877 : vector<16x16xf32>
    %879 = arith.addf %874, %878 : vector<16x16xf32>
    %880 = vector.extract_strided_slice %854 {offsets = [0, 15], sizes = [16, 16], strides = [1, 1]} : vector<16x34xf32> to vector<16x16xf32>
    %c0_427 = arith.constant 0 : index
    %c5_428 = arith.constant 5 : index
    %881 = memref.load %arg6[%c0_427, %c5_428] : memref<4x49xf32, #tpu.memory_space<smem>>
    %882 = vector.broadcast %881 : f32 to vector<16x16xf32>
    %883 = arith.mulf %880, %882 : vector<16x16xf32>
    %884 = arith.addf %879, %883 : vector<16x16xf32>
    %885 = vector.extract_strided_slice %854 {offsets = [0, 18], sizes = [16, 16], strides = [1, 1]} : vector<16x34xf32> to vector<16x16xf32>
    %c0_429 = arith.constant 0 : index
    %c6_430 = arith.constant 6 : index
    %886 = memref.load %arg6[%c0_429, %c6_430] : memref<4x49xf32, #tpu.memory_space<smem>>
    %887 = vector.broadcast %886 : f32 to vector<16x16xf32>
    %888 = arith.mulf %885, %887 : vector<16x16xf32>
    %889 = arith.addf %884, %888 : vector<16x16xf32>
    %c0_431 = arith.constant 0 : index
    %c3_432 = arith.constant 3 : index
    %c0_433 = arith.constant 0 : index
    %890 = vector.load %arg16[%c0_431, %c3_432, %c0_433] : memref<4x34x34xf32, #tpu.memory_space<vmem>>, vector<1x16x34xf32>
    %891 = vector.shape_cast %890 : vector<1x16x34xf32> to vector<16x34xf32>
    %892 = vector.extract_strided_slice %891 {offsets = [0, 0], sizes = [16, 16], strides = [1, 1]} : vector<16x34xf32> to vector<16x16xf32>
    %c0_434 = arith.constant 0 : index
    %c7_435 = arith.constant 7 : index
    %893 = memref.load %arg6[%c0_434, %c7_435] : memref<4x49xf32, #tpu.memory_space<smem>>
    %894 = vector.broadcast %893 : f32 to vector<16x16xf32>
    %895 = arith.mulf %892, %894 : vector<16x16xf32>
    %896 = arith.addf %889, %895 : vector<16x16xf32>
    %897 = vector.extract_strided_slice %891 {offsets = [0, 3], sizes = [16, 16], strides = [1, 1]} : vector<16x34xf32> to vector<16x16xf32>
    %c0_436 = arith.constant 0 : index
    %c8_437 = arith.constant 8 : index
    %898 = memref.load %arg6[%c0_436, %c8_437] : memref<4x49xf32, #tpu.memory_space<smem>>
    %899 = vector.broadcast %898 : f32 to vector<16x16xf32>
    %900 = arith.mulf %897, %899 : vector<16x16xf32>
    %901 = arith.addf %896, %900 : vector<16x16xf32>
    %902 = vector.extract_strided_slice %891 {offsets = [0, 6], sizes = [16, 16], strides = [1, 1]} : vector<16x34xf32> to vector<16x16xf32>
    %c0_438 = arith.constant 0 : index
    %c9_439 = arith.constant 9 : index
    %903 = memref.load %arg6[%c0_438, %c9_439] : memref<4x49xf32, #tpu.memory_space<smem>>
    %904 = vector.broadcast %903 : f32 to vector<16x16xf32>
    %905 = arith.mulf %902, %904 : vector<16x16xf32>
    %906 = arith.addf %901, %905 : vector<16x16xf32>
    %907 = vector.extract_strided_slice %891 {offsets = [0, 9], sizes = [16, 16], strides = [1, 1]} : vector<16x34xf32> to vector<16x16xf32>
    %c0_440 = arith.constant 0 : index
    %c10_441 = arith.constant 10 : index
    %908 = memref.load %arg6[%c0_440, %c10_441] : memref<4x49xf32, #tpu.memory_space<smem>>
    %909 = vector.broadcast %908 : f32 to vector<16x16xf32>
    %910 = arith.mulf %907, %909 : vector<16x16xf32>
    %911 = arith.addf %906, %910 : vector<16x16xf32>
    %912 = vector.extract_strided_slice %891 {offsets = [0, 12], sizes = [16, 16], strides = [1, 1]} : vector<16x34xf32> to vector<16x16xf32>
    %c0_442 = arith.constant 0 : index
    %c11_443 = arith.constant 11 : index
    %913 = memref.load %arg6[%c0_442, %c11_443] : memref<4x49xf32, #tpu.memory_space<smem>>
    %914 = vector.broadcast %913 : f32 to vector<16x16xf32>
    %915 = arith.mulf %912, %914 : vector<16x16xf32>
    %916 = arith.addf %911, %915 : vector<16x16xf32>
    %917 = vector.extract_strided_slice %891 {offsets = [0, 15], sizes = [16, 16], strides = [1, 1]} : vector<16x34xf32> to vector<16x16xf32>
    %c0_444 = arith.constant 0 : index
    %c12_445 = arith.constant 12 : index
    %918 = memref.load %arg6[%c0_444, %c12_445] : memref<4x49xf32, #tpu.memory_space<smem>>
    %919 = vector.broadcast %918 : f32 to vector<16x16xf32>
    %920 = arith.mulf %917, %919 : vector<16x16xf32>
    %921 = arith.addf %916, %920 : vector<16x16xf32>
    %922 = vector.extract_strided_slice %891 {offsets = [0, 18], sizes = [16, 16], strides = [1, 1]} : vector<16x34xf32> to vector<16x16xf32>
    %c0_446 = arith.constant 0 : index
    %c13_447 = arith.constant 13 : index
    %923 = memref.load %arg6[%c0_446, %c13_447] : memref<4x49xf32, #tpu.memory_space<smem>>
    %924 = vector.broadcast %923 : f32 to vector<16x16xf32>
    %925 = arith.mulf %922, %924 : vector<16x16xf32>
    %926 = arith.addf %921, %925 : vector<16x16xf32>
    %c0_448 = arith.constant 0 : index
    %c6_449 = arith.constant 6 : index
    %c0_450 = arith.constant 0 : index
    %927 = vector.load %arg16[%c0_448, %c6_449, %c0_450] : memref<4x34x34xf32, #tpu.memory_space<vmem>>, vector<1x16x34xf32>
    %928 = vector.shape_cast %927 : vector<1x16x34xf32> to vector<16x34xf32>
    %929 = vector.extract_strided_slice %928 {offsets = [0, 0], sizes = [16, 16], strides = [1, 1]} : vector<16x34xf32> to vector<16x16xf32>
    %c0_451 = arith.constant 0 : index
    %c14_452 = arith.constant 14 : index
    %930 = memref.load %arg6[%c0_451, %c14_452] : memref<4x49xf32, #tpu.memory_space<smem>>
    %931 = vector.broadcast %930 : f32 to vector<16x16xf32>
    %932 = arith.mulf %929, %931 : vector<16x16xf32>
    %933 = arith.addf %926, %932 : vector<16x16xf32>
    %934 = vector.extract_strided_slice %928 {offsets = [0, 3], sizes = [16, 16], strides = [1, 1]} : vector<16x34xf32> to vector<16x16xf32>
    %c0_453 = arith.constant 0 : index
    %c15_454 = arith.constant 15 : index
    %935 = memref.load %arg6[%c0_453, %c15_454] : memref<4x49xf32, #tpu.memory_space<smem>>
    %936 = vector.broadcast %935 : f32 to vector<16x16xf32>
    %937 = arith.mulf %934, %936 : vector<16x16xf32>
    %938 = arith.addf %933, %937 : vector<16x16xf32>
    %939 = vector.extract_strided_slice %928 {offsets = [0, 6], sizes = [16, 16], strides = [1, 1]} : vector<16x34xf32> to vector<16x16xf32>
    %c0_455 = arith.constant 0 : index
    %c16_456 = arith.constant 16 : index
    %940 = memref.load %arg6[%c0_455, %c16_456] : memref<4x49xf32, #tpu.memory_space<smem>>
    %941 = vector.broadcast %940 : f32 to vector<16x16xf32>
    %942 = arith.mulf %939, %941 : vector<16x16xf32>
    %943 = arith.addf %938, %942 : vector<16x16xf32>
    %944 = vector.extract_strided_slice %928 {offsets = [0, 9], sizes = [16, 16], strides = [1, 1]} : vector<16x34xf32> to vector<16x16xf32>
    %c0_457 = arith.constant 0 : index
    %c17_458 = arith.constant 17 : index
    %945 = memref.load %arg6[%c0_457, %c17_458] : memref<4x49xf32, #tpu.memory_space<smem>>
    %946 = vector.broadcast %945 : f32 to vector<16x16xf32>
    %947 = arith.mulf %944, %946 : vector<16x16xf32>
    %948 = arith.addf %943, %947 : vector<16x16xf32>
    %949 = vector.extract_strided_slice %928 {offsets = [0, 12], sizes = [16, 16], strides = [1, 1]} : vector<16x34xf32> to vector<16x16xf32>
    %c0_459 = arith.constant 0 : index
    %c18_460 = arith.constant 18 : index
    %950 = memref.load %arg6[%c0_459, %c18_460] : memref<4x49xf32, #tpu.memory_space<smem>>
    %951 = vector.broadcast %950 : f32 to vector<16x16xf32>
    %952 = arith.mulf %949, %951 : vector<16x16xf32>
    %953 = arith.addf %948, %952 : vector<16x16xf32>
    %954 = vector.extract_strided_slice %928 {offsets = [0, 15], sizes = [16, 16], strides = [1, 1]} : vector<16x34xf32> to vector<16x16xf32>
    %c0_461 = arith.constant 0 : index
    %c19_462 = arith.constant 19 : index
    %955 = memref.load %arg6[%c0_461, %c19_462] : memref<4x49xf32, #tpu.memory_space<smem>>
    %956 = vector.broadcast %955 : f32 to vector<16x16xf32>
    %957 = arith.mulf %954, %956 : vector<16x16xf32>
    %958 = arith.addf %953, %957 : vector<16x16xf32>
    %959 = vector.extract_strided_slice %928 {offsets = [0, 18], sizes = [16, 16], strides = [1, 1]} : vector<16x34xf32> to vector<16x16xf32>
    %c0_463 = arith.constant 0 : index
    %c20_464 = arith.constant 20 : index
    %960 = memref.load %arg6[%c0_463, %c20_464] : memref<4x49xf32, #tpu.memory_space<smem>>
    %961 = vector.broadcast %960 : f32 to vector<16x16xf32>
    %962 = arith.mulf %959, %961 : vector<16x16xf32>
    %963 = arith.addf %958, %962 : vector<16x16xf32>
    %c0_465 = arith.constant 0 : index
    %c9_466 = arith.constant 9 : index
    %c0_467 = arith.constant 0 : index
    %964 = vector.load %arg16[%c0_465, %c9_466, %c0_467] : memref<4x34x34xf32, #tpu.memory_space<vmem>>, vector<1x16x34xf32>
    %965 = vector.shape_cast %964 : vector<1x16x34xf32> to vector<16x34xf32>
    %966 = vector.extract_strided_slice %965 {offsets = [0, 0], sizes = [16, 16], strides = [1, 1]} : vector<16x34xf32> to vector<16x16xf32>
    %c0_468 = arith.constant 0 : index
    %c21_469 = arith.constant 21 : index
    %967 = memref.load %arg6[%c0_468, %c21_469] : memref<4x49xf32, #tpu.memory_space<smem>>
    %968 = vector.broadcast %967 : f32 to vector<16x16xf32>
    %969 = arith.mulf %966, %968 : vector<16x16xf32>
    %970 = arith.addf %963, %969 : vector<16x16xf32>
    %971 = vector.extract_strided_slice %965 {offsets = [0, 3], sizes = [16, 16], strides = [1, 1]} : vector<16x34xf32> to vector<16x16xf32>
    %c0_470 = arith.constant 0 : index
    %c22_471 = arith.constant 22 : index
    %972 = memref.load %arg6[%c0_470, %c22_471] : memref<4x49xf32, #tpu.memory_space<smem>>
    %973 = vector.broadcast %972 : f32 to vector<16x16xf32>
    %974 = arith.mulf %971, %973 : vector<16x16xf32>
    %975 = arith.addf %970, %974 : vector<16x16xf32>
    %976 = vector.extract_strided_slice %965 {offsets = [0, 6], sizes = [16, 16], strides = [1, 1]} : vector<16x34xf32> to vector<16x16xf32>
    %c0_472 = arith.constant 0 : index
    %c23_473 = arith.constant 23 : index
    %977 = memref.load %arg6[%c0_472, %c23_473] : memref<4x49xf32, #tpu.memory_space<smem>>
    %978 = vector.broadcast %977 : f32 to vector<16x16xf32>
    %979 = arith.mulf %976, %978 : vector<16x16xf32>
    %980 = arith.addf %975, %979 : vector<16x16xf32>
    %981 = vector.extract_strided_slice %965 {offsets = [0, 9], sizes = [16, 16], strides = [1, 1]} : vector<16x34xf32> to vector<16x16xf32>
    %c0_474 = arith.constant 0 : index
    %c24_475 = arith.constant 24 : index
    %982 = memref.load %arg6[%c0_474, %c24_475] : memref<4x49xf32, #tpu.memory_space<smem>>
    %983 = vector.broadcast %982 : f32 to vector<16x16xf32>
    %984 = arith.mulf %981, %983 : vector<16x16xf32>
    %985 = arith.addf %980, %984 : vector<16x16xf32>
    %986 = vector.extract_strided_slice %965 {offsets = [0, 12], sizes = [16, 16], strides = [1, 1]} : vector<16x34xf32> to vector<16x16xf32>
    %c0_476 = arith.constant 0 : index
    %c25_477 = arith.constant 25 : index
    %987 = memref.load %arg6[%c0_476, %c25_477] : memref<4x49xf32, #tpu.memory_space<smem>>
    %988 = vector.broadcast %987 : f32 to vector<16x16xf32>
    %989 = arith.mulf %986, %988 : vector<16x16xf32>
    %990 = arith.addf %985, %989 : vector<16x16xf32>
    %991 = vector.extract_strided_slice %965 {offsets = [0, 15], sizes = [16, 16], strides = [1, 1]} : vector<16x34xf32> to vector<16x16xf32>
    %c0_478 = arith.constant 0 : index
    %c26 = arith.constant 26 : index
    %992 = memref.load %arg6[%c0_478, %c26] : memref<4x49xf32, #tpu.memory_space<smem>>
    %993 = vector.broadcast %992 : f32 to vector<16x16xf32>
    %994 = arith.mulf %991, %993 : vector<16x16xf32>
    %995 = arith.addf %990, %994 : vector<16x16xf32>
    %996 = vector.extract_strided_slice %965 {offsets = [0, 18], sizes = [16, 16], strides = [1, 1]} : vector<16x34xf32> to vector<16x16xf32>
    %c0_479 = arith.constant 0 : index
    %c27 = arith.constant 27 : index
    %997 = memref.load %arg6[%c0_479, %c27] : memref<4x49xf32, #tpu.memory_space<smem>>
    %998 = vector.broadcast %997 : f32 to vector<16x16xf32>
    %999 = arith.mulf %996, %998 : vector<16x16xf32>
    %1000 = arith.addf %995, %999 : vector<16x16xf32>
    %c0_480 = arith.constant 0 : index
    %c12_481 = arith.constant 12 : index
    %c0_482 = arith.constant 0 : index
    %1001 = vector.load %arg16[%c0_480, %c12_481, %c0_482] : memref<4x34x34xf32, #tpu.memory_space<vmem>>, vector<1x16x34xf32>
    %1002 = vector.shape_cast %1001 : vector<1x16x34xf32> to vector<16x34xf32>
    %1003 = vector.extract_strided_slice %1002 {offsets = [0, 0], sizes = [16, 16], strides = [1, 1]} : vector<16x34xf32> to vector<16x16xf32>
    %c0_483 = arith.constant 0 : index
    %c28 = arith.constant 28 : index
    %1004 = memref.load %arg6[%c0_483, %c28] : memref<4x49xf32, #tpu.memory_space<smem>>
    %1005 = vector.broadcast %1004 : f32 to vector<16x16xf32>
    %1006 = arith.mulf %1003, %1005 : vector<16x16xf32>
    %1007 = arith.addf %1000, %1006 : vector<16x16xf32>
    %1008 = vector.extract_strided_slice %1002 {offsets = [0, 3], sizes = [16, 16], strides = [1, 1]} : vector<16x34xf32> to vector<16x16xf32>
    %c0_484 = arith.constant 0 : index
    %c29 = arith.constant 29 : index
    %1009 = memref.load %arg6[%c0_484, %c29] : memref<4x49xf32, #tpu.memory_space<smem>>
    %1010 = vector.broadcast %1009 : f32 to vector<16x16xf32>
    %1011 = arith.mulf %1008, %1010 : vector<16x16xf32>
    %1012 = arith.addf %1007, %1011 : vector<16x16xf32>
    %1013 = vector.extract_strided_slice %1002 {offsets = [0, 6], sizes = [16, 16], strides = [1, 1]} : vector<16x34xf32> to vector<16x16xf32>
    %c0_485 = arith.constant 0 : index
    %c30 = arith.constant 30 : index
    %1014 = memref.load %arg6[%c0_485, %c30] : memref<4x49xf32, #tpu.memory_space<smem>>
    %1015 = vector.broadcast %1014 : f32 to vector<16x16xf32>
    %1016 = arith.mulf %1013, %1015 : vector<16x16xf32>
    %1017 = arith.addf %1012, %1016 : vector<16x16xf32>
    %1018 = vector.extract_strided_slice %1002 {offsets = [0, 9], sizes = [16, 16], strides = [1, 1]} : vector<16x34xf32> to vector<16x16xf32>
    %c0_486 = arith.constant 0 : index
    %c31 = arith.constant 31 : index
    %1019 = memref.load %arg6[%c0_486, %c31] : memref<4x49xf32, #tpu.memory_space<smem>>
    %1020 = vector.broadcast %1019 : f32 to vector<16x16xf32>
    %1021 = arith.mulf %1018, %1020 : vector<16x16xf32>
    %1022 = arith.addf %1017, %1021 : vector<16x16xf32>
    %1023 = vector.extract_strided_slice %1002 {offsets = [0, 12], sizes = [16, 16], strides = [1, 1]} : vector<16x34xf32> to vector<16x16xf32>
    %c0_487 = arith.constant 0 : index
    %c32 = arith.constant 32 : index
    %1024 = memref.load %arg6[%c0_487, %c32] : memref<4x49xf32, #tpu.memory_space<smem>>
    %1025 = vector.broadcast %1024 : f32 to vector<16x16xf32>
    %1026 = arith.mulf %1023, %1025 : vector<16x16xf32>
    %1027 = arith.addf %1022, %1026 : vector<16x16xf32>
    %1028 = vector.extract_strided_slice %1002 {offsets = [0, 15], sizes = [16, 16], strides = [1, 1]} : vector<16x34xf32> to vector<16x16xf32>
    %c0_488 = arith.constant 0 : index
    %c33 = arith.constant 33 : index
    %1029 = memref.load %arg6[%c0_488, %c33] : memref<4x49xf32, #tpu.memory_space<smem>>
    %1030 = vector.broadcast %1029 : f32 to vector<16x16xf32>
    %1031 = arith.mulf %1028, %1030 : vector<16x16xf32>
    %1032 = arith.addf %1027, %1031 : vector<16x16xf32>
    %1033 = vector.extract_strided_slice %1002 {offsets = [0, 18], sizes = [16, 16], strides = [1, 1]} : vector<16x34xf32> to vector<16x16xf32>
    %c0_489 = arith.constant 0 : index
    %c34 = arith.constant 34 : index
    %1034 = memref.load %arg6[%c0_489, %c34] : memref<4x49xf32, #tpu.memory_space<smem>>
    %1035 = vector.broadcast %1034 : f32 to vector<16x16xf32>
    %1036 = arith.mulf %1033, %1035 : vector<16x16xf32>
    %1037 = arith.addf %1032, %1036 : vector<16x16xf32>
    %c0_490 = arith.constant 0 : index
    %c15_491 = arith.constant 15 : index
    %c0_492 = arith.constant 0 : index
    %1038 = vector.load %arg16[%c0_490, %c15_491, %c0_492] : memref<4x34x34xf32, #tpu.memory_space<vmem>>, vector<1x16x34xf32>
    %1039 = vector.shape_cast %1038 : vector<1x16x34xf32> to vector<16x34xf32>
    %1040 = vector.extract_strided_slice %1039 {offsets = [0, 0], sizes = [16, 16], strides = [1, 1]} : vector<16x34xf32> to vector<16x16xf32>
    %c0_493 = arith.constant 0 : index
    %c35 = arith.constant 35 : index
    %1041 = memref.load %arg6[%c0_493, %c35] : memref<4x49xf32, #tpu.memory_space<smem>>
    %1042 = vector.broadcast %1041 : f32 to vector<16x16xf32>
    %1043 = arith.mulf %1040, %1042 : vector<16x16xf32>
    %1044 = arith.addf %1037, %1043 : vector<16x16xf32>
    %1045 = vector.extract_strided_slice %1039 {offsets = [0, 3], sizes = [16, 16], strides = [1, 1]} : vector<16x34xf32> to vector<16x16xf32>
    %c0_494 = arith.constant 0 : index
    %c36 = arith.constant 36 : index
    %1046 = memref.load %arg6[%c0_494, %c36] : memref<4x49xf32, #tpu.memory_space<smem>>
    %1047 = vector.broadcast %1046 : f32 to vector<16x16xf32>
    %1048 = arith.mulf %1045, %1047 : vector<16x16xf32>
    %1049 = arith.addf %1044, %1048 : vector<16x16xf32>
    %1050 = vector.extract_strided_slice %1039 {offsets = [0, 6], sizes = [16, 16], strides = [1, 1]} : vector<16x34xf32> to vector<16x16xf32>
    %c0_495 = arith.constant 0 : index
    %c37 = arith.constant 37 : index
    %1051 = memref.load %arg6[%c0_495, %c37] : memref<4x49xf32, #tpu.memory_space<smem>>
    %1052 = vector.broadcast %1051 : f32 to vector<16x16xf32>
    %1053 = arith.mulf %1050, %1052 : vector<16x16xf32>
    %1054 = arith.addf %1049, %1053 : vector<16x16xf32>
    %1055 = vector.extract_strided_slice %1039 {offsets = [0, 9], sizes = [16, 16], strides = [1, 1]} : vector<16x34xf32> to vector<16x16xf32>
    %c0_496 = arith.constant 0 : index
    %c38 = arith.constant 38 : index
    %1056 = memref.load %arg6[%c0_496, %c38] : memref<4x49xf32, #tpu.memory_space<smem>>
    %1057 = vector.broadcast %1056 : f32 to vector<16x16xf32>
    %1058 = arith.mulf %1055, %1057 : vector<16x16xf32>
    %1059 = arith.addf %1054, %1058 : vector<16x16xf32>
    %1060 = vector.extract_strided_slice %1039 {offsets = [0, 12], sizes = [16, 16], strides = [1, 1]} : vector<16x34xf32> to vector<16x16xf32>
    %c0_497 = arith.constant 0 : index
    %c39 = arith.constant 39 : index
    %1061 = memref.load %arg6[%c0_497, %c39] : memref<4x49xf32, #tpu.memory_space<smem>>
    %1062 = vector.broadcast %1061 : f32 to vector<16x16xf32>
    %1063 = arith.mulf %1060, %1062 : vector<16x16xf32>
    %1064 = arith.addf %1059, %1063 : vector<16x16xf32>
    %1065 = vector.extract_strided_slice %1039 {offsets = [0, 15], sizes = [16, 16], strides = [1, 1]} : vector<16x34xf32> to vector<16x16xf32>
    %c0_498 = arith.constant 0 : index
    %c40 = arith.constant 40 : index
    %1066 = memref.load %arg6[%c0_498, %c40] : memref<4x49xf32, #tpu.memory_space<smem>>
    %1067 = vector.broadcast %1066 : f32 to vector<16x16xf32>
    %1068 = arith.mulf %1065, %1067 : vector<16x16xf32>
    %1069 = arith.addf %1064, %1068 : vector<16x16xf32>
    %1070 = vector.extract_strided_slice %1039 {offsets = [0, 18], sizes = [16, 16], strides = [1, 1]} : vector<16x34xf32> to vector<16x16xf32>
    %c0_499 = arith.constant 0 : index
    %c41 = arith.constant 41 : index
    %1071 = memref.load %arg6[%c0_499, %c41] : memref<4x49xf32, #tpu.memory_space<smem>>
    %1072 = vector.broadcast %1071 : f32 to vector<16x16xf32>
    %1073 = arith.mulf %1070, %1072 : vector<16x16xf32>
    %1074 = arith.addf %1069, %1073 : vector<16x16xf32>
    %c0_500 = arith.constant 0 : index
    %c18_501 = arith.constant 18 : index
    %c0_502 = arith.constant 0 : index
    %1075 = vector.load %arg16[%c0_500, %c18_501, %c0_502] : memref<4x34x34xf32, #tpu.memory_space<vmem>>, vector<1x16x34xf32>
    %1076 = vector.shape_cast %1075 : vector<1x16x34xf32> to vector<16x34xf32>
    %1077 = vector.extract_strided_slice %1076 {offsets = [0, 0], sizes = [16, 16], strides = [1, 1]} : vector<16x34xf32> to vector<16x16xf32>
    %c0_503 = arith.constant 0 : index
    %c42 = arith.constant 42 : index
    %1078 = memref.load %arg6[%c0_503, %c42] : memref<4x49xf32, #tpu.memory_space<smem>>
    %1079 = vector.broadcast %1078 : f32 to vector<16x16xf32>
    %1080 = arith.mulf %1077, %1079 : vector<16x16xf32>
    %1081 = arith.addf %1074, %1080 : vector<16x16xf32>
    %1082 = vector.extract_strided_slice %1076 {offsets = [0, 3], sizes = [16, 16], strides = [1, 1]} : vector<16x34xf32> to vector<16x16xf32>
    %c0_504 = arith.constant 0 : index
    %c43 = arith.constant 43 : index
    %1083 = memref.load %arg6[%c0_504, %c43] : memref<4x49xf32, #tpu.memory_space<smem>>
    %1084 = vector.broadcast %1083 : f32 to vector<16x16xf32>
    %1085 = arith.mulf %1082, %1084 : vector<16x16xf32>
    %1086 = arith.addf %1081, %1085 : vector<16x16xf32>
    %1087 = vector.extract_strided_slice %1076 {offsets = [0, 6], sizes = [16, 16], strides = [1, 1]} : vector<16x34xf32> to vector<16x16xf32>
    %c0_505 = arith.constant 0 : index
    %c44 = arith.constant 44 : index
    %1088 = memref.load %arg6[%c0_505, %c44] : memref<4x49xf32, #tpu.memory_space<smem>>
    %1089 = vector.broadcast %1088 : f32 to vector<16x16xf32>
    %1090 = arith.mulf %1087, %1089 : vector<16x16xf32>
    %1091 = arith.addf %1086, %1090 : vector<16x16xf32>
    %1092 = vector.extract_strided_slice %1076 {offsets = [0, 9], sizes = [16, 16], strides = [1, 1]} : vector<16x34xf32> to vector<16x16xf32>
    %c0_506 = arith.constant 0 : index
    %c45 = arith.constant 45 : index
    %1093 = memref.load %arg6[%c0_506, %c45] : memref<4x49xf32, #tpu.memory_space<smem>>
    %1094 = vector.broadcast %1093 : f32 to vector<16x16xf32>
    %1095 = arith.mulf %1092, %1094 : vector<16x16xf32>
    %1096 = arith.addf %1091, %1095 : vector<16x16xf32>
    %1097 = vector.extract_strided_slice %1076 {offsets = [0, 12], sizes = [16, 16], strides = [1, 1]} : vector<16x34xf32> to vector<16x16xf32>
    %c0_507 = arith.constant 0 : index
    %c46 = arith.constant 46 : index
    %1098 = memref.load %arg6[%c0_507, %c46] : memref<4x49xf32, #tpu.memory_space<smem>>
    %1099 = vector.broadcast %1098 : f32 to vector<16x16xf32>
    %1100 = arith.mulf %1097, %1099 : vector<16x16xf32>
    %1101 = arith.addf %1096, %1100 : vector<16x16xf32>
    %1102 = vector.extract_strided_slice %1076 {offsets = [0, 15], sizes = [16, 16], strides = [1, 1]} : vector<16x34xf32> to vector<16x16xf32>
    %c0_508 = arith.constant 0 : index
    %c47 = arith.constant 47 : index
    %1103 = memref.load %arg6[%c0_508, %c47] : memref<4x49xf32, #tpu.memory_space<smem>>
    %1104 = vector.broadcast %1103 : f32 to vector<16x16xf32>
    %1105 = arith.mulf %1102, %1104 : vector<16x16xf32>
    %1106 = arith.addf %1101, %1105 : vector<16x16xf32>
    %1107 = vector.extract_strided_slice %1076 {offsets = [0, 18], sizes = [16, 16], strides = [1, 1]} : vector<16x34xf32> to vector<16x16xf32>
    %c0_509 = arith.constant 0 : index
    %c48 = arith.constant 48 : index
    %1108 = memref.load %arg6[%c0_509, %c48] : memref<4x49xf32, #tpu.memory_space<smem>>
    %1109 = vector.broadcast %1108 : f32 to vector<16x16xf32>
    %1110 = arith.mulf %1107, %1109 : vector<16x16xf32>
    %1111 = arith.addf %1106, %1110 : vector<16x16xf32>
    %c0_510 = arith.constant 0 : index
    %1112 = memref.load %arg7[%c0_510] : memref<4xf32, #tpu.memory_space<smem>>
    %1113 = vector.broadcast %1112 : f32 to vector<16x16xf32>
    %1114 = arith.addf %1111, %1113 : vector<16x16xf32>
    %cst_511 = arith.constant 0.000000e+00 : f32
    %1115 = vector.broadcast %cst_511 : f32 to vector<16x16xf32>
    %c1_512 = arith.constant 1 : index
    %c0_513 = arith.constant 0 : index
    %c0_514 = arith.constant 0 : index
    %1116 = vector.load %arg16[%c1_512, %c0_513, %c0_514] : memref<4x34x34xf32, #tpu.memory_space<vmem>>, vector<1x16x34xf32>
    %1117 = vector.shape_cast %1116 : vector<1x16x34xf32> to vector<16x34xf32>
    %1118 = vector.extract_strided_slice %1117 {offsets = [0, 0], sizes = [16, 16], strides = [1, 1]} : vector<16x34xf32> to vector<16x16xf32>
    %c1_515 = arith.constant 1 : index
    %c0_516 = arith.constant 0 : index
    %1119 = memref.load %arg6[%c1_515, %c0_516] : memref<4x49xf32, #tpu.memory_space<smem>>
    %1120 = vector.broadcast %1119 : f32 to vector<16x16xf32>
    %1121 = arith.mulf %1118, %1120 : vector<16x16xf32>
    %1122 = arith.addf %1115, %1121 : vector<16x16xf32>
    %1123 = vector.extract_strided_slice %1117 {offsets = [0, 3], sizes = [16, 16], strides = [1, 1]} : vector<16x34xf32> to vector<16x16xf32>
    %c1_517 = arith.constant 1 : index
    %c1_518 = arith.constant 1 : index
    %1124 = memref.load %arg6[%c1_517, %c1_518] : memref<4x49xf32, #tpu.memory_space<smem>>
    %1125 = vector.broadcast %1124 : f32 to vector<16x16xf32>
    %1126 = arith.mulf %1123, %1125 : vector<16x16xf32>
    %1127 = arith.addf %1122, %1126 : vector<16x16xf32>
    %1128 = vector.extract_strided_slice %1117 {offsets = [0, 6], sizes = [16, 16], strides = [1, 1]} : vector<16x34xf32> to vector<16x16xf32>
    %c1_519 = arith.constant 1 : index
    %c2_520 = arith.constant 2 : index
    %1129 = memref.load %arg6[%c1_519, %c2_520] : memref<4x49xf32, #tpu.memory_space<smem>>
    %1130 = vector.broadcast %1129 : f32 to vector<16x16xf32>
    %1131 = arith.mulf %1128, %1130 : vector<16x16xf32>
    %1132 = arith.addf %1127, %1131 : vector<16x16xf32>
    %1133 = vector.extract_strided_slice %1117 {offsets = [0, 9], sizes = [16, 16], strides = [1, 1]} : vector<16x34xf32> to vector<16x16xf32>
    %c1_521 = arith.constant 1 : index
    %c3_522 = arith.constant 3 : index
    %1134 = memref.load %arg6[%c1_521, %c3_522] : memref<4x49xf32, #tpu.memory_space<smem>>
    %1135 = vector.broadcast %1134 : f32 to vector<16x16xf32>
    %1136 = arith.mulf %1133, %1135 : vector<16x16xf32>
    %1137 = arith.addf %1132, %1136 : vector<16x16xf32>
    %1138 = vector.extract_strided_slice %1117 {offsets = [0, 12], sizes = [16, 16], strides = [1, 1]} : vector<16x34xf32> to vector<16x16xf32>
    %c1_523 = arith.constant 1 : index
    %c4_524 = arith.constant 4 : index
    %1139 = memref.load %arg6[%c1_523, %c4_524] : memref<4x49xf32, #tpu.memory_space<smem>>
    %1140 = vector.broadcast %1139 : f32 to vector<16x16xf32>
    %1141 = arith.mulf %1138, %1140 : vector<16x16xf32>
    %1142 = arith.addf %1137, %1141 : vector<16x16xf32>
    %1143 = vector.extract_strided_slice %1117 {offsets = [0, 15], sizes = [16, 16], strides = [1, 1]} : vector<16x34xf32> to vector<16x16xf32>
    %c1_525 = arith.constant 1 : index
    %c5_526 = arith.constant 5 : index
    %1144 = memref.load %arg6[%c1_525, %c5_526] : memref<4x49xf32, #tpu.memory_space<smem>>
    %1145 = vector.broadcast %1144 : f32 to vector<16x16xf32>
    %1146 = arith.mulf %1143, %1145 : vector<16x16xf32>
    %1147 = arith.addf %1142, %1146 : vector<16x16xf32>
    %1148 = vector.extract_strided_slice %1117 {offsets = [0, 18], sizes = [16, 16], strides = [1, 1]} : vector<16x34xf32> to vector<16x16xf32>
    %c1_527 = arith.constant 1 : index
    %c6_528 = arith.constant 6 : index
    %1149 = memref.load %arg6[%c1_527, %c6_528] : memref<4x49xf32, #tpu.memory_space<smem>>
    %1150 = vector.broadcast %1149 : f32 to vector<16x16xf32>
    %1151 = arith.mulf %1148, %1150 : vector<16x16xf32>
    %1152 = arith.addf %1147, %1151 : vector<16x16xf32>
    %c1_529 = arith.constant 1 : index
    %c3_530 = arith.constant 3 : index
    %c0_531 = arith.constant 0 : index
    %1153 = vector.load %arg16[%c1_529, %c3_530, %c0_531] : memref<4x34x34xf32, #tpu.memory_space<vmem>>, vector<1x16x34xf32>
    %1154 = vector.shape_cast %1153 : vector<1x16x34xf32> to vector<16x34xf32>
    %1155 = vector.extract_strided_slice %1154 {offsets = [0, 0], sizes = [16, 16], strides = [1, 1]} : vector<16x34xf32> to vector<16x16xf32>
    %c1_532 = arith.constant 1 : index
    %c7_533 = arith.constant 7 : index
    %1156 = memref.load %arg6[%c1_532, %c7_533] : memref<4x49xf32, #tpu.memory_space<smem>>
    %1157 = vector.broadcast %1156 : f32 to vector<16x16xf32>
    %1158 = arith.mulf %1155, %1157 : vector<16x16xf32>
    %1159 = arith.addf %1152, %1158 : vector<16x16xf32>
    %1160 = vector.extract_strided_slice %1154 {offsets = [0, 3], sizes = [16, 16], strides = [1, 1]} : vector<16x34xf32> to vector<16x16xf32>
    %c1_534 = arith.constant 1 : index
    %c8_535 = arith.constant 8 : index
    %1161 = memref.load %arg6[%c1_534, %c8_535] : memref<4x49xf32, #tpu.memory_space<smem>>
    %1162 = vector.broadcast %1161 : f32 to vector<16x16xf32>
    %1163 = arith.mulf %1160, %1162 : vector<16x16xf32>
    %1164 = arith.addf %1159, %1163 : vector<16x16xf32>
    %1165 = vector.extract_strided_slice %1154 {offsets = [0, 6], sizes = [16, 16], strides = [1, 1]} : vector<16x34xf32> to vector<16x16xf32>
    %c1_536 = arith.constant 1 : index
    %c9_537 = arith.constant 9 : index
    %1166 = memref.load %arg6[%c1_536, %c9_537] : memref<4x49xf32, #tpu.memory_space<smem>>
    %1167 = vector.broadcast %1166 : f32 to vector<16x16xf32>
    %1168 = arith.mulf %1165, %1167 : vector<16x16xf32>
    %1169 = arith.addf %1164, %1168 : vector<16x16xf32>
    %1170 = vector.extract_strided_slice %1154 {offsets = [0, 9], sizes = [16, 16], strides = [1, 1]} : vector<16x34xf32> to vector<16x16xf32>
    %c1_538 = arith.constant 1 : index
    %c10_539 = arith.constant 10 : index
    %1171 = memref.load %arg6[%c1_538, %c10_539] : memref<4x49xf32, #tpu.memory_space<smem>>
    %1172 = vector.broadcast %1171 : f32 to vector<16x16xf32>
    %1173 = arith.mulf %1170, %1172 : vector<16x16xf32>
    %1174 = arith.addf %1169, %1173 : vector<16x16xf32>
    %1175 = vector.extract_strided_slice %1154 {offsets = [0, 12], sizes = [16, 16], strides = [1, 1]} : vector<16x34xf32> to vector<16x16xf32>
    %c1_540 = arith.constant 1 : index
    %c11_541 = arith.constant 11 : index
    %1176 = memref.load %arg6[%c1_540, %c11_541] : memref<4x49xf32, #tpu.memory_space<smem>>
    %1177 = vector.broadcast %1176 : f32 to vector<16x16xf32>
    %1178 = arith.mulf %1175, %1177 : vector<16x16xf32>
    %1179 = arith.addf %1174, %1178 : vector<16x16xf32>
    %1180 = vector.extract_strided_slice %1154 {offsets = [0, 15], sizes = [16, 16], strides = [1, 1]} : vector<16x34xf32> to vector<16x16xf32>
    %c1_542 = arith.constant 1 : index
    %c12_543 = arith.constant 12 : index
    %1181 = memref.load %arg6[%c1_542, %c12_543] : memref<4x49xf32, #tpu.memory_space<smem>>
    %1182 = vector.broadcast %1181 : f32 to vector<16x16xf32>
    %1183 = arith.mulf %1180, %1182 : vector<16x16xf32>
    %1184 = arith.addf %1179, %1183 : vector<16x16xf32>
    %1185 = vector.extract_strided_slice %1154 {offsets = [0, 18], sizes = [16, 16], strides = [1, 1]} : vector<16x34xf32> to vector<16x16xf32>
    %c1_544 = arith.constant 1 : index
    %c13_545 = arith.constant 13 : index
    %1186 = memref.load %arg6[%c1_544, %c13_545] : memref<4x49xf32, #tpu.memory_space<smem>>
    %1187 = vector.broadcast %1186 : f32 to vector<16x16xf32>
    %1188 = arith.mulf %1185, %1187 : vector<16x16xf32>
    %1189 = arith.addf %1184, %1188 : vector<16x16xf32>
    %c1_546 = arith.constant 1 : index
    %c6_547 = arith.constant 6 : index
    %c0_548 = arith.constant 0 : index
    %1190 = vector.load %arg16[%c1_546, %c6_547, %c0_548] : memref<4x34x34xf32, #tpu.memory_space<vmem>>, vector<1x16x34xf32>
    %1191 = vector.shape_cast %1190 : vector<1x16x34xf32> to vector<16x34xf32>
    %1192 = vector.extract_strided_slice %1191 {offsets = [0, 0], sizes = [16, 16], strides = [1, 1]} : vector<16x34xf32> to vector<16x16xf32>
    %c1_549 = arith.constant 1 : index
    %c14_550 = arith.constant 14 : index
    %1193 = memref.load %arg6[%c1_549, %c14_550] : memref<4x49xf32, #tpu.memory_space<smem>>
    %1194 = vector.broadcast %1193 : f32 to vector<16x16xf32>
    %1195 = arith.mulf %1192, %1194 : vector<16x16xf32>
    %1196 = arith.addf %1189, %1195 : vector<16x16xf32>
    %1197 = vector.extract_strided_slice %1191 {offsets = [0, 3], sizes = [16, 16], strides = [1, 1]} : vector<16x34xf32> to vector<16x16xf32>
    %c1_551 = arith.constant 1 : index
    %c15_552 = arith.constant 15 : index
    %1198 = memref.load %arg6[%c1_551, %c15_552] : memref<4x49xf32, #tpu.memory_space<smem>>
    %1199 = vector.broadcast %1198 : f32 to vector<16x16xf32>
    %1200 = arith.mulf %1197, %1199 : vector<16x16xf32>
    %1201 = arith.addf %1196, %1200 : vector<16x16xf32>
    %1202 = vector.extract_strided_slice %1191 {offsets = [0, 6], sizes = [16, 16], strides = [1, 1]} : vector<16x34xf32> to vector<16x16xf32>
    %c1_553 = arith.constant 1 : index
    %c16_554 = arith.constant 16 : index
    %1203 = memref.load %arg6[%c1_553, %c16_554] : memref<4x49xf32, #tpu.memory_space<smem>>
    %1204 = vector.broadcast %1203 : f32 to vector<16x16xf32>
    %1205 = arith.mulf %1202, %1204 : vector<16x16xf32>
    %1206 = arith.addf %1201, %1205 : vector<16x16xf32>
    %1207 = vector.extract_strided_slice %1191 {offsets = [0, 9], sizes = [16, 16], strides = [1, 1]} : vector<16x34xf32> to vector<16x16xf32>
    %c1_555 = arith.constant 1 : index
    %c17_556 = arith.constant 17 : index
    %1208 = memref.load %arg6[%c1_555, %c17_556] : memref<4x49xf32, #tpu.memory_space<smem>>
    %1209 = vector.broadcast %1208 : f32 to vector<16x16xf32>
    %1210 = arith.mulf %1207, %1209 : vector<16x16xf32>
    %1211 = arith.addf %1206, %1210 : vector<16x16xf32>
    %1212 = vector.extract_strided_slice %1191 {offsets = [0, 12], sizes = [16, 16], strides = [1, 1]} : vector<16x34xf32> to vector<16x16xf32>
    %c1_557 = arith.constant 1 : index
    %c18_558 = arith.constant 18 : index
    %1213 = memref.load %arg6[%c1_557, %c18_558] : memref<4x49xf32, #tpu.memory_space<smem>>
    %1214 = vector.broadcast %1213 : f32 to vector<16x16xf32>
    %1215 = arith.mulf %1212, %1214 : vector<16x16xf32>
    %1216 = arith.addf %1211, %1215 : vector<16x16xf32>
    %1217 = vector.extract_strided_slice %1191 {offsets = [0, 15], sizes = [16, 16], strides = [1, 1]} : vector<16x34xf32> to vector<16x16xf32>
    %c1_559 = arith.constant 1 : index
    %c19_560 = arith.constant 19 : index
    %1218 = memref.load %arg6[%c1_559, %c19_560] : memref<4x49xf32, #tpu.memory_space<smem>>
    %1219 = vector.broadcast %1218 : f32 to vector<16x16xf32>
    %1220 = arith.mulf %1217, %1219 : vector<16x16xf32>
    %1221 = arith.addf %1216, %1220 : vector<16x16xf32>
    %1222 = vector.extract_strided_slice %1191 {offsets = [0, 18], sizes = [16, 16], strides = [1, 1]} : vector<16x34xf32> to vector<16x16xf32>
    %c1_561 = arith.constant 1 : index
    %c20_562 = arith.constant 20 : index
    %1223 = memref.load %arg6[%c1_561, %c20_562] : memref<4x49xf32, #tpu.memory_space<smem>>
    %1224 = vector.broadcast %1223 : f32 to vector<16x16xf32>
    %1225 = arith.mulf %1222, %1224 : vector<16x16xf32>
    %1226 = arith.addf %1221, %1225 : vector<16x16xf32>
    %c1_563 = arith.constant 1 : index
    %c9_564 = arith.constant 9 : index
    %c0_565 = arith.constant 0 : index
    %1227 = vector.load %arg16[%c1_563, %c9_564, %c0_565] : memref<4x34x34xf32, #tpu.memory_space<vmem>>, vector<1x16x34xf32>
    %1228 = vector.shape_cast %1227 : vector<1x16x34xf32> to vector<16x34xf32>
    %1229 = vector.extract_strided_slice %1228 {offsets = [0, 0], sizes = [16, 16], strides = [1, 1]} : vector<16x34xf32> to vector<16x16xf32>
    %c1_566 = arith.constant 1 : index
    %c21_567 = arith.constant 21 : index
    %1230 = memref.load %arg6[%c1_566, %c21_567] : memref<4x49xf32, #tpu.memory_space<smem>>
    %1231 = vector.broadcast %1230 : f32 to vector<16x16xf32>
    %1232 = arith.mulf %1229, %1231 : vector<16x16xf32>
    %1233 = arith.addf %1226, %1232 : vector<16x16xf32>
    %1234 = vector.extract_strided_slice %1228 {offsets = [0, 3], sizes = [16, 16], strides = [1, 1]} : vector<16x34xf32> to vector<16x16xf32>
    %c1_568 = arith.constant 1 : index
    %c22_569 = arith.constant 22 : index
    %1235 = memref.load %arg6[%c1_568, %c22_569] : memref<4x49xf32, #tpu.memory_space<smem>>
    %1236 = vector.broadcast %1235 : f32 to vector<16x16xf32>
    %1237 = arith.mulf %1234, %1236 : vector<16x16xf32>
    %1238 = arith.addf %1233, %1237 : vector<16x16xf32>
    %1239 = vector.extract_strided_slice %1228 {offsets = [0, 6], sizes = [16, 16], strides = [1, 1]} : vector<16x34xf32> to vector<16x16xf32>
    %c1_570 = arith.constant 1 : index
    %c23_571 = arith.constant 23 : index
    %1240 = memref.load %arg6[%c1_570, %c23_571] : memref<4x49xf32, #tpu.memory_space<smem>>
    %1241 = vector.broadcast %1240 : f32 to vector<16x16xf32>
    %1242 = arith.mulf %1239, %1241 : vector<16x16xf32>
    %1243 = arith.addf %1238, %1242 : vector<16x16xf32>
    %1244 = vector.extract_strided_slice %1228 {offsets = [0, 9], sizes = [16, 16], strides = [1, 1]} : vector<16x34xf32> to vector<16x16xf32>
    %c1_572 = arith.constant 1 : index
    %c24_573 = arith.constant 24 : index
    %1245 = memref.load %arg6[%c1_572, %c24_573] : memref<4x49xf32, #tpu.memory_space<smem>>
    %1246 = vector.broadcast %1245 : f32 to vector<16x16xf32>
    %1247 = arith.mulf %1244, %1246 : vector<16x16xf32>
    %1248 = arith.addf %1243, %1247 : vector<16x16xf32>
    %1249 = vector.extract_strided_slice %1228 {offsets = [0, 12], sizes = [16, 16], strides = [1, 1]} : vector<16x34xf32> to vector<16x16xf32>
    %c1_574 = arith.constant 1 : index
    %c25_575 = arith.constant 25 : index
    %1250 = memref.load %arg6[%c1_574, %c25_575] : memref<4x49xf32, #tpu.memory_space<smem>>
    %1251 = vector.broadcast %1250 : f32 to vector<16x16xf32>
    %1252 = arith.mulf %1249, %1251 : vector<16x16xf32>
    %1253 = arith.addf %1248, %1252 : vector<16x16xf32>
    %1254 = vector.extract_strided_slice %1228 {offsets = [0, 15], sizes = [16, 16], strides = [1, 1]} : vector<16x34xf32> to vector<16x16xf32>
    %c1_576 = arith.constant 1 : index
    %c26_577 = arith.constant 26 : index
    %1255 = memref.load %arg6[%c1_576, %c26_577] : memref<4x49xf32, #tpu.memory_space<smem>>
    %1256 = vector.broadcast %1255 : f32 to vector<16x16xf32>
    %1257 = arith.mulf %1254, %1256 : vector<16x16xf32>
    %1258 = arith.addf %1253, %1257 : vector<16x16xf32>
    %1259 = vector.extract_strided_slice %1228 {offsets = [0, 18], sizes = [16, 16], strides = [1, 1]} : vector<16x34xf32> to vector<16x16xf32>
    %c1_578 = arith.constant 1 : index
    %c27_579 = arith.constant 27 : index
    %1260 = memref.load %arg6[%c1_578, %c27_579] : memref<4x49xf32, #tpu.memory_space<smem>>
    %1261 = vector.broadcast %1260 : f32 to vector<16x16xf32>
    %1262 = arith.mulf %1259, %1261 : vector<16x16xf32>
    %1263 = arith.addf %1258, %1262 : vector<16x16xf32>
    %c1_580 = arith.constant 1 : index
    %c12_581 = arith.constant 12 : index
    %c0_582 = arith.constant 0 : index
    %1264 = vector.load %arg16[%c1_580, %c12_581, %c0_582] : memref<4x34x34xf32, #tpu.memory_space<vmem>>, vector<1x16x34xf32>
    %1265 = vector.shape_cast %1264 : vector<1x16x34xf32> to vector<16x34xf32>
    %1266 = vector.extract_strided_slice %1265 {offsets = [0, 0], sizes = [16, 16], strides = [1, 1]} : vector<16x34xf32> to vector<16x16xf32>
    %c1_583 = arith.constant 1 : index
    %c28_584 = arith.constant 28 : index
    %1267 = memref.load %arg6[%c1_583, %c28_584] : memref<4x49xf32, #tpu.memory_space<smem>>
    %1268 = vector.broadcast %1267 : f32 to vector<16x16xf32>
    %1269 = arith.mulf %1266, %1268 : vector<16x16xf32>
    %1270 = arith.addf %1263, %1269 : vector<16x16xf32>
    %1271 = vector.extract_strided_slice %1265 {offsets = [0, 3], sizes = [16, 16], strides = [1, 1]} : vector<16x34xf32> to vector<16x16xf32>
    %c1_585 = arith.constant 1 : index
    %c29_586 = arith.constant 29 : index
    %1272 = memref.load %arg6[%c1_585, %c29_586] : memref<4x49xf32, #tpu.memory_space<smem>>
    %1273 = vector.broadcast %1272 : f32 to vector<16x16xf32>
    %1274 = arith.mulf %1271, %1273 : vector<16x16xf32>
    %1275 = arith.addf %1270, %1274 : vector<16x16xf32>
    %1276 = vector.extract_strided_slice %1265 {offsets = [0, 6], sizes = [16, 16], strides = [1, 1]} : vector<16x34xf32> to vector<16x16xf32>
    %c1_587 = arith.constant 1 : index
    %c30_588 = arith.constant 30 : index
    %1277 = memref.load %arg6[%c1_587, %c30_588] : memref<4x49xf32, #tpu.memory_space<smem>>
    %1278 = vector.broadcast %1277 : f32 to vector<16x16xf32>
    %1279 = arith.mulf %1276, %1278 : vector<16x16xf32>
    %1280 = arith.addf %1275, %1279 : vector<16x16xf32>
    %1281 = vector.extract_strided_slice %1265 {offsets = [0, 9], sizes = [16, 16], strides = [1, 1]} : vector<16x34xf32> to vector<16x16xf32>
    %c1_589 = arith.constant 1 : index
    %c31_590 = arith.constant 31 : index
    %1282 = memref.load %arg6[%c1_589, %c31_590] : memref<4x49xf32, #tpu.memory_space<smem>>
    %1283 = vector.broadcast %1282 : f32 to vector<16x16xf32>
    %1284 = arith.mulf %1281, %1283 : vector<16x16xf32>
    %1285 = arith.addf %1280, %1284 : vector<16x16xf32>
    %1286 = vector.extract_strided_slice %1265 {offsets = [0, 12], sizes = [16, 16], strides = [1, 1]} : vector<16x34xf32> to vector<16x16xf32>
    %c1_591 = arith.constant 1 : index
    %c32_592 = arith.constant 32 : index
    %1287 = memref.load %arg6[%c1_591, %c32_592] : memref<4x49xf32, #tpu.memory_space<smem>>
    %1288 = vector.broadcast %1287 : f32 to vector<16x16xf32>
    %1289 = arith.mulf %1286, %1288 : vector<16x16xf32>
    %1290 = arith.addf %1285, %1289 : vector<16x16xf32>
    %1291 = vector.extract_strided_slice %1265 {offsets = [0, 15], sizes = [16, 16], strides = [1, 1]} : vector<16x34xf32> to vector<16x16xf32>
    %c1_593 = arith.constant 1 : index
    %c33_594 = arith.constant 33 : index
    %1292 = memref.load %arg6[%c1_593, %c33_594] : memref<4x49xf32, #tpu.memory_space<smem>>
    %1293 = vector.broadcast %1292 : f32 to vector<16x16xf32>
    %1294 = arith.mulf %1291, %1293 : vector<16x16xf32>
    %1295 = arith.addf %1290, %1294 : vector<16x16xf32>
    %1296 = vector.extract_strided_slice %1265 {offsets = [0, 18], sizes = [16, 16], strides = [1, 1]} : vector<16x34xf32> to vector<16x16xf32>
    %c1_595 = arith.constant 1 : index
    %c34_596 = arith.constant 34 : index
    %1297 = memref.load %arg6[%c1_595, %c34_596] : memref<4x49xf32, #tpu.memory_space<smem>>
    %1298 = vector.broadcast %1297 : f32 to vector<16x16xf32>
    %1299 = arith.mulf %1296, %1298 : vector<16x16xf32>
    %1300 = arith.addf %1295, %1299 : vector<16x16xf32>
    %c1_597 = arith.constant 1 : index
    %c15_598 = arith.constant 15 : index
    %c0_599 = arith.constant 0 : index
    %1301 = vector.load %arg16[%c1_597, %c15_598, %c0_599] : memref<4x34x34xf32, #tpu.memory_space<vmem>>, vector<1x16x34xf32>
    %1302 = vector.shape_cast %1301 : vector<1x16x34xf32> to vector<16x34xf32>
    %1303 = vector.extract_strided_slice %1302 {offsets = [0, 0], sizes = [16, 16], strides = [1, 1]} : vector<16x34xf32> to vector<16x16xf32>
    %c1_600 = arith.constant 1 : index
    %c35_601 = arith.constant 35 : index
    %1304 = memref.load %arg6[%c1_600, %c35_601] : memref<4x49xf32, #tpu.memory_space<smem>>
    %1305 = vector.broadcast %1304 : f32 to vector<16x16xf32>
    %1306 = arith.mulf %1303, %1305 : vector<16x16xf32>
    %1307 = arith.addf %1300, %1306 : vector<16x16xf32>
    %1308 = vector.extract_strided_slice %1302 {offsets = [0, 3], sizes = [16, 16], strides = [1, 1]} : vector<16x34xf32> to vector<16x16xf32>
    %c1_602 = arith.constant 1 : index
    %c36_603 = arith.constant 36 : index
    %1309 = memref.load %arg6[%c1_602, %c36_603] : memref<4x49xf32, #tpu.memory_space<smem>>
    %1310 = vector.broadcast %1309 : f32 to vector<16x16xf32>
    %1311 = arith.mulf %1308, %1310 : vector<16x16xf32>
    %1312 = arith.addf %1307, %1311 : vector<16x16xf32>
    %1313 = vector.extract_strided_slice %1302 {offsets = [0, 6], sizes = [16, 16], strides = [1, 1]} : vector<16x34xf32> to vector<16x16xf32>
    %c1_604 = arith.constant 1 : index
    %c37_605 = arith.constant 37 : index
    %1314 = memref.load %arg6[%c1_604, %c37_605] : memref<4x49xf32, #tpu.memory_space<smem>>
    %1315 = vector.broadcast %1314 : f32 to vector<16x16xf32>
    %1316 = arith.mulf %1313, %1315 : vector<16x16xf32>
    %1317 = arith.addf %1312, %1316 : vector<16x16xf32>
    %1318 = vector.extract_strided_slice %1302 {offsets = [0, 9], sizes = [16, 16], strides = [1, 1]} : vector<16x34xf32> to vector<16x16xf32>
    %c1_606 = arith.constant 1 : index
    %c38_607 = arith.constant 38 : index
    %1319 = memref.load %arg6[%c1_606, %c38_607] : memref<4x49xf32, #tpu.memory_space<smem>>
    %1320 = vector.broadcast %1319 : f32 to vector<16x16xf32>
    %1321 = arith.mulf %1318, %1320 : vector<16x16xf32>
    %1322 = arith.addf %1317, %1321 : vector<16x16xf32>
    %1323 = vector.extract_strided_slice %1302 {offsets = [0, 12], sizes = [16, 16], strides = [1, 1]} : vector<16x34xf32> to vector<16x16xf32>
    %c1_608 = arith.constant 1 : index
    %c39_609 = arith.constant 39 : index
    %1324 = memref.load %arg6[%c1_608, %c39_609] : memref<4x49xf32, #tpu.memory_space<smem>>
    %1325 = vector.broadcast %1324 : f32 to vector<16x16xf32>
    %1326 = arith.mulf %1323, %1325 : vector<16x16xf32>
    %1327 = arith.addf %1322, %1326 : vector<16x16xf32>
    %1328 = vector.extract_strided_slice %1302 {offsets = [0, 15], sizes = [16, 16], strides = [1, 1]} : vector<16x34xf32> to vector<16x16xf32>
    %c1_610 = arith.constant 1 : index
    %c40_611 = arith.constant 40 : index
    %1329 = memref.load %arg6[%c1_610, %c40_611] : memref<4x49xf32, #tpu.memory_space<smem>>
    %1330 = vector.broadcast %1329 : f32 to vector<16x16xf32>
    %1331 = arith.mulf %1328, %1330 : vector<16x16xf32>
    %1332 = arith.addf %1327, %1331 : vector<16x16xf32>
    %1333 = vector.extract_strided_slice %1302 {offsets = [0, 18], sizes = [16, 16], strides = [1, 1]} : vector<16x34xf32> to vector<16x16xf32>
    %c1_612 = arith.constant 1 : index
    %c41_613 = arith.constant 41 : index
    %1334 = memref.load %arg6[%c1_612, %c41_613] : memref<4x49xf32, #tpu.memory_space<smem>>
    %1335 = vector.broadcast %1334 : f32 to vector<16x16xf32>
    %1336 = arith.mulf %1333, %1335 : vector<16x16xf32>
    %1337 = arith.addf %1332, %1336 : vector<16x16xf32>
    %c1_614 = arith.constant 1 : index
    %c18_615 = arith.constant 18 : index
    %c0_616 = arith.constant 0 : index
    %1338 = vector.load %arg16[%c1_614, %c18_615, %c0_616] : memref<4x34x34xf32, #tpu.memory_space<vmem>>, vector<1x16x34xf32>
    %1339 = vector.shape_cast %1338 : vector<1x16x34xf32> to vector<16x34xf32>
    %1340 = vector.extract_strided_slice %1339 {offsets = [0, 0], sizes = [16, 16], strides = [1, 1]} : vector<16x34xf32> to vector<16x16xf32>
    %c1_617 = arith.constant 1 : index
    %c42_618 = arith.constant 42 : index
    %1341 = memref.load %arg6[%c1_617, %c42_618] : memref<4x49xf32, #tpu.memory_space<smem>>
    %1342 = vector.broadcast %1341 : f32 to vector<16x16xf32>
    %1343 = arith.mulf %1340, %1342 : vector<16x16xf32>
    %1344 = arith.addf %1337, %1343 : vector<16x16xf32>
    %1345 = vector.extract_strided_slice %1339 {offsets = [0, 3], sizes = [16, 16], strides = [1, 1]} : vector<16x34xf32> to vector<16x16xf32>
    %c1_619 = arith.constant 1 : index
    %c43_620 = arith.constant 43 : index
    %1346 = memref.load %arg6[%c1_619, %c43_620] : memref<4x49xf32, #tpu.memory_space<smem>>
    %1347 = vector.broadcast %1346 : f32 to vector<16x16xf32>
    %1348 = arith.mulf %1345, %1347 : vector<16x16xf32>
    %1349 = arith.addf %1344, %1348 : vector<16x16xf32>
    %1350 = vector.extract_strided_slice %1339 {offsets = [0, 6], sizes = [16, 16], strides = [1, 1]} : vector<16x34xf32> to vector<16x16xf32>
    %c1_621 = arith.constant 1 : index
    %c44_622 = arith.constant 44 : index
    %1351 = memref.load %arg6[%c1_621, %c44_622] : memref<4x49xf32, #tpu.memory_space<smem>>
    %1352 = vector.broadcast %1351 : f32 to vector<16x16xf32>
    %1353 = arith.mulf %1350, %1352 : vector<16x16xf32>
    %1354 = arith.addf %1349, %1353 : vector<16x16xf32>
    %1355 = vector.extract_strided_slice %1339 {offsets = [0, 9], sizes = [16, 16], strides = [1, 1]} : vector<16x34xf32> to vector<16x16xf32>
    %c1_623 = arith.constant 1 : index
    %c45_624 = arith.constant 45 : index
    %1356 = memref.load %arg6[%c1_623, %c45_624] : memref<4x49xf32, #tpu.memory_space<smem>>
    %1357 = vector.broadcast %1356 : f32 to vector<16x16xf32>
    %1358 = arith.mulf %1355, %1357 : vector<16x16xf32>
    %1359 = arith.addf %1354, %1358 : vector<16x16xf32>
    %1360 = vector.extract_strided_slice %1339 {offsets = [0, 12], sizes = [16, 16], strides = [1, 1]} : vector<16x34xf32> to vector<16x16xf32>
    %c1_625 = arith.constant 1 : index
    %c46_626 = arith.constant 46 : index
    %1361 = memref.load %arg6[%c1_625, %c46_626] : memref<4x49xf32, #tpu.memory_space<smem>>
    %1362 = vector.broadcast %1361 : f32 to vector<16x16xf32>
    %1363 = arith.mulf %1360, %1362 : vector<16x16xf32>
    %1364 = arith.addf %1359, %1363 : vector<16x16xf32>
    %1365 = vector.extract_strided_slice %1339 {offsets = [0, 15], sizes = [16, 16], strides = [1, 1]} : vector<16x34xf32> to vector<16x16xf32>
    %c1_627 = arith.constant 1 : index
    %c47_628 = arith.constant 47 : index
    %1366 = memref.load %arg6[%c1_627, %c47_628] : memref<4x49xf32, #tpu.memory_space<smem>>
    %1367 = vector.broadcast %1366 : f32 to vector<16x16xf32>
    %1368 = arith.mulf %1365, %1367 : vector<16x16xf32>
    %1369 = arith.addf %1364, %1368 : vector<16x16xf32>
    %1370 = vector.extract_strided_slice %1339 {offsets = [0, 18], sizes = [16, 16], strides = [1, 1]} : vector<16x34xf32> to vector<16x16xf32>
    %c1_629 = arith.constant 1 : index
    %c48_630 = arith.constant 48 : index
    %1371 = memref.load %arg6[%c1_629, %c48_630] : memref<4x49xf32, #tpu.memory_space<smem>>
    %1372 = vector.broadcast %1371 : f32 to vector<16x16xf32>
    %1373 = arith.mulf %1370, %1372 : vector<16x16xf32>
    %1374 = arith.addf %1369, %1373 : vector<16x16xf32>
    %c1_631 = arith.constant 1 : index
    %1375 = memref.load %arg7[%c1_631] : memref<4xf32, #tpu.memory_space<smem>>
    %1376 = vector.broadcast %1375 : f32 to vector<16x16xf32>
    %1377 = arith.addf %1374, %1376 : vector<16x16xf32>
    %cst_632 = arith.constant 0.000000e+00 : f32
    %1378 = vector.broadcast %cst_632 : f32 to vector<16x16xf32>
    %c2_633 = arith.constant 2 : index
    %c0_634 = arith.constant 0 : index
    %c0_635 = arith.constant 0 : index
    %1379 = vector.load %arg16[%c2_633, %c0_634, %c0_635] : memref<4x34x34xf32, #tpu.memory_space<vmem>>, vector<1x16x34xf32>
    %1380 = vector.shape_cast %1379 : vector<1x16x34xf32> to vector<16x34xf32>
    %1381 = vector.extract_strided_slice %1380 {offsets = [0, 0], sizes = [16, 16], strides = [1, 1]} : vector<16x34xf32> to vector<16x16xf32>
    %c2_636 = arith.constant 2 : index
    %c0_637 = arith.constant 0 : index
    %1382 = memref.load %arg6[%c2_636, %c0_637] : memref<4x49xf32, #tpu.memory_space<smem>>
    %1383 = vector.broadcast %1382 : f32 to vector<16x16xf32>
    %1384 = arith.mulf %1381, %1383 : vector<16x16xf32>
    %1385 = arith.addf %1378, %1384 : vector<16x16xf32>
    %1386 = vector.extract_strided_slice %1380 {offsets = [0, 3], sizes = [16, 16], strides = [1, 1]} : vector<16x34xf32> to vector<16x16xf32>
    %c2_638 = arith.constant 2 : index
    %c1_639 = arith.constant 1 : index
    %1387 = memref.load %arg6[%c2_638, %c1_639] : memref<4x49xf32, #tpu.memory_space<smem>>
    %1388 = vector.broadcast %1387 : f32 to vector<16x16xf32>
    %1389 = arith.mulf %1386, %1388 : vector<16x16xf32>
    %1390 = arith.addf %1385, %1389 : vector<16x16xf32>
    %1391 = vector.extract_strided_slice %1380 {offsets = [0, 6], sizes = [16, 16], strides = [1, 1]} : vector<16x34xf32> to vector<16x16xf32>
    %c2_640 = arith.constant 2 : index
    %c2_641 = arith.constant 2 : index
    %1392 = memref.load %arg6[%c2_640, %c2_641] : memref<4x49xf32, #tpu.memory_space<smem>>
    %1393 = vector.broadcast %1392 : f32 to vector<16x16xf32>
    %1394 = arith.mulf %1391, %1393 : vector<16x16xf32>
    %1395 = arith.addf %1390, %1394 : vector<16x16xf32>
    %1396 = vector.extract_strided_slice %1380 {offsets = [0, 9], sizes = [16, 16], strides = [1, 1]} : vector<16x34xf32> to vector<16x16xf32>
    %c2_642 = arith.constant 2 : index
    %c3_643 = arith.constant 3 : index
    %1397 = memref.load %arg6[%c2_642, %c3_643] : memref<4x49xf32, #tpu.memory_space<smem>>
    %1398 = vector.broadcast %1397 : f32 to vector<16x16xf32>
    %1399 = arith.mulf %1396, %1398 : vector<16x16xf32>
    %1400 = arith.addf %1395, %1399 : vector<16x16xf32>
    %1401 = vector.extract_strided_slice %1380 {offsets = [0, 12], sizes = [16, 16], strides = [1, 1]} : vector<16x34xf32> to vector<16x16xf32>
    %c2_644 = arith.constant 2 : index
    %c4_645 = arith.constant 4 : index
    %1402 = memref.load %arg6[%c2_644, %c4_645] : memref<4x49xf32, #tpu.memory_space<smem>>
    %1403 = vector.broadcast %1402 : f32 to vector<16x16xf32>
    %1404 = arith.mulf %1401, %1403 : vector<16x16xf32>
    %1405 = arith.addf %1400, %1404 : vector<16x16xf32>
    %1406 = vector.extract_strided_slice %1380 {offsets = [0, 15], sizes = [16, 16], strides = [1, 1]} : vector<16x34xf32> to vector<16x16xf32>
    %c2_646 = arith.constant 2 : index
    %c5_647 = arith.constant 5 : index
    %1407 = memref.load %arg6[%c2_646, %c5_647] : memref<4x49xf32, #tpu.memory_space<smem>>
    %1408 = vector.broadcast %1407 : f32 to vector<16x16xf32>
    %1409 = arith.mulf %1406, %1408 : vector<16x16xf32>
    %1410 = arith.addf %1405, %1409 : vector<16x16xf32>
    %1411 = vector.extract_strided_slice %1380 {offsets = [0, 18], sizes = [16, 16], strides = [1, 1]} : vector<16x34xf32> to vector<16x16xf32>
    %c2_648 = arith.constant 2 : index
    %c6_649 = arith.constant 6 : index
    %1412 = memref.load %arg6[%c2_648, %c6_649] : memref<4x49xf32, #tpu.memory_space<smem>>
    %1413 = vector.broadcast %1412 : f32 to vector<16x16xf32>
    %1414 = arith.mulf %1411, %1413 : vector<16x16xf32>
    %1415 = arith.addf %1410, %1414 : vector<16x16xf32>
    %c2_650 = arith.constant 2 : index
    %c3_651 = arith.constant 3 : index
    %c0_652 = arith.constant 0 : index
    %1416 = vector.load %arg16[%c2_650, %c3_651, %c0_652] : memref<4x34x34xf32, #tpu.memory_space<vmem>>, vector<1x16x34xf32>
    %1417 = vector.shape_cast %1416 : vector<1x16x34xf32> to vector<16x34xf32>
    %1418 = vector.extract_strided_slice %1417 {offsets = [0, 0], sizes = [16, 16], strides = [1, 1]} : vector<16x34xf32> to vector<16x16xf32>
    %c2_653 = arith.constant 2 : index
    %c7_654 = arith.constant 7 : index
    %1419 = memref.load %arg6[%c2_653, %c7_654] : memref<4x49xf32, #tpu.memory_space<smem>>
    %1420 = vector.broadcast %1419 : f32 to vector<16x16xf32>
    %1421 = arith.mulf %1418, %1420 : vector<16x16xf32>
    %1422 = arith.addf %1415, %1421 : vector<16x16xf32>
    %1423 = vector.extract_strided_slice %1417 {offsets = [0, 3], sizes = [16, 16], strides = [1, 1]} : vector<16x34xf32> to vector<16x16xf32>
    %c2_655 = arith.constant 2 : index
    %c8_656 = arith.constant 8 : index
    %1424 = memref.load %arg6[%c2_655, %c8_656] : memref<4x49xf32, #tpu.memory_space<smem>>
    %1425 = vector.broadcast %1424 : f32 to vector<16x16xf32>
    %1426 = arith.mulf %1423, %1425 : vector<16x16xf32>
    %1427 = arith.addf %1422, %1426 : vector<16x16xf32>
    %1428 = vector.extract_strided_slice %1417 {offsets = [0, 6], sizes = [16, 16], strides = [1, 1]} : vector<16x34xf32> to vector<16x16xf32>
    %c2_657 = arith.constant 2 : index
    %c9_658 = arith.constant 9 : index
    %1429 = memref.load %arg6[%c2_657, %c9_658] : memref<4x49xf32, #tpu.memory_space<smem>>
    %1430 = vector.broadcast %1429 : f32 to vector<16x16xf32>
    %1431 = arith.mulf %1428, %1430 : vector<16x16xf32>
    %1432 = arith.addf %1427, %1431 : vector<16x16xf32>
    %1433 = vector.extract_strided_slice %1417 {offsets = [0, 9], sizes = [16, 16], strides = [1, 1]} : vector<16x34xf32> to vector<16x16xf32>
    %c2_659 = arith.constant 2 : index
    %c10_660 = arith.constant 10 : index
    %1434 = memref.load %arg6[%c2_659, %c10_660] : memref<4x49xf32, #tpu.memory_space<smem>>
    %1435 = vector.broadcast %1434 : f32 to vector<16x16xf32>
    %1436 = arith.mulf %1433, %1435 : vector<16x16xf32>
    %1437 = arith.addf %1432, %1436 : vector<16x16xf32>
    %1438 = vector.extract_strided_slice %1417 {offsets = [0, 12], sizes = [16, 16], strides = [1, 1]} : vector<16x34xf32> to vector<16x16xf32>
    %c2_661 = arith.constant 2 : index
    %c11_662 = arith.constant 11 : index
    %1439 = memref.load %arg6[%c2_661, %c11_662] : memref<4x49xf32, #tpu.memory_space<smem>>
    %1440 = vector.broadcast %1439 : f32 to vector<16x16xf32>
    %1441 = arith.mulf %1438, %1440 : vector<16x16xf32>
    %1442 = arith.addf %1437, %1441 : vector<16x16xf32>
    %1443 = vector.extract_strided_slice %1417 {offsets = [0, 15], sizes = [16, 16], strides = [1, 1]} : vector<16x34xf32> to vector<16x16xf32>
    %c2_663 = arith.constant 2 : index
    %c12_664 = arith.constant 12 : index
    %1444 = memref.load %arg6[%c2_663, %c12_664] : memref<4x49xf32, #tpu.memory_space<smem>>
    %1445 = vector.broadcast %1444 : f32 to vector<16x16xf32>
    %1446 = arith.mulf %1443, %1445 : vector<16x16xf32>
    %1447 = arith.addf %1442, %1446 : vector<16x16xf32>
    %1448 = vector.extract_strided_slice %1417 {offsets = [0, 18], sizes = [16, 16], strides = [1, 1]} : vector<16x34xf32> to vector<16x16xf32>
    %c2_665 = arith.constant 2 : index
    %c13_666 = arith.constant 13 : index
    %1449 = memref.load %arg6[%c2_665, %c13_666] : memref<4x49xf32, #tpu.memory_space<smem>>
    %1450 = vector.broadcast %1449 : f32 to vector<16x16xf32>
    %1451 = arith.mulf %1448, %1450 : vector<16x16xf32>
    %1452 = arith.addf %1447, %1451 : vector<16x16xf32>
    %c2_667 = arith.constant 2 : index
    %c6_668 = arith.constant 6 : index
    %c0_669 = arith.constant 0 : index
    %1453 = vector.load %arg16[%c2_667, %c6_668, %c0_669] : memref<4x34x34xf32, #tpu.memory_space<vmem>>, vector<1x16x34xf32>
    %1454 = vector.shape_cast %1453 : vector<1x16x34xf32> to vector<16x34xf32>
    %1455 = vector.extract_strided_slice %1454 {offsets = [0, 0], sizes = [16, 16], strides = [1, 1]} : vector<16x34xf32> to vector<16x16xf32>
    %c2_670 = arith.constant 2 : index
    %c14_671 = arith.constant 14 : index
    %1456 = memref.load %arg6[%c2_670, %c14_671] : memref<4x49xf32, #tpu.memory_space<smem>>
    %1457 = vector.broadcast %1456 : f32 to vector<16x16xf32>
    %1458 = arith.mulf %1455, %1457 : vector<16x16xf32>
    %1459 = arith.addf %1452, %1458 : vector<16x16xf32>
    %1460 = vector.extract_strided_slice %1454 {offsets = [0, 3], sizes = [16, 16], strides = [1, 1]} : vector<16x34xf32> to vector<16x16xf32>
    %c2_672 = arith.constant 2 : index
    %c15_673 = arith.constant 15 : index
    %1461 = memref.load %arg6[%c2_672, %c15_673] : memref<4x49xf32, #tpu.memory_space<smem>>
    %1462 = vector.broadcast %1461 : f32 to vector<16x16xf32>
    %1463 = arith.mulf %1460, %1462 : vector<16x16xf32>
    %1464 = arith.addf %1459, %1463 : vector<16x16xf32>
    %1465 = vector.extract_strided_slice %1454 {offsets = [0, 6], sizes = [16, 16], strides = [1, 1]} : vector<16x34xf32> to vector<16x16xf32>
    %c2_674 = arith.constant 2 : index
    %c16_675 = arith.constant 16 : index
    %1466 = memref.load %arg6[%c2_674, %c16_675] : memref<4x49xf32, #tpu.memory_space<smem>>
    %1467 = vector.broadcast %1466 : f32 to vector<16x16xf32>
    %1468 = arith.mulf %1465, %1467 : vector<16x16xf32>
    %1469 = arith.addf %1464, %1468 : vector<16x16xf32>
    %1470 = vector.extract_strided_slice %1454 {offsets = [0, 9], sizes = [16, 16], strides = [1, 1]} : vector<16x34xf32> to vector<16x16xf32>
    %c2_676 = arith.constant 2 : index
    %c17_677 = arith.constant 17 : index
    %1471 = memref.load %arg6[%c2_676, %c17_677] : memref<4x49xf32, #tpu.memory_space<smem>>
    %1472 = vector.broadcast %1471 : f32 to vector<16x16xf32>
    %1473 = arith.mulf %1470, %1472 : vector<16x16xf32>
    %1474 = arith.addf %1469, %1473 : vector<16x16xf32>
    %1475 = vector.extract_strided_slice %1454 {offsets = [0, 12], sizes = [16, 16], strides = [1, 1]} : vector<16x34xf32> to vector<16x16xf32>
    %c2_678 = arith.constant 2 : index
    %c18_679 = arith.constant 18 : index
    %1476 = memref.load %arg6[%c2_678, %c18_679] : memref<4x49xf32, #tpu.memory_space<smem>>
    %1477 = vector.broadcast %1476 : f32 to vector<16x16xf32>
    %1478 = arith.mulf %1475, %1477 : vector<16x16xf32>
    %1479 = arith.addf %1474, %1478 : vector<16x16xf32>
    %1480 = vector.extract_strided_slice %1454 {offsets = [0, 15], sizes = [16, 16], strides = [1, 1]} : vector<16x34xf32> to vector<16x16xf32>
    %c2_680 = arith.constant 2 : index
    %c19_681 = arith.constant 19 : index
    %1481 = memref.load %arg6[%c2_680, %c19_681] : memref<4x49xf32, #tpu.memory_space<smem>>
    %1482 = vector.broadcast %1481 : f32 to vector<16x16xf32>
    %1483 = arith.mulf %1480, %1482 : vector<16x16xf32>
    %1484 = arith.addf %1479, %1483 : vector<16x16xf32>
    %1485 = vector.extract_strided_slice %1454 {offsets = [0, 18], sizes = [16, 16], strides = [1, 1]} : vector<16x34xf32> to vector<16x16xf32>
    %c2_682 = arith.constant 2 : index
    %c20_683 = arith.constant 20 : index
    %1486 = memref.load %arg6[%c2_682, %c20_683] : memref<4x49xf32, #tpu.memory_space<smem>>
    %1487 = vector.broadcast %1486 : f32 to vector<16x16xf32>
    %1488 = arith.mulf %1485, %1487 : vector<16x16xf32>
    %1489 = arith.addf %1484, %1488 : vector<16x16xf32>
    %c2_684 = arith.constant 2 : index
    %c9_685 = arith.constant 9 : index
    %c0_686 = arith.constant 0 : index
    %1490 = vector.load %arg16[%c2_684, %c9_685, %c0_686] : memref<4x34x34xf32, #tpu.memory_space<vmem>>, vector<1x16x34xf32>
    %1491 = vector.shape_cast %1490 : vector<1x16x34xf32> to vector<16x34xf32>
    %1492 = vector.extract_strided_slice %1491 {offsets = [0, 0], sizes = [16, 16], strides = [1, 1]} : vector<16x34xf32> to vector<16x16xf32>
    %c2_687 = arith.constant 2 : index
    %c21_688 = arith.constant 21 : index
    %1493 = memref.load %arg6[%c2_687, %c21_688] : memref<4x49xf32, #tpu.memory_space<smem>>
    %1494 = vector.broadcast %1493 : f32 to vector<16x16xf32>
    %1495 = arith.mulf %1492, %1494 : vector<16x16xf32>
    %1496 = arith.addf %1489, %1495 : vector<16x16xf32>
    %1497 = vector.extract_strided_slice %1491 {offsets = [0, 3], sizes = [16, 16], strides = [1, 1]} : vector<16x34xf32> to vector<16x16xf32>
    %c2_689 = arith.constant 2 : index
    %c22_690 = arith.constant 22 : index
    %1498 = memref.load %arg6[%c2_689, %c22_690] : memref<4x49xf32, #tpu.memory_space<smem>>
    %1499 = vector.broadcast %1498 : f32 to vector<16x16xf32>
    %1500 = arith.mulf %1497, %1499 : vector<16x16xf32>
    %1501 = arith.addf %1496, %1500 : vector<16x16xf32>
    %1502 = vector.extract_strided_slice %1491 {offsets = [0, 6], sizes = [16, 16], strides = [1, 1]} : vector<16x34xf32> to vector<16x16xf32>
    %c2_691 = arith.constant 2 : index
    %c23_692 = arith.constant 23 : index
    %1503 = memref.load %arg6[%c2_691, %c23_692] : memref<4x49xf32, #tpu.memory_space<smem>>
    %1504 = vector.broadcast %1503 : f32 to vector<16x16xf32>
    %1505 = arith.mulf %1502, %1504 : vector<16x16xf32>
    %1506 = arith.addf %1501, %1505 : vector<16x16xf32>
    %1507 = vector.extract_strided_slice %1491 {offsets = [0, 9], sizes = [16, 16], strides = [1, 1]} : vector<16x34xf32> to vector<16x16xf32>
    %c2_693 = arith.constant 2 : index
    %c24_694 = arith.constant 24 : index
    %1508 = memref.load %arg6[%c2_693, %c24_694] : memref<4x49xf32, #tpu.memory_space<smem>>
    %1509 = vector.broadcast %1508 : f32 to vector<16x16xf32>
    %1510 = arith.mulf %1507, %1509 : vector<16x16xf32>
    %1511 = arith.addf %1506, %1510 : vector<16x16xf32>
    %1512 = vector.extract_strided_slice %1491 {offsets = [0, 12], sizes = [16, 16], strides = [1, 1]} : vector<16x34xf32> to vector<16x16xf32>
    %c2_695 = arith.constant 2 : index
    %c25_696 = arith.constant 25 : index
    %1513 = memref.load %arg6[%c2_695, %c25_696] : memref<4x49xf32, #tpu.memory_space<smem>>
    %1514 = vector.broadcast %1513 : f32 to vector<16x16xf32>
    %1515 = arith.mulf %1512, %1514 : vector<16x16xf32>
    %1516 = arith.addf %1511, %1515 : vector<16x16xf32>
    %1517 = vector.extract_strided_slice %1491 {offsets = [0, 15], sizes = [16, 16], strides = [1, 1]} : vector<16x34xf32> to vector<16x16xf32>
    %c2_697 = arith.constant 2 : index
    %c26_698 = arith.constant 26 : index
    %1518 = memref.load %arg6[%c2_697, %c26_698] : memref<4x49xf32, #tpu.memory_space<smem>>
    %1519 = vector.broadcast %1518 : f32 to vector<16x16xf32>
    %1520 = arith.mulf %1517, %1519 : vector<16x16xf32>
    %1521 = arith.addf %1516, %1520 : vector<16x16xf32>
    %1522 = vector.extract_strided_slice %1491 {offsets = [0, 18], sizes = [16, 16], strides = [1, 1]} : vector<16x34xf32> to vector<16x16xf32>
    %c2_699 = arith.constant 2 : index
    %c27_700 = arith.constant 27 : index
    %1523 = memref.load %arg6[%c2_699, %c27_700] : memref<4x49xf32, #tpu.memory_space<smem>>
    %1524 = vector.broadcast %1523 : f32 to vector<16x16xf32>
    %1525 = arith.mulf %1522, %1524 : vector<16x16xf32>
    %1526 = arith.addf %1521, %1525 : vector<16x16xf32>
    %c2_701 = arith.constant 2 : index
    %c12_702 = arith.constant 12 : index
    %c0_703 = arith.constant 0 : index
    %1527 = vector.load %arg16[%c2_701, %c12_702, %c0_703] : memref<4x34x34xf32, #tpu.memory_space<vmem>>, vector<1x16x34xf32>
    %1528 = vector.shape_cast %1527 : vector<1x16x34xf32> to vector<16x34xf32>
    %1529 = vector.extract_strided_slice %1528 {offsets = [0, 0], sizes = [16, 16], strides = [1, 1]} : vector<16x34xf32> to vector<16x16xf32>
    %c2_704 = arith.constant 2 : index
    %c28_705 = arith.constant 28 : index
    %1530 = memref.load %arg6[%c2_704, %c28_705] : memref<4x49xf32, #tpu.memory_space<smem>>
    %1531 = vector.broadcast %1530 : f32 to vector<16x16xf32>
    %1532 = arith.mulf %1529, %1531 : vector<16x16xf32>
    %1533 = arith.addf %1526, %1532 : vector<16x16xf32>
    %1534 = vector.extract_strided_slice %1528 {offsets = [0, 3], sizes = [16, 16], strides = [1, 1]} : vector<16x34xf32> to vector<16x16xf32>
    %c2_706 = arith.constant 2 : index
    %c29_707 = arith.constant 29 : index
    %1535 = memref.load %arg6[%c2_706, %c29_707] : memref<4x49xf32, #tpu.memory_space<smem>>
    %1536 = vector.broadcast %1535 : f32 to vector<16x16xf32>
    %1537 = arith.mulf %1534, %1536 : vector<16x16xf32>
    %1538 = arith.addf %1533, %1537 : vector<16x16xf32>
    %1539 = vector.extract_strided_slice %1528 {offsets = [0, 6], sizes = [16, 16], strides = [1, 1]} : vector<16x34xf32> to vector<16x16xf32>
    %c2_708 = arith.constant 2 : index
    %c30_709 = arith.constant 30 : index
    %1540 = memref.load %arg6[%c2_708, %c30_709] : memref<4x49xf32, #tpu.memory_space<smem>>
    %1541 = vector.broadcast %1540 : f32 to vector<16x16xf32>
    %1542 = arith.mulf %1539, %1541 : vector<16x16xf32>
    %1543 = arith.addf %1538, %1542 : vector<16x16xf32>
    %1544 = vector.extract_strided_slice %1528 {offsets = [0, 9], sizes = [16, 16], strides = [1, 1]} : vector<16x34xf32> to vector<16x16xf32>
    %c2_710 = arith.constant 2 : index
    %c31_711 = arith.constant 31 : index
    %1545 = memref.load %arg6[%c2_710, %c31_711] : memref<4x49xf32, #tpu.memory_space<smem>>
    %1546 = vector.broadcast %1545 : f32 to vector<16x16xf32>
    %1547 = arith.mulf %1544, %1546 : vector<16x16xf32>
    %1548 = arith.addf %1543, %1547 : vector<16x16xf32>
    %1549 = vector.extract_strided_slice %1528 {offsets = [0, 12], sizes = [16, 16], strides = [1, 1]} : vector<16x34xf32> to vector<16x16xf32>
    %c2_712 = arith.constant 2 : index
    %c32_713 = arith.constant 32 : index
    %1550 = memref.load %arg6[%c2_712, %c32_713] : memref<4x49xf32, #tpu.memory_space<smem>>
    %1551 = vector.broadcast %1550 : f32 to vector<16x16xf32>
    %1552 = arith.mulf %1549, %1551 : vector<16x16xf32>
    %1553 = arith.addf %1548, %1552 : vector<16x16xf32>
    %1554 = vector.extract_strided_slice %1528 {offsets = [0, 15], sizes = [16, 16], strides = [1, 1]} : vector<16x34xf32> to vector<16x16xf32>
    %c2_714 = arith.constant 2 : index
    %c33_715 = arith.constant 33 : index
    %1555 = memref.load %arg6[%c2_714, %c33_715] : memref<4x49xf32, #tpu.memory_space<smem>>
    %1556 = vector.broadcast %1555 : f32 to vector<16x16xf32>
    %1557 = arith.mulf %1554, %1556 : vector<16x16xf32>
    %1558 = arith.addf %1553, %1557 : vector<16x16xf32>
    %1559 = vector.extract_strided_slice %1528 {offsets = [0, 18], sizes = [16, 16], strides = [1, 1]} : vector<16x34xf32> to vector<16x16xf32>
    %c2_716 = arith.constant 2 : index
    %c34_717 = arith.constant 34 : index
    %1560 = memref.load %arg6[%c2_716, %c34_717] : memref<4x49xf32, #tpu.memory_space<smem>>
    %1561 = vector.broadcast %1560 : f32 to vector<16x16xf32>
    %1562 = arith.mulf %1559, %1561 : vector<16x16xf32>
    %1563 = arith.addf %1558, %1562 : vector<16x16xf32>
    %c2_718 = arith.constant 2 : index
    %c15_719 = arith.constant 15 : index
    %c0_720 = arith.constant 0 : index
    %1564 = vector.load %arg16[%c2_718, %c15_719, %c0_720] : memref<4x34x34xf32, #tpu.memory_space<vmem>>, vector<1x16x34xf32>
    %1565 = vector.shape_cast %1564 : vector<1x16x34xf32> to vector<16x34xf32>
    %1566 = vector.extract_strided_slice %1565 {offsets = [0, 0], sizes = [16, 16], strides = [1, 1]} : vector<16x34xf32> to vector<16x16xf32>
    %c2_721 = arith.constant 2 : index
    %c35_722 = arith.constant 35 : index
    %1567 = memref.load %arg6[%c2_721, %c35_722] : memref<4x49xf32, #tpu.memory_space<smem>>
    %1568 = vector.broadcast %1567 : f32 to vector<16x16xf32>
    %1569 = arith.mulf %1566, %1568 : vector<16x16xf32>
    %1570 = arith.addf %1563, %1569 : vector<16x16xf32>
    %1571 = vector.extract_strided_slice %1565 {offsets = [0, 3], sizes = [16, 16], strides = [1, 1]} : vector<16x34xf32> to vector<16x16xf32>
    %c2_723 = arith.constant 2 : index
    %c36_724 = arith.constant 36 : index
    %1572 = memref.load %arg6[%c2_723, %c36_724] : memref<4x49xf32, #tpu.memory_space<smem>>
    %1573 = vector.broadcast %1572 : f32 to vector<16x16xf32>
    %1574 = arith.mulf %1571, %1573 : vector<16x16xf32>
    %1575 = arith.addf %1570, %1574 : vector<16x16xf32>
    %1576 = vector.extract_strided_slice %1565 {offsets = [0, 6], sizes = [16, 16], strides = [1, 1]} : vector<16x34xf32> to vector<16x16xf32>
    %c2_725 = arith.constant 2 : index
    %c37_726 = arith.constant 37 : index
    %1577 = memref.load %arg6[%c2_725, %c37_726] : memref<4x49xf32, #tpu.memory_space<smem>>
    %1578 = vector.broadcast %1577 : f32 to vector<16x16xf32>
    %1579 = arith.mulf %1576, %1578 : vector<16x16xf32>
    %1580 = arith.addf %1575, %1579 : vector<16x16xf32>
    %1581 = vector.extract_strided_slice %1565 {offsets = [0, 9], sizes = [16, 16], strides = [1, 1]} : vector<16x34xf32> to vector<16x16xf32>
    %c2_727 = arith.constant 2 : index
    %c38_728 = arith.constant 38 : index
    %1582 = memref.load %arg6[%c2_727, %c38_728] : memref<4x49xf32, #tpu.memory_space<smem>>
    %1583 = vector.broadcast %1582 : f32 to vector<16x16xf32>
    %1584 = arith.mulf %1581, %1583 : vector<16x16xf32>
    %1585 = arith.addf %1580, %1584 : vector<16x16xf32>
    %1586 = vector.extract_strided_slice %1565 {offsets = [0, 12], sizes = [16, 16], strides = [1, 1]} : vector<16x34xf32> to vector<16x16xf32>
    %c2_729 = arith.constant 2 : index
    %c39_730 = arith.constant 39 : index
    %1587 = memref.load %arg6[%c2_729, %c39_730] : memref<4x49xf32, #tpu.memory_space<smem>>
    %1588 = vector.broadcast %1587 : f32 to vector<16x16xf32>
    %1589 = arith.mulf %1586, %1588 : vector<16x16xf32>
    %1590 = arith.addf %1585, %1589 : vector<16x16xf32>
    %1591 = vector.extract_strided_slice %1565 {offsets = [0, 15], sizes = [16, 16], strides = [1, 1]} : vector<16x34xf32> to vector<16x16xf32>
    %c2_731 = arith.constant 2 : index
    %c40_732 = arith.constant 40 : index
    %1592 = memref.load %arg6[%c2_731, %c40_732] : memref<4x49xf32, #tpu.memory_space<smem>>
    %1593 = vector.broadcast %1592 : f32 to vector<16x16xf32>
    %1594 = arith.mulf %1591, %1593 : vector<16x16xf32>
    %1595 = arith.addf %1590, %1594 : vector<16x16xf32>
    %1596 = vector.extract_strided_slice %1565 {offsets = [0, 18], sizes = [16, 16], strides = [1, 1]} : vector<16x34xf32> to vector<16x16xf32>
    %c2_733 = arith.constant 2 : index
    %c41_734 = arith.constant 41 : index
    %1597 = memref.load %arg6[%c2_733, %c41_734] : memref<4x49xf32, #tpu.memory_space<smem>>
    %1598 = vector.broadcast %1597 : f32 to vector<16x16xf32>
    %1599 = arith.mulf %1596, %1598 : vector<16x16xf32>
    %1600 = arith.addf %1595, %1599 : vector<16x16xf32>
    %c2_735 = arith.constant 2 : index
    %c18_736 = arith.constant 18 : index
    %c0_737 = arith.constant 0 : index
    %1601 = vector.load %arg16[%c2_735, %c18_736, %c0_737] : memref<4x34x34xf32, #tpu.memory_space<vmem>>, vector<1x16x34xf32>
    %1602 = vector.shape_cast %1601 : vector<1x16x34xf32> to vector<16x34xf32>
    %1603 = vector.extract_strided_slice %1602 {offsets = [0, 0], sizes = [16, 16], strides = [1, 1]} : vector<16x34xf32> to vector<16x16xf32>
    %c2_738 = arith.constant 2 : index
    %c42_739 = arith.constant 42 : index
    %1604 = memref.load %arg6[%c2_738, %c42_739] : memref<4x49xf32, #tpu.memory_space<smem>>
    %1605 = vector.broadcast %1604 : f32 to vector<16x16xf32>
    %1606 = arith.mulf %1603, %1605 : vector<16x16xf32>
    %1607 = arith.addf %1600, %1606 : vector<16x16xf32>
    %1608 = vector.extract_strided_slice %1602 {offsets = [0, 3], sizes = [16, 16], strides = [1, 1]} : vector<16x34xf32> to vector<16x16xf32>
    %c2_740 = arith.constant 2 : index
    %c43_741 = arith.constant 43 : index
    %1609 = memref.load %arg6[%c2_740, %c43_741] : memref<4x49xf32, #tpu.memory_space<smem>>
    %1610 = vector.broadcast %1609 : f32 to vector<16x16xf32>
    %1611 = arith.mulf %1608, %1610 : vector<16x16xf32>
    %1612 = arith.addf %1607, %1611 : vector<16x16xf32>
    %1613 = vector.extract_strided_slice %1602 {offsets = [0, 6], sizes = [16, 16], strides = [1, 1]} : vector<16x34xf32> to vector<16x16xf32>
    %c2_742 = arith.constant 2 : index
    %c44_743 = arith.constant 44 : index
    %1614 = memref.load %arg6[%c2_742, %c44_743] : memref<4x49xf32, #tpu.memory_space<smem>>
    %1615 = vector.broadcast %1614 : f32 to vector<16x16xf32>
    %1616 = arith.mulf %1613, %1615 : vector<16x16xf32>
    %1617 = arith.addf %1612, %1616 : vector<16x16xf32>
    %1618 = vector.extract_strided_slice %1602 {offsets = [0, 9], sizes = [16, 16], strides = [1, 1]} : vector<16x34xf32> to vector<16x16xf32>
    %c2_744 = arith.constant 2 : index
    %c45_745 = arith.constant 45 : index
    %1619 = memref.load %arg6[%c2_744, %c45_745] : memref<4x49xf32, #tpu.memory_space<smem>>
    %1620 = vector.broadcast %1619 : f32 to vector<16x16xf32>
    %1621 = arith.mulf %1618, %1620 : vector<16x16xf32>
    %1622 = arith.addf %1617, %1621 : vector<16x16xf32>
    %1623 = vector.extract_strided_slice %1602 {offsets = [0, 12], sizes = [16, 16], strides = [1, 1]} : vector<16x34xf32> to vector<16x16xf32>
    %c2_746 = arith.constant 2 : index
    %c46_747 = arith.constant 46 : index
    %1624 = memref.load %arg6[%c2_746, %c46_747] : memref<4x49xf32, #tpu.memory_space<smem>>
    %1625 = vector.broadcast %1624 : f32 to vector<16x16xf32>
    %1626 = arith.mulf %1623, %1625 : vector<16x16xf32>
    %1627 = arith.addf %1622, %1626 : vector<16x16xf32>
    %1628 = vector.extract_strided_slice %1602 {offsets = [0, 15], sizes = [16, 16], strides = [1, 1]} : vector<16x34xf32> to vector<16x16xf32>
    %c2_748 = arith.constant 2 : index
    %c47_749 = arith.constant 47 : index
    %1629 = memref.load %arg6[%c2_748, %c47_749] : memref<4x49xf32, #tpu.memory_space<smem>>
    %1630 = vector.broadcast %1629 : f32 to vector<16x16xf32>
    %1631 = arith.mulf %1628, %1630 : vector<16x16xf32>
    %1632 = arith.addf %1627, %1631 : vector<16x16xf32>
    %1633 = vector.extract_strided_slice %1602 {offsets = [0, 18], sizes = [16, 16], strides = [1, 1]} : vector<16x34xf32> to vector<16x16xf32>
    %c2_750 = arith.constant 2 : index
    %c48_751 = arith.constant 48 : index
    %1634 = memref.load %arg6[%c2_750, %c48_751] : memref<4x49xf32, #tpu.memory_space<smem>>
    %1635 = vector.broadcast %1634 : f32 to vector<16x16xf32>
    %1636 = arith.mulf %1633, %1635 : vector<16x16xf32>
    %1637 = arith.addf %1632, %1636 : vector<16x16xf32>
    %c2_752 = arith.constant 2 : index
    %1638 = memref.load %arg7[%c2_752] : memref<4xf32, #tpu.memory_space<smem>>
    %1639 = vector.broadcast %1638 : f32 to vector<16x16xf32>
    %1640 = arith.addf %1637, %1639 : vector<16x16xf32>
    %cst_753 = arith.constant 0.000000e+00 : f32
    %1641 = vector.broadcast %cst_753 : f32 to vector<16x16xf32>
    %c3_754 = arith.constant 3 : index
    %c0_755 = arith.constant 0 : index
    %c0_756 = arith.constant 0 : index
    %1642 = vector.load %arg16[%c3_754, %c0_755, %c0_756] : memref<4x34x34xf32, #tpu.memory_space<vmem>>, vector<1x16x34xf32>
    %1643 = vector.shape_cast %1642 : vector<1x16x34xf32> to vector<16x34xf32>
    %1644 = vector.extract_strided_slice %1643 {offsets = [0, 0], sizes = [16, 16], strides = [1, 1]} : vector<16x34xf32> to vector<16x16xf32>
    %c3_757 = arith.constant 3 : index
    %c0_758 = arith.constant 0 : index
    %1645 = memref.load %arg6[%c3_757, %c0_758] : memref<4x49xf32, #tpu.memory_space<smem>>
    %1646 = vector.broadcast %1645 : f32 to vector<16x16xf32>
    %1647 = arith.mulf %1644, %1646 : vector<16x16xf32>
    %1648 = arith.addf %1641, %1647 : vector<16x16xf32>
    %1649 = vector.extract_strided_slice %1643 {offsets = [0, 3], sizes = [16, 16], strides = [1, 1]} : vector<16x34xf32> to vector<16x16xf32>
    %c3_759 = arith.constant 3 : index
    %c1_760 = arith.constant 1 : index
    %1650 = memref.load %arg6[%c3_759, %c1_760] : memref<4x49xf32, #tpu.memory_space<smem>>
    %1651 = vector.broadcast %1650 : f32 to vector<16x16xf32>
    %1652 = arith.mulf %1649, %1651 : vector<16x16xf32>
    %1653 = arith.addf %1648, %1652 : vector<16x16xf32>
    %1654 = vector.extract_strided_slice %1643 {offsets = [0, 6], sizes = [16, 16], strides = [1, 1]} : vector<16x34xf32> to vector<16x16xf32>
    %c3_761 = arith.constant 3 : index
    %c2_762 = arith.constant 2 : index
    %1655 = memref.load %arg6[%c3_761, %c2_762] : memref<4x49xf32, #tpu.memory_space<smem>>
    %1656 = vector.broadcast %1655 : f32 to vector<16x16xf32>
    %1657 = arith.mulf %1654, %1656 : vector<16x16xf32>
    %1658 = arith.addf %1653, %1657 : vector<16x16xf32>
    %1659 = vector.extract_strided_slice %1643 {offsets = [0, 9], sizes = [16, 16], strides = [1, 1]} : vector<16x34xf32> to vector<16x16xf32>
    %c3_763 = arith.constant 3 : index
    %c3_764 = arith.constant 3 : index
    %1660 = memref.load %arg6[%c3_763, %c3_764] : memref<4x49xf32, #tpu.memory_space<smem>>
    %1661 = vector.broadcast %1660 : f32 to vector<16x16xf32>
    %1662 = arith.mulf %1659, %1661 : vector<16x16xf32>
    %1663 = arith.addf %1658, %1662 : vector<16x16xf32>
    %1664 = vector.extract_strided_slice %1643 {offsets = [0, 12], sizes = [16, 16], strides = [1, 1]} : vector<16x34xf32> to vector<16x16xf32>
    %c3_765 = arith.constant 3 : index
    %c4_766 = arith.constant 4 : index
    %1665 = memref.load %arg6[%c3_765, %c4_766] : memref<4x49xf32, #tpu.memory_space<smem>>
    %1666 = vector.broadcast %1665 : f32 to vector<16x16xf32>
    %1667 = arith.mulf %1664, %1666 : vector<16x16xf32>
    %1668 = arith.addf %1663, %1667 : vector<16x16xf32>
    %1669 = vector.extract_strided_slice %1643 {offsets = [0, 15], sizes = [16, 16], strides = [1, 1]} : vector<16x34xf32> to vector<16x16xf32>
    %c3_767 = arith.constant 3 : index
    %c5_768 = arith.constant 5 : index
    %1670 = memref.load %arg6[%c3_767, %c5_768] : memref<4x49xf32, #tpu.memory_space<smem>>
    %1671 = vector.broadcast %1670 : f32 to vector<16x16xf32>
    %1672 = arith.mulf %1669, %1671 : vector<16x16xf32>
    %1673 = arith.addf %1668, %1672 : vector<16x16xf32>
    %1674 = vector.extract_strided_slice %1643 {offsets = [0, 18], sizes = [16, 16], strides = [1, 1]} : vector<16x34xf32> to vector<16x16xf32>
    %c3_769 = arith.constant 3 : index
    %c6_770 = arith.constant 6 : index
    %1675 = memref.load %arg6[%c3_769, %c6_770] : memref<4x49xf32, #tpu.memory_space<smem>>
    %1676 = vector.broadcast %1675 : f32 to vector<16x16xf32>
    %1677 = arith.mulf %1674, %1676 : vector<16x16xf32>
    %1678 = arith.addf %1673, %1677 : vector<16x16xf32>
    %c3_771 = arith.constant 3 : index
    %c3_772 = arith.constant 3 : index
    %c0_773 = arith.constant 0 : index
    %1679 = vector.load %arg16[%c3_771, %c3_772, %c0_773] : memref<4x34x34xf32, #tpu.memory_space<vmem>>, vector<1x16x34xf32>
    %1680 = vector.shape_cast %1679 : vector<1x16x34xf32> to vector<16x34xf32>
    %1681 = vector.extract_strided_slice %1680 {offsets = [0, 0], sizes = [16, 16], strides = [1, 1]} : vector<16x34xf32> to vector<16x16xf32>
    %c3_774 = arith.constant 3 : index
    %c7_775 = arith.constant 7 : index
    %1682 = memref.load %arg6[%c3_774, %c7_775] : memref<4x49xf32, #tpu.memory_space<smem>>
    %1683 = vector.broadcast %1682 : f32 to vector<16x16xf32>
    %1684 = arith.mulf %1681, %1683 : vector<16x16xf32>
    %1685 = arith.addf %1678, %1684 : vector<16x16xf32>
    %1686 = vector.extract_strided_slice %1680 {offsets = [0, 3], sizes = [16, 16], strides = [1, 1]} : vector<16x34xf32> to vector<16x16xf32>
    %c3_776 = arith.constant 3 : index
    %c8_777 = arith.constant 8 : index
    %1687 = memref.load %arg6[%c3_776, %c8_777] : memref<4x49xf32, #tpu.memory_space<smem>>
    %1688 = vector.broadcast %1687 : f32 to vector<16x16xf32>
    %1689 = arith.mulf %1686, %1688 : vector<16x16xf32>
    %1690 = arith.addf %1685, %1689 : vector<16x16xf32>
    %1691 = vector.extract_strided_slice %1680 {offsets = [0, 6], sizes = [16, 16], strides = [1, 1]} : vector<16x34xf32> to vector<16x16xf32>
    %c3_778 = arith.constant 3 : index
    %c9_779 = arith.constant 9 : index
    %1692 = memref.load %arg6[%c3_778, %c9_779] : memref<4x49xf32, #tpu.memory_space<smem>>
    %1693 = vector.broadcast %1692 : f32 to vector<16x16xf32>
    %1694 = arith.mulf %1691, %1693 : vector<16x16xf32>
    %1695 = arith.addf %1690, %1694 : vector<16x16xf32>
    %1696 = vector.extract_strided_slice %1680 {offsets = [0, 9], sizes = [16, 16], strides = [1, 1]} : vector<16x34xf32> to vector<16x16xf32>
    %c3_780 = arith.constant 3 : index
    %c10_781 = arith.constant 10 : index
    %1697 = memref.load %arg6[%c3_780, %c10_781] : memref<4x49xf32, #tpu.memory_space<smem>>
    %1698 = vector.broadcast %1697 : f32 to vector<16x16xf32>
    %1699 = arith.mulf %1696, %1698 : vector<16x16xf32>
    %1700 = arith.addf %1695, %1699 : vector<16x16xf32>
    %1701 = vector.extract_strided_slice %1680 {offsets = [0, 12], sizes = [16, 16], strides = [1, 1]} : vector<16x34xf32> to vector<16x16xf32>
    %c3_782 = arith.constant 3 : index
    %c11_783 = arith.constant 11 : index
    %1702 = memref.load %arg6[%c3_782, %c11_783] : memref<4x49xf32, #tpu.memory_space<smem>>
    %1703 = vector.broadcast %1702 : f32 to vector<16x16xf32>
    %1704 = arith.mulf %1701, %1703 : vector<16x16xf32>
    %1705 = arith.addf %1700, %1704 : vector<16x16xf32>
    %1706 = vector.extract_strided_slice %1680 {offsets = [0, 15], sizes = [16, 16], strides = [1, 1]} : vector<16x34xf32> to vector<16x16xf32>
    %c3_784 = arith.constant 3 : index
    %c12_785 = arith.constant 12 : index
    %1707 = memref.load %arg6[%c3_784, %c12_785] : memref<4x49xf32, #tpu.memory_space<smem>>
    %1708 = vector.broadcast %1707 : f32 to vector<16x16xf32>
    %1709 = arith.mulf %1706, %1708 : vector<16x16xf32>
    %1710 = arith.addf %1705, %1709 : vector<16x16xf32>
    %1711 = vector.extract_strided_slice %1680 {offsets = [0, 18], sizes = [16, 16], strides = [1, 1]} : vector<16x34xf32> to vector<16x16xf32>
    %c3_786 = arith.constant 3 : index
    %c13_787 = arith.constant 13 : index
    %1712 = memref.load %arg6[%c3_786, %c13_787] : memref<4x49xf32, #tpu.memory_space<smem>>
    %1713 = vector.broadcast %1712 : f32 to vector<16x16xf32>
    %1714 = arith.mulf %1711, %1713 : vector<16x16xf32>
    %1715 = arith.addf %1710, %1714 : vector<16x16xf32>
    %c3_788 = arith.constant 3 : index
    %c6_789 = arith.constant 6 : index
    %c0_790 = arith.constant 0 : index
    %1716 = vector.load %arg16[%c3_788, %c6_789, %c0_790] : memref<4x34x34xf32, #tpu.memory_space<vmem>>, vector<1x16x34xf32>
    %1717 = vector.shape_cast %1716 : vector<1x16x34xf32> to vector<16x34xf32>
    %1718 = vector.extract_strided_slice %1717 {offsets = [0, 0], sizes = [16, 16], strides = [1, 1]} : vector<16x34xf32> to vector<16x16xf32>
    %c3_791 = arith.constant 3 : index
    %c14_792 = arith.constant 14 : index
    %1719 = memref.load %arg6[%c3_791, %c14_792] : memref<4x49xf32, #tpu.memory_space<smem>>
    %1720 = vector.broadcast %1719 : f32 to vector<16x16xf32>
    %1721 = arith.mulf %1718, %1720 : vector<16x16xf32>
    %1722 = arith.addf %1715, %1721 : vector<16x16xf32>
    %1723 = vector.extract_strided_slice %1717 {offsets = [0, 3], sizes = [16, 16], strides = [1, 1]} : vector<16x34xf32> to vector<16x16xf32>
    %c3_793 = arith.constant 3 : index
    %c15_794 = arith.constant 15 : index
    %1724 = memref.load %arg6[%c3_793, %c15_794] : memref<4x49xf32, #tpu.memory_space<smem>>
    %1725 = vector.broadcast %1724 : f32 to vector<16x16xf32>
    %1726 = arith.mulf %1723, %1725 : vector<16x16xf32>
    %1727 = arith.addf %1722, %1726 : vector<16x16xf32>
    %1728 = vector.extract_strided_slice %1717 {offsets = [0, 6], sizes = [16, 16], strides = [1, 1]} : vector<16x34xf32> to vector<16x16xf32>
    %c3_795 = arith.constant 3 : index
    %c16_796 = arith.constant 16 : index
    %1729 = memref.load %arg6[%c3_795, %c16_796] : memref<4x49xf32, #tpu.memory_space<smem>>
    %1730 = vector.broadcast %1729 : f32 to vector<16x16xf32>
    %1731 = arith.mulf %1728, %1730 : vector<16x16xf32>
    %1732 = arith.addf %1727, %1731 : vector<16x16xf32>
    %1733 = vector.extract_strided_slice %1717 {offsets = [0, 9], sizes = [16, 16], strides = [1, 1]} : vector<16x34xf32> to vector<16x16xf32>
    %c3_797 = arith.constant 3 : index
    %c17_798 = arith.constant 17 : index
    %1734 = memref.load %arg6[%c3_797, %c17_798] : memref<4x49xf32, #tpu.memory_space<smem>>
    %1735 = vector.broadcast %1734 : f32 to vector<16x16xf32>
    %1736 = arith.mulf %1733, %1735 : vector<16x16xf32>
    %1737 = arith.addf %1732, %1736 : vector<16x16xf32>
    %1738 = vector.extract_strided_slice %1717 {offsets = [0, 12], sizes = [16, 16], strides = [1, 1]} : vector<16x34xf32> to vector<16x16xf32>
    %c3_799 = arith.constant 3 : index
    %c18_800 = arith.constant 18 : index
    %1739 = memref.load %arg6[%c3_799, %c18_800] : memref<4x49xf32, #tpu.memory_space<smem>>
    %1740 = vector.broadcast %1739 : f32 to vector<16x16xf32>
    %1741 = arith.mulf %1738, %1740 : vector<16x16xf32>
    %1742 = arith.addf %1737, %1741 : vector<16x16xf32>
    %1743 = vector.extract_strided_slice %1717 {offsets = [0, 15], sizes = [16, 16], strides = [1, 1]} : vector<16x34xf32> to vector<16x16xf32>
    %c3_801 = arith.constant 3 : index
    %c19_802 = arith.constant 19 : index
    %1744 = memref.load %arg6[%c3_801, %c19_802] : memref<4x49xf32, #tpu.memory_space<smem>>
    %1745 = vector.broadcast %1744 : f32 to vector<16x16xf32>
    %1746 = arith.mulf %1743, %1745 : vector<16x16xf32>
    %1747 = arith.addf %1742, %1746 : vector<16x16xf32>
    %1748 = vector.extract_strided_slice %1717 {offsets = [0, 18], sizes = [16, 16], strides = [1, 1]} : vector<16x34xf32> to vector<16x16xf32>
    %c3_803 = arith.constant 3 : index
    %c20_804 = arith.constant 20 : index
    %1749 = memref.load %arg6[%c3_803, %c20_804] : memref<4x49xf32, #tpu.memory_space<smem>>
    %1750 = vector.broadcast %1749 : f32 to vector<16x16xf32>
    %1751 = arith.mulf %1748, %1750 : vector<16x16xf32>
    %1752 = arith.addf %1747, %1751 : vector<16x16xf32>
    %c3_805 = arith.constant 3 : index
    %c9_806 = arith.constant 9 : index
    %c0_807 = arith.constant 0 : index
    %1753 = vector.load %arg16[%c3_805, %c9_806, %c0_807] : memref<4x34x34xf32, #tpu.memory_space<vmem>>, vector<1x16x34xf32>
    %1754 = vector.shape_cast %1753 : vector<1x16x34xf32> to vector<16x34xf32>
    %1755 = vector.extract_strided_slice %1754 {offsets = [0, 0], sizes = [16, 16], strides = [1, 1]} : vector<16x34xf32> to vector<16x16xf32>
    %c3_808 = arith.constant 3 : index
    %c21_809 = arith.constant 21 : index
    %1756 = memref.load %arg6[%c3_808, %c21_809] : memref<4x49xf32, #tpu.memory_space<smem>>
    %1757 = vector.broadcast %1756 : f32 to vector<16x16xf32>
    %1758 = arith.mulf %1755, %1757 : vector<16x16xf32>
    %1759 = arith.addf %1752, %1758 : vector<16x16xf32>
    %1760 = vector.extract_strided_slice %1754 {offsets = [0, 3], sizes = [16, 16], strides = [1, 1]} : vector<16x34xf32> to vector<16x16xf32>
    %c3_810 = arith.constant 3 : index
    %c22_811 = arith.constant 22 : index
    %1761 = memref.load %arg6[%c3_810, %c22_811] : memref<4x49xf32, #tpu.memory_space<smem>>
    %1762 = vector.broadcast %1761 : f32 to vector<16x16xf32>
    %1763 = arith.mulf %1760, %1762 : vector<16x16xf32>
    %1764 = arith.addf %1759, %1763 : vector<16x16xf32>
    %1765 = vector.extract_strided_slice %1754 {offsets = [0, 6], sizes = [16, 16], strides = [1, 1]} : vector<16x34xf32> to vector<16x16xf32>
    %c3_812 = arith.constant 3 : index
    %c23_813 = arith.constant 23 : index
    %1766 = memref.load %arg6[%c3_812, %c23_813] : memref<4x49xf32, #tpu.memory_space<smem>>
    %1767 = vector.broadcast %1766 : f32 to vector<16x16xf32>
    %1768 = arith.mulf %1765, %1767 : vector<16x16xf32>
    %1769 = arith.addf %1764, %1768 : vector<16x16xf32>
    %1770 = vector.extract_strided_slice %1754 {offsets = [0, 9], sizes = [16, 16], strides = [1, 1]} : vector<16x34xf32> to vector<16x16xf32>
    %c3_814 = arith.constant 3 : index
    %c24_815 = arith.constant 24 : index
    %1771 = memref.load %arg6[%c3_814, %c24_815] : memref<4x49xf32, #tpu.memory_space<smem>>
    %1772 = vector.broadcast %1771 : f32 to vector<16x16xf32>
    %1773 = arith.mulf %1770, %1772 : vector<16x16xf32>
    %1774 = arith.addf %1769, %1773 : vector<16x16xf32>
    %1775 = vector.extract_strided_slice %1754 {offsets = [0, 12], sizes = [16, 16], strides = [1, 1]} : vector<16x34xf32> to vector<16x16xf32>
    %c3_816 = arith.constant 3 : index
    %c25_817 = arith.constant 25 : index
    %1776 = memref.load %arg6[%c3_816, %c25_817] : memref<4x49xf32, #tpu.memory_space<smem>>
    %1777 = vector.broadcast %1776 : f32 to vector<16x16xf32>
    %1778 = arith.mulf %1775, %1777 : vector<16x16xf32>
    %1779 = arith.addf %1774, %1778 : vector<16x16xf32>
    %1780 = vector.extract_strided_slice %1754 {offsets = [0, 15], sizes = [16, 16], strides = [1, 1]} : vector<16x34xf32> to vector<16x16xf32>
    %c3_818 = arith.constant 3 : index
    %c26_819 = arith.constant 26 : index
    %1781 = memref.load %arg6[%c3_818, %c26_819] : memref<4x49xf32, #tpu.memory_space<smem>>
    %1782 = vector.broadcast %1781 : f32 to vector<16x16xf32>
    %1783 = arith.mulf %1780, %1782 : vector<16x16xf32>
    %1784 = arith.addf %1779, %1783 : vector<16x16xf32>
    %1785 = vector.extract_strided_slice %1754 {offsets = [0, 18], sizes = [16, 16], strides = [1, 1]} : vector<16x34xf32> to vector<16x16xf32>
    %c3_820 = arith.constant 3 : index
    %c27_821 = arith.constant 27 : index
    %1786 = memref.load %arg6[%c3_820, %c27_821] : memref<4x49xf32, #tpu.memory_space<smem>>
    %1787 = vector.broadcast %1786 : f32 to vector<16x16xf32>
    %1788 = arith.mulf %1785, %1787 : vector<16x16xf32>
    %1789 = arith.addf %1784, %1788 : vector<16x16xf32>
    %c3_822 = arith.constant 3 : index
    %c12_823 = arith.constant 12 : index
    %c0_824 = arith.constant 0 : index
    %1790 = vector.load %arg16[%c3_822, %c12_823, %c0_824] : memref<4x34x34xf32, #tpu.memory_space<vmem>>, vector<1x16x34xf32>
    %1791 = vector.shape_cast %1790 : vector<1x16x34xf32> to vector<16x34xf32>
    %1792 = vector.extract_strided_slice %1791 {offsets = [0, 0], sizes = [16, 16], strides = [1, 1]} : vector<16x34xf32> to vector<16x16xf32>
    %c3_825 = arith.constant 3 : index
    %c28_826 = arith.constant 28 : index
    %1793 = memref.load %arg6[%c3_825, %c28_826] : memref<4x49xf32, #tpu.memory_space<smem>>
    %1794 = vector.broadcast %1793 : f32 to vector<16x16xf32>
    %1795 = arith.mulf %1792, %1794 : vector<16x16xf32>
    %1796 = arith.addf %1789, %1795 : vector<16x16xf32>
    %1797 = vector.extract_strided_slice %1791 {offsets = [0, 3], sizes = [16, 16], strides = [1, 1]} : vector<16x34xf32> to vector<16x16xf32>
    %c3_827 = arith.constant 3 : index
    %c29_828 = arith.constant 29 : index
    %1798 = memref.load %arg6[%c3_827, %c29_828] : memref<4x49xf32, #tpu.memory_space<smem>>
    %1799 = vector.broadcast %1798 : f32 to vector<16x16xf32>
    %1800 = arith.mulf %1797, %1799 : vector<16x16xf32>
    %1801 = arith.addf %1796, %1800 : vector<16x16xf32>
    %1802 = vector.extract_strided_slice %1791 {offsets = [0, 6], sizes = [16, 16], strides = [1, 1]} : vector<16x34xf32> to vector<16x16xf32>
    %c3_829 = arith.constant 3 : index
    %c30_830 = arith.constant 30 : index
    %1803 = memref.load %arg6[%c3_829, %c30_830] : memref<4x49xf32, #tpu.memory_space<smem>>
    %1804 = vector.broadcast %1803 : f32 to vector<16x16xf32>
    %1805 = arith.mulf %1802, %1804 : vector<16x16xf32>
    %1806 = arith.addf %1801, %1805 : vector<16x16xf32>
    %1807 = vector.extract_strided_slice %1791 {offsets = [0, 9], sizes = [16, 16], strides = [1, 1]} : vector<16x34xf32> to vector<16x16xf32>
    %c3_831 = arith.constant 3 : index
    %c31_832 = arith.constant 31 : index
    %1808 = memref.load %arg6[%c3_831, %c31_832] : memref<4x49xf32, #tpu.memory_space<smem>>
    %1809 = vector.broadcast %1808 : f32 to vector<16x16xf32>
    %1810 = arith.mulf %1807, %1809 : vector<16x16xf32>
    %1811 = arith.addf %1806, %1810 : vector<16x16xf32>
    %1812 = vector.extract_strided_slice %1791 {offsets = [0, 12], sizes = [16, 16], strides = [1, 1]} : vector<16x34xf32> to vector<16x16xf32>
    %c3_833 = arith.constant 3 : index
    %c32_834 = arith.constant 32 : index
    %1813 = memref.load %arg6[%c3_833, %c32_834] : memref<4x49xf32, #tpu.memory_space<smem>>
    %1814 = vector.broadcast %1813 : f32 to vector<16x16xf32>
    %1815 = arith.mulf %1812, %1814 : vector<16x16xf32>
    %1816 = arith.addf %1811, %1815 : vector<16x16xf32>
    %1817 = vector.extract_strided_slice %1791 {offsets = [0, 15], sizes = [16, 16], strides = [1, 1]} : vector<16x34xf32> to vector<16x16xf32>
    %c3_835 = arith.constant 3 : index
    %c33_836 = arith.constant 33 : index
    %1818 = memref.load %arg6[%c3_835, %c33_836] : memref<4x49xf32, #tpu.memory_space<smem>>
    %1819 = vector.broadcast %1818 : f32 to vector<16x16xf32>
    %1820 = arith.mulf %1817, %1819 : vector<16x16xf32>
    %1821 = arith.addf %1816, %1820 : vector<16x16xf32>
    %1822 = vector.extract_strided_slice %1791 {offsets = [0, 18], sizes = [16, 16], strides = [1, 1]} : vector<16x34xf32> to vector<16x16xf32>
    %c3_837 = arith.constant 3 : index
    %c34_838 = arith.constant 34 : index
    %1823 = memref.load %arg6[%c3_837, %c34_838] : memref<4x49xf32, #tpu.memory_space<smem>>
    %1824 = vector.broadcast %1823 : f32 to vector<16x16xf32>
    %1825 = arith.mulf %1822, %1824 : vector<16x16xf32>
    %1826 = arith.addf %1821, %1825 : vector<16x16xf32>
    %c3_839 = arith.constant 3 : index
    %c15_840 = arith.constant 15 : index
    %c0_841 = arith.constant 0 : index
    %1827 = vector.load %arg16[%c3_839, %c15_840, %c0_841] : memref<4x34x34xf32, #tpu.memory_space<vmem>>, vector<1x16x34xf32>
    %1828 = vector.shape_cast %1827 : vector<1x16x34xf32> to vector<16x34xf32>
    %1829 = vector.extract_strided_slice %1828 {offsets = [0, 0], sizes = [16, 16], strides = [1, 1]} : vector<16x34xf32> to vector<16x16xf32>
    %c3_842 = arith.constant 3 : index
    %c35_843 = arith.constant 35 : index
    %1830 = memref.load %arg6[%c3_842, %c35_843] : memref<4x49xf32, #tpu.memory_space<smem>>
    %1831 = vector.broadcast %1830 : f32 to vector<16x16xf32>
    %1832 = arith.mulf %1829, %1831 : vector<16x16xf32>
    %1833 = arith.addf %1826, %1832 : vector<16x16xf32>
    %1834 = vector.extract_strided_slice %1828 {offsets = [0, 3], sizes = [16, 16], strides = [1, 1]} : vector<16x34xf32> to vector<16x16xf32>
    %c3_844 = arith.constant 3 : index
    %c36_845 = arith.constant 36 : index
    %1835 = memref.load %arg6[%c3_844, %c36_845] : memref<4x49xf32, #tpu.memory_space<smem>>
    %1836 = vector.broadcast %1835 : f32 to vector<16x16xf32>
    %1837 = arith.mulf %1834, %1836 : vector<16x16xf32>
    %1838 = arith.addf %1833, %1837 : vector<16x16xf32>
    %1839 = vector.extract_strided_slice %1828 {offsets = [0, 6], sizes = [16, 16], strides = [1, 1]} : vector<16x34xf32> to vector<16x16xf32>
    %c3_846 = arith.constant 3 : index
    %c37_847 = arith.constant 37 : index
    %1840 = memref.load %arg6[%c3_846, %c37_847] : memref<4x49xf32, #tpu.memory_space<smem>>
    %1841 = vector.broadcast %1840 : f32 to vector<16x16xf32>
    %1842 = arith.mulf %1839, %1841 : vector<16x16xf32>
    %1843 = arith.addf %1838, %1842 : vector<16x16xf32>
    %1844 = vector.extract_strided_slice %1828 {offsets = [0, 9], sizes = [16, 16], strides = [1, 1]} : vector<16x34xf32> to vector<16x16xf32>
    %c3_848 = arith.constant 3 : index
    %c38_849 = arith.constant 38 : index
    %1845 = memref.load %arg6[%c3_848, %c38_849] : memref<4x49xf32, #tpu.memory_space<smem>>
    %1846 = vector.broadcast %1845 : f32 to vector<16x16xf32>
    %1847 = arith.mulf %1844, %1846 : vector<16x16xf32>
    %1848 = arith.addf %1843, %1847 : vector<16x16xf32>
    %1849 = vector.extract_strided_slice %1828 {offsets = [0, 12], sizes = [16, 16], strides = [1, 1]} : vector<16x34xf32> to vector<16x16xf32>
    %c3_850 = arith.constant 3 : index
    %c39_851 = arith.constant 39 : index
    %1850 = memref.load %arg6[%c3_850, %c39_851] : memref<4x49xf32, #tpu.memory_space<smem>>
    %1851 = vector.broadcast %1850 : f32 to vector<16x16xf32>
    %1852 = arith.mulf %1849, %1851 : vector<16x16xf32>
    %1853 = arith.addf %1848, %1852 : vector<16x16xf32>
    %1854 = vector.extract_strided_slice %1828 {offsets = [0, 15], sizes = [16, 16], strides = [1, 1]} : vector<16x34xf32> to vector<16x16xf32>
    %c3_852 = arith.constant 3 : index
    %c40_853 = arith.constant 40 : index
    %1855 = memref.load %arg6[%c3_852, %c40_853] : memref<4x49xf32, #tpu.memory_space<smem>>
    %1856 = vector.broadcast %1855 : f32 to vector<16x16xf32>
    %1857 = arith.mulf %1854, %1856 : vector<16x16xf32>
    %1858 = arith.addf %1853, %1857 : vector<16x16xf32>
    %1859 = vector.extract_strided_slice %1828 {offsets = [0, 18], sizes = [16, 16], strides = [1, 1]} : vector<16x34xf32> to vector<16x16xf32>
    %c3_854 = arith.constant 3 : index
    %c41_855 = arith.constant 41 : index
    %1860 = memref.load %arg6[%c3_854, %c41_855] : memref<4x49xf32, #tpu.memory_space<smem>>
    %1861 = vector.broadcast %1860 : f32 to vector<16x16xf32>
    %1862 = arith.mulf %1859, %1861 : vector<16x16xf32>
    %1863 = arith.addf %1858, %1862 : vector<16x16xf32>
    %c3_856 = arith.constant 3 : index
    %c18_857 = arith.constant 18 : index
    %c0_858 = arith.constant 0 : index
    %1864 = vector.load %arg16[%c3_856, %c18_857, %c0_858] : memref<4x34x34xf32, #tpu.memory_space<vmem>>, vector<1x16x34xf32>
    %1865 = vector.shape_cast %1864 : vector<1x16x34xf32> to vector<16x34xf32>
    %1866 = vector.extract_strided_slice %1865 {offsets = [0, 0], sizes = [16, 16], strides = [1, 1]} : vector<16x34xf32> to vector<16x16xf32>
    %c3_859 = arith.constant 3 : index
    %c42_860 = arith.constant 42 : index
    %1867 = memref.load %arg6[%c3_859, %c42_860] : memref<4x49xf32, #tpu.memory_space<smem>>
    %1868 = vector.broadcast %1867 : f32 to vector<16x16xf32>
    %1869 = arith.mulf %1866, %1868 : vector<16x16xf32>
    %1870 = arith.addf %1863, %1869 : vector<16x16xf32>
    %1871 = vector.extract_strided_slice %1865 {offsets = [0, 3], sizes = [16, 16], strides = [1, 1]} : vector<16x34xf32> to vector<16x16xf32>
    %c3_861 = arith.constant 3 : index
    %c43_862 = arith.constant 43 : index
    %1872 = memref.load %arg6[%c3_861, %c43_862] : memref<4x49xf32, #tpu.memory_space<smem>>
    %1873 = vector.broadcast %1872 : f32 to vector<16x16xf32>
    %1874 = arith.mulf %1871, %1873 : vector<16x16xf32>
    %1875 = arith.addf %1870, %1874 : vector<16x16xf32>
    %1876 = vector.extract_strided_slice %1865 {offsets = [0, 6], sizes = [16, 16], strides = [1, 1]} : vector<16x34xf32> to vector<16x16xf32>
    %c3_863 = arith.constant 3 : index
    %c44_864 = arith.constant 44 : index
    %1877 = memref.load %arg6[%c3_863, %c44_864] : memref<4x49xf32, #tpu.memory_space<smem>>
    %1878 = vector.broadcast %1877 : f32 to vector<16x16xf32>
    %1879 = arith.mulf %1876, %1878 : vector<16x16xf32>
    %1880 = arith.addf %1875, %1879 : vector<16x16xf32>
    %1881 = vector.extract_strided_slice %1865 {offsets = [0, 9], sizes = [16, 16], strides = [1, 1]} : vector<16x34xf32> to vector<16x16xf32>
    %c3_865 = arith.constant 3 : index
    %c45_866 = arith.constant 45 : index
    %1882 = memref.load %arg6[%c3_865, %c45_866] : memref<4x49xf32, #tpu.memory_space<smem>>
    %1883 = vector.broadcast %1882 : f32 to vector<16x16xf32>
    %1884 = arith.mulf %1881, %1883 : vector<16x16xf32>
    %1885 = arith.addf %1880, %1884 : vector<16x16xf32>
    %1886 = vector.extract_strided_slice %1865 {offsets = [0, 12], sizes = [16, 16], strides = [1, 1]} : vector<16x34xf32> to vector<16x16xf32>
    %c3_867 = arith.constant 3 : index
    %c46_868 = arith.constant 46 : index
    %1887 = memref.load %arg6[%c3_867, %c46_868] : memref<4x49xf32, #tpu.memory_space<smem>>
    %1888 = vector.broadcast %1887 : f32 to vector<16x16xf32>
    %1889 = arith.mulf %1886, %1888 : vector<16x16xf32>
    %1890 = arith.addf %1885, %1889 : vector<16x16xf32>
    %1891 = vector.extract_strided_slice %1865 {offsets = [0, 15], sizes = [16, 16], strides = [1, 1]} : vector<16x34xf32> to vector<16x16xf32>
    %c3_869 = arith.constant 3 : index
    %c47_870 = arith.constant 47 : index
    %1892 = memref.load %arg6[%c3_869, %c47_870] : memref<4x49xf32, #tpu.memory_space<smem>>
    %1893 = vector.broadcast %1892 : f32 to vector<16x16xf32>
    %1894 = arith.mulf %1891, %1893 : vector<16x16xf32>
    %1895 = arith.addf %1890, %1894 : vector<16x16xf32>
    %1896 = vector.extract_strided_slice %1865 {offsets = [0, 18], sizes = [16, 16], strides = [1, 1]} : vector<16x34xf32> to vector<16x16xf32>
    %c3_871 = arith.constant 3 : index
    %c48_872 = arith.constant 48 : index
    %1897 = memref.load %arg6[%c3_871, %c48_872] : memref<4x49xf32, #tpu.memory_space<smem>>
    %1898 = vector.broadcast %1897 : f32 to vector<16x16xf32>
    %1899 = arith.mulf %1896, %1898 : vector<16x16xf32>
    %1900 = arith.addf %1895, %1899 : vector<16x16xf32>
    %c3_873 = arith.constant 3 : index
    %1901 = memref.load %arg7[%c3_873] : memref<4xf32, #tpu.memory_space<smem>>
    %1902 = vector.broadcast %1901 : f32 to vector<16x16xf32>
    %1903 = arith.addf %1900, %1902 : vector<16x16xf32>
    %c0_874 = arith.constant 0 : index
    %c0_875 = arith.constant 0 : index
    %1904 = memref.load %arg8[%c0_874, %c0_875] : memref<4x4xf32, #tpu.memory_space<smem>>
    %1905 = vector.broadcast %1904 : f32 to vector<16x16xf32>
    %1906 = arith.mulf %1114, %1905 : vector<16x16xf32>
    %c0_876 = arith.constant 0 : index
    %c0_877 = arith.constant 0 : index
    %1907 = memref.load %arg10[%c0_876, %c0_877] : memref<4x4xf32, #tpu.memory_space<smem>>
    %1908 = vector.broadcast %1907 : f32 to vector<16x16xf32>
    %1909 = arith.mulf %1114, %1908 : vector<16x16xf32>
    %c0_878 = arith.constant 0 : index
    %c1_879 = arith.constant 1 : index
    %1910 = memref.load %arg8[%c0_878, %c1_879] : memref<4x4xf32, #tpu.memory_space<smem>>
    %1911 = vector.broadcast %1910 : f32 to vector<16x16xf32>
    %1912 = arith.mulf %1377, %1911 : vector<16x16xf32>
    %1913 = arith.addf %1906, %1912 : vector<16x16xf32>
    %c0_880 = arith.constant 0 : index
    %c1_881 = arith.constant 1 : index
    %1914 = memref.load %arg10[%c0_880, %c1_881] : memref<4x4xf32, #tpu.memory_space<smem>>
    %1915 = vector.broadcast %1914 : f32 to vector<16x16xf32>
    %1916 = arith.mulf %1377, %1915 : vector<16x16xf32>
    %1917 = arith.addf %1909, %1916 : vector<16x16xf32>
    %c0_882 = arith.constant 0 : index
    %c2_883 = arith.constant 2 : index
    %1918 = memref.load %arg8[%c0_882, %c2_883] : memref<4x4xf32, #tpu.memory_space<smem>>
    %1919 = vector.broadcast %1918 : f32 to vector<16x16xf32>
    %1920 = arith.mulf %1640, %1919 : vector<16x16xf32>
    %1921 = arith.addf %1913, %1920 : vector<16x16xf32>
    %c0_884 = arith.constant 0 : index
    %c2_885 = arith.constant 2 : index
    %1922 = memref.load %arg10[%c0_884, %c2_885] : memref<4x4xf32, #tpu.memory_space<smem>>
    %1923 = vector.broadcast %1922 : f32 to vector<16x16xf32>
    %1924 = arith.mulf %1640, %1923 : vector<16x16xf32>
    %1925 = arith.addf %1917, %1924 : vector<16x16xf32>
    %c0_886 = arith.constant 0 : index
    %c3_887 = arith.constant 3 : index
    %1926 = memref.load %arg8[%c0_886, %c3_887] : memref<4x4xf32, #tpu.memory_space<smem>>
    %1927 = vector.broadcast %1926 : f32 to vector<16x16xf32>
    %1928 = arith.mulf %1903, %1927 : vector<16x16xf32>
    %1929 = arith.addf %1921, %1928 : vector<16x16xf32>
    %c0_888 = arith.constant 0 : index
    %c3_889 = arith.constant 3 : index
    %1930 = memref.load %arg10[%c0_888, %c3_889] : memref<4x4xf32, #tpu.memory_space<smem>>
    %1931 = vector.broadcast %1930 : f32 to vector<16x16xf32>
    %1932 = arith.mulf %1903, %1931 : vector<16x16xf32>
    %1933 = arith.addf %1925, %1932 : vector<16x16xf32>
    %c0_890 = arith.constant 0 : index
    %1934 = memref.load %arg9[%c0_890] : memref<4xf32, #tpu.memory_space<smem>>
    %1935 = vector.broadcast %1934 : f32 to vector<16x16xf32>
    %1936 = arith.addf %1929, %1935 : vector<16x16xf32>
    %c0_891 = arith.constant 0 : index
    %1937 = memref.load %arg11[%c0_891] : memref<4xf32, #tpu.memory_space<smem>>
    %1938 = vector.broadcast %1937 : f32 to vector<16x16xf32>
    %1939 = arith.addf %1933, %1938 : vector<16x16xf32>
    %cst_892 = arith.constant 5.000000e-01 : f32
    %1940 = vector.broadcast %cst_892 : f32 to vector<16x16xf32>
    %1941 = arith.mulf %1940, %1939 : vector<16x16xf32>
    %1942 = math.tanh %1941 : vector<16x16xf32>
    %cst_893 = arith.constant 5.000000e-01 : f32
    %1943 = vector.broadcast %cst_893 : f32 to vector<16x16xf32>
    %1944 = arith.mulf %1943, %1942 : vector<16x16xf32>
    %cst_894 = arith.constant 5.000000e-01 : f32
    %1945 = vector.broadcast %cst_894 : f32 to vector<16x16xf32>
    %1946 = arith.addf %1945, %1944 : vector<16x16xf32>
    %1947 = arith.mulf %1936, %1946 : vector<16x16xf32>
    %c1_895 = arith.constant 1 : index
    %c0_896 = arith.constant 0 : index
    %1948 = memref.load %arg8[%c1_895, %c0_896] : memref<4x4xf32, #tpu.memory_space<smem>>
    %1949 = vector.broadcast %1948 : f32 to vector<16x16xf32>
    %1950 = arith.mulf %1114, %1949 : vector<16x16xf32>
    %c1_897 = arith.constant 1 : index
    %c0_898 = arith.constant 0 : index
    %1951 = memref.load %arg10[%c1_897, %c0_898] : memref<4x4xf32, #tpu.memory_space<smem>>
    %1952 = vector.broadcast %1951 : f32 to vector<16x16xf32>
    %1953 = arith.mulf %1114, %1952 : vector<16x16xf32>
    %c1_899 = arith.constant 1 : index
    %c1_900 = arith.constant 1 : index
    %1954 = memref.load %arg8[%c1_899, %c1_900] : memref<4x4xf32, #tpu.memory_space<smem>>
    %1955 = vector.broadcast %1954 : f32 to vector<16x16xf32>
    %1956 = arith.mulf %1377, %1955 : vector<16x16xf32>
    %1957 = arith.addf %1950, %1956 : vector<16x16xf32>
    %c1_901 = arith.constant 1 : index
    %c1_902 = arith.constant 1 : index
    %1958 = memref.load %arg10[%c1_901, %c1_902] : memref<4x4xf32, #tpu.memory_space<smem>>
    %1959 = vector.broadcast %1958 : f32 to vector<16x16xf32>
    %1960 = arith.mulf %1377, %1959 : vector<16x16xf32>
    %1961 = arith.addf %1953, %1960 : vector<16x16xf32>
    %c1_903 = arith.constant 1 : index
    %c2_904 = arith.constant 2 : index
    %1962 = memref.load %arg8[%c1_903, %c2_904] : memref<4x4xf32, #tpu.memory_space<smem>>
    %1963 = vector.broadcast %1962 : f32 to vector<16x16xf32>
    %1964 = arith.mulf %1640, %1963 : vector<16x16xf32>
    %1965 = arith.addf %1957, %1964 : vector<16x16xf32>
    %c1_905 = arith.constant 1 : index
    %c2_906 = arith.constant 2 : index
    %1966 = memref.load %arg10[%c1_905, %c2_906] : memref<4x4xf32, #tpu.memory_space<smem>>
    %1967 = vector.broadcast %1966 : f32 to vector<16x16xf32>
    %1968 = arith.mulf %1640, %1967 : vector<16x16xf32>
    %1969 = arith.addf %1961, %1968 : vector<16x16xf32>
    %c1_907 = arith.constant 1 : index
    %c3_908 = arith.constant 3 : index
    %1970 = memref.load %arg8[%c1_907, %c3_908] : memref<4x4xf32, #tpu.memory_space<smem>>
    %1971 = vector.broadcast %1970 : f32 to vector<16x16xf32>
    %1972 = arith.mulf %1903, %1971 : vector<16x16xf32>
    %1973 = arith.addf %1965, %1972 : vector<16x16xf32>
    %c1_909 = arith.constant 1 : index
    %c3_910 = arith.constant 3 : index
    %1974 = memref.load %arg10[%c1_909, %c3_910] : memref<4x4xf32, #tpu.memory_space<smem>>
    %1975 = vector.broadcast %1974 : f32 to vector<16x16xf32>
    %1976 = arith.mulf %1903, %1975 : vector<16x16xf32>
    %1977 = arith.addf %1969, %1976 : vector<16x16xf32>
    %c1_911 = arith.constant 1 : index
    %1978 = memref.load %arg9[%c1_911] : memref<4xf32, #tpu.memory_space<smem>>
    %1979 = vector.broadcast %1978 : f32 to vector<16x16xf32>
    %1980 = arith.addf %1973, %1979 : vector<16x16xf32>
    %c1_912 = arith.constant 1 : index
    %1981 = memref.load %arg11[%c1_912] : memref<4xf32, #tpu.memory_space<smem>>
    %1982 = vector.broadcast %1981 : f32 to vector<16x16xf32>
    %1983 = arith.addf %1977, %1982 : vector<16x16xf32>
    %cst_913 = arith.constant 5.000000e-01 : f32
    %1984 = vector.broadcast %cst_913 : f32 to vector<16x16xf32>
    %1985 = arith.mulf %1984, %1983 : vector<16x16xf32>
    %1986 = math.tanh %1985 : vector<16x16xf32>
    %cst_914 = arith.constant 5.000000e-01 : f32
    %1987 = vector.broadcast %cst_914 : f32 to vector<16x16xf32>
    %1988 = arith.mulf %1987, %1986 : vector<16x16xf32>
    %cst_915 = arith.constant 5.000000e-01 : f32
    %1989 = vector.broadcast %cst_915 : f32 to vector<16x16xf32>
    %1990 = arith.addf %1989, %1988 : vector<16x16xf32>
    %1991 = arith.mulf %1980, %1990 : vector<16x16xf32>
    %c2_916 = arith.constant 2 : index
    %c0_917 = arith.constant 0 : index
    %1992 = memref.load %arg8[%c2_916, %c0_917] : memref<4x4xf32, #tpu.memory_space<smem>>
    %1993 = vector.broadcast %1992 : f32 to vector<16x16xf32>
    %1994 = arith.mulf %1114, %1993 : vector<16x16xf32>
    %c2_918 = arith.constant 2 : index
    %c0_919 = arith.constant 0 : index
    %1995 = memref.load %arg10[%c2_918, %c0_919] : memref<4x4xf32, #tpu.memory_space<smem>>
    %1996 = vector.broadcast %1995 : f32 to vector<16x16xf32>
    %1997 = arith.mulf %1114, %1996 : vector<16x16xf32>
    %c2_920 = arith.constant 2 : index
    %c1_921 = arith.constant 1 : index
    %1998 = memref.load %arg8[%c2_920, %c1_921] : memref<4x4xf32, #tpu.memory_space<smem>>
    %1999 = vector.broadcast %1998 : f32 to vector<16x16xf32>
    %2000 = arith.mulf %1377, %1999 : vector<16x16xf32>
    %2001 = arith.addf %1994, %2000 : vector<16x16xf32>
    %c2_922 = arith.constant 2 : index
    %c1_923 = arith.constant 1 : index
    %2002 = memref.load %arg10[%c2_922, %c1_923] : memref<4x4xf32, #tpu.memory_space<smem>>
    %2003 = vector.broadcast %2002 : f32 to vector<16x16xf32>
    %2004 = arith.mulf %1377, %2003 : vector<16x16xf32>
    %2005 = arith.addf %1997, %2004 : vector<16x16xf32>
    %c2_924 = arith.constant 2 : index
    %c2_925 = arith.constant 2 : index
    %2006 = memref.load %arg8[%c2_924, %c2_925] : memref<4x4xf32, #tpu.memory_space<smem>>
    %2007 = vector.broadcast %2006 : f32 to vector<16x16xf32>
    %2008 = arith.mulf %1640, %2007 : vector<16x16xf32>
    %2009 = arith.addf %2001, %2008 : vector<16x16xf32>
    %c2_926 = arith.constant 2 : index
    %c2_927 = arith.constant 2 : index
    %2010 = memref.load %arg10[%c2_926, %c2_927] : memref<4x4xf32, #tpu.memory_space<smem>>
    %2011 = vector.broadcast %2010 : f32 to vector<16x16xf32>
    %2012 = arith.mulf %1640, %2011 : vector<16x16xf32>
    %2013 = arith.addf %2005, %2012 : vector<16x16xf32>
    %c2_928 = arith.constant 2 : index
    %c3_929 = arith.constant 3 : index
    %2014 = memref.load %arg8[%c2_928, %c3_929] : memref<4x4xf32, #tpu.memory_space<smem>>
    %2015 = vector.broadcast %2014 : f32 to vector<16x16xf32>
    %2016 = arith.mulf %1903, %2015 : vector<16x16xf32>
    %2017 = arith.addf %2009, %2016 : vector<16x16xf32>
    %c2_930 = arith.constant 2 : index
    %c3_931 = arith.constant 3 : index
    %2018 = memref.load %arg10[%c2_930, %c3_931] : memref<4x4xf32, #tpu.memory_space<smem>>
    %2019 = vector.broadcast %2018 : f32 to vector<16x16xf32>
    %2020 = arith.mulf %1903, %2019 : vector<16x16xf32>
    %2021 = arith.addf %2013, %2020 : vector<16x16xf32>
    %c2_932 = arith.constant 2 : index
    %2022 = memref.load %arg9[%c2_932] : memref<4xf32, #tpu.memory_space<smem>>
    %2023 = vector.broadcast %2022 : f32 to vector<16x16xf32>
    %2024 = arith.addf %2017, %2023 : vector<16x16xf32>
    %c2_933 = arith.constant 2 : index
    %2025 = memref.load %arg11[%c2_933] : memref<4xf32, #tpu.memory_space<smem>>
    %2026 = vector.broadcast %2025 : f32 to vector<16x16xf32>
    %2027 = arith.addf %2021, %2026 : vector<16x16xf32>
    %cst_934 = arith.constant 5.000000e-01 : f32
    %2028 = vector.broadcast %cst_934 : f32 to vector<16x16xf32>
    %2029 = arith.mulf %2028, %2027 : vector<16x16xf32>
    %2030 = math.tanh %2029 : vector<16x16xf32>
    %cst_935 = arith.constant 5.000000e-01 : f32
    %2031 = vector.broadcast %cst_935 : f32 to vector<16x16xf32>
    %2032 = arith.mulf %2031, %2030 : vector<16x16xf32>
    %cst_936 = arith.constant 5.000000e-01 : f32
    %2033 = vector.broadcast %cst_936 : f32 to vector<16x16xf32>
    %2034 = arith.addf %2033, %2032 : vector<16x16xf32>
    %2035 = arith.mulf %2024, %2034 : vector<16x16xf32>
    %c3_937 = arith.constant 3 : index
    %c0_938 = arith.constant 0 : index
    %2036 = memref.load %arg8[%c3_937, %c0_938] : memref<4x4xf32, #tpu.memory_space<smem>>
    %2037 = vector.broadcast %2036 : f32 to vector<16x16xf32>
    %2038 = arith.mulf %1114, %2037 : vector<16x16xf32>
    %c3_939 = arith.constant 3 : index
    %c0_940 = arith.constant 0 : index
    %2039 = memref.load %arg10[%c3_939, %c0_940] : memref<4x4xf32, #tpu.memory_space<smem>>
    %2040 = vector.broadcast %2039 : f32 to vector<16x16xf32>
    %2041 = arith.mulf %1114, %2040 : vector<16x16xf32>
    %c3_941 = arith.constant 3 : index
    %c1_942 = arith.constant 1 : index
    %2042 = memref.load %arg8[%c3_941, %c1_942] : memref<4x4xf32, #tpu.memory_space<smem>>
    %2043 = vector.broadcast %2042 : f32 to vector<16x16xf32>
    %2044 = arith.mulf %1377, %2043 : vector<16x16xf32>
    %2045 = arith.addf %2038, %2044 : vector<16x16xf32>
    %c3_943 = arith.constant 3 : index
    %c1_944 = arith.constant 1 : index
    %2046 = memref.load %arg10[%c3_943, %c1_944] : memref<4x4xf32, #tpu.memory_space<smem>>
    %2047 = vector.broadcast %2046 : f32 to vector<16x16xf32>
    %2048 = arith.mulf %1377, %2047 : vector<16x16xf32>
    %2049 = arith.addf %2041, %2048 : vector<16x16xf32>
    %c3_945 = arith.constant 3 : index
    %c2_946 = arith.constant 2 : index
    %2050 = memref.load %arg8[%c3_945, %c2_946] : memref<4x4xf32, #tpu.memory_space<smem>>
    %2051 = vector.broadcast %2050 : f32 to vector<16x16xf32>
    %2052 = arith.mulf %1640, %2051 : vector<16x16xf32>
    %2053 = arith.addf %2045, %2052 : vector<16x16xf32>
    %c3_947 = arith.constant 3 : index
    %c2_948 = arith.constant 2 : index
    %2054 = memref.load %arg10[%c3_947, %c2_948] : memref<4x4xf32, #tpu.memory_space<smem>>
    %2055 = vector.broadcast %2054 : f32 to vector<16x16xf32>
    %2056 = arith.mulf %1640, %2055 : vector<16x16xf32>
    %2057 = arith.addf %2049, %2056 : vector<16x16xf32>
    %c3_949 = arith.constant 3 : index
    %c3_950 = arith.constant 3 : index
    %2058 = memref.load %arg8[%c3_949, %c3_950] : memref<4x4xf32, #tpu.memory_space<smem>>
    %2059 = vector.broadcast %2058 : f32 to vector<16x16xf32>
    %2060 = arith.mulf %1903, %2059 : vector<16x16xf32>
    %2061 = arith.addf %2053, %2060 : vector<16x16xf32>
    %c3_951 = arith.constant 3 : index
    %c3_952 = arith.constant 3 : index
    %2062 = memref.load %arg10[%c3_951, %c3_952] : memref<4x4xf32, #tpu.memory_space<smem>>
    %2063 = vector.broadcast %2062 : f32 to vector<16x16xf32>
    %2064 = arith.mulf %1903, %2063 : vector<16x16xf32>
    %2065 = arith.addf %2057, %2064 : vector<16x16xf32>
    %c3_953 = arith.constant 3 : index
    %2066 = memref.load %arg9[%c3_953] : memref<4xf32, #tpu.memory_space<smem>>
    %2067 = vector.broadcast %2066 : f32 to vector<16x16xf32>
    %2068 = arith.addf %2061, %2067 : vector<16x16xf32>
    %c3_954 = arith.constant 3 : index
    %2069 = memref.load %arg11[%c3_954] : memref<4xf32, #tpu.memory_space<smem>>
    %2070 = vector.broadcast %2069 : f32 to vector<16x16xf32>
    %2071 = arith.addf %2065, %2070 : vector<16x16xf32>
    %cst_955 = arith.constant 5.000000e-01 : f32
    %2072 = vector.broadcast %cst_955 : f32 to vector<16x16xf32>
    %2073 = arith.mulf %2072, %2071 : vector<16x16xf32>
    %2074 = math.tanh %2073 : vector<16x16xf32>
    %cst_956 = arith.constant 5.000000e-01 : f32
    %2075 = vector.broadcast %cst_956 : f32 to vector<16x16xf32>
    %2076 = arith.mulf %2075, %2074 : vector<16x16xf32>
    %cst_957 = arith.constant 5.000000e-01 : f32
    %2077 = vector.broadcast %cst_957 : f32 to vector<16x16xf32>
    %2078 = arith.addf %2077, %2076 : vector<16x16xf32>
    %2079 = arith.mulf %2068, %2078 : vector<16x16xf32>
    %c0_958 = arith.constant 0 : index
    %c0_959 = arith.constant 0 : index
    %2080 = memref.load %arg12[%c0_958, %c0_959] : memref<4x4xf32, #tpu.memory_space<smem>>
    %2081 = vector.broadcast %2080 : f32 to vector<16x16xf32>
    %2082 = arith.mulf %1947, %2081 : vector<16x16xf32>
    %c0_960 = arith.constant 0 : index
    %c1_961 = arith.constant 1 : index
    %2083 = memref.load %arg12[%c0_960, %c1_961] : memref<4x4xf32, #tpu.memory_space<smem>>
    %2084 = vector.broadcast %2083 : f32 to vector<16x16xf32>
    %2085 = arith.mulf %1991, %2084 : vector<16x16xf32>
    %2086 = arith.addf %2082, %2085 : vector<16x16xf32>
    %c0_962 = arith.constant 0 : index
    %c2_963 = arith.constant 2 : index
    %2087 = memref.load %arg12[%c0_962, %c2_963] : memref<4x4xf32, #tpu.memory_space<smem>>
    %2088 = vector.broadcast %2087 : f32 to vector<16x16xf32>
    %2089 = arith.mulf %2035, %2088 : vector<16x16xf32>
    %2090 = arith.addf %2086, %2089 : vector<16x16xf32>
    %c0_964 = arith.constant 0 : index
    %c3_965 = arith.constant 3 : index
    %2091 = memref.load %arg12[%c0_964, %c3_965] : memref<4x4xf32, #tpu.memory_space<smem>>
    %2092 = vector.broadcast %2091 : f32 to vector<16x16xf32>
    %2093 = arith.mulf %2079, %2092 : vector<16x16xf32>
    %2094 = arith.addf %2090, %2093 : vector<16x16xf32>
    %c0_966 = arith.constant 0 : index
    %2095 = memref.load %arg13[%c0_966] : memref<4xf32, #tpu.memory_space<smem>>
    %2096 = vector.broadcast %2095 : f32 to vector<16x16xf32>
    %2097 = arith.addf %2094, %2096 : vector<16x16xf32>
    %c0_967 = arith.constant 0 : index
    %c0_968 = arith.constant 0 : index
    %c0_969 = arith.constant 0 : index
    %c0_970 = arith.constant 0 : index
    %2098 = vector.load %arg1[%c0_967, %c0_968, %c0_969, %c0_970] : memref<1x4x16x16xf32, #tpu.memory_space<vmem>>, vector<1x1x16x16xf32>
    %2099 = vector.shape_cast %2098 : vector<1x1x16x16xf32> to vector<16x16xf32>
    %2100 = arith.addf %2097, %2099 : vector<16x16xf32>
    %c0_971 = arith.constant 0 : index
    %c0_972 = arith.constant 0 : index
    %c0_973 = arith.constant 0 : index
    %c0_974 = arith.constant 0 : index
    %2101 = vector.load %arg14[%c0_971, %c0_972, %c0_973, %c0_974] : memref<1x4x16x16xf32, #tpu.memory_space<vmem>>, vector<1x1x16x16xf32>
    %2102 = vector.shape_cast %2101 : vector<1x1x16x16xf32> to vector<16x16xf32>
    %2103 = vector.shape_cast %2100 : vector<16x16xf32> to vector<1x1x16x16xf32>
    tpu.vector_store %arg14[%c0_971, %c0_972, %c0_973, %c0_974], %2103 {strides = array<i32>} : memref<1x4x16x16xf32, #tpu.memory_space<vmem>>, vector<1x1x16x16xf32>,
    %c1_975 = arith.constant 1 : index
    %c0_976 = arith.constant 0 : index
    %2104 = memref.load %arg12[%c1_975, %c0_976] : memref<4x4xf32, #tpu.memory_space<smem>>
    %2105 = vector.broadcast %2104 : f32 to vector<16x16xf32>
    %2106 = arith.mulf %1947, %2105 : vector<16x16xf32>
    %c1_977 = arith.constant 1 : index
    %c1_978 = arith.constant 1 : index
    %2107 = memref.load %arg12[%c1_977, %c1_978] : memref<4x4xf32, #tpu.memory_space<smem>>
    %2108 = vector.broadcast %2107 : f32 to vector<16x16xf32>
    %2109 = arith.mulf %1991, %2108 : vector<16x16xf32>
    %2110 = arith.addf %2106, %2109 : vector<16x16xf32>
    %c1_979 = arith.constant 1 : index
    %c2_980 = arith.constant 2 : index
    %2111 = memref.load %arg12[%c1_979, %c2_980] : memref<4x4xf32, #tpu.memory_space<smem>>
    %2112 = vector.broadcast %2111 : f32 to vector<16x16xf32>
    %2113 = arith.mulf %2035, %2112 : vector<16x16xf32>
    %2114 = arith.addf %2110, %2113 : vector<16x16xf32>
    %c1_981 = arith.constant 1 : index
    %c3_982 = arith.constant 3 : index
    %2115 = memref.load %arg12[%c1_981, %c3_982] : memref<4x4xf32, #tpu.memory_space<smem>>
    %2116 = vector.broadcast %2115 : f32 to vector<16x16xf32>
    %2117 = arith.mulf %2079, %2116 : vector<16x16xf32>
    %2118 = arith.addf %2114, %2117 : vector<16x16xf32>
    %c1_983 = arith.constant 1 : index
    %2119 = memref.load %arg13[%c1_983] : memref<4xf32, #tpu.memory_space<smem>>
    %2120 = vector.broadcast %2119 : f32 to vector<16x16xf32>
    %2121 = arith.addf %2118, %2120 : vector<16x16xf32>
    %c0_984 = arith.constant 0 : index
    %c1_985 = arith.constant 1 : index
    %c0_986 = arith.constant 0 : index
    %c0_987 = arith.constant 0 : index
    %2122 = vector.load %arg1[%c0_984, %c1_985, %c0_986, %c0_987] : memref<1x4x16x16xf32, #tpu.memory_space<vmem>>, vector<1x1x16x16xf32>
    %2123 = vector.shape_cast %2122 : vector<1x1x16x16xf32> to vector<16x16xf32>
    %2124 = arith.addf %2121, %2123 : vector<16x16xf32>
    %c0_988 = arith.constant 0 : index
    %c1_989 = arith.constant 1 : index
    %c0_990 = arith.constant 0 : index
    %c0_991 = arith.constant 0 : index
    %2125 = vector.load %arg14[%c0_988, %c1_989, %c0_990, %c0_991] : memref<1x4x16x16xf32, #tpu.memory_space<vmem>>, vector<1x1x16x16xf32>
    %2126 = vector.shape_cast %2125 : vector<1x1x16x16xf32> to vector<16x16xf32>
    %2127 = vector.shape_cast %2124 : vector<16x16xf32> to vector<1x1x16x16xf32>
    tpu.vector_store %arg14[%c0_988, %c1_989, %c0_990, %c0_991], %2127 {strides = array<i32>} : memref<1x4x16x16xf32, #tpu.memory_space<vmem>>, vector<1x1x16x16xf32>,
    %c2_992 = arith.constant 2 : index
    %c0_993 = arith.constant 0 : index
    %2128 = memref.load %arg12[%c2_992, %c0_993] : memref<4x4xf32, #tpu.memory_space<smem>>
    %2129 = vector.broadcast %2128 : f32 to vector<16x16xf32>
    %2130 = arith.mulf %1947, %2129 : vector<16x16xf32>
    %c2_994 = arith.constant 2 : index
    %c1_995 = arith.constant 1 : index
    %2131 = memref.load %arg12[%c2_994, %c1_995] : memref<4x4xf32, #tpu.memory_space<smem>>
    %2132 = vector.broadcast %2131 : f32 to vector<16x16xf32>
    %2133 = arith.mulf %1991, %2132 : vector<16x16xf32>
    %2134 = arith.addf %2130, %2133 : vector<16x16xf32>
    %c2_996 = arith.constant 2 : index
    %c2_997 = arith.constant 2 : index
    %2135 = memref.load %arg12[%c2_996, %c2_997] : memref<4x4xf32, #tpu.memory_space<smem>>
    %2136 = vector.broadcast %2135 : f32 to vector<16x16xf32>
    %2137 = arith.mulf %2035, %2136 : vector<16x16xf32>
    %2138 = arith.addf %2134, %2137 : vector<16x16xf32>
    %c2_998 = arith.constant 2 : index
    %c3_999 = arith.constant 3 : index
    %2139 = memref.load %arg12[%c2_998, %c3_999] : memref<4x4xf32, #tpu.memory_space<smem>>
    %2140 = vector.broadcast %2139 : f32 to vector<16x16xf32>
    %2141 = arith.mulf %2079, %2140 : vector<16x16xf32>
    %2142 = arith.addf %2138, %2141 : vector<16x16xf32>
    %c2_1000 = arith.constant 2 : index
    %2143 = memref.load %arg13[%c2_1000] : memref<4xf32, #tpu.memory_space<smem>>
    %2144 = vector.broadcast %2143 : f32 to vector<16x16xf32>
    %2145 = arith.addf %2142, %2144 : vector<16x16xf32>
    %c0_1001 = arith.constant 0 : index
    %c2_1002 = arith.constant 2 : index
    %c0_1003 = arith.constant 0 : index
    %c0_1004 = arith.constant 0 : index
    %2146 = vector.load %arg1[%c0_1001, %c2_1002, %c0_1003, %c0_1004] : memref<1x4x16x16xf32, #tpu.memory_space<vmem>>, vector<1x1x16x16xf32>
    %2147 = vector.shape_cast %2146 : vector<1x1x16x16xf32> to vector<16x16xf32>
    %2148 = arith.addf %2145, %2147 : vector<16x16xf32>
    %c0_1005 = arith.constant 0 : index
    %c2_1006 = arith.constant 2 : index
    %c0_1007 = arith.constant 0 : index
    %c0_1008 = arith.constant 0 : index
    %2149 = vector.load %arg14[%c0_1005, %c2_1006, %c0_1007, %c0_1008] : memref<1x4x16x16xf32, #tpu.memory_space<vmem>>, vector<1x1x16x16xf32>
    %2150 = vector.shape_cast %2149 : vector<1x1x16x16xf32> to vector<16x16xf32>
    %2151 = vector.shape_cast %2148 : vector<16x16xf32> to vector<1x1x16x16xf32>
    tpu.vector_store %arg14[%c0_1005, %c2_1006, %c0_1007, %c0_1008], %2151 {strides = array<i32>} : memref<1x4x16x16xf32, #tpu.memory_space<vmem>>, vector<1x1x16x16xf32>,
    %c3_1009 = arith.constant 3 : index
    %c0_1010 = arith.constant 0 : index
    %2152 = memref.load %arg12[%c3_1009, %c0_1010] : memref<4x4xf32, #tpu.memory_space<smem>>
    %2153 = vector.broadcast %2152 : f32 to vector<16x16xf32>
    %2154 = arith.mulf %1947, %2153 : vector<16x16xf32>
    %c3_1011 = arith.constant 3 : index
    %c1_1012 = arith.constant 1 : index
    %2155 = memref.load %arg12[%c3_1011, %c1_1012] : memref<4x4xf32, #tpu.memory_space<smem>>
    %2156 = vector.broadcast %2155 : f32 to vector<16x16xf32>
    %2157 = arith.mulf %1991, %2156 : vector<16x16xf32>
    %2158 = arith.addf %2154, %2157 : vector<16x16xf32>
    %c3_1013 = arith.constant 3 : index
    %c2_1014 = arith.constant 2 : index
    %2159 = memref.load %arg12[%c3_1013, %c2_1014] : memref<4x4xf32, #tpu.memory_space<smem>>
    %2160 = vector.broadcast %2159 : f32 to vector<16x16xf32>
    %2161 = arith.mulf %2035, %2160 : vector<16x16xf32>
    %2162 = arith.addf %2158, %2161 : vector<16x16xf32>
    %c3_1015 = arith.constant 3 : index
    %c3_1016 = arith.constant 3 : index
    %2163 = memref.load %arg12[%c3_1015, %c3_1016] : memref<4x4xf32, #tpu.memory_space<smem>>
    %2164 = vector.broadcast %2163 : f32 to vector<16x16xf32>
    %2165 = arith.mulf %2079, %2164 : vector<16x16xf32>
    %2166 = arith.addf %2162, %2165 : vector<16x16xf32>
    %c3_1017 = arith.constant 3 : index
    %2167 = memref.load %arg13[%c3_1017] : memref<4xf32, #tpu.memory_space<smem>>
    %2168 = vector.broadcast %2167 : f32 to vector<16x16xf32>
    %2169 = arith.addf %2166, %2168 : vector<16x16xf32>
    %c0_1018 = arith.constant 0 : index
    %c3_1019 = arith.constant 3 : index
    %c0_1020 = arith.constant 0 : index
    %c0_1021 = arith.constant 0 : index
    %2170 = vector.load %arg1[%c0_1018, %c3_1019, %c0_1020, %c0_1021] : memref<1x4x16x16xf32, #tpu.memory_space<vmem>>, vector<1x1x16x16xf32>
    %2171 = vector.shape_cast %2170 : vector<1x1x16x16xf32> to vector<16x16xf32>
    %2172 = arith.addf %2169, %2171 : vector<16x16xf32>
    %c0_1022 = arith.constant 0 : index
    %c3_1023 = arith.constant 3 : index
    %c0_1024 = arith.constant 0 : index
    %c0_1025 = arith.constant 0 : index
    %2173 = vector.load %arg14[%c0_1022, %c3_1023, %c0_1024, %c0_1025] : memref<1x4x16x16xf32, #tpu.memory_space<vmem>>, vector<1x1x16x16xf32>
    %2174 = vector.shape_cast %2173 : vector<1x1x16x16xf32> to vector<16x16xf32>
    %2175 = vector.shape_cast %2172 : vector<16x16xf32> to vector<1x1x16x16xf32>
    tpu.vector_store %arg14[%c0_1022, %c3_1023, %c0_1024, %c0_1025], %2175 {strides = array<i32>} : memref<1x4x16x16xf32, #tpu.memory_space<vmem>>, vector<1x1x16x16xf32>,
    return
  }
  func.func @transform_0(%arg0: i32) -> (i32, i32, i32, i32) {
    %c0_i32 = arith.constant 0 : i32
    %c0_i32_0 = arith.constant 0 : i32
    %c0_i32_1 = arith.constant 0 : i32
    %c0_i32_2 = arith.constant 0 : i32
    return %arg0, %c0_i32, %c0_i32_0, %c0_i32_1 : i32, i32, i32, i32
  }
  func.func @transform_1(%arg0: i32) -> (i32, i32) {
    %c0_i32 = arith.constant 0 : i32
    %c0_i32_0 = arith.constant 0 : i32
    %c0_i32_1 = arith.constant 0 : i32
    return %c0_i32, %c0_i32_0 : i32, i32
  }
  func.func @transform_2(%arg0: i32) -> i32 {
    %c0_i32 = arith.constant 0 : i32
    %c0_i32_0 = arith.constant 0 : i32
    return %c0_i32 : i32
  }
  func.func @transform_3(%arg0: i32) -> (i32, i32) {
    %c0_i32 = arith.constant 0 : i32
    %c0_i32_0 = arith.constant 0 : i32
    %c0_i32_1 = arith.constant 0 : i32
    return %c0_i32, %c0_i32_0 : i32, i32
  }
  func.func @transform_4(%arg0: i32) -> i32 {
    %c0_i32 = arith.constant 0 : i32
    %c0_i32_0 = arith.constant 0 : i32
    return %c0_i32 : i32
  }
  func.func @transform_5(%arg0: i32) -> (i32, i32) {
    %c0_i32 = arith.constant 0 : i32
    %c0_i32_0 = arith.constant 0 : i32
    %c0_i32_1 = arith.constant 0 : i32
    return %c0_i32, %c0_i32_0 : i32, i32
  }
  func.func @transform_6(%arg0: i32) -> i32 {
    %c0_i32 = arith.constant 0 : i32
    %c0_i32_0 = arith.constant 0 : i32
    return %c0_i32 : i32
  }
  func.func @transform_7(%arg0: i32) -> (i32, i32) {
    %c0_i32 = arith.constant 0 : i32
    %c0_i32_0 = arith.constant 0 : i32
    %c0_i32_1 = arith.constant 0 : i32
    return %c0_i32, %c0_i32_0 : i32, i32
  }
  func.func @transform_8(%arg0: i32) -> i32 {
    %c0_i32 = arith.constant 0 : i32
    %c0_i32_0 = arith.constant 0 : i32
    return %c0_i32 : i32
  }
  func.func @transform_9(%arg0: i32) -> (i32, i32) {
    %c0_i32 = arith.constant 0 : i32
    %c0_i32_0 = arith.constant 0 : i32
    %c0_i32_1 = arith.constant 0 : i32
    return %c0_i32, %c0_i32_0 : i32, i32
  }
  func.func @transform_10(%arg0: i32) -> i32 {
    %c0_i32 = arith.constant 0 : i32
    %c0_i32_0 = arith.constant 0 : i32
    return %c0_i32 : i32
  }
  func.func @transform_11(%arg0: i32) -> (i32, i32) {
    %c0_i32 = arith.constant 0 : i32
    %c0_i32_0 = arith.constant 0 : i32
    %c0_i32_1 = arith.constant 0 : i32
    return %c0_i32, %c0_i32_0 : i32, i32
  }
  func.func @transform_12(%arg0: i32) -> i32 {
    %c0_i32 = arith.constant 0 : i32
    %c0_i32_0 = arith.constant 0 : i32
    return %c0_i32 : i32
  }
  func.func @transform_13(%arg0: i32) -> (i32, i32, i32, i32) {
    %c0_i32 = arith.constant 0 : i32
    %c0_i32_0 = arith.constant 0 : i32
    %c0_i32_1 = arith.constant 0 : i32
    %c0_i32_2 = arith.constant 0 : i32
    return %arg0, %c0_i32, %c0_i32_0, %c0_i32_1 : i32, i32, i32, i32
  }
}

</mosaic_0001>

<llo_original>
// kernel: tpu_custom_call.1
$region0: #{tpu_custom_call.1}
  #allocation0 [shape = 'u32[]', space=smem, size = 0x4, offset = 0x4, fixed_abs, tag = 'smem constant byte address 0x4 - core index']
  #allocation1 [shape = 'u32[144,128]{1,0:T(1,128)}', space=vmem, size = 0x12000, scoped, tag = 'internal scratch']
  #allocation2 [shape = 'f32[4,20,20]{2,1,0:T(8,128)}', space=vmem, size = 0xc000, scoped, tag = 'scratch operand']
  #allocation3 [shape = 'f32[4,34,34]{2,1,0:T(8,128)}', space=vmem, size = 0x14000, scoped, tag = 'scratch operand']
  %s0 = inlined_call_operand.hbm [shape: f32[2,4,16,16], index: 0, kind: input, shape index: {}]
  %s1 = inlined_call_operand.hbm [shape: f32[4,4], index: 1, kind: input, shape index: {}]
  %s2 = inlined_call_operand.hbm [shape: f32[4], index: 2, kind: input, shape index: {}]
  %s3 = inlined_call_operand.vmem [shape: f32[4,25], index: 3, kind: input, shape index: {}]
  %s4 = inlined_call_operand.hbm [shape: f32[4], index: 4, kind: input, shape index: {}]
  %s5 = inlined_call_operand.vmem [shape: f32[4,49], index: 5, kind: input, shape index: {}]
  %s6 = inlined_call_operand.hbm [shape: f32[4], index: 6, kind: input, shape index: {}]
  %s7 = inlined_call_operand.vmem [shape: f32[4,4], index: 7, kind: input, shape index: {}]
  %s8 = inlined_call_operand.hbm [shape: f32[4], index: 8, kind: input, shape index: {}]
  %s9 = inlined_call_operand.vmem [shape: f32[4,4], index: 9, kind: input, shape index: {}]
  %s10 = inlined_call_operand.hbm [shape: f32[4], index: 10, kind: input, shape index: {}]
  %s11 = inlined_call_operand.vmem [shape: f32[4,4], index: 11, kind: input, shape index: {}]
  %s12 = inlined_call_operand.vmem [shape: f32[4], index: 12, kind: input, shape index: {}]
  %s13 = inlined_call_operand.hbm [shape: f32[2,4,16,16], index: 13, kind: output, shape index: {}]
  %s14 = sld [smem:[#allocation0]]
  $region137: #{tpu_custom_call.1} parent=0
    _
  %s16 = ssub.s32 1, %s14
  %s17 = scalar_select 0, %s16, %s14
  $region1: #{tpu_custom_call.1} parent=0
    #allocation4 [shape = 'u8[65536]{0}', space=vmem, size = 0x10000, scoped, tag = 'input window, operand 0']
    #allocation5 [shape = 's32[2]{0}', space=sflag, size = 0x8, scoped, tag = 'scoped memory for tpu_custom_call.1']
    #allocation6 [shape = 's32[2]{0}', space=sflag, size = 0x8, scoped, tag = 'scoped memory for tpu_custom_call.1']
    #allocation7 [shape = 's32[2]{0}', space=sflag, size = 0x8, scoped, tag = 'scoped memory for tpu_custom_call.1']
    #allocation8 [shape = 's32[2]{0}', space=sflag, size = 0x8, scoped, tag = 'scoped memory for tpu_custom_call.1']
    #allocation9 [shape = 'u8[2048]{0}', space=smem, size = 0x800, scoped, tag = 'input window, operand 1, single buffered']
    #allocation10 [shape = 'u8[512]{0}', space=smem, size = 0x200, scoped, tag = 'input window, operand 2, single buffered']
    #allocation11 [shape = 's32[1]{0}', space=sflag, size = 0x4, scoped, tag = 'scoped memory for tpu_custom_call.1']
    #allocation12 [shape = 'u8[2048]{0}', space=smem, size = 0x800, scoped, tag = 'input window, operand 3, single buffered']
    #allocation13 [shape = 'u8[512]{0}', space=smem, size = 0x200, scoped, tag = 'input window, operand 4, single buffered']
    #allocation14 [shape = 'u8[2048]{0}', space=smem, size = 0x800, scoped, tag = 'input window, operand 5, single buffered']
    #allocation15 [shape = 's32[1]{0}', space=sflag, size = 0x4, scoped, tag = 'scoped memory for tpu_custom_call.1']
    #allocation16 [shape = 'u8[512]{0}', space=smem, size = 0x200, scoped, tag = 'input window, operand 6, single buffered']
    #allocation17 [shape = 's32[1]{0}', space=sflag, size = 0x4, scoped, tag = 'scoped memory for tpu_custom_call.1']
    #allocation18 [shape = 'u8[2048]{0}', space=smem, size = 0x800, scoped, tag = 'input window, operand 7, single buffered']
    #allocation19 [shape = 'u8[512]{0}', space=smem, size = 0x200, scoped, tag = 'input window, operand 8, single buffered']
    #allocation20 [shape = 'u8[2048]{0}', space=smem, size = 0x800, scoped, tag = 'input window, operand 9, single buffered']
    #allocation21 [shape = 's32[1]{0}', space=sflag, size = 0x4, scoped, tag = 'scoped memory for tpu_custom_call.1']
    #allocation22 [shape = 'u8[512]{0}', space=smem, size = 0x200, scoped, tag = 'input window, operand 10, single buffered']
    #allocation23 [shape = 's32[1]{0}', space=sflag, size = 0x4, scoped, tag = 'scoped memory for tpu_custom_call.1']
    #allocation24 [shape = 'u8[2048]{0}', space=smem, size = 0x800, scoped, tag = 'input window, operand 11, single buffered']
    #allocation25 [shape = 'u8[512]{0}', space=smem, size = 0x200, scoped, tag = 'input window, operand 12, single buffered']
    #allocation26 [shape = 's32[1]{0}', space=sflag, size = 0x4, scoped, tag = 'scoped memory for tpu_custom_call.1']
    #allocation27 [shape = 'u8[65536]{0}', space=vmem, size = 0x10000, scoped, tag = 'output window, operand 0']
    %18 = vsyncpa [#allocation5], 0
    %s19 = scalar_lea.sflag [#allocation5], 1
    %20 = vsyncpa %s19, 0
    %21 = vsyncpa [#allocation7], 0
    %22 = vsyncpa [#allocation11], 0
    %23 = vsyncpa [#allocation8], 0
    %24 = vsyncpa [#allocation15], 0
    %25 = vsyncpa [#allocation17], 0
    %26 = vsyncpa [#allocation21], 0
    %27 = vsyncpa [#allocation23], 0
    %28 = vsyncpa [#allocation26], 0
    %29 = vsyncpa [#allocation6], 0
    %s30 = scalar_lea.sflag [#allocation6], 1
    %31 = vsyncpa %s30, 0
    loop: start=0, step=1, limit=4
    $region2: #{tpu_custom_call.1} parent=1 // loop_pre_header
      _
    $region3: #{tpu_custom_call.1} parent=1 // loop_header
      %s33 = sphi 0, %s37
      %p34 = scmp.ge.s32.totalorder %s33, 4
      %s43 = sphi 0, %s45
      %s46 = sphi 0, %s43
      %s47 = sphi 0, %s46
      %s63 = sphi 0, %s47
      %s67 = sphi 0, %s67
      %s69 = sphi 0, %s67
      %s70 = sphi 0, %s69
      %s84 = sphi 0, %s70
      %s88 = sphi 0, %s88
      %s90 = sphi 0, %s88
      %s91 = sphi 0, %s90
      %s105 = sphi 0, %s91
      %s109 = sphi 0, %s109
      %s111 = sphi 0, %s109
      %s112 = sphi 0, %s111
      %s126 = sphi 0, %s112
      %s130 = sphi 0, %s130
      %s132 = sphi 0, %s130
      %s133 = sphi 0, %s132
      %s147 = sphi 0, %s133
      %s151 = sphi 0, %s151
      %s153 = sphi 0, %s151
      %s154 = sphi 0, %s153
      %s168 = sphi 0, %s154
      %s172 = sphi 0, %s172
      %s174 = sphi 0, %s172
      %s175 = sphi 0, %s174
      %s189 = sphi 0, %s175
      %s193 = sphi 0, %s193
      %s195 = sphi 0, %s193
      %s196 = sphi 0, %s195
      %s210 = sphi 0, %s196
      %s214 = sphi 0, %s214
      %s216 = sphi 0, %s214
      %s217 = sphi 0, %s216
      %s231 = sphi 0, %s217
      %s235 = sphi 0, %s235
      %s237 = sphi 0, %s235
      %s238 = sphi 0, %s237
      %s252 = sphi 0, %s238
      %s256 = sphi 0, %s256
      %s258 = sphi 0, %s256
      %s259 = sphi 0, %s258
      %s273 = sphi 0, %s259
      %s277 = sphi 0, %s277
      %s279 = sphi 0, %s277
      %s280 = sphi 0, %s279
      %s294 = sphi 0, %s280
      %s298 = sphi 0, %s298
      %s300 = sphi 0, %s298
      %s301 = sphi 0, %s300
      %s315 = sphi 0, %s301
      %s321 = sphi 0, %s323
      %s324 = sphi 0, %s321
      %s325 = sphi 0, %s324
      %s341 = sphi 0, %s325
    $region4: #{tpu_custom_call.1} parent=1 // loop_header_branch
      %36 = sbr.rel (%p34) target = $region8
    $region5: #{tpu_custom_call.1} parent=1 // loop_body
      %s38 = ssub.s32 %s33, 1
      %s39 = ssub.s32 %s33, 2
      %s40 = sadd.s32 %s33, 1
      %s41 = ssub.s32 %s33, %s40
      %p42 = scmp.eq.s32.totalorder %s41, 0
      %s44 = sadd.s32 %s43, 1
      %s45 = scalar_select %p42, %s43, %s44
      %p48 = pneg %p42
      %p49 = scmp.eq.s32.totalorder %s33, 1
      %p50 = por %p48, %p49
      %p51 = scmp.ne.s32.totalorder %s43, %s46
      %p52 = scmp.eq.s32.totalorder %s33, 0
      %p53 = por %p51, %p52
      %p54 = scmp.ne.s32.totalorder %s43, %s46
      %p55 = scmp.eq.s32.totalorder %s38, 1
      %p56 = por %p54, %p55
      %p57 = scmp.ne.s32.totalorder %s46, %s47
      %p58 = scmp.eq.s32.totalorder %s38, 0
      %p59 = por %p57, %p58
      %p60 = scmp.ne.s32.totalorder %s46, %s47
      %p61 = scmp.eq.s32.totalorder %s39, 1
      %p62 = por %p60, %p61
      %p64 = scmp.ne.s32.totalorder %s47, %s63
      %p65 = scmp.eq.s32.totalorder %s39, 0
      %p66 = por %p64, %p65
      %s68 = sadd.s32 %s67, 1
      %p71 = scmp.eq.s32.totalorder %s33, 1
      %p72 = scmp.ne.s32.totalorder %s67, %s69
      %p73 = scmp.eq.s32.totalorder %s33, 0
      %p74 = por %p72, %p73
      %p75 = scmp.ne.s32.totalorder %s67, %s69
      %p76 = scmp.eq.s32.totalorder %s38, 1
      %p77 = por %p75, %p76
      %p78 = scmp.ne.s32.totalorder %s69, %s70
      %p79 = scmp.eq.s32.totalorder %s38, 0
      %p80 = por %p78, %p79
      %p81 = scmp.ne.s32.totalorder %s69, %s70
      %p82 = scmp.eq.s32.totalorder %s39, 1
      %p83 = por %p81, %p82
      %p85 = scmp.ne.s32.totalorder %s70, %s84
      %p86 = scmp.eq.s32.totalorder %s39, 0
      %p87 = por %p85, %p86
      %s89 = sadd.s32 %s88, 1
      %p92 = scmp.eq.s32.totalorder %s33, 1
      %p93 = scmp.ne.s32.totalorder %s88, %s90
      %p94 = scmp.eq.s32.totalorder %s33, 0
      %p95 = por %p93, %p94
      %p96 = scmp.ne.s32.totalorder %s88, %s90
      %p97 = scmp.eq.s32.totalorder %s38, 1
      %p98 = por %p96, %p97
      %p99 = scmp.ne.s32.totalorder %s90, %s91
      %p100 = scmp.eq.s32.totalorder %s38, 0
      %p101 = por %p99, %p100
      %p102 = scmp.ne.s32.totalorder %s90, %s91
      %p103 = scmp.eq.s32.totalorder %s39, 1
      %p104 = por %p102, %p103
      %p106 = scmp.ne.s32.totalorder %s91, %s105
      %p107 = scmp.eq.s32.totalorder %s39, 0
      %p108 = por %p106, %p107
      %s110 = sadd.s32 %s109, 1
      %p113 = scmp.eq.s32.totalorder %s33, 1
      %p114 = scmp.ne.s32.totalorder %s109, %s111
      %p115 = scmp.eq.s32.totalorder %s33, 0
      %p116 = por %p114, %p115
      %p117 = scmp.ne.s32.totalorder %s109, %s111
      %p118 = scmp.eq.s32.totalorder %s38, 1
      %p119 = por %p117, %p118
      %p120 = scmp.ne.s32.totalorder %s111, %s112
      %p121 = scmp.eq.s32.totalorder %s38, 0
      %p122 = por %p120, %p121
      %p123 = scmp.ne.s32.totalorder %s111, %s112
      %p124 = scmp.eq.s32.totalorder %s39, 1
      %p125 = por %p123, %p124
      %p127 = scmp.ne.s32.totalorder %s112, %s126
      %p128 = scmp.eq.s32.totalorder %s39, 0
      %p129 = por %p127, %p128
      %s131 = sadd.s32 %s130, 1
      %p134 = scmp.eq.s32.totalorder %s33, 1
      %p135 = scmp.ne.s32.totalorder %s130, %s132
      %p136 = scmp.eq.s32.totalorder %s33, 0
      %p137 = por %p135, %p136
      %p138 = scmp.ne.s32.totalorder %s130, %s132
      %p139 = scmp.eq.s32.totalorder %s38, 1
      %p140 = por %p138, %p139
      %p141 = scmp.ne.s32.totalorder %s132, %s133
      %p142 = scmp.eq.s32.totalorder %s38, 0
      %p143 = por %p141, %p142
      %p144 = scmp.ne.s32.totalorder %s132, %s133
      %p145 = scmp.eq.s32.totalorder %s39, 1
      %p146 = por %p144, %p145
      %p148 = scmp.ne.s32.totalorder %s133, %s147
      %p149 = scmp.eq.s32.totalorder %s39, 0
      %p150 = por %p148, %p149
      %s152 = sadd.s32 %s151, 1
      %p155 = scmp.eq.s32.totalorder %s33, 1
      %p156 = scmp.ne.s32.totalorder %s151, %s153
      %p157 = scmp.eq.s32.totalorder %s33, 0
      %p158 = por %p156, %p157
      %p159 = scmp.ne.s32.totalorder %s151, %s153
      %p160 = scmp.eq.s32.totalorder %s38, 1
      %p161 = por %p159, %p160
      %p162 = scmp.ne.s32.totalorder %s153, %s154
      %p163 = scmp.eq.s32.totalorder %s38, 0
      %p164 = por %p162, %p163
      %p165 = scmp.ne.s32.totalorder %s153, %s154
      %p166 = scmp.eq.s32.totalorder %s39, 1
      %p167 = por %p165, %p166
      %p169 = scmp.ne.s32.totalorder %s154, %s168
      %p170 = scmp.eq.s32.totalorder %s39, 0
      %p171 = por %p169, %p170
      %s173 = sadd.s32 %s172, 1
      %p176 = scmp.eq.s32.totalorder %s33, 1
      %p177 = scmp.ne.s32.totalorder %s172, %s174
      %p178 = scmp.eq.s32.totalorder %s33, 0
      %p179 = por %p177, %p178
      %p180 = scmp.ne.s32.totalorder %s172, %s174
      %p181 = scmp.eq.s32.totalorder %s38, 1
      %p182 = por %p180, %p181
      %p183 = scmp.ne.s32.totalorder %s174, %s175
      %p184 = scmp.eq.s32.totalorder %s38, 0
      %p185 = por %p183, %p184
      %p186 = scmp.ne.s32.totalorder %s174, %s175
      %p187 = scmp.eq.s32.totalorder %s39, 1
      %p188 = por %p186, %p187
      %p190 = scmp.ne.s32.totalorder %s175, %s189
      %p191 = scmp.eq.s32.totalorder %s39, 0
      %p192 = por %p190, %p191
      %s194 = sadd.s32 %s193, 1
      %p197 = scmp.eq.s32.totalorder %s33, 1
      %p198 = scmp.ne.s32.totalorder %s193, %s195
      %p199 = scmp.eq.s32.totalorder %s33, 0
      %p200 = por %p198, %p199
      %p201 = scmp.ne.s32.totalorder %s193, %s195
      %p202 = scmp.eq.s32.totalorder %s38, 1
      %p203 = por %p201, %p202
      %p204 = scmp.ne.s32.totalorder %s195, %s196
      %p205 = scmp.eq.s32.totalorder %s38, 0
      %p206 = por %p204, %p205
      %p207 = scmp.ne.s32.totalorder %s195, %s196
      %p208 = scmp.eq.s32.totalorder %s39, 1
      %p209 = por %p207, %p208
      %p211 = scmp.ne.s32.totalorder %s196, %s210
      %p212 = scmp.eq.s32.totalorder %s39, 0
      %p213 = por %p211, %p212
      %s215 = sadd.s32 %s214, 1
      %p218 = scmp.eq.s32.totalorder %s33, 1
      %p219 = scmp.ne.s32.totalorder %s214, %s216
      %p220 = scmp.eq.s32.totalorder %s33, 0
      %p221 = por %p219, %p220
      %p222 = scmp.ne.s32.totalorder %s214, %s216
      %p223 = scmp.eq.s32.totalorder %s38, 1
      %p224 = por %p222, %p223
      %p225 = scmp.ne.s32.totalorder %s216, %s217
      %p226 = scmp.eq.s32.totalorder %s38, 0
      %p227 = por %p225, %p226
      %p228 = scmp.ne.s32.totalorder %s216, %s217
      %p229 = scmp.eq.s32.totalorder %s39, 1
      %p230 = por %p228, %p229
      %p232 = scmp.ne.s32.totalorder %s217, %s231
      %p233 = scmp.eq.s32.totalorder %s39, 0
      %p234 = por %p232, %p233
      %s236 = sadd.s32 %s235, 1
      %p239 = scmp.eq.s32.totalorder %s33, 1
      %p240 = scmp.ne.s32.totalorder %s235, %s237
      %p241 = scmp.eq.s32.totalorder %s33, 0
      %p242 = por %p240, %p241
      %p243 = scmp.ne.s32.totalorder %s235, %s237
      %p244 = scmp.eq.s32.totalorder %s38, 1
      %p245 = por %p243, %p244
      %p246 = scmp.ne.s32.totalorder %s237, %s238
      %p247 = scmp.eq.s32.totalorder %s38, 0
      %p248 = por %p246, %p247
      %p249 = scmp.ne.s32.totalorder %s237, %s238
      %p250 = scmp.eq.s32.totalorder %s39, 1
      %p251 = por %p249, %p250
      %p253 = scmp.ne.s32.totalorder %s238, %s252
      %p254 = scmp.eq.s32.totalorder %s39, 0
      %p255 = por %p253, %p254
      %s257 = sadd.s32 %s256, 1
      %p260 = scmp.eq.s32.totalorder %s33, 1
      %p261 = scmp.ne.s32.totalorder %s256, %s258
      %p262 = scmp.eq.s32.totalorder %s33, 0
      %p263 = por %p261, %p262
      %p264 = scmp.ne.s32.totalorder %s256, %s258
      %p265 = scmp.eq.s32.totalorder %s38, 1
      %p266 = por %p264, %p265
      %p267 = scmp.ne.s32.totalorder %s258, %s259
      %p268 = scmp.eq.s32.totalorder %s38, 0
      %p269 = por %p267, %p268
      %p270 = scmp.ne.s32.totalorder %s258, %s259
      %p271 = scmp.eq.s32.totalorder %s39, 1
      %p272 = por %p270, %p271
      %p274 = scmp.ne.s32.totalorder %s259, %s273
      %p275 = scmp.eq.s32.totalorder %s39, 0
      %p276 = por %p274, %p275
      %s278 = sadd.s32 %s277, 1
      %p281 = scmp.eq.s32.totalorder %s33, 1
      %p282 = scmp.ne.s32.totalorder %s277, %s279
      %p283 = scmp.eq.s32.totalorder %s33, 0
      %p284 = por %p282, %p283
      %p285 = scmp.ne.s32.totalorder %s277, %s279
      %p286 = scmp.eq.s32.totalorder %s38, 1
      %p287 = por %p285, %p286
      %p288 = scmp.ne.s32.totalorder %s279, %s280
      %p289 = scmp.eq.s32.totalorder %s38, 0
      %p290 = por %p288, %p289
      %p291 = scmp.ne.s32.totalorder %s279, %s280
      %p292 = scmp.eq.s32.totalorder %s39, 1
      %p293 = por %p291, %p292
      %p295 = scmp.ne.s32.totalorder %s280, %s294
      %p296 = scmp.eq.s32.totalorder %s39, 0
      %p297 = por %p295, %p296
      %s299 = sadd.s32 %s298, 1
      %p302 = scmp.eq.s32.totalorder %s33, 1
      %p303 = scmp.ne.s32.totalorder %s298, %s300
      %p304 = scmp.eq.s32.totalorder %s33, 0
      %p305 = por %p303, %p304
      %p306 = scmp.ne.s32.totalorder %s298, %s300
      %p307 = scmp.eq.s32.totalorder %s38, 1
      %p308 = por %p306, %p307
      %p309 = scmp.ne.s32.totalorder %s300, %s301
      %p310 = scmp.eq.s32.totalorder %s38, 0
      %p311 = por %p309, %p310
      %p312 = scmp.ne.s32.totalorder %s300, %s301
      %p313 = scmp.eq.s32.totalorder %s39, 1
      %p314 = por %p312, %p313
      %p316 = scmp.ne.s32.totalorder %s301, %s315
      %p317 = scmp.eq.s32.totalorder %s39, 0
      %p318 = por %p316, %p317
      %s319 = ssub.s32 %s33, %s40
      %p320 = scmp.eq.s32.totalorder %s319, 0
      %s322 = sadd.s32 %s321, 1
      %s323 = scalar_select %p320, %s321, %s322
      %p326 = pneg %p320
      %p327 = scmp.eq.s32.totalorder %s33, 1
      %p328 = por %p326, %p327
      %p329 = scmp.ne.s32.totalorder %s321, %s324
      %p330 = scmp.eq.s32.totalorder %s33, 0
      %p331 = por %p329, %p330
      %p332 = scmp.ne.s32.totalorder %s321, %s324
      %p333 = scmp.eq.s32.totalorder %s38, 1
      %p334 = por %p332, %p333
      %p335 = scmp.ne.s32.totalorder %s324, %s325
      %p336 = scmp.eq.s32.totalorder %s38, 0
      %p337 = por %p335, %p336
      %p338 = scmp.ne.s32.totalorder %s324, %s325
      %p339 = scmp.eq.s32.totalorder %s39, 1
      %p340 = por %p338, %p339
      %p342 = scmp.ne.s32.totalorder %s325, %s341
      %p343 = scmp.eq.s32.totalorder %s39, 0
      %p344 = por %p342, %p343
      %p345 = scmp.le.s32.totalorder 1, %s33
      %p346 = scmp.lt.s32.totalorder %s33, 3
      %p347 = pnand %p345, %p346
      %p348 = pneg %p347
      // Predicated region
      $region9: #{tpu_custom_call.1} parent=5 // pred_check
        _
      $region10: #{tpu_custom_call.1} parent=5 // pred_check_branch
        %350 = sbr.rel (%p347) target = $region12
      $region11: #{tpu_custom_call.1} parent=5 // pred_region
        %s351 = ssub.s32 %s33, 1
        // Predicated region
        $region13: #{tpu_custom_call.1} parent=11 // pred_check
          %p352 = pneg %p80
        $region14: #{tpu_custom_call.1} parent=11 // pred_check_branch
          %354 = sbr.rel (%p352) target = $region16
        $region15: #{tpu_custom_call.1} parent=11 // pred_region
          %s356 = ssub.s32 64, 64
          %357 = vsyncadd [#allocation7], %s356
          %360 = dma.hbm_to_smem %s1, 64, [#allocation9], [#allocation7]
        $region16: #{tpu_custom_call.1} parent=11 // pred_fallthru
          _
        // Predicated region
        $region17: #{tpu_custom_call.1} parent=11 // pred_check
          %p361 = pneg %p101
        $region18: #{tpu_custom_call.1} parent=11 // pred_check_branch
          %363 = sbr.rel (%p361) target = $region20
        $region19: #{tpu_custom_call.1} parent=11 // pred_region
          %s365 = ssub.s32 16, 16
          %366 = vsyncadd [#allocation11], %s365
          %369 = dma.hbm_to_smem %s2, 16, [#allocation10], [#allocation11]
        $region20: #{tpu_custom_call.1} parent=11 // pred_fallthru
          _
        // Predicated region
        $region21: #{tpu_custom_call.1} parent=11 // pred_check
          %p370 = pneg %p122
        $region22: #{tpu_custom_call.1} parent=11 // pred_check_branch
          %372 = sbr.rel (%p370) target = $region24
        $region23: #{tpu_custom_call.1} parent=11 // pred_region
          %s374 = ssub.s32 64, 64
          %375 = vsyncadd [#allocation8], %s374
          %s377 = sshll.u32 %s3, 4
          %s378 = int_to_ptr.vmem [resolvable:$true] %s377
          %380 = dma.vmem_to_smem %s378, 64, [#allocation12], [#allocation8]
        $region24: #{tpu_custom_call.1} parent=11 // pred_fallthru
          _
        // Predicated region
        $region25: #{tpu_custom_call.1} parent=11 // pred_check
          %p381 = pneg %p143
        $region26: #{tpu_custom_call.1} parent=11 // pred_check_branch
          %383 = sbr.rel (%p381) target = $region28
        $region27: #{tpu_custom_call.1} parent=11 // pred_region
          %s385 = ssub.s32 16, 16
          %386 = vsyncadd [#allocation11], %s385
          %389 = dma.hbm_to_smem %s4, 16, [#allocation13], [#allocation11]
        $region28: #{tpu_custom_call.1} parent=11 // pred_fallthru
          _
        // Predicated region
        $region29: #{tpu_custom_call.1} parent=11 // pred_check
          %p390 = pneg %p164
        $region30: #{tpu_custom_call.1} parent=11 // pred_check_branch
          %392 = sbr.rel (%p390) target = $region32
        $region31: #{tpu_custom_call.1} parent=11 // pred_region
          %s394 = ssub.s32 64, 64
          %395 = vsyncadd [#allocation15], %s394
          %s397 = sshll.u32 %s5, 4
          %s398 = int_to_ptr.vmem [resolvable:$true] %s397
          %400 = dma.vmem_to_smem %s398, 64, [#allocation14], [#allocation15]
        $region32: #{tpu_custom_call.1} parent=11 // pred_fallthru
          _
        // Predicated region
        $region33: #{tpu_custom_call.1} parent=11 // pred_check
          %p401 = pneg %p185
        $region34: #{tpu_custom_call.1} parent=11 // pred_check_branch
          %403 = sbr.rel (%p401) target = $region36
        $region35: #{tpu_custom_call.1} parent=11 // pred_region
          %s405 = ssub.s32 16, 16
          %406 = vsyncadd [#allocation17], %s405
          %409 = dma.hbm_to_smem %s6, 16, [#allocation16], [#allocation17]
        $region36: #{tpu_custom_call.1} parent=11 // pred_fallthru
          _
        // Predicated region
        $region37: #{tpu_custom_call.1} parent=11 // pred_check
          %p410 = pneg %p206
        $region38: #{tpu_custom_call.1} parent=11 // pred_check_branch
          %412 = sbr.rel (%p410) target = $region40
        $region39: #{tpu_custom_call.1} parent=11 // pred_region
          %s414 = ssub.s32 64, 64
          %415 = vsyncadd [#allocation15], %s414
          %s417 = sshll.u32 %s7, 4
          %s418 = int_to_ptr.vmem [resolvable:$true] %s417
          %420 = dma.vmem_to_smem %s418, 64, [#allocation18], [#allocation15]
        $region40: #{tpu_custom_call.1} parent=11 // pred_fallthru
          _
        // Predicated region
        $region41: #{tpu_custom_call.1} parent=11 // pred_check
          %p421 = pneg %p227
        $region42: #{tpu_custom_call.1} parent=11 // pred_check_branch
          %423 = sbr.rel (%p421) target = $region44
        $region43: #{tpu_custom_call.1} parent=11 // pred_region
          %s425 = ssub.s32 16, 16
          %426 = vsyncadd [#allocation17], %s425
          %429 = dma.hbm_to_smem %s8, 16, [#allocation19], [#allocation17]
        $region44: #{tpu_custom_call.1} parent=11 // pred_fallthru
          _
        // Predicated region
        $region45: #{tpu_custom_call.1} parent=11 // pred_check
          %p430 = pneg %p248
        $region46: #{tpu_custom_call.1} parent=11 // pred_check_branch
          %432 = sbr.rel (%p430) target = $region48
        $region47: #{tpu_custom_call.1} parent=11 // pred_region
          %s434 = ssub.s32 64, 64
          %435 = vsyncadd [#allocation21], %s434
          %s437 = sshll.u32 %s9, 4
          %s438 = int_to_ptr.vmem [resolvable:$true] %s437
          %440 = dma.vmem_to_smem %s438, 64, [#allocation20], [#allocation21]
        $region48: #{tpu_custom_call.1} parent=11 // pred_fallthru
          _
        // Predicated region
        $region49: #{tpu_custom_call.1} parent=11 // pred_check
          %p441 = pneg %p269
        $region50: #{tpu_custom_call.1} parent=11 // pred_check_branch
          %443 = sbr.rel (%p441) target = $region52
        $region51: #{tpu_custom_call.1} parent=11 // pred_region
          %s445 = ssub.s32 16, 16
          %446 = vsyncadd [#allocation23], %s445
          %449 = dma.hbm_to_smem %s10, 16, [#allocation22], [#allocation23]
        $region52: #{tpu_custom_call.1} parent=11 // pred_fallthru
          _
        // Predicated region
        $region53: #{tpu_custom_call.1} parent=11 // pred_check
          %p450 = pneg %p290
        $region54: #{tpu_custom_call.1} parent=11 // pred_check_branch
          %452 = sbr.rel (%p450) target = $region56
        $region55: #{tpu_custom_call.1} parent=11 // pred_region
          %s454 = ssub.s32 64, 64
          %455 = vsyncadd [#allocation21], %s454
          %s457 = sshll.u32 %s11, 4
          %s458 = int_to_ptr.vmem [resolvable:$true] %s457
          %460 = dma.vmem_to_smem %s458, 64, [#allocation24], [#allocation21]
        $region56: #{tpu_custom_call.1} parent=11 // pred_fallthru
          _
        // Predicated region
        $region57: #{tpu_custom_call.1} parent=11 // pred_check
          %p461 = pneg %p311
        $region58: #{tpu_custom_call.1} parent=11 // pred_check_branch
          %463 = sbr.rel (%p461) target = $region60
        $region59: #{tpu_custom_call.1} parent=11 // pred_region
          %s465 = ssub.s32 16, 16
          %466 = vsyncadd [#allocation26], %s465
          %s468 = sshll.u32 %s12, 4
          %s469 = int_to_ptr.vmem [resolvable:$true] %s468
          %471 = dma.vmem_to_smem %s469, 16, [#allocation25], [#allocation26]
        $region60: #{tpu_custom_call.1} parent=11 // pred_fallthru
          _
      $region12: #{tpu_custom_call.1} parent=5 // pred_fallthru
        _
      %p472 = scmp.lt.s32.totalorder %s33, 2
      // Predicated region
      $region61: #{tpu_custom_call.1} parent=5 // pred_check
        %p473 = pneg %p472
      $region62: #{tpu_custom_call.1} parent=5 // pred_check_branch
        %475 = sbr.rel (%p473) target = $region64
      $region63: #{tpu_custom_call.1} parent=5 // pred_region
        // Predicated region
        $region65: #{tpu_custom_call.1} parent=63 // pred_check
          %p476 = pneg %p53
        $region66: #{tpu_custom_call.1} parent=63 // pred_check_branch
          %478 = sbr.rel (%p476) target = $region68
        $region67: #{tpu_custom_call.1} parent=63 // pred_region
          %s479 = sand.u32 %s43, 1
          %s480 = scalar_lea.sflag [#allocation5], %s479
          %s481 = sand.u32 %s43, 1
          %s482 = smul.addr %s481, 64
          %s483 = scalar_lea.vmem [#allocation4], %s482
          %s485 = ssub.s32 1024, 1024
          %486 = vsyncadd %s480, %s485
          %s487 = smul.addr %s33, 8
          %s488 = smul.addr %s487, 128
          %s489 = scalar_lea.hbm %s0, %s488
          %s490 = sshll.u32 %s483, 4
          %s491 = int_to_ptr.vmem [resolvable:$true] %s490
          %496 = dma.hbm_to_vmem [thread:$0]  %s489, 1024, %s491, %s480, 128, 128, 8
        $region68: #{tpu_custom_call.1} parent=63 // pred_fallthru
          _
      $region64: #{tpu_custom_call.1} parent=5 // pred_fallthru
        _
      %p497 = scmp.le.s32.totalorder 1, %s33
      %p498 = scmp.lt.s32.totalorder %s33, 3
      %p499 = pnand %p497, %p498
      %p500 = pneg %p499
      // Predicated region
      $region69: #{tpu_custom_call.1} parent=5 // pred_check
        _
      $region70: #{tpu_custom_call.1} parent=5 // pred_check_branch
        %502 = sbr.rel (%p499) target = $region72
      $region71: #{tpu_custom_call.1} parent=5 // pred_region
        %s503 = ssub.s32 %s33, 1
        %s504 = sand.u32 %s46, 1
        %s505 = scalar_lea.sflag [#allocation5], %s504
        %s506 = sand.u32 %s46, 1
        %s507 = smul.addr %s506, 64
        %s508 = scalar_lea.vmem [#allocation4], %s507
        // Predicated region
        $region73: #{tpu_custom_call.1} parent=71 // pred_check
          %p509 = pneg %p59
        $region74: #{tpu_custom_call.1} parent=71 // pred_check_branch
          %511 = sbr.rel (%p509) target = $region76
        $region75: #{tpu_custom_call.1} parent=71 // pred_region
          %512 = dma.done %s505, 1024
        $region76: #{tpu_custom_call.1} parent=71 // pred_fallthru
          _
        // Predicated region
        $region77: #{tpu_custom_call.1} parent=71 // pred_check
          %p513 = pneg %p80
        $region78: #{tpu_custom_call.1} parent=71 // pred_check_branch
          %515 = sbr.rel (%p513) target = $region80
        $region79: #{tpu_custom_call.1} parent=71 // pred_region
          %516 = dma.done [#allocation7], 64
        $region80: #{tpu_custom_call.1} parent=71 // pred_fallthru
          _
        // Predicated region
        $region81: #{tpu_custom_call.1} parent=71 // pred_check
          %p517 = pneg %p101
        $region82: #{tpu_custom_call.1} parent=71 // pred_check_branch
          %519 = sbr.rel (%p517) target = $region84
        $region83: #{tpu_custom_call.1} parent=71 // pred_region
          %520 = dma.done [#allocation11], 16
        $region84: #{tpu_custom_call.1} parent=71 // pred_fallthru
          _
        // Predicated region
        $region85: #{tpu_custom_call.1} parent=71 // pred_check
          %p521 = pneg %p122
        $region86: #{tpu_custom_call.1} parent=71 // pred_check_branch
          %523 = sbr.rel (%p521) target = $region88
        $region87: #{tpu_custom_call.1} parent=71 // pred_region
          %524 = dma.done [#allocation8], 64
        $region88: #{tpu_custom_call.1} parent=71 // pred_fallthru
          _
        // Predicated region
        $region89: #{tpu_custom_call.1} parent=71 // pred_check
          %p525 = pneg %p143
        $region90: #{tpu_custom_call.1} parent=71 // pred_check_branch
          %527 = sbr.rel (%p525) target = $region92
        $region91: #{tpu_custom_call.1} parent=71 // pred_region
          %528 = dma.done [#allocation11], 16
        $region92: #{tpu_custom_call.1} parent=71 // pred_fallthru
          _
        // Predicated region
        $region93: #{tpu_custom_call.1} parent=71 // pred_check
          %p529 = pneg %p164
        $region94: #{tpu_custom_call.1} parent=71 // pred_check_branch
          %531 = sbr.rel (%p529) target = $region96
        $region95: #{tpu_custom_call.1} parent=71 // pred_region
          %532 = dma.done [#allocation15], 64
        $region96: #{tpu_custom_call.1} parent=71 // pred_fallthru
          _
        // Predicated region
        $region97: #{tpu_custom_call.1} parent=71 // pred_check
          %p533 = pneg %p185
        $region98: #{tpu_custom_call.1} parent=71 // pred_check_branch
          %535 = sbr.rel (%p533) target = $region100
        $region99: #{tpu_custom_call.1} parent=71 // pred_region
          %536 = dma.done [#allocation17], 16
        $region100: #{tpu_custom_call.1} parent=71 // pred_fallthru
          _
        // Predicated region
        $region101: #{tpu_custom_call.1} parent=71 // pred_check
          %p537 = pneg %p206
        $region102: #{tpu_custom_call.1} parent=71 // pred_check_branch
          %539 = sbr.rel (%p537) target = $region104
        $region103: #{tpu_custom_call.1} parent=71 // pred_region
          %540 = dma.done [#allocation15], 64
        $region104: #{tpu_custom_call.1} parent=71 // pred_fallthru
          _
        // Predicated region
        $region105: #{tpu_custom_call.1} parent=71 // pred_check
          %p541 = pneg %p227
        $region106: #{tpu_custom_call.1} parent=71 // pred_check_branch
          %543 = sbr.rel (%p541) target = $region108
        $region107: #{tpu_custom_call.1} parent=71 // pred_region
          %544 = dma.done [#allocation17], 16
        $region108: #{tpu_custom_call.1} parent=71 // pred_fallthru
          _
        // Predicated region
        $region109: #{tpu_custom_call.1} parent=71 // pred_check
          %p545 = pneg %p248
        $region110: #{tpu_custom_call.1} parent=71 // pred_check_branch
          %547 = sbr.rel (%p545) target = $region112
        $region111: #{tpu_custom_call.1} parent=71 // pred_region
          %548 = dma.done [#allocation21], 64
        $region112: #{tpu_custom_call.1} parent=71 // pred_fallthru
          _
        // Predicated region
        $region113: #{tpu_custom_call.1} parent=71 // pred_check
          %p549 = pneg %p269
        $region114: #{tpu_custom_call.1} parent=71 // pred_check_branch
          %551 = sbr.rel (%p549) target = $region116
        $region115: #{tpu_custom_call.1} parent=71 // pred_region
          %552 = dma.done [#allocation23], 16
        $region116: #{tpu_custom_call.1} parent=71 // pred_fallthru
          _
        // Predicated region
        $region117: #{tpu_custom_call.1} parent=71 // pred_check
          %p553 = pneg %p290
        $region118: #{tpu_custom_call.1} parent=71 // pred_check_branch
          %555 = sbr.rel (%p553) target = $region120
        $region119: #{tpu_custom_call.1} parent=71 // pred_region
          %556 = dma.done [#allocation21], 64
        $region120: #{tpu_custom_call.1} parent=71 // pred_fallthru
          _
        // Predicated region
        $region121: #{tpu_custom_call.1} parent=71 // pred_check
          %p557 = pneg %p311
        $region122: #{tpu_custom_call.1} parent=71 // pred_check_branch
          %559 = sbr.rel (%p557) target = $region124
        $region123: #{tpu_custom_call.1} parent=71 // pred_region
          %560 = dma.done [#allocation26], 16
        $region124: #{tpu_custom_call.1} parent=71 // pred_fallthru
          _
        %561 = sfence
        %s562 = sand.u32 %s46, 1
        %s563 = scalar_lea.sflag [#allocation5], %s562
        %s564 = sand.u32 %s46, 1
        %s565 = smul.addr %s564, 64
        %s566 = scalar_lea.vmem [#allocation4], %s565
        %p567 = pneg %p59
        %p568 = pneg %p56
        %p569 = pneg %p80
        %p570 = pneg %p77
        %p571 = pneg %p101
        %p572 = pneg %p98
        %p573 = pneg %p122
        %p574 = pneg %p119
        %p575 = pneg %p143
        %p576 = pneg %p140
        %p577 = pneg %p164
        %p578 = pneg %p161
        %p579 = pneg %p185
        %p580 = pneg %p182
        %p581 = pneg %p206
        %p582 = pneg %p203
        %p583 = pneg %p227
        %p584 = pneg %p224
        %p585 = pneg %p248
        %p586 = pneg %p245
        %p587 = pneg %p269
        %p588 = pneg %p266
        %p589 = pneg %p290
        %p590 = pneg %p287
        %p591 = pneg %p311
        %p592 = pneg %p308
        %p593 = pneg %p337
        %p594 = pneg %p334
        %s595 = sand.u32 %s324, 1
        %s596 = scalar_lea.sflag [#allocation6], %s595
        %s597 = sand.u32 %s324, 1
        %s598 = smul.addr %s597, 64
        %s599 = scalar_lea.vmem [#allocation27], %s598
        %vm600 = vcmask 156672
        %601 = vst.msk [vmem:[#allocation2] sm:$0x3] %vm600, 0.0
        %602 = vst.msk [vmem:[#allocation2 + $0x18] sm:$0x3] %vm600, 0.0
        %603 = vst.msk [vmem:[#allocation2 + $0x30] sm:$0x3] %vm600, 0.0
        %604 = vst.msk [vmem:[#allocation2 + $0x48] sm:$0x3] %vm600, 0.0
        %605 = vst.msk [vmem:[#allocation2 + $0x12] sm:$0x3] %vm600, 0.0
        %606 = vst.msk [vmem:[#allocation2 + $0x2a] sm:$0x3] %vm600, 0.0
        %607 = vst.msk [vmem:[#allocation2 + $0x42] sm:$0x3] %vm600, 0.0
        %608 = vst.msk [vmem:[#allocation2 + $0x5a] sm:$0x3] %vm600, 0.0
        %vm609 = vcmask 15360
        %610 = vst.msk [vmem:[#allocation2 + $0x2] sm:$0xff] %vm609, 0.0
        %611 = vst.msk [vmem:[#allocation2 + $0xa] sm:$0xff] %vm609, 0.0
        %612 = vst.msk [vmem:[#allocation2 + $0x1a] sm:$0xff] %vm609, 0.0
        %613 = vst.msk [vmem:[#allocation2 + $0x22] sm:$0xff] %vm609, 0.0
        %614 = vst.msk [vmem:[#allocation2 + $0x32] sm:$0xff] %vm609, 0.0
        %615 = vst.msk [vmem:[#allocation2 + $0x3a] sm:$0xff] %vm609, 0.0
        %616 = vst.msk [vmem:[#allocation2 + $0x4a] sm:$0xff] %vm609, 0.0
        %617 = vst.msk [vmem:[#allocation2 + $0x52] sm:$0xff] %vm609, 0.0
        %vm618 = vcmask 162960
        %619 = vst.msk [vmem:[#allocation2 + $0x2] sm:$0xff] %vm618, 0.0
        %620 = vst.msk [vmem:[#allocation2 + $0xa] sm:$0xff] %vm618, 0.0
        %621 = vst.msk [vmem:[#allocation2 + $0x1a] sm:$0xff] %vm618, 0.0
        %622 = vst.msk [vmem:[#allocation2 + $0x22] sm:$0xff] %vm618, 0.0
        %623 = vst.msk [vmem:[#allocation2 + $0x32] sm:$0xff] %vm618, 0.0
        %624 = vst.msk [vmem:[#allocation2 + $0x3a] sm:$0xff] %vm618, 0.0
        %625 = vst.msk [vmem:[#allocation2 + $0x4a] sm:$0xff] %vm618, 0.0
        %626 = vst.msk [vmem:[#allocation2 + $0x52] sm:$0xff] %vm618, 0.0
        %vm627 = vcmask 277504
        %628 = vst.msk [vmem:[#allocation3] sm:$0xff] %vm627, 0.0
        %vm629 = vcmask 270336
        %630 = vst.msk [vmem:[#allocation3 + $0x8] sm:$0x1] %vm629, 0.0
        %631 = vst.msk [vmem:[#allocation3 + $0x28] sm:$0xff] %vm627, 0.0
        %632 = vst.msk [vmem:[#allocation3 + $0x30] sm:$0x1] %vm629, 0.0
        %633 = vst.msk [vmem:[#allocation3 + $0x50] sm:$0xff] %vm627, 0.0
        %634 = vst.msk [vmem:[#allocation3 + $0x58] sm:$0x1] %vm629, 0.0
        %635 = vst.msk [vmem:[#allocation3 + $0x78] sm:$0xff] %vm627, 0.0
        %636 = vst.msk [vmem:[#allocation3 + $0x80] sm:$0x1] %vm629, 0.0
        %637 = vst.msk [vmem:[#allocation3 + $0x19] sm:$0xff] %vm627, 0.0
        %638 = vst.msk [vmem:[#allocation3 + $0x21] sm:$0x1] %vm629, 0.0
        %639 = vst.msk [vmem:[#allocation3 + $0x41] sm:$0xff] %vm627, 0.0
        %640 = vst.msk [vmem:[#allocation3 + $0x49] sm:$0x1] %vm629, 0.0
        %641 = vst.msk [vmem:[#allocation3 + $0x69] sm:$0xff] %vm627, 0.0
        %642 = vst.msk [vmem:[#allocation3 + $0x71] sm:$0x1] %vm629, 0.0
        %643 = vst.msk [vmem:[#allocation3 + $0x91] sm:$0xff] %vm627, 0.0
        %644 = vst.msk [vmem:[#allocation3 + $0x99] sm:$0x1] %vm629, 0.0
        %vm645 = vcmask 72704
        %646 = vst.msk [vmem:[#allocation3 + $0x9] sm:$0xff] %vm645, 0.0
        %647 = vst.msk [vmem:[#allocation3 + $0x11] sm:$0xff] %vm645, 0.0
        %648 = vst.msk [vmem:[#allocation3 + $0x31] sm:$0xff] %vm645, 0.0
        %649 = vst.msk [vmem:[#allocation3 + $0x39] sm:$0xff] %vm645, 0.0
        %650 = vst.msk [vmem:[#allocation3 + $0x59] sm:$0xff] %vm645, 0.0
        %651 = vst.msk [vmem:[#allocation3 + $0x61] sm:$0xff] %vm645, 0.0
        %652 = vst.msk [vmem:[#allocation3 + $0x81] sm:$0xff] %vm645, 0.0
        %653 = vst.msk [vmem:[#allocation3 + $0x89] sm:$0xff] %vm645, 0.0
        %vm654 = vcmask 277704
        %655 = vst.msk [vmem:[#allocation3 + $0x9] sm:$0xff] %vm654, 0.0
        %656 = vst.msk [vmem:[#allocation3 + $0x11] sm:$0xff] %vm654, 0.0
        %657 = vst.msk [vmem:[#allocation3 + $0x31] sm:$0xff] %vm654, 0.0
        %658 = vst.msk [vmem:[#allocation3 + $0x39] sm:$0xff] %vm654, 0.0
        %659 = vst.msk [vmem:[#allocation3 + $0x59] sm:$0xff] %vm654, 0.0
        %660 = vst.msk [vmem:[#allocation3 + $0x61] sm:$0xff] %vm654, 0.0
        %661 = vst.msk [vmem:[#allocation3 + $0x81] sm:$0xff] %vm654, 0.0
        %662 = vst.msk [vmem:[#allocation3 + $0x89] sm:$0xff] %vm654, 0.0
        %v663 = vld [vmem:[%s508] sm:$0xff]
        %v664 = vld [vmem:[%s508 + $0x8] sm:$0xff]
        %s665 = scalar_lea.vmem %s508, 16 [#allocation4]
        %v666 = vld [vmem:[%s665] sm:$0xff]
        %v667 = vld [vmem:[%s665 + $0x8] sm:$0xff]
        %s668 = scalar_lea.vmem %s508, 32 [#allocation4]
        %v669 = vld [vmem:[%s668] sm:$0xff]
        %v670 = vld [vmem:[%s668 + $0x8] sm:$0xff]
        %s671 = scalar_lea.vmem %s508, 48 [#allocation4]
        %v672 = vld [vmem:[%s671] sm:$0xff]
        %v673 = vld [vmem:[%s671 + $0x8] sm:$0xff]
        %s674 = sld [smem:[#allocation9]]
        %v675 = vstv %s674
        %v676 = vmul.f32 %v663, %v675
        %v677 = vmul.f32 %v664, %v675
        %s678 = sld [smem:[#allocation9 + $0x1]]
        %v679 = vstv %s678
        %v680 = vmul.f32 %v666, %v679
        %v681 = vmul.f32 %v667, %v679
        %v682 = vadd.f32 %v676, %v680
        %v683 = vadd.f32 %v677, %v681
        %s684 = sld [smem:[#allocation9 + $0x2]]
        %v685 = vstv %s684
        %v686 = vmul.f32 %v669, %v685
        %v687 = vmul.f32 %v670, %v685
        %v688 = vadd.f32 %v682, %v686
        %v689 = vadd.f32 %v683, %v687
        %s690 = sld [smem:[#allocation9 + $0x3]]
        %v691 = vstv %s690
        %v692 = vmul.f32 %v672, %v691
        %v693 = vmul.f32 %v673, %v691
        %v694 = vadd.f32 %v688, %v692
        %v695 = vadd.f32 %v689, %v693
        %s696 = sld [smem:[#allocation10]]
        %v697 = vstv %s696
        %v698 = vadd.f32 %v694, %v697
        %v699 = vadd.f32 %v695, %v697
        %v700 = vmul.f32 %v698, 0.70710677
        %v701 = vmul.f32 %v699, 0.70710677
        %v702 = vand.u32 2147483647, %v700
        %v703 = vand.u32 2147483647, %v701
        %vm704 = vcmp.ge.f32.partialorder %v700, 0.0
        %vm705 = vcmp.ge.f32.partialorder %v701, 0.0
        %v706 = vsel %vm704, 1.0, -1.0
        %v707 = vsel %vm705, 1.0, -1.0
        %v708 = vmul.f32 %v702, 0.3275911
        %v709 = vmul.f32 %v703, 0.3275911
        %v710 = vadd.f32 %v708, 1.0
        %v711 = vadd.f32 %v709, 1.0
        %v712 = vrcp.pop %v710
        %v713 = vrcp.pop %v711
        %v714 = vmul.f32 %v710, %v712
        %v715 = vmul.f32 %v711, %v713
        %v716 = vsub.f32 2.0, %v714
        %v717 = vsub.f32 2.0, %v715
        %v718 = vmul.f32 %v712, %v716
        %v719 = vmul.f32 %v713, %v717
        %v720 = vmul.f32 %v718, 1.0614054
        %v721 = vmul.f32 %v719, 1.0614054
        %v722 = vadd.f32 %v720, -1.4531521
        %v723 = vadd.f32 %v721, -1.4531521
        %v724 = vmul.f32 %v718, %v722
        %v725 = vmul.f32 %v719, %v723
        %v726 = vadd.f32 %v724, 1.4214138
        %v727 = vadd.f32 %v725, 1.4214138
        %v728 = vmul.f32 %v718, %v726
        %v729 = vmul.f32 %v719, %v727
        %v730 = vadd.f32 %v728, -0.28449672
        %v731 = vadd.f32 %v729, -0.28449672
        %v732 = vmul.f32 %v718, %v730
        %v733 = vmul.f32 %v719, %v731
        %v734 = vadd.f32 %v732, 0.2548296
        %v735 = vadd.f32 %v733, 0.2548296
        %v736 = vmul.f32 %v718, %v734
        %v737 = vmul.f32 %v719, %v735
        %v738 = vsub.f32 0.0, %v702
        %v739 = vsub.f32 0.0, %v703
        %v740 = vmul.f32 %v738, %v702
        %v741 = vmul.f32 %v739, %v703
        %v742 = vmul.f32 %v740, 1.442695
        %v743 = vpow.pop %v742
        %v744 = vmul.f32 %v741, 1.442695
        %v745 = vpow.pop %v744
        %v746 = vmul.f32 %v736, %v743
        %v747 = vmul.f32 %v737, %v745
        %v748 = vsub.f32 1.0, %v746
        %v749 = vsub.f32 1.0, %v747
        %v750 = vmul.f32 %v706, %v748
        %v751 = vmul.f32 %v707, %v749
        %v752 = vmul.f32 %v698, 0.5
        %v753 = vmul.f32 %v699, 0.5
        %v754 = vadd.f32 %v750, 1.0
        %v755 = vadd.f32 %v751, 1.0
        %v756 = vmul.f32 %v752, %v754
        %v757 = vmul.f32 %v753, %v755
        %760 = vrot.lane.b32.xlu0 %v756, 2
        %v761 = vpop.permute.xlu0 %760
        %762 = vrot.lane.b32.xlu0 %v757, 2
        %v763 = vpop.permute.xlu0 %762
        %vm766 = vcmask 146448
        %767 = vst.msk [vmem:[#allocation2 + $0x2] sm:$0xff] %vm766, %v761
        %768 = vst.msk [vmem:[#allocation2 + $0xa] sm:$0xff] %vm766, %v763
        %s769 = sld [smem:[#allocation9 + $0x80]]
        %v770 = vstv %s769
        %v771 = vmul.f32 %v663, %v770
        %v772 = vmul.f32 %v664, %v770
        %s773 = sld [smem:[#allocation9 + $0x81]]
        %v774 = vstv %s773
        %v775 = vmul.f32 %v666, %v774
        %v776 = vmul.f32 %v667, %v774
        %v777 = vadd.f32 %v771, %v775
        %v778 = vadd.f32 %v772, %v776
        %s779 = sld [smem:[#allocation9 + $0x82]]
        %v780 = vstv %s779
        %v781 = vmul.f32 %v669, %v780
        %v782 = vmul.f32 %v670, %v780
        %v783 = vadd.f32 %v777, %v781
        %v784 = vadd.f32 %v778, %v782
        %s785 = sld [smem:[#allocation9 + $0x83]]
        %v786 = vstv %s785
        %v787 = vmul.f32 %v672, %v786
        %v788 = vmul.f32 %v673, %v786
        %v789 = vadd.f32 %v783, %v787
        %v790 = vadd.f32 %v784, %v788
        %s791 = sld [smem:[#allocation10 + $0x1]]
        %v792 = vstv %s791
        %v793 = vadd.f32 %v789, %v792
        %v794 = vadd.f32 %v790, %v792
        %v795 = vmul.f32 %v793, 0.70710677
        %v796 = vmul.f32 %v794, 0.70710677
        %v797 = vand.u32 2147483647, %v795
        %v798 = vand.u32 2147483647, %v796
        %vm799 = vcmp.ge.f32.partialorder %v795, 0.0
        %vm800 = vcmp.ge.f32.partialorder %v796, 0.0
        %v801 = vsel %vm799, 1.0, -1.0
        %v802 = vsel %vm800, 1.0, -1.0
        %v803 = vmul.f32 %v797, 0.3275911
        %v804 = vmul.f32 %v798, 0.3275911
        %v805 = vadd.f32 %v803, 1.0
        %v806 = vadd.f32 %v804, 1.0
        %v807 = vrcp.pop %v805
        %v808 = vrcp.pop %v806
        %v809 = vmul.f32 %v805, %v807
        %v810 = vmul.f32 %v806, %v808
        %v811 = vsub.f32 2.0, %v809
        %v812 = vsub.f32 2.0, %v810
        %v813 = vmul.f32 %v807, %v811
        %v814 = vmul.f32 %v808, %v812
        %v815 = vmul.f32 %v813, 1.0614054
        %v816 = vmul.f32 %v814, 1.0614054
        %v817 = vadd.f32 %v815, -1.4531521
        %v818 = vadd.f32 %v816, -1.4531521
        %v819 = vmul.f32 %v813, %v817
        %v820 = vmul.f32 %v814, %v818
        %v821 = vadd.f32 %v819, 1.4214138
        %v822 = vadd.f32 %v820, 1.4214138
        %v823 = vmul.f32 %v813, %v821
        %v824 = vmul.f32 %v814, %v822
        %v825 = vadd.f32 %v823, -0.28449672
        %v826 = vadd.f32 %v824, -0.28449672
        %v827 = vmul.f32 %v813, %v825
        %v828 = vmul.f32 %v814, %v826
        %v829 = vadd.f32 %v827, 0.2548296
        %v830 = vadd.f32 %v828, 0.2548296
        %v831 = vmul.f32 %v813, %v829
        %v832 = vmul.f32 %v814, %v830
        %v833 = vsub.f32 0.0, %v797
        %v834 = vsub.f32 0.0, %v798
        %v835 = vmul.f32 %v833, %v797
        %v836 = vmul.f32 %v834, %v798
        %v837 = vmul.f32 %v835, 1.442695
        %v838 = vpow.pop %v837
        %v839 = vmul.f32 %v836, 1.442695
        %v840 = vpow.pop %v839
        %v841 = vmul.f32 %v831, %v838
        %v842 = vmul.f32 %v832, %v840
        %v843 = vsub.f32 1.0, %v841
        %v844 = vsub.f32 1.0, %v842
        %v845 = vmul.f32 %v801, %v843
        %v846 = vmul.f32 %v802, %v844
        %v847 = vmul.f32 %v793, 0.5
        %v848 = vmul.f32 %v794, 0.5
        %v849 = vadd.f32 %v845, 1.0
        %v850 = vadd.f32 %v846, 1.0
        %v851 = vmul.f32 %v847, %v849
        %v852 = vmul.f32 %v848, %v850
        %855 = vrot.lane.b32.xlu0 %v851, 2
        %v856 = vpop.permute.xlu0 %855
        %857 = vrot.lane.b32.xlu0 %v852, 2
        %v858 = vpop.permute.xlu0 %857
        %s861 = scalar_lea.vmem [#allocation2], 24
        %862 = vst.msk [vmem:[%s861 + $0x2] sm:$0xff] %vm766, %v856
        %863 = vst.msk [vmem:[%s861 + $0xa] sm:$0xff] %vm766, %v858
        %s864 = sld [smem:[#allocation9 + $0x100]]
        %v865 = vstv %s864
        %v866 = vmul.f32 %v663, %v865
        %v867 = vmul.f32 %v664, %v865
        %s868 = sld [smem:[#allocation9 + $0x101]]
        %v869 = vstv %s868
        %v870 = vmul.f32 %v666, %v869
        %v871 = vmul.f32 %v667, %v869
        %v872 = vadd.f32 %v866, %v870
        %v873 = vadd.f32 %v867, %v871
        %s874 = sld [smem:[#allocation9 + $0x102]]
        %v875 = vstv %s874
        %v876 = vmul.f32 %v669, %v875
        %v877 = vmul.f32 %v670, %v875
        %v878 = vadd.f32 %v872, %v876
        %v879 = vadd.f32 %v873, %v877
        %s880 = sld [smem:[#allocation9 + $0x103]]
        %v881 = vstv %s880
        %v882 = vmul.f32 %v672, %v881
        %v883 = vmul.f32 %v673, %v881
        %v884 = vadd.f32 %v878, %v882
        %v885 = vadd.f32 %v879, %v883
        %s886 = sld [smem:[#allocation10 + $0x2]]
        %v887 = vstv %s886
        %v888 = vadd.f32 %v884, %v887
        %v889 = vadd.f32 %v885, %v887
        %v890 = vmul.f32 %v888, 0.70710677
        %v891 = vmul.f32 %v889, 0.70710677
        %v892 = vand.u32 2147483647, %v890
        %v893 = vand.u32 2147483647, %v891
        %vm894 = vcmp.ge.f32.partialorder %v890, 0.0
        %vm895 = vcmp.ge.f32.partialorder %v891, 0.0
        %v896 = vsel %vm894, 1.0, -1.0
        %v897 = vsel %vm895, 1.0, -1.0
        %v898 = vmul.f32 %v892, 0.3275911
        %v899 = vmul.f32 %v893, 0.3275911
        %v900 = vadd.f32 %v898, 1.0
        %v901 = vadd.f32 %v899, 1.0
        %v902 = vrcp.pop %v900
        %v903 = vrcp.pop %v901
        %v904 = vmul.f32 %v900, %v902
        %v905 = vmul.f32 %v901, %v903
        %v906 = vsub.f32 2.0, %v904
        %v907 = vsub.f32 2.0, %v905
        %v908 = vmul.f32 %v902, %v906
        %v909 = vmul.f32 %v903, %v907
        %v910 = vmul.f32 %v908, 1.0614054
        %v911 = vmul.f32 %v909, 1.0614054
        %v912 = vadd.f32 %v910, -1.4531521
        %v913 = vadd.f32 %v911, -1.4531521
        %v914 = vmul.f32 %v908, %v912
        %v915 = vmul.f32 %v909, %v913
        %v916 = vadd.f32 %v914, 1.4214138
        %v917 = vadd.f32 %v915, 1.4214138
        %v918 = vmul.f32 %v908, %v916
        %v919 = vmul.f32 %v909, %v917
        %v920 = vadd.f32 %v918, -0.28449672
        %v921 = vadd.f32 %v919, -0.28449672
        %v922 = vmul.f32 %v908, %v920
        %v923 = vmul.f32 %v909, %v921
        %v924 = vadd.f32 %v922, 0.2548296
        %v925 = vadd.f32 %v923, 0.2548296
        %v926 = vmul.f32 %v908, %v924
        %v927 = vmul.f32 %v909, %v925
        %v928 = vsub.f32 0.0, %v892
        %v929 = vsub.f32 0.0, %v893
        %v930 = vmul.f32 %v928, %v892
        %v931 = vmul.f32 %v929, %v893
        %v932 = vmul.f32 %v930, 1.442695
        %v933 = vpow.pop %v932
        %v934 = vmul.f32 %v931, 1.442695
        %v935 = vpow.pop %v934
        %v936 = vmul.f32 %v926, %v933
        %v937 = vmul.f32 %v927, %v935
        %v938 = vsub.f32 1.0, %v936
        %v939 = vsub.f32 1.0, %v937
        %v940 = vmul.f32 %v896, %v938
        %v941 = vmul.f32 %v897, %v939
        %v942 = vmul.f32 %v888, 0.5
        %v943 = vmul.f32 %v889, 0.5
        %v944 = vadd.f32 %v940, 1.0
        %v945 = vadd.f32 %v941, 1.0
        %v946 = vmul.f32 %v942, %v944
        %v947 = vmul.f32 %v943, %v945
        %950 = vrot.lane.b32.xlu0 %v946, 2
        %v951 = vpop.permute.xlu0 %950
        %952 = vrot.lane.b32.xlu0 %v947, 2
        %v953 = vpop.permute.xlu0 %952
        %s956 = scalar_lea.vmem [#allocation2], 48
        %957 = vst.msk [vmem:[%s956 + $0x2] sm:$0xff] %vm766, %v951
        %958 = vst.msk [vmem:[%s956 + $0xa] sm:$0xff] %vm766, %v953
        %s959 = sld [smem:[#allocation9 + $0x180]]
        %v960 = vstv %s959
        %v961 = vmul.f32 %v663, %v960
        %v962 = vmul.f32 %v664, %v960
        %s963 = sld [smem:[#allocation9 + $0x181]]
        %v964 = vstv %s963
        %v965 = vmul.f32 %v666, %v964
        %v966 = vmul.f32 %v667, %v964
        %v967 = vadd.f32 %v961, %v965
        %v968 = vadd.f32 %v962, %v966
        %s969 = sld [smem:[#allocation9 + $0x182]]
        %v970 = vstv %s969
        %v971 = vmul.f32 %v669, %v970
        %v972 = vmul.f32 %v670, %v970
        %v973 = vadd.f32 %v967, %v971
        %v974 = vadd.f32 %v968, %v972
        %s975 = sld [smem:[#allocation9 + $0x183]]
        %v976 = vstv %s975
        %v977 = vmul.f32 %v672, %v976
        %v978 = vmul.f32 %v673, %v976
        %v979 = vadd.f32 %v973, %v977
        %v980 = vadd.f32 %v974, %v978
        %s981 = sld [smem:[#allocation10 + $0x3]]
        %v982 = vstv %s981
        %v983 = vadd.f32 %v979, %v982
        %v984 = vadd.f32 %v980, %v982
        %v985 = vmul.f32 %v983, 0.70710677
        %v986 = vmul.f32 %v984, 0.70710677
        %v987 = vand.u32 2147483647, %v985
        %v988 = vand.u32 2147483647, %v986
        %vm989 = vcmp.ge.f32.partialorder %v985, 0.0
        %vm990 = vcmp.ge.f32.partialorder %v986, 0.0
        %v991 = vsel %vm989, 1.0, -1.0
        %v992 = vsel %vm990, 1.0, -1.0
        %v993 = vmul.f32 %v987, 0.3275911
        %v994 = vmul.f32 %v988, 0.3275911
        %v995 = vadd.f32 %v993, 1.0
        %v996 = vadd.f32 %v994, 1.0
        %v997 = vrcp.pop %v995
        %v998 = vrcp.pop %v996
        %v999 = vmul.f32 %v995, %v997
        %v1000 = vmul.f32 %v996, %v998
        %v1001 = vsub.f32 2.0, %v999
        %v1002 = vsub.f32 2.0, %v1000
        %v1003 = vmul.f32 %v997, %v1001
        %v1004 = vmul.f32 %v998, %v1002
        %v1005 = vmul.f32 %v1003, 1.0614054
        %v1006 = vmul.f32 %v1004, 1.0614054
        %v1007 = vadd.f32 %v1005, -1.4531521
        %v1008 = vadd.f32 %v1006, -1.4531521
        %v1009 = vmul.f32 %v1003, %v1007
        %v1010 = vmul.f32 %v1004, %v1008
        %v1011 = vadd.f32 %v1009, 1.4214138
        %v1012 = vadd.f32 %v1010, 1.4214138
        %v1013 = vmul.f32 %v1003, %v1011
        %v1014 = vmul.f32 %v1004, %v1012
        %v1015 = vadd.f32 %v1013, -0.28449672
        %v1016 = vadd.f32 %v1014, -0.28449672
        %v1017 = vmul.f32 %v1003, %v1015
        %v1018 = vmul.f32 %v1004, %v1016
        %v1019 = vadd.f32 %v1017, 0.2548296
        %v1020 = vadd.f32 %v1018, 0.2548296
        %v1021 = vmul.f32 %v1003, %v1019
        %v1022 = vmul.f32 %v1004, %v1020
        %v1023 = vsub.f32 0.0, %v987
        %v1024 = vsub.f32 0.0, %v988
        %v1025 = vmul.f32 %v1023, %v987
        %v1026 = vmul.f32 %v1024, %v988
        %v1027 = vmul.f32 %v1025, 1.442695
        %v1028 = vpow.pop %v1027
        %v1029 = vmul.f32 %v1026, 1.442695
        %v1030 = vpow.pop %v1029
        %v1031 = vmul.f32 %v1021, %v1028
        %v1032 = vmul.f32 %v1022, %v1030
        %v1033 = vsub.f32 1.0, %v1031
        %v1034 = vsub.f32 1.0, %v1032
        %v1035 = vmul.f32 %v991, %v1033
        %v1036 = vmul.f32 %v992, %v1034
        %v1037 = vmul.f32 %v983, 0.5
        %v1038 = vmul.f32 %v984, 0.5
        %v1039 = vadd.f32 %v1035, 1.0
        %v1040 = vadd.f32 %v1036, 1.0
        %v1041 = vmul.f32 %v1037, %v1039
        %v1042 = vmul.f32 %v1038, %v1040
        %1045 = vrot.lane.b32.xlu0 %v1041, 2
        %v1046 = vpop.permute.xlu0 %1045
        %1047 = vrot.lane.b32.xlu0 %v1042, 2
        %v1048 = vpop.permute.xlu0 %1047
        %s1051 = scalar_lea.vmem [#allocation2], 72
        %1052 = vst.msk [vmem:[%s1051 + $0x2] sm:$0xff] %vm766, %v1046
        %1053 = vst.msk [vmem:[%s1051 + $0xa] sm:$0xff] %vm766, %v1048
        %v1054 = vld [vmem:[#allocation2] sm:$0xff]
        %v1055 = vld [vmem:[#allocation2 + $0x8] sm:$0xff]
        %s1056 = sld [smem:[#allocation12]]
        %v1057 = vstv %s1056
        %v1058 = vmul.f32 %v1054, %v1057
        %v1059 = vmul.f32 %v1055, %v1057
        %v1060 = vadd.f32 %v1058, 0.0
        %v1061 = vadd.f32 %v1059, 0.0
        %s1062 = sld [smem:[#allocation12 + $0x1]]
        %v1063 = vstv %s1062
        %v1064 = vmul.f32 %v1054, %v1063
        %v1065 = vmul.f32 %v1055, %v1063
        %1068 = vrot.lane.b32.xlu0 %v1064, 127
        %v1069 = vpop.permute.xlu0 %1068
        %1070 = vrot.lane.b32.xlu0 %v1065, 127
        %v1071 = vpop.permute.xlu0 %1070
        %v1074 = vadd.f32 %v1060, %v1069
        %v1075 = vadd.f32 %v1061, %v1071
        %s1076 = sld [smem:[#allocation12 + $0x2]]
        %v1077 = vstv %s1076
        %v1078 = vmul.f32 %v1054, %v1077
        %v1079 = vmul.f32 %v1055, %v1077
        %1082 = vrot.lane.b32.xlu0 %v1078, 126
        %v1083 = vpop.permute.xlu0 %1082
        %1084 = vrot.lane.b32.xlu0 %v1079, 126
        %v1085 = vpop.permute.xlu0 %1084
        %v1088 = vadd.f32 %v1074, %v1083
        %v1089 = vadd.f32 %v1075, %v1085
        %s1090 = sld [smem:[#allocation12 + $0x3]]
        %v1091 = vstv %s1090
        %v1092 = vmul.f32 %v1054, %v1091
        %v1093 = vmul.f32 %v1055, %v1091
        %1096 = vrot.lane.b32.xlu0 %v1092, 125
        %v1097 = vpop.permute.xlu0 %1096
        %1098 = vrot.lane.b32.xlu0 %v1093, 125
        %v1099 = vpop.permute.xlu0 %1098
        %v1102 = vadd.f32 %v1088, %v1097
        %v1103 = vadd.f32 %v1089, %v1099
        %s1104 = sld [smem:[#allocation12 + $0x4]]
        %v1105 = vstv %s1104
        %v1106 = vmul.f32 %v1054, %v1105
        %v1107 = vmul.f32 %v1055, %v1105
        %1110 = vrot.lane.b32.xlu0 %v1106, 124
        %v1111 = vpop.permute.xlu0 %1110
        %1112 = vrot.lane.b32.xlu0 %v1107, 124
        %v1113 = vpop.permute.xlu0 %1112
        %v1116 = vadd.f32 %v1102, %v1111
        %v1117 = vadd.f32 %v1103, %v1113
        %v1118 = vld [vmem:[#allocation2 + $0x1] sm:$0xff]
        %v1119 = vld [vmem:[#allocation2 + $0x9] sm:$0xff]
        %s1120 = sld [smem:[#allocation12 + $0x5]]
        %v1121 = vstv %s1120
        %v1122 = vmul.f32 %v1118, %v1121
        %v1123 = vmul.f32 %v1119, %v1121
        %v1124 = vadd.f32 %v1116, %v1122
        %v1125 = vadd.f32 %v1117, %v1123
        %s1126 = sld [smem:[#allocation12 + $0x6]]
        %v1127 = vstv %s1126
        %v1128 = vmul.f32 %v1118, %v1127
        %v1129 = vmul.f32 %v1119, %v1127
        %1132 = vrot.lane.b32.xlu0 %v1128, 127
        %v1133 = vpop.permute.xlu0 %1132
        %1134 = vrot.lane.b32.xlu0 %v1129, 127
        %v1135 = vpop.permute.xlu0 %1134
        %v1138 = vadd.f32 %v1124, %v1133
        %v1139 = vadd.f32 %v1125, %v1135
        %s1140 = sld [smem:[#allocation12 + $0x7]]
        %v1141 = vstv %s1140
        %v1142 = vmul.f32 %v1118, %v1141
        %v1143 = vmul.f32 %v1119, %v1141
        %1146 = vrot.lane.b32.xlu0 %v1142, 126
        %v1147 = vpop.permute.xlu0 %1146
        %1148 = vrot.lane.b32.xlu0 %v1143, 126
        %v1149 = vpop.permute.xlu0 %1148
        %v1152 = vadd.f32 %v1138, %v1147
        %v1153 = vadd.f32 %v1139, %v1149
        %s1154 = sld [smem:[#allocation12 + $0x8]]
        %v1155 = vstv %s1154
        %v1156 = vmul.f32 %v1118, %v1155
        %v1157 = vmul.f32 %v1119, %v1155
        %1160 = vrot.lane.b32.xlu0 %v1156, 125
        %v1161 = vpop.permute.xlu0 %1160
        %1162 = vrot.lane.b32.xlu0 %v1157, 125
        %v1163 = vpop.permute.xlu0 %1162
        %v1166 = vadd.f32 %v1152, %v1161
        %v1167 = vadd.f32 %v1153, %v1163
        %s1168 = sld [smem:[#allocation12 + $0x9]]
        %v1169 = vstv %s1168
        %v1170 = vmul.f32 %v1118, %v1169
        %v1171 = vmul.f32 %v1119, %v1169
        %1174 = vrot.lane.b32.xlu0 %v1170, 124
        %v1175 = vpop.permute.xlu0 %1174
        %1176 = vrot.lane.b32.xlu0 %v1171, 124
        %v1177 = vpop.permute.xlu0 %1176
        %v1180 = vadd.f32 %v1166, %v1175
        %v1181 = vadd.f32 %v1167, %v1177
        %v1182 = vld [vmem:[#allocation2 + $0x2] sm:$0xff]
        %v1183 = vld [vmem:[#allocation2 + $0xa] sm:$0xff]
        %s1184 = sld [smem:[#allocation12 + $0xa]]
        %v1185 = vstv %s1184
        %v1186 = vmul.f32 %v1182, %v1185
        %v1187 = vmul.f32 %v1183, %v1185
        %v1188 = vadd.f32 %v1180, %v1186
        %v1189 = vadd.f32 %v1181, %v1187
        %s1190 = sld [smem:[#allocation12 + $0xb]]
        %v1191 = vstv %s1190
        %v1192 = vmul.f32 %v1182, %v1191
        %v1193 = vmul.f32 %v1183, %v1191
        %1196 = vrot.lane.b32.xlu0 %v1192, 127
        %v1197 = vpop.permute.xlu0 %1196
        %1198 = vrot.lane.b32.xlu0 %v1193, 127
        %v1199 = vpop.permute.xlu0 %1198
        %v1202 = vadd.f32 %v1188, %v1197
        %v1203 = vadd.f32 %v1189, %v1199
        %s1204 = sld [smem:[#allocation12 + $0xc]]
        %v1205 = vstv %s1204
        %v1206 = vmul.f32 %v1182, %v1205
        %v1207 = vmul.f32 %v1183, %v1205
        %1210 = vrot.lane.b32.xlu0 %v1206, 126
        %v1211 = vpop.permute.xlu0 %1210
        %1212 = vrot.lane.b32.xlu0 %v1207, 126
        %v1213 = vpop.permute.xlu0 %1212
        %v1216 = vadd.f32 %v1202, %v1211
        %v1217 = vadd.f32 %v1203, %v1213
        %s1218 = sld [smem:[#allocation12 + $0xd]]
        %v1219 = vstv %s1218
        %v1220 = vmul.f32 %v1182, %v1219
        %v1221 = vmul.f32 %v1183, %v1219
        %1224 = vrot.lane.b32.xlu0 %v1220, 125
        %v1225 = vpop.permute.xlu0 %1224
        %1226 = vrot.lane.b32.xlu0 %v1221, 125
        %v1227 = vpop.permute.xlu0 %1226
        %v1230 = vadd.f32 %v1216, %v1225
        %v1231 = vadd.f32 %v1217, %v1227
        %s1232 = sld [smem:[#allocation12 + $0xe]]
        %v1233 = vstv %s1232
        %v1234 = vmul.f32 %v1182, %v1233
        %v1235 = vmul.f32 %v1183, %v1233
        %1238 = vrot.lane.b32.xlu0 %v1234, 124
        %v1239 = vpop.permute.xlu0 %1238
        %1240 = vrot.lane.b32.xlu0 %v1235, 124
        %v1241 = vpop.permute.xlu0 %1240
        %v1244 = vadd.f32 %v1230, %v1239
        %v1245 = vadd.f32 %v1231, %v1241
        %v1246 = vld [vmem:[#allocation2 + $0x3] sm:$0xff]
        %v1247 = vld [vmem:[#allocation2 + $0xb] sm:$0xff]
        %s1248 = sld [smem:[#allocation12 + $0xf]]
        %v1249 = vstv %s1248
        %v1250 = vmul.f32 %v1246, %v1249
        %v1251 = vmul.f32 %v1247, %v1249
        %v1252 = vadd.f32 %v1244, %v1250
        %v1253 = vadd.f32 %v1245, %v1251
        %s1254 = sld [smem:[#allocation12 + $0x10]]
        %v1255 = vstv %s1254
        %v1256 = vmul.f32 %v1246, %v1255
        %v1257 = vmul.f32 %v1247, %v1255
        %1260 = vrot.lane.b32.xlu0 %v1256, 127
        %v1261 = vpop.permute.xlu0 %1260
        %1262 = vrot.lane.b32.xlu0 %v1257, 127
        %v1263 = vpop.permute.xlu0 %1262
        %v1266 = vadd.f32 %v1252, %v1261
        %v1267 = vadd.f32 %v1253, %v1263
        %s1268 = sld [smem:[#allocation12 + $0x11]]
        %v1269 = vstv %s1268
        %v1270 = vmul.f32 %v1246, %v1269
        %v1271 = vmul.f32 %v1247, %v1269
        %1274 = vrot.lane.b32.xlu0 %v1270, 126
        %v1275 = vpop.permute.xlu0 %1274
        %1276 = vrot.lane.b32.xlu0 %v1271, 126
        %v1277 = vpop.permute.xlu0 %1276
        %v1280 = vadd.f32 %v1266, %v1275
        %v1281 = vadd.f32 %v1267, %v1277
        %s1282 = sld [smem:[#allocation12 + $0x12]]
        %v1283 = vstv %s1282
        %v1284 = vmul.f32 %v1246, %v1283
        %v1285 = vmul.f32 %v1247, %v1283
        %1288 = vrot.lane.b32.xlu0 %v1284, 125
        %v1289 = vpop.permute.xlu0 %1288
        %1290 = vrot.lane.b32.xlu0 %v1285, 125
        %v1291 = vpop.permute.xlu0 %1290
        %v1294 = vadd.f32 %v1280, %v1289
        %v1295 = vadd.f32 %v1281, %v1291
        %s1296 = sld [smem:[#allocation12 + $0x13]]
        %v1297 = vstv %s1296
        %v1298 = vmul.f32 %v1246, %v1297
        %v1299 = vmul.f32 %v1247, %v1297
        %1302 = vrot.lane.b32.xlu0 %v1298, 124
        %v1303 = vpop.permute.xlu0 %1302
        %1304 = vrot.lane.b32.xlu0 %v1299, 124
        %v1305 = vpop.permute.xlu0 %1304
        %v1308 = vadd.f32 %v1294, %v1303
        %v1309 = vadd.f32 %v1295, %v1305
        %v1310 = vld [vmem:[#allocation2 + $0x4] sm:$0xff]
        %v1311 = vld [vmem:[#allocation2 + $0xc] sm:$0xff]
        %s1312 = sld [smem:[#allocation12 + $0x14]]
        %v1313 = vstv %s1312
        %v1314 = vmul.f32 %v1310, %v1313
        %v1315 = vmul.f32 %v1311, %v1313
        %v1316 = vadd.f32 %v1308, %v1314
        %v1317 = vadd.f32 %v1309, %v1315
        %s1318 = sld [smem:[#allocation12 + $0x15]]
        %v1319 = vstv %s1318
        %v1320 = vmul.f32 %v1310, %v1319
        %v1321 = vmul.f32 %v1311, %v1319
        %1324 = vrot.lane.b32.xlu0 %v1320, 127
        %v1325 = vpop.permute.xlu0 %1324
        %1326 = vrot.lane.b32.xlu0 %v1321, 127
        %v1327 = vpop.permute.xlu0 %1326
        %v1330 = vadd.f32 %v1316, %v1325
        %v1331 = vadd.f32 %v1317, %v1327
        %s1332 = sld [smem:[#allocation12 + $0x16]]
        %v1333 = vstv %s1332
        %v1334 = vmul.f32 %v1310, %v1333
        %v1335 = vmul.f32 %v1311, %v1333
        %1338 = vrot.lane.b32.xlu0 %v1334, 126
        %v1339 = vpop.permute.xlu0 %1338
        %1340 = vrot.lane.b32.xlu0 %v1335, 126
        %v1341 = vpop.permute.xlu0 %1340
        %v1344 = vadd.f32 %v1330, %v1339
        %v1345 = vadd.f32 %v1331, %v1341
        %s1346 = sld [smem:[#allocation12 + $0x17]]
        %v1347 = vstv %s1346
        %v1348 = vmul.f32 %v1310, %v1347
        %v1349 = vmul.f32 %v1311, %v1347
        %1352 = vrot.lane.b32.xlu0 %v1348, 125
        %v1353 = vpop.permute.xlu0 %1352
        %1354 = vrot.lane.b32.xlu0 %v1349, 125
        %v1355 = vpop.permute.xlu0 %1354
        %v1358 = vadd.f32 %v1344, %v1353
        %v1359 = vadd.f32 %v1345, %v1355
        %s1360 = sld [smem:[#allocation12 + $0x18]]
        %v1361 = vstv %s1360
        %v1362 = vmul.f32 %v1310, %v1361
        %v1363 = vmul.f32 %v1311, %v1361
        %1366 = vrot.lane.b32.xlu0 %v1362, 124
        %v1367 = vpop.permute.xlu0 %1366
        %1368 = vrot.lane.b32.xlu0 %v1363, 124
        %v1369 = vpop.permute.xlu0 %1368
        %v1372 = vadd.f32 %v1358, %v1367
        %v1373 = vadd.f32 %v1359, %v1369
        %s1374 = sld [smem:[#allocation13]]
        %v1375 = vstv %s1374
        %v1376 = vadd.f32 %v1372, %v1375
        %v1377 = vadd.f32 %v1373, %v1375
        %1380 = vrot.lane.b32.xlu0 %v1376, 9
        %v1381 = vpop.permute.xlu0 %1380
        %1382 = vrot.lane.b32.xlu0 %v1377, 9
        %v1383 = vpop.permute.xlu0 %1382
        %vm1386 = vcmask 203848
        %1387 = vst.msk [vmem:[#allocation3 + $0x9] sm:$0xff] %vm1386, %v1381
        %1388 = vst.msk [vmem:[#allocation3 + $0x11] sm:$0xff] %vm1386, %v1383
        %v1389 = vld [vmem:[%s861] sm:$0xff]
        %v1390 = vld [vmem:[%s861 + $0x8] sm:$0xff]
        %s1391 = sld [smem:[#allocation12 + $0x80]]
        %v1392 = vstv %s1391
        %v1393 = vmul.f32 %v1389, %v1392
        %v1394 = vmul.f32 %v1390, %v1392
        %v1395 = vadd.f32 %v1393, 0.0
        %v1396 = vadd.f32 %v1394, 0.0
        %s1397 = sld [smem:[#allocation12 + $0x81]]
        %v1398 = vstv %s1397
        %v1399 = vmul.f32 %v1389, %v1398
        %v1400 = vmul.f32 %v1390, %v1398
        %1403 = vrot.lane.b32.xlu0 %v1399, 127
        %v1404 = vpop.permute.xlu0 %1403
        %1405 = vrot.lane.b32.xlu0 %v1400, 127
        %v1406 = vpop.permute.xlu0 %1405
        %v1409 = vadd.f32 %v1395, %v1404
        %v1410 = vadd.f32 %v1396, %v1406
        %s1411 = sld [smem:[#allocation12 + $0x82]]
        %v1412 = vstv %s1411
        %v1413 = vmul.f32 %v1389, %v1412
        %v1414 = vmul.f32 %v1390, %v1412
        %1417 = vrot.lane.b32.xlu0 %v1413, 126
        %v1418 = vpop.permute.xlu0 %1417
        %1419 = vrot.lane.b32.xlu0 %v1414, 126
        %v1420 = vpop.permute.xlu0 %1419
        %v1423 = vadd.f32 %v1409, %v1418
        %v1424 = vadd.f32 %v1410, %v1420
        %s1425 = sld [smem:[#allocation12 + $0x83]]
        %v1426 = vstv %s1425
        %v1427 = vmul.f32 %v1389, %v1426
        %v1428 = vmul.f32 %v1390, %v1426
        %1431 = vrot.lane.b32.xlu0 %v1427, 125
        %v1432 = vpop.permute.xlu0 %1431
        %1433 = vrot.lane.b32.xlu0 %v1428, 125
        %v1434 = vpop.permute.xlu0 %1433
        %v1437 = vadd.f32 %v1423, %v1432
        %v1438 = vadd.f32 %v1424, %v1434
        %s1439 = sld [smem:[#allocation12 + $0x84]]
        %v1440 = vstv %s1439
        %v1441 = vmul.f32 %v1389, %v1440
        %v1442 = vmul.f32 %v1390, %v1440
        %1445 = vrot.lane.b32.xlu0 %v1441, 124
        %v1446 = vpop.permute.xlu0 %1445
        %1447 = vrot.lane.b32.xlu0 %v1442, 124
        %v1448 = vpop.permute.xlu0 %1447
        %v1451 = vadd.f32 %v1437, %v1446
        %v1452 = vadd.f32 %v1438, %v1448
        %v1453 = vld [vmem:[%s861 + $0x1] sm:$0xff]
        %v1454 = vld [vmem:[%s861 + $0x9] sm:$0xff]
        %s1455 = sld [smem:[#allocation12 + $0x85]]
        %v1456 = vstv %s1455
        %v1457 = vmul.f32 %v1453, %v1456
        %v1458 = vmul.f32 %v1454, %v1456
        %v1459 = vadd.f32 %v1451, %v1457
        %v1460 = vadd.f32 %v1452, %v1458
        %s1461 = sld [smem:[#allocation12 + $0x86]]
        %v1462 = vstv %s1461
        %v1463 = vmul.f32 %v1453, %v1462
        %v1464 = vmul.f32 %v1454, %v1462
        %1467 = vrot.lane.b32.xlu0 %v1463, 127
        %v1468 = vpop.permute.xlu0 %1467
        %1469 = vrot.lane.b32.xlu0 %v1464, 127
        %v1470 = vpop.permute.xlu0 %1469
        %v1473 = vadd.f32 %v1459, %v1468
        %v1474 = vadd.f32 %v1460, %v1470
        %s1475 = sld [smem:[#allocation12 + $0x87]]
        %v1476 = vstv %s1475
        %v1477 = vmul.f32 %v1453, %v1476
        %v1478 = vmul.f32 %v1454, %v1476
        %1481 = vrot.lane.b32.xlu0 %v1477, 126
        %v1482 = vpop.permute.xlu0 %1481
        %1483 = vrot.lane.b32.xlu0 %v1478, 126
        %v1484 = vpop.permute.xlu0 %1483
        %v1487 = vadd.f32 %v1473, %v1482
        %v1488 = vadd.f32 %v1474, %v1484
        %s1489 = sld [smem:[#allocation12 + $0x88]]
        %v1490 = vstv %s1489
        %v1491 = vmul.f32 %v1453, %v1490
        %v1492 = vmul.f32 %v1454, %v1490
        %1495 = vrot.lane.b32.xlu0 %v1491, 125
        %v1496 = vpop.permute.xlu0 %1495
        %1497 = vrot.lane.b32.xlu0 %v1492, 125
        %v1498 = vpop.permute.xlu0 %1497
        %v1501 = vadd.f32 %v1487, %v1496
        %v1502 = vadd.f32 %v1488, %v1498
        %s1503 = sld [smem:[#allocation12 + $0x89]]
        %v1504 = vstv %s1503
        %v1505 = vmul.f32 %v1453, %v1504
        %v1506 = vmul.f32 %v1454, %v1504
        %1509 = vrot.lane.b32.xlu0 %v1505, 124
        %v1510 = vpop.permute.xlu0 %1509
        %1511 = vrot.lane.b32.xlu0 %v1506, 124
        %v1512 = vpop.permute.xlu0 %1511
        %v1515 = vadd.f32 %v1501, %v1510
        %v1516 = vadd.f32 %v1502, %v1512
        %v1517 = vld [vmem:[%s861 + $0x2] sm:$0xff]
        %v1518 = vld [vmem:[%s861 + $0xa] sm:$0xff]
        %s1519 = sld [smem:[#allocation12 + $0x8a]]
        %v1520 = vstv %s1519
        %v1521 = vmul.f32 %v1517, %v1520
        %v1522 = vmul.f32 %v1518, %v1520
        %v1523 = vadd.f32 %v1515, %v1521
        %v1524 = vadd.f32 %v1516, %v1522
        %s1525 = sld [smem:[#allocation12 + $0x8b]]
        %v1526 = vstv %s1525
        %v1527 = vmul.f32 %v1517, %v1526
        %v1528 = vmul.f32 %v1518, %v1526
        %1531 = vrot.lane.b32.xlu0 %v1527, 127
        %v1532 = vpop.permute.xlu0 %1531
        %1533 = vrot.lane.b32.xlu0 %v1528, 127
        %v1534 = vpop.permute.xlu0 %1533
        %v1537 = vadd.f32 %v1523, %v1532
        %v1538 = vadd.f32 %v1524, %v1534
        %s1539 = sld [smem:[#allocation12 + $0x8c]]
        %v1540 = vstv %s1539
        %v1541 = vmul.f32 %v1517, %v1540
        %v1542 = vmul.f32 %v1518, %v1540
        %1545 = vrot.lane.b32.xlu0 %v1541, 126
        %v1546 = vpop.permute.xlu0 %1545
        %1547 = vrot.lane.b32.xlu0 %v1542, 126
        %v1548 = vpop.permute.xlu0 %1547
        %v1551 = vadd.f32 %v1537, %v1546
        %v1552 = vadd.f32 %v1538, %v1548
        %s1553 = sld [smem:[#allocation12 + $0x8d]]
        %v1554 = vstv %s1553
        %v1555 = vmul.f32 %v1517, %v1554
        %v1556 = vmul.f32 %v1518, %v1554
        %1559 = vrot.lane.b32.xlu0 %v1555, 125
        %v1560 = vpop.permute.xlu0 %1559
        %1561 = vrot.lane.b32.xlu0 %v1556, 125
        %v1562 = vpop.permute.xlu0 %1561
        %v1565 = vadd.f32 %v1551, %v1560
        %v1566 = vadd.f32 %v1552, %v1562
        %s1567 = sld [smem:[#allocation12 + $0x8e]]
        %v1568 = vstv %s1567
        %v1569 = vmul.f32 %v1517, %v1568
        %v1570 = vmul.f32 %v1518, %v1568
        %1573 = vrot.lane.b32.xlu0 %v1569, 124
        %v1574 = vpop.permute.xlu0 %1573
        %1575 = vrot.lane.b32.xlu0 %v1570, 124
        %v1576 = vpop.permute.xlu0 %1575
        %v1579 = vadd.f32 %v1565, %v1574
        %v1580 = vadd.f32 %v1566, %v1576
        %v1581 = vld [vmem:[%s861 + $0x3] sm:$0xff]
        %v1582 = vld [vmem:[%s861 + $0xb] sm:$0xff]
        %s1583 = sld [smem:[#allocation12 + $0x8f]]
        %v1584 = vstv %s1583
        %v1585 = vmul.f32 %v1581, %v1584
        %v1586 = vmul.f32 %v1582, %v1584
        %v1587 = vadd.f32 %v1579, %v1585
        %v1588 = vadd.f32 %v1580, %v1586
        %s1589 = sld [smem:[#allocation12 + $0x90]]
        %v1590 = vstv %s1589
        %v1591 = vmul.f32 %v1581, %v1590
        %v1592 = vmul.f32 %v1582, %v1590
        %1595 = vrot.lane.b32.xlu0 %v1591, 127
        %v1596 = vpop.permute.xlu0 %1595
        %1597 = vrot.lane.b32.xlu0 %v1592, 127
        %v1598 = vpop.permute.xlu0 %1597
        %v1601 = vadd.f32 %v1587, %v1596
        %v1602 = vadd.f32 %v1588, %v1598
        %s1603 = sld [smem:[#allocation12 + $0x91]]
        %v1604 = vstv %s1603
        %v1605 = vmul.f32 %v1581, %v1604
        %v1606 = vmul.f32 %v1582, %v1604
        %1609 = vrot.lane.b32.xlu0 %v1605, 126
        %v1610 = vpop.permute.xlu0 %1609
        %1611 = vrot.lane.b32.xlu0 %v1606, 126
        %v1612 = vpop.permute.xlu0 %1611
        %v1615 = vadd.f32 %v1601, %v1610
        %v1616 = vadd.f32 %v1602, %v1612
        %s1617 = sld [smem:[#allocation12 + $0x92]]
        %v1618 = vstv %s1617
        %v1619 = vmul.f32 %v1581, %v1618
        %v1620 = vmul.f32 %v1582, %v1618
        %1623 = vrot.lane.b32.xlu0 %v1619, 125
        %v1624 = vpop.permute.xlu0 %1623
        %1625 = vrot.lane.b32.xlu0 %v1620, 125
        %v1626 = vpop.permute.xlu0 %1625
        %v1629 = vadd.f32 %v1615, %v1624
        %v1630 = vadd.f32 %v1616, %v1626
        %s1631 = sld [smem:[#allocation12 + $0x93]]
        %v1632 = vstv %s1631
        %v1633 = vmul.f32 %v1581, %v1632
        %v1634 = vmul.f32 %v1582, %v1632
        %1637 = vrot.lane.b32.xlu0 %v1633, 124
        %v1638 = vpop.permute.xlu0 %1637
        %1639 = vrot.lane.b32.xlu0 %v1634, 124
        %v1640 = vpop.permute.xlu0 %1639
        %v1643 = vadd.f32 %v1629, %v1638
        %v1644 = vadd.f32 %v1630, %v1640
        %v1645 = vld [vmem:[%s861 + $0x4] sm:$0xff]
        %v1646 = vld [vmem:[%s861 + $0xc] sm:$0xff]
        %s1647 = sld [smem:[#allocation12 + $0x94]]
        %v1648 = vstv %s1647
        %v1649 = vmul.f32 %v1645, %v1648
        %v1650 = vmul.f32 %v1646, %v1648
        %v1651 = vadd.f32 %v1643, %v1649
        %v1652 = vadd.f32 %v1644, %v1650
        %s1653 = sld [smem:[#allocation12 + $0x95]]
        %v1654 = vstv %s1653
        %v1655 = vmul.f32 %v1645, %v1654
        %v1656 = vmul.f32 %v1646, %v1654
        %1659 = vrot.lane.b32.xlu0 %v1655, 127
        %v1660 = vpop.permute.xlu0 %1659
        %1661 = vrot.lane.b32.xlu0 %v1656, 127
        %v1662 = vpop.permute.xlu0 %1661
        %v1665 = vadd.f32 %v1651, %v1660
        %v1666 = vadd.f32 %v1652, %v1662
        %s1667 = sld [smem:[#allocation12 + $0x96]]
        %v1668 = vstv %s1667
        %v1669 = vmul.f32 %v1645, %v1668
        %v1670 = vmul.f32 %v1646, %v1668
        %1673 = vrot.lane.b32.xlu0 %v1669, 126
        %v1674 = vpop.permute.xlu0 %1673
        %1675 = vrot.lane.b32.xlu0 %v1670, 126
        %v1676 = vpop.permute.xlu0 %1675
        %v1679 = vadd.f32 %v1665, %v1674
        %v1680 = vadd.f32 %v1666, %v1676
        %s1681 = sld [smem:[#allocation12 + $0x97]]
        %v1682 = vstv %s1681
        %v1683 = vmul.f32 %v1645, %v1682
        %v1684 = vmul.f32 %v1646, %v1682
        %1687 = vrot.lane.b32.xlu0 %v1683, 125
        %v1688 = vpop.permute.xlu0 %1687
        %1689 = vrot.lane.b32.xlu0 %v1684, 125
        %v1690 = vpop.permute.xlu0 %1689
        %v1693 = vadd.f32 %v1679, %v1688
        %v1694 = vadd.f32 %v1680, %v1690
        %s1695 = sld [smem:[#allocation12 + $0x98]]
        %v1696 = vstv %s1695
        %v1697 = vmul.f32 %v1645, %v1696
        %v1698 = vmul.f32 %v1646, %v1696
        %1701 = vrot.lane.b32.xlu0 %v1697, 124
        %v1702 = vpop.permute.xlu0 %1701
        %1703 = vrot.lane.b32.xlu0 %v1698, 124
        %v1704 = vpop.permute.xlu0 %1703
        %v1707 = vadd.f32 %v1693, %v1702
        %v1708 = vadd.f32 %v1694, %v1704
        %s1709 = sld [smem:[#allocation13 + $0x1]]
        %v1710 = vstv %s1709
        %v1711 = vadd.f32 %v1707, %v1710
        %v1712 = vadd.f32 %v1708, %v1710
        %1715 = vrot.lane.b32.xlu0 %v1711, 9
        %v1716 = vpop.permute.xlu0 %1715
        %1717 = vrot.lane.b32.xlu0 %v1712, 9
        %v1718 = vpop.permute.xlu0 %1717
        %s1721 = scalar_lea.vmem [#allocation3], 40
        %1722 = vst.msk [vmem:[%s1721 + $0x9] sm:$0xff] %vm1386, %v1716
        %1723 = vst.msk [vmem:[%s1721 + $0x11] sm:$0xff] %vm1386, %v1718
        %v1724 = vld [vmem:[%s956] sm:$0xff]
        %v1725 = vld [vmem:[%s956 + $0x8] sm:$0xff]
        %s1726 = sld [smem:[#allocation12 + $0x100]]
        %v1727 = vstv %s1726
        %v1728 = vmul.f32 %v1724, %v1727
        %v1729 = vmul.f32 %v1725, %v1727
        %v1730 = vadd.f32 %v1728, 0.0
        %v1731 = vadd.f32 %v1729, 0.0
        %s1732 = sld [smem:[#allocation12 + $0x101]]
        %v1733 = vstv %s1732
        %v1734 = vmul.f32 %v1724, %v1733
        %v1735 = vmul.f32 %v1725, %v1733
        %1738 = vrot.lane.b32.xlu0 %v1734, 127
        %v1739 = vpop.permute.xlu0 %1738
        %1740 = vrot.lane.b32.xlu0 %v1735, 127
        %v1741 = vpop.permute.xlu0 %1740
        %v1744 = vadd.f32 %v1730, %v1739
        %v1745 = vadd.f32 %v1731, %v1741
        %s1746 = sld [smem:[#allocation12 + $0x102]]
        %v1747 = vstv %s1746
        %v1748 = vmul.f32 %v1724, %v1747
        %v1749 = vmul.f32 %v1725, %v1747
        %1752 = vrot.lane.b32.xlu0 %v1748, 126
        %v1753 = vpop.permute.xlu0 %1752
        %1754 = vrot.lane.b32.xlu0 %v1749, 126
        %v1755 = vpop.permute.xlu0 %1754
        %v1758 = vadd.f32 %v1744, %v1753
        %v1759 = vadd.f32 %v1745, %v1755
        %s1760 = sld [smem:[#allocation12 + $0x103]]
        %v1761 = vstv %s1760
        %v1762 = vmul.f32 %v1724, %v1761
        %v1763 = vmul.f32 %v1725, %v1761
        %1766 = vrot.lane.b32.xlu0 %v1762, 125
        %v1767 = vpop.permute.xlu0 %1766
        %1768 = vrot.lane.b32.xlu0 %v1763, 125
        %v1769 = vpop.permute.xlu0 %1768
        %v1772 = vadd.f32 %v1758, %v1767
        %v1773 = vadd.f32 %v1759, %v1769
        %s1774 = sld [smem:[#allocation12 + $0x104]]
        %v1775 = vstv %s1774
        %v1776 = vmul.f32 %v1724, %v1775
        %v1777 = vmul.f32 %v1725, %v1775
        %1780 = vrot.lane.b32.xlu0 %v1776, 124
        %v1781 = vpop.permute.xlu0 %1780
        %1782 = vrot.lane.b32.xlu0 %v1777, 124
        %v1783 = vpop.permute.xlu0 %1782
        %v1786 = vadd.f32 %v1772, %v1781
        %v1787 = vadd.f32 %v1773, %v1783
        %v1788 = vld [vmem:[%s956 + $0x1] sm:$0xff]
        %v1789 = vld [vmem:[%s956 + $0x9] sm:$0xff]
        %s1790 = sld [smem:[#allocation12 + $0x105]]
        %v1791 = vstv %s1790
        %v1792 = vmul.f32 %v1788, %v1791
        %v1793 = vmul.f32 %v1789, %v1791
        %v1794 = vadd.f32 %v1786, %v1792
        %v1795 = vadd.f32 %v1787, %v1793
        %s1796 = sld [smem:[#allocation12 + $0x106]]
        %v1797 = vstv %s1796
        %v1798 = vmul.f32 %v1788, %v1797
        %v1799 = vmul.f32 %v1789, %v1797
        %1802 = vrot.lane.b32.xlu0 %v1798, 127
        %v1803 = vpop.permute.xlu0 %1802
        %1804 = vrot.lane.b32.xlu0 %v1799, 127
        %v1805 = vpop.permute.xlu0 %1804
        %v1808 = vadd.f32 %v1794, %v1803
        %v1809 = vadd.f32 %v1795, %v1805
        %s1810 = sld [smem:[#allocation12 + $0x107]]
        %v1811 = vstv %s1810
        %v1812 = vmul.f32 %v1788, %v1811
        %v1813 = vmul.f32 %v1789, %v1811
        %1816 = vrot.lane.b32.xlu0 %v1812, 126
        %v1817 = vpop.permute.xlu0 %1816
        %1818 = vrot.lane.b32.xlu0 %v1813, 126
        %v1819 = vpop.permute.xlu0 %1818
        %v1822 = vadd.f32 %v1808, %v1817
        %v1823 = vadd.f32 %v1809, %v1819
        %s1824 = sld [smem:[#allocation12 + $0x108]]
        %v1825 = vstv %s1824
        %v1826 = vmul.f32 %v1788, %v1825
        %v1827 = vmul.f32 %v1789, %v1825
        %1830 = vrot.lane.b32.xlu0 %v1826, 125
        %v1831 = vpop.permute.xlu0 %1830
        %1832 = vrot.lane.b32.xlu0 %v1827, 125
        %v1833 = vpop.permute.xlu0 %1832
        %v1836 = vadd.f32 %v1822, %v1831
        %v1837 = vadd.f32 %v1823, %v1833
        %s1838 = sld [smem:[#allocation12 + $0x109]]
        %v1839 = vstv %s1838
        %v1840 = vmul.f32 %v1788, %v1839
        %v1841 = vmul.f32 %v1789, %v1839
        %1844 = vrot.lane.b32.xlu0 %v1840, 124
        %v1845 = vpop.permute.xlu0 %1844
        %1846 = vrot.lane.b32.xlu0 %v1841, 124
        %v1847 = vpop.permute.xlu0 %1846
        %v1850 = vadd.f32 %v1836, %v1845
        %v1851 = vadd.f32 %v1837, %v1847
        %v1852 = vld [vmem:[%s956 + $0x2] sm:$0xff]
        %v1853 = vld [vmem:[%s956 + $0xa] sm:$0xff]
        %s1854 = sld [smem:[#allocation12 + $0x10a]]
        %v1855 = vstv %s1854
        %v1856 = vmul.f32 %v1852, %v1855
        %v1857 = vmul.f32 %v1853, %v1855
        %v1858 = vadd.f32 %v1850, %v1856
        %v1859 = vadd.f32 %v1851, %v1857
        %s1860 = sld [smem:[#allocation12 + $0x10b]]
        %v1861 = vstv %s1860
        %v1862 = vmul.f32 %v1852, %v1861
        %v1863 = vmul.f32 %v1853, %v1861
        %1866 = vrot.lane.b32.xlu0 %v1862, 127
        %v1867 = vpop.permute.xlu0 %1866
        %1868 = vrot.lane.b32.xlu0 %v1863, 127
        %v1869 = vpop.permute.xlu0 %1868
        %v1872 = vadd.f32 %v1858, %v1867
        %v1873 = vadd.f32 %v1859, %v1869
        %s1874 = sld [smem:[#allocation12 + $0x10c]]
        %v1875 = vstv %s1874
        %v1876 = vmul.f32 %v1852, %v1875
        %v1877 = vmul.f32 %v1853, %v1875
        %1880 = vrot.lane.b32.xlu0 %v1876, 126
        %v1881 = vpop.permute.xlu0 %1880
        %1882 = vrot.lane.b32.xlu0 %v1877, 126
        %v1883 = vpop.permute.xlu0 %1882
        %v1886 = vadd.f32 %v1872, %v1881
        %v1887 = vadd.f32 %v1873, %v1883
        %s1888 = sld [smem:[#allocation12 + $0x10d]]
        %v1889 = vstv %s1888
        %v1890 = vmul.f32 %v1852, %v1889
        %v1891 = vmul.f32 %v1853, %v1889
        %1894 = vrot.lane.b32.xlu0 %v1890, 125
        %v1895 = vpop.permute.xlu0 %1894
        %1896 = vrot.lane.b32.xlu0 %v1891, 125
        %v1897 = vpop.permute.xlu0 %1896
        %v1900 = vadd.f32 %v1886, %v1895
        %v1901 = vadd.f32 %v1887, %v1897
        %s1902 = sld [smem:[#allocation12 + $0x10e]]
        %v1903 = vstv %s1902
        %v1904 = vmul.f32 %v1852, %v1903
        %v1905 = vmul.f32 %v1853, %v1903
        %1908 = vrot.lane.b32.xlu0 %v1904, 124
        %v1909 = vpop.permute.xlu0 %1908
        %1910 = vrot.lane.b32.xlu0 %v1905, 124
        %v1911 = vpop.permute.xlu0 %1910
        %v1914 = vadd.f32 %v1900, %v1909
        %v1915 = vadd.f32 %v1901, %v1911
        %v1916 = vld [vmem:[%s956 + $0x3] sm:$0xff]
        %v1917 = vld [vmem:[%s956 + $0xb] sm:$0xff]
        %s1918 = sld [smem:[#allocation12 + $0x10f]]
        %v1919 = vstv %s1918
        %v1920 = vmul.f32 %v1916, %v1919
        %v1921 = vmul.f32 %v1917, %v1919
        %v1922 = vadd.f32 %v1914, %v1920
        %v1923 = vadd.f32 %v1915, %v1921
        %s1924 = sld [smem:[#allocation12 + $0x110]]
        %v1925 = vstv %s1924
        %v1926 = vmul.f32 %v1916, %v1925
        %v1927 = vmul.f32 %v1917, %v1925
        %1930 = vrot.lane.b32.xlu0 %v1926, 127
        %v1931 = vpop.permute.xlu0 %1930
        %1932 = vrot.lane.b32.xlu0 %v1927, 127
        %v1933 = vpop.permute.xlu0 %1932
        %v1936 = vadd.f32 %v1922, %v1931
        %v1937 = vadd.f32 %v1923, %v1933
        %s1938 = sld [smem:[#allocation12 + $0x111]]
        %v1939 = vstv %s1938
        %v1940 = vmul.f32 %v1916, %v1939
        %v1941 = vmul.f32 %v1917, %v1939
        %1944 = vrot.lane.b32.xlu0 %v1940, 126
        %v1945 = vpop.permute.xlu0 %1944
        %1946 = vrot.lane.b32.xlu0 %v1941, 126
        %v1947 = vpop.permute.xlu0 %1946
        %v1950 = vadd.f32 %v1936, %v1945
        %v1951 = vadd.f32 %v1937, %v1947
        %s1952 = sld [smem:[#allocation12 + $0x112]]
        %v1953 = vstv %s1952
        %v1954 = vmul.f32 %v1916, %v1953
        %v1955 = vmul.f32 %v1917, %v1953
        %1958 = vrot.lane.b32.xlu0 %v1954, 125
        %v1959 = vpop.permute.xlu0 %1958
        %1960 = vrot.lane.b32.xlu0 %v1955, 125
        %v1961 = vpop.permute.xlu0 %1960
        %v1964 = vadd.f32 %v1950, %v1959
        %v1965 = vadd.f32 %v1951, %v1961
        %s1966 = sld [smem:[#allocation12 + $0x113]]
        %v1967 = vstv %s1966
        %v1968 = vmul.f32 %v1916, %v1967
        %v1969 = vmul.f32 %v1917, %v1967
        %1972 = vrot.lane.b32.xlu0 %v1968, 124
        %v1973 = vpop.permute.xlu0 %1972
        %1974 = vrot.lane.b32.xlu0 %v1969, 124
        %v1975 = vpop.permute.xlu0 %1974
        %v1978 = vadd.f32 %v1964, %v1973
        %v1979 = vadd.f32 %v1965, %v1975
        %v1980 = vld [vmem:[%s956 + $0x4] sm:$0xff]
        %v1981 = vld [vmem:[%s956 + $0xc] sm:$0xff]
        %s1982 = sld [smem:[#allocation12 + $0x114]]
        %v1983 = vstv %s1982
        %v1984 = vmul.f32 %v1980, %v1983
        %v1985 = vmul.f32 %v1981, %v1983
        %v1986 = vadd.f32 %v1978, %v1984
        %v1987 = vadd.f32 %v1979, %v1985
        %s1988 = sld [smem:[#allocation12 + $0x115]]
        %v1989 = vstv %s1988
        %v1990 = vmul.f32 %v1980, %v1989
        %v1991 = vmul.f32 %v1981, %v1989
        %1994 = vrot.lane.b32.xlu0 %v1990, 127
        %v1995 = vpop.permute.xlu0 %1994
        %1996 = vrot.lane.b32.xlu0 %v1991, 127
        %v1997 = vpop.permute.xlu0 %1996
        %v2000 = vadd.f32 %v1986, %v1995
        %v2001 = vadd.f32 %v1987, %v1997
        %s2002 = sld [smem:[#allocation12 + $0x116]]
        %v2003 = vstv %s2002
        %v2004 = vmul.f32 %v1980, %v2003
        %v2005 = vmul.f32 %v1981, %v2003
        %2008 = vrot.lane.b32.xlu0 %v2004, 126
        %v2009 = vpop.permute.xlu0 %2008
        %2010 = vrot.lane.b32.xlu0 %v2005, 126
        %v2011 = vpop.permute.xlu0 %2010
        %v2014 = vadd.f32 %v2000, %v2009
        %v2015 = vadd.f32 %v2001, %v2011
        %s2016 = sld [smem:[#allocation12 + $0x117]]
        %v2017 = vstv %s2016
        %v2018 = vmul.f32 %v1980, %v2017
        %v2019 = vmul.f32 %v1981, %v2017
        %2022 = vrot.lane.b32.xlu0 %v2018, 125
        %v2023 = vpop.permute.xlu0 %2022
        %2024 = vrot.lane.b32.xlu0 %v2019, 125
        %v2025 = vpop.permute.xlu0 %2024
        %v2028 = vadd.f32 %v2014, %v2023
        %v2029 = vadd.f32 %v2015, %v2025
        %s2030 = sld [smem:[#allocation12 + $0x118]]
        %v2031 = vstv %s2030
        %v2032 = vmul.f32 %v1980, %v2031
        %v2033 = vmul.f32 %v1981, %v2031
        %2036 = vrot.lane.b32.xlu0 %v2032, 124
        %v2037 = vpop.permute.xlu0 %2036
        %2038 = vrot.lane.b32.xlu0 %v2033, 124
        %v2039 = vpop.permute.xlu0 %2038
        %v2042 = vadd.f32 %v2028, %v2037
        %v2043 = vadd.f32 %v2029, %v2039
        %s2044 = sld [smem:[#allocation13 + $0x2]]
        %v2045 = vstv %s2044
        %v2046 = vadd.f32 %v2042, %v2045
        %v2047 = vadd.f32 %v2043, %v2045
        %2050 = vrot.lane.b32.xlu0 %v2046, 9
        %v2051 = vpop.permute.xlu0 %2050
        %2052 = vrot.lane.b32.xlu0 %v2047, 9
        %v2053 = vpop.permute.xlu0 %2052
        %s2056 = scalar_lea.vmem [#allocation3], 80
        %2057 = vst.msk [vmem:[%s2056 + $0x9] sm:$0xff] %vm1386, %v2051
        %2058 = vst.msk [vmem:[%s2056 + $0x11] sm:$0xff] %vm1386, %v2053
        %v2059 = vld [vmem:[%s1051] sm:$0xff]
        %v2060 = vld [vmem:[%s1051 + $0x8] sm:$0xff]
        %s2061 = sld [smem:[#allocation12 + $0x180]]
        %v2062 = vstv %s2061
        %v2063 = vmul.f32 %v2059, %v2062
        %v2064 = vmul.f32 %v2060, %v2062
        %v2065 = vadd.f32 %v2063, 0.0
        %v2066 = vadd.f32 %v2064, 0.0
        %s2067 = sld [smem:[#allocation12 + $0x181]]
        %v2068 = vstv %s2067
        %v2069 = vmul.f32 %v2059, %v2068
        %v2070 = vmul.f32 %v2060, %v2068
        %2073 = vrot.lane.b32.xlu0 %v2069, 127
        %v2074 = vpop.permute.xlu0 %2073
        %2075 = vrot.lane.b32.xlu0 %v2070, 127
        %v2076 = vpop.permute.xlu0 %2075
        %v2079 = vadd.f32 %v2065, %v2074
        %v2080 = vadd.f32 %v2066, %v2076
        %s2081 = sld [smem:[#allocation12 + $0x182]]
        %v2082 = vstv %s2081
        %v2083 = vmul.f32 %v2059, %v2082
        %v2084 = vmul.f32 %v2060, %v2082
        %2087 = vrot.lane.b32.xlu0 %v2083, 126
        %v2088 = vpop.permute.xlu0 %2087
        %2089 = vrot.lane.b32.xlu0 %v2084, 126
        %v2090 = vpop.permute.xlu0 %2089
        %v2093 = vadd.f32 %v2079, %v2088
        %v2094 = vadd.f32 %v2080, %v2090
        %s2095 = sld [smem:[#allocation12 + $0x183]]
        %v2096 = vstv %s2095
        %v2097 = vmul.f32 %v2059, %v2096
        %v2098 = vmul.f32 %v2060, %v2096
        %2101 = vrot.lane.b32.xlu0 %v2097, 125
        %v2102 = vpop.permute.xlu0 %2101
        %2103 = vrot.lane.b32.xlu0 %v2098, 125
        %v2104 = vpop.permute.xlu0 %2103
        %v2107 = vadd.f32 %v2093, %v2102
        %v2108 = vadd.f32 %v2094, %v2104
        %s2109 = sld [smem:[#allocation12 + $0x184]]
        %v2110 = vstv %s2109
        %v2111 = vmul.f32 %v2059, %v2110
        %v2112 = vmul.f32 %v2060, %v2110
        %2115 = vrot.lane.b32.xlu0 %v2111, 124
        %v2116 = vpop.permute.xlu0 %2115
        %2117 = vrot.lane.b32.xlu0 %v2112, 124
        %v2118 = vpop.permute.xlu0 %2117
        %v2121 = vadd.f32 %v2107, %v2116
        %v2122 = vadd.f32 %v2108, %v2118
        %v2123 = vld [vmem:[%s1051 + $0x1] sm:$0xff]
        %v2124 = vld [vmem:[%s1051 + $0x9] sm:$0xff]
        %s2125 = sld [smem:[#allocation12 + $0x185]]
        %v2126 = vstv %s2125
        %v2127 = vmul.f32 %v2123, %v2126
        %v2128 = vmul.f32 %v2124, %v2126
        %v2129 = vadd.f32 %v2121, %v2127
        %v2130 = vadd.f32 %v2122, %v2128
        %s2131 = sld [smem:[#allocation12 + $0x186]]
        %v2132 = vstv %s2131
        %v2133 = vmul.f32 %v2123, %v2132
        %v2134 = vmul.f32 %v2124, %v2132
        %2137 = vrot.lane.b32.xlu0 %v2133, 127
        %v2138 = vpop.permute.xlu0 %2137
        %2139 = vrot.lane.b32.xlu0 %v2134, 127
        %v2140 = vpop.permute.xlu0 %2139
        %v2143 = vadd.f32 %v2129, %v2138
        %v2144 = vadd.f32 %v2130, %v2140
        %s2145 = sld [smem:[#allocation12 + $0x187]]
        %v2146 = vstv %s2145
        %v2147 = vmul.f32 %v2123, %v2146
        %v2148 = vmul.f32 %v2124, %v2146
        %2151 = vrot.lane.b32.xlu0 %v2147, 126
        %v2152 = vpop.permute.xlu0 %2151
        %2153 = vrot.lane.b32.xlu0 %v2148, 126
        %v2154 = vpop.permute.xlu0 %2153
        %v2157 = vadd.f32 %v2143, %v2152
        %v2158 = vadd.f32 %v2144, %v2154
        %s2159 = sld [smem:[#allocation12 + $0x188]]
        %v2160 = vstv %s2159
        %v2161 = vmul.f32 %v2123, %v2160
        %v2162 = vmul.f32 %v2124, %v2160
        %2165 = vrot.lane.b32.xlu0 %v2161, 125
        %v2166 = vpop.permute.xlu0 %2165
        %2167 = vrot.lane.b32.xlu0 %v2162, 125
        %v2168 = vpop.permute.xlu0 %2167
        %v2171 = vadd.f32 %v2157, %v2166
        %v2172 = vadd.f32 %v2158, %v2168
        %s2173 = sld [smem:[#allocation12 + $0x189]]
        %v2174 = vstv %s2173
        %v2175 = vmul.f32 %v2123, %v2174
        %v2176 = vmul.f32 %v2124, %v2174
        %2179 = vrot.lane.b32.xlu0 %v2175, 124
        %v2180 = vpop.permute.xlu0 %2179
        %2181 = vrot.lane.b32.xlu0 %v2176, 124
        %v2182 = vpop.permute.xlu0 %2181
        %v2185 = vadd.f32 %v2171, %v2180
        %v2186 = vadd.f32 %v2172, %v2182
        %v2187 = vld [vmem:[%s1051 + $0x2] sm:$0xff]
        %v2188 = vld [vmem:[%s1051 + $0xa] sm:$0xff]
        %s2189 = sld [smem:[#allocation12 + $0x18a]]
        %v2190 = vstv %s2189
        %v2191 = vmul.f32 %v2187, %v2190
        %v2192 = vmul.f32 %v2188, %v2190
        %v2193 = vadd.f32 %v2185, %v2191
        %v2194 = vadd.f32 %v2186, %v2192
        %s2195 = sld [smem:[#allocation12 + $0x18b]]
        %v2196 = vstv %s2195
        %v2197 = vmul.f32 %v2187, %v2196
        %v2198 = vmul.f32 %v2188, %v2196
        %2201 = vrot.lane.b32.xlu0 %v2197, 127
        %v2202 = vpop.permute.xlu0 %2201
        %2203 = vrot.lane.b32.xlu0 %v2198, 127
        %v2204 = vpop.permute.xlu0 %2203
        %v2207 = vadd.f32 %v2193, %v2202
        %v2208 = vadd.f32 %v2194, %v2204
        %s2209 = sld [smem:[#allocation12 + $0x18c]]
        %v2210 = vstv %s2209
        %v2211 = vmul.f32 %v2187, %v2210
        %v2212 = vmul.f32 %v2188, %v2210
        %2215 = vrot.lane.b32.xlu0 %v2211, 126
        %v2216 = vpop.permute.xlu0 %2215
        %2217 = vrot.lane.b32.xlu0 %v2212, 126
        %v2218 = vpop.permute.xlu0 %2217
        %v2221 = vadd.f32 %v2207, %v2216
        %v2222 = vadd.f32 %v2208, %v2218
        %s2223 = sld [smem:[#allocation12 + $0x18d]]
        %v2224 = vstv %s2223
        %v2225 = vmul.f32 %v2187, %v2224
        %v2226 = vmul.f32 %v2188, %v2224
        %2229 = vrot.lane.b32.xlu0 %v2225, 125
        %v2230 = vpop.permute.xlu0 %2229
        %2231 = vrot.lane.b32.xlu0 %v2226, 125
        %v2232 = vpop.permute.xlu0 %2231
        %v2235 = vadd.f32 %v2221, %v2230
        %v2236 = vadd.f32 %v2222, %v2232
        %s2237 = sld [smem:[#allocation12 + $0x18e]]
        %v2238 = vstv %s2237
        %v2239 = vmul.f32 %v2187, %v2238
        %v2240 = vmul.f32 %v2188, %v2238
        %2243 = vrot.lane.b32.xlu0 %v2239, 124
        %v2244 = vpop.permute.xlu0 %2243
        %2245 = vrot.lane.b32.xlu0 %v2240, 124
        %v2246 = vpop.permute.xlu0 %2245
        %v2249 = vadd.f32 %v2235, %v2244
        %v2250 = vadd.f32 %v2236, %v2246
        %v2251 = vld [vmem:[%s1051 + $0x3] sm:$0xff]
        %v2252 = vld [vmem:[%s1051 + $0xb] sm:$0xff]
        %s2253 = sld [smem:[#allocation12 + $0x18f]]
        %v2254 = vstv %s2253
        %v2255 = vmul.f32 %v2251, %v2254
        %v2256 = vmul.f32 %v2252, %v2254
        %v2257 = vadd.f32 %v2249, %v2255
        %v2258 = vadd.f32 %v2250, %v2256
        %s2259 = sld [smem:[#allocation12 + $0x190]]
        %v2260 = vstv %s2259
        %v2261 = vmul.f32 %v2251, %v2260
        %v2262 = vmul.f32 %v2252, %v2260
        %2265 = vrot.lane.b32.xlu0 %v2261, 127
        %v2266 = vpop.permute.xlu0 %2265
        %2267 = vrot.lane.b32.xlu0 %v2262, 127
        %v2268 = vpop.permute.xlu0 %2267
        %v2271 = vadd.f32 %v2257, %v2266
        %v2272 = vadd.f32 %v2258, %v2268
        %s2273 = sld [smem:[#allocation12 + $0x191]]
        %v2274 = vstv %s2273
        %v2275 = vmul.f32 %v2251, %v2274
        %v2276 = vmul.f32 %v2252, %v2274
        %2279 = vrot.lane.b32.xlu0 %v2275, 126
        %v2280 = vpop.permute.xlu0 %2279
        %2281 = vrot.lane.b32.xlu0 %v2276, 126
        %v2282 = vpop.permute.xlu0 %2281
        %v2285 = vadd.f32 %v2271, %v2280
        %v2286 = vadd.f32 %v2272, %v2282
        %s2287 = sld [smem:[#allocation12 + $0x192]]
        %v2288 = vstv %s2287
        %v2289 = vmul.f32 %v2251, %v2288
        %v2290 = vmul.f32 %v2252, %v2288
        %2293 = vrot.lane.b32.xlu0 %v2289, 125
        %v2294 = vpop.permute.xlu0 %2293
        %2295 = vrot.lane.b32.xlu0 %v2290, 125
        %v2296 = vpop.permute.xlu0 %2295
        %v2299 = vadd.f32 %v2285, %v2294
        %v2300 = vadd.f32 %v2286, %v2296
        %s2301 = sld [smem:[#allocation12 + $0x193]]
        %v2302 = vstv %s2301
        %v2303 = vmul.f32 %v2251, %v2302
        %v2304 = vmul.f32 %v2252, %v2302
        %2307 = vrot.lane.b32.xlu0 %v2303, 124
        %v2308 = vpop.permute.xlu0 %2307
        %2309 = vrot.lane.b32.xlu0 %v2304, 124
        %v2310 = vpop.permute.xlu0 %2309
        %v2313 = vadd.f32 %v2299, %v2308
        %v2314 = vadd.f32 %v2300, %v2310
        %v2315 = vld [vmem:[%s1051 + $0x4] sm:$0xff]
        %v2316 = vld [vmem:[%s1051 + $0xc] sm:$0xff]
        %s2317 = sld [smem:[#allocation12 + $0x194]]
        %v2318 = vstv %s2317
        %v2319 = vmul.f32 %v2315, %v2318
        %v2320 = vmul.f32 %v2316, %v2318
        %v2321 = vadd.f32 %v2313, %v2319
        %v2322 = vadd.f32 %v2314, %v2320
        %s2323 = sld [smem:[#allocation12 + $0x195]]
        %v2324 = vstv %s2323
        %v2325 = vmul.f32 %v2315, %v2324
        %v2326 = vmul.f32 %v2316, %v2324
        %2329 = vrot.lane.b32.xlu0 %v2325, 127
        %v2330 = vpop.permute.xlu0 %2329
        %2331 = vrot.lane.b32.xlu0 %v2326, 127
        %v2332 = vpop.permute.xlu0 %2331
        %v2335 = vadd.f32 %v2321, %v2330
        %v2336 = vadd.f32 %v2322, %v2332
        %s2337 = sld [smem:[#allocation12 + $0x196]]
        %v2338 = vstv %s2337
        %v2339 = vmul.f32 %v2315, %v2338
        %v2340 = vmul.f32 %v2316, %v2338
        %2343 = vrot.lane.b32.xlu0 %v2339, 126
        %v2344 = vpop.permute.xlu0 %2343
        %2345 = vrot.lane.b32.xlu0 %v2340, 126
        %v2346 = vpop.permute.xlu0 %2345
        %v2349 = vadd.f32 %v2335, %v2344
        %v2350 = vadd.f32 %v2336, %v2346
        %s2351 = sld [smem:[#allocation12 + $0x197]]
        %v2352 = vstv %s2351
        %v2353 = vmul.f32 %v2315, %v2352
        %v2354 = vmul.f32 %v2316, %v2352
        %2357 = vrot.lane.b32.xlu0 %v2353, 125
        %v2358 = vpop.permute.xlu0 %2357
        %2359 = vrot.lane.b32.xlu0 %v2354, 125
        %v2360 = vpop.permute.xlu0 %2359
        %v2363 = vadd.f32 %v2349, %v2358
        %v2364 = vadd.f32 %v2350, %v2360
        %s2365 = sld [smem:[#allocation12 + $0x198]]
        %v2366 = vstv %s2365
        %v2367 = vmul.f32 %v2315, %v2366
        %v2368 = vmul.f32 %v2316, %v2366
        %2371 = vrot.lane.b32.xlu0 %v2367, 124
        %v2372 = vpop.permute.xlu0 %2371
        %2373 = vrot.lane.b32.xlu0 %v2368, 124
        %v2374 = vpop.permute.xlu0 %2373
        %v2377 = vadd.f32 %v2363, %v2372
        %v2378 = vadd.f32 %v2364, %v2374
        %s2379 = sld [smem:[#allocation13 + $0x3]]
        %v2380 = vstv %s2379
        %v2381 = vadd.f32 %v2377, %v2380
        %v2382 = vadd.f32 %v2378, %v2380
        %2385 = vrot.lane.b32.xlu0 %v2381, 9
        %v2386 = vpop.permute.xlu0 %2385
        %2387 = vrot.lane.b32.xlu0 %v2382, 9
        %v2388 = vpop.permute.xlu0 %2387
        %s2391 = scalar_lea.vmem [#allocation3], 120
        %2392 = vst.msk [vmem:[%s2391 + $0x9] sm:$0xff] %vm1386, %v2386
        %2393 = vst.msk [vmem:[%s2391 + $0x11] sm:$0xff] %vm1386, %v2388
        %v2394 = vld [vmem:[#allocation3] sm:$0xff]
        %v2395 = vld [vmem:[#allocation3 + $0x8] sm:$0xff]
        %s2396 = sld [smem:[#allocation14]]
        %v2397 = vstv %s2396
        %v2398 = vmul.f32 %v2394, %v2397
        %v2399 = vmul.f32 %v2395, %v2397
        %v2400 = vadd.f32 %v2398, 0.0
        %v2401 = vadd.f32 %v2399, 0.0
        %s2402 = sld [smem:[#allocation14 + $0x1]]
        %v2403 = vstv %s2402
        %v2404 = vmul.f32 %v2394, %v2403
        %v2405 = vmul.f32 %v2395, %v2403
        %2408 = vrot.lane.b32.xlu0 %v2404, 125
        %v2409 = vpop.permute.xlu0 %2408
        %2410 = vrot.lane.b32.xlu0 %v2405, 125
        %v2411 = vpop.permute.xlu0 %2410
        %v2414 = vadd.f32 %v2400, %v2409
        %v2415 = vadd.f32 %v2401, %v2411
        %s2416 = sld [smem:[#allocation14 + $0x2]]
        %v2417 = vstv %s2416
        %v2418 = vmul.f32 %v2394, %v2417
        %v2419 = vmul.f32 %v2395, %v2417
        %2422 = vrot.lane.b32.xlu0 %v2418, 122
        %v2423 = vpop.permute.xlu0 %2422
        %2424 = vrot.lane.b32.xlu0 %v2419, 122
        %v2425 = vpop.permute.xlu0 %2424
        %v2428 = vadd.f32 %v2414, %v2423
        %v2429 = vadd.f32 %v2415, %v2425
        %s2430 = sld [smem:[#allocation14 + $0x3]]
        %v2431 = vstv %s2430
        %v2432 = vmul.f32 %v2394, %v2431
        %v2433 = vmul.f32 %v2395, %v2431
        %2436 = vrot.lane.b32.xlu0 %v2432, 119
        %v2437 = vpop.permute.xlu0 %2436
        %2438 = vrot.lane.b32.xlu0 %v2433, 119
        %v2439 = vpop.permute.xlu0 %2438
        %v2442 = vadd.f32 %v2428, %v2437
        %v2443 = vadd.f32 %v2429, %v2439
        %s2444 = sld [smem:[#allocation14 + $0x4]]
        %v2445 = vstv %s2444
        %v2446 = vmul.f32 %v2394, %v2445
        %v2447 = vmul.f32 %v2395, %v2445
        %2450 = vrot.lane.b32.xlu0 %v2446, 116
        %v2451 = vpop.permute.xlu0 %2450
        %2452 = vrot.lane.b32.xlu0 %v2447, 116
        %v2453 = vpop.permute.xlu0 %2452
        %v2456 = vadd.f32 %v2442, %v2451
        %v2457 = vadd.f32 %v2443, %v2453
        %s2458 = sld [smem:[#allocation14 + $0x5]]
        %v2459 = vstv %s2458
        %v2460 = vmul.f32 %v2394, %v2459
        %v2461 = vmul.f32 %v2395, %v2459
        %2464 = vrot.lane.b32.xlu0 %v2460, 113
        %v2465 = vpop.permute.xlu0 %2464
        %2466 = vrot.lane.b32.xlu0 %v2461, 113
        %v2467 = vpop.permute.xlu0 %2466
        %v2470 = vadd.f32 %v2456, %v2465
        %v2471 = vadd.f32 %v2457, %v2467
        %s2472 = sld [smem:[#allocation14 + $0x6]]
        %v2473 = vstv %s2472
        %v2474 = vmul.f32 %v2394, %v2473
        %v2475 = vmul.f32 %v2395, %v2473
        %2478 = vrot.lane.b32.xlu0 %v2474, 110
        %v2479 = vpop.permute.xlu0 %2478
        %2480 = vrot.lane.b32.xlu0 %v2475, 110
        %v2481 = vpop.permute.xlu0 %2480
        %v2484 = vadd.f32 %v2470, %v2479
        %v2485 = vadd.f32 %v2471, %v2481
        %v2486 = vld [vmem:[#allocation3 + $0x3] sm:$0xff]
        %v2487 = vld [vmem:[#allocation3 + $0xb] sm:$0xff]
        %s2488 = sld [smem:[#allocation14 + $0x7]]
        %v2489 = vstv %s2488
        %v2490 = vmul.f32 %v2486, %v2489
        %v2491 = vmul.f32 %v2487, %v2489
        %v2492 = vadd.f32 %v2484, %v2490
        %v2493 = vadd.f32 %v2485, %v2491
        %s2494 = sld [smem:[#allocation14 + $0x8]]
        %v2495 = vstv %s2494
        %v2496 = vmul.f32 %v2486, %v2495
        %v2497 = vmul.f32 %v2487, %v2495
        %2500 = vrot.lane.b32.xlu0 %v2496, 125
        %v2501 = vpop.permute.xlu0 %2500
        %2502 = vrot.lane.b32.xlu0 %v2497, 125
        %v2503 = vpop.permute.xlu0 %2502
        %v2506 = vadd.f32 %v2492, %v2501
        %v2507 = vadd.f32 %v2493, %v2503
        %s2508 = sld [smem:[#allocation14 + $0x9]]
        %v2509 = vstv %s2508
        %v2510 = vmul.f32 %v2486, %v2509
        %v2511 = vmul.f32 %v2487, %v2509
        %2514 = vrot.lane.b32.xlu0 %v2510, 122
        %v2515 = vpop.permute.xlu0 %2514
        %2516 = vrot.lane.b32.xlu0 %v2511, 122
        %v2517 = vpop.permute.xlu0 %2516
        %v2520 = vadd.f32 %v2506, %v2515
        %v2521 = vadd.f32 %v2507, %v2517
        %s2522 = sld [smem:[#allocation14 + $0xa]]
        %v2523 = vstv %s2522
        %v2524 = vmul.f32 %v2486, %v2523
        %v2525 = vmul.f32 %v2487, %v2523
        %2528 = vrot.lane.b32.xlu0 %v2524, 119
        %v2529 = vpop.permute.xlu0 %2528
        %2530 = vrot.lane.b32.xlu0 %v2525, 119
        %v2531 = vpop.permute.xlu0 %2530
        %v2534 = vadd.f32 %v2520, %v2529
        %v2535 = vadd.f32 %v2521, %v2531
        %s2536 = sld [smem:[#allocation14 + $0xb]]
        %v2537 = vstv %s2536
        %v2538 = vmul.f32 %v2486, %v2537
        %v2539 = vmul.f32 %v2487, %v2537
        %2542 = vrot.lane.b32.xlu0 %v2538, 116
        %v2543 = vpop.permute.xlu0 %2542
        %2544 = vrot.lane.b32.xlu0 %v2539, 116
        %v2545 = vpop.permute.xlu0 %2544
        %v2548 = vadd.f32 %v2534, %v2543
        %v2549 = vadd.f32 %v2535, %v2545
        %s2550 = sld [smem:[#allocation14 + $0xc]]
        %v2551 = vstv %s2550
        %v2552 = vmul.f32 %v2486, %v2551
        %v2553 = vmul.f32 %v2487, %v2551
        %2556 = vrot.lane.b32.xlu0 %v2552, 113
        %v2557 = vpop.permute.xlu0 %2556
        %2558 = vrot.lane.b32.xlu0 %v2553, 113
        %v2559 = vpop.permute.xlu0 %2558
        %v2562 = vadd.f32 %v2548, %v2557
        %v2563 = vadd.f32 %v2549, %v2559
        %s2564 = sld [smem:[#allocation14 + $0xd]]
        %v2565 = vstv %s2564
        %v2566 = vmul.f32 %v2486, %v2565
        %v2567 = vmul.f32 %v2487, %v2565
        %2570 = vrot.lane.b32.xlu0 %v2566, 110
        %v2571 = vpop.permute.xlu0 %2570
        %2572 = vrot.lane.b32.xlu0 %v2567, 110
        %v2573 = vpop.permute.xlu0 %2572
        %v2576 = vadd.f32 %v2562, %v2571
        %v2577 = vadd.f32 %v2563, %v2573
        %v2578 = vld [vmem:[#allocation3 + $0x6] sm:$0xff]
        %v2579 = vld [vmem:[#allocation3 + $0xe] sm:$0xff]
        %s2580 = sld [smem:[#allocation14 + $0xe]]
        %v2581 = vstv %s2580
        %v2582 = vmul.f32 %v2578, %v2581
        %v2583 = vmul.f32 %v2579, %v2581
        %v2584 = vadd.f32 %v2576, %v2582
        %v2585 = vadd.f32 %v2577, %v2583
        %s2586 = sld [smem:[#allocation14 + $0xf]]
        %v2587 = vstv %s2586
        %v2588 = vmul.f32 %v2578, %v2587
        %v2589 = vmul.f32 %v2579, %v2587
        %2592 = vrot.lane.b32.xlu0 %v2588, 125
        %v2593 = vpop.permute.xlu0 %2592
        %2594 = vrot.lane.b32.xlu0 %v2589, 125
        %v2595 = vpop.permute.xlu0 %2594
        %v2598 = vadd.f32 %v2584, %v2593
        %v2599 = vadd.f32 %v2585, %v2595
        %s2600 = sld [smem:[#allocation14 + $0x10]]
        %v2601 = vstv %s2600
        %v2602 = vmul.f32 %v2578, %v2601
        %v2603 = vmul.f32 %v2579, %v2601
        %2606 = vrot.lane.b32.xlu0 %v2602, 122
        %v2607 = vpop.permute.xlu0 %2606
        %2608 = vrot.lane.b32.xlu0 %v2603, 122
        %v2609 = vpop.permute.xlu0 %2608
        %v2612 = vadd.f32 %v2598, %v2607
        %v2613 = vadd.f32 %v2599, %v2609
        %s2614 = sld [smem:[#allocation14 + $0x11]]
        %v2615 = vstv %s2614
        %v2616 = vmul.f32 %v2578, %v2615
        %v2617 = vmul.f32 %v2579, %v2615
        %2620 = vrot.lane.b32.xlu0 %v2616, 119
        %v2621 = vpop.permute.xlu0 %2620
        %2622 = vrot.lane.b32.xlu0 %v2617, 119
        %v2623 = vpop.permute.xlu0 %2622
        %v2626 = vadd.f32 %v2612, %v2621
        %v2627 = vadd.f32 %v2613, %v2623
        %s2628 = sld [smem:[#allocation14 + $0x12]]
        %v2629 = vstv %s2628
        %v2630 = vmul.f32 %v2578, %v2629
        %v2631 = vmul.f32 %v2579, %v2629
        %2634 = vrot.lane.b32.xlu0 %v2630, 116
        %v2635 = vpop.permute.xlu0 %2634
        %2636 = vrot.lane.b32.xlu0 %v2631, 116
        %v2637 = vpop.permute.xlu0 %2636
        %v2640 = vadd.f32 %v2626, %v2635
        %v2641 = vadd.f32 %v2627, %v2637
        %s2642 = sld [smem:[#allocation14 + $0x13]]
        %v2643 = vstv %s2642
        %v2644 = vmul.f32 %v2578, %v2643
        %v2645 = vmul.f32 %v2579, %v2643
        %2648 = vrot.lane.b32.xlu0 %v2644, 113
        %v2649 = vpop.permute.xlu0 %2648
        %2650 = vrot.lane.b32.xlu0 %v2645, 113
        %v2651 = vpop.permute.xlu0 %2650
        %v2654 = vadd.f32 %v2640, %v2649
        %v2655 = vadd.f32 %v2641, %v2651
        %s2656 = sld [smem:[#allocation14 + $0x14]]
        %v2657 = vstv %s2656
        %v2658 = vmul.f32 %v2578, %v2657
        %v2659 = vmul.f32 %v2579, %v2657
        %2662 = vrot.lane.b32.xlu0 %v2658, 110
        %v2663 = vpop.permute.xlu0 %2662
        %2664 = vrot.lane.b32.xlu0 %v2659, 110
        %v2665 = vpop.permute.xlu0 %2664
        %v2668 = vadd.f32 %v2654, %v2663
        %v2669 = vadd.f32 %v2655, %v2665
        %v2670 = vld [vmem:[#allocation3 + $0x9] sm:$0xff]
        %v2671 = vld [vmem:[#allocation3 + $0x11] sm:$0xff]
        %s2672 = sld [smem:[#allocation14 + $0x15]]
        %v2673 = vstv %s2672
        %v2674 = vmul.f32 %v2670, %v2673
        %v2675 = vmul.f32 %v2671, %v2673
        %v2676 = vadd.f32 %v2668, %v2674
        %v2677 = vadd.f32 %v2669, %v2675
        %s2678 = sld [smem:[#allocation14 + $0x16]]
        %v2679 = vstv %s2678
        %v2680 = vmul.f32 %v2670, %v2679
        %v2681 = vmul.f32 %v2671, %v2679
        %2684 = vrot.lane.b32.xlu0 %v2680, 125
        %v2685 = vpop.permute.xlu0 %2684
        %2686 = vrot.lane.b32.xlu0 %v2681, 125
        %v2687 = vpop.permute.xlu0 %2686
        %v2690 = vadd.f32 %v2676, %v2685
        %v2691 = vadd.f32 %v2677, %v2687
        %s2692 = sld [smem:[#allocation14 + $0x17]]
        %v2693 = vstv %s2692
        %v2694 = vmul.f32 %v2670, %v2693
        %v2695 = vmul.f32 %v2671, %v2693
        %2698 = vrot.lane.b32.xlu0 %v2694, 122
        %v2699 = vpop.permute.xlu0 %2698
        %2700 = vrot.lane.b32.xlu0 %v2695, 122
        %v2701 = vpop.permute.xlu0 %2700
        %v2704 = vadd.f32 %v2690, %v2699
        %v2705 = vadd.f32 %v2691, %v2701
        %s2706 = sld [smem:[#allocation14 + $0x18]]
        %v2707 = vstv %s2706
        %v2708 = vmul.f32 %v2670, %v2707
        %v2709 = vmul.f32 %v2671, %v2707
        %2712 = vrot.lane.b32.xlu0 %v2708, 119
        %v2713 = vpop.permute.xlu0 %2712
        %2714 = vrot.lane.b32.xlu0 %v2709, 119
        %v2715 = vpop.permute.xlu0 %2714
        %v2718 = vadd.f32 %v2704, %v2713
        %v2719 = vadd.f32 %v2705, %v2715
        %s2720 = sld [smem:[#allocation14 + $0x19]]
        %v2721 = vstv %s2720
        %v2722 = vmul.f32 %v2670, %v2721
        %v2723 = vmul.f32 %v2671, %v2721
        %2726 = vrot.lane.b32.xlu0 %v2722, 116
        %v2727 = vpop.permute.xlu0 %2726
        %2728 = vrot.lane.b32.xlu0 %v2723, 116
        %v2729 = vpop.permute.xlu0 %2728
        %v2732 = vadd.f32 %v2718, %v2727
        %v2733 = vadd.f32 %v2719, %v2729
        %s2734 = sld [smem:[#allocation14 + $0x1a]]
        %v2735 = vstv %s2734
        %v2736 = vmul.f32 %v2670, %v2735
        %v2737 = vmul.f32 %v2671, %v2735
        %2740 = vrot.lane.b32.xlu0 %v2736, 113
        %v2741 = vpop.permute.xlu0 %2740
        %2742 = vrot.lane.b32.xlu0 %v2737, 113
        %v2743 = vpop.permute.xlu0 %2742
        %v2746 = vadd.f32 %v2732, %v2741
        %v2747 = vadd.f32 %v2733, %v2743
        %s2748 = sld [smem:[#allocation14 + $0x1b]]
        %v2749 = vstv %s2748
        %v2750 = vmul.f32 %v2670, %v2749
        %v2751 = vmul.f32 %v2671, %v2749
        %2754 = vrot.lane.b32.xlu0 %v2750, 110
        %v2755 = vpop.permute.xlu0 %2754
        %2756 = vrot.lane.b32.xlu0 %v2751, 110
        %v2757 = vpop.permute.xlu0 %2756
        %v2760 = vadd.f32 %v2746, %v2755
        %v2761 = vadd.f32 %v2747, %v2757
        %v2762 = vld [vmem:[#allocation3 + $0xc] sm:$0xff]
        %v2763 = vld [vmem:[#allocation3 + $0x14] sm:$0xff]
        %s2764 = sld [smem:[#allocation14 + $0x1c]]
        %v2765 = vstv %s2764
        %v2766 = vmul.f32 %v2762, %v2765
        %v2767 = vmul.f32 %v2763, %v2765
        %v2768 = vadd.f32 %v2760, %v2766
        %v2769 = vadd.f32 %v2761, %v2767
        %s2770 = sld [smem:[#allocation14 + $0x1d]]
        %v2771 = vstv %s2770
        %v2772 = vmul.f32 %v2762, %v2771
        %v2773 = vmul.f32 %v2763, %v2771
        %2776 = vrot.lane.b32.xlu0 %v2772, 125
        %v2777 = vpop.permute.xlu0 %2776
        %2778 = vrot.lane.b32.xlu0 %v2773, 125
        %v2779 = vpop.permute.xlu0 %2778
        %v2782 = vadd.f32 %v2768, %v2777
        %v2783 = vadd.f32 %v2769, %v2779
        %s2784 = sld [smem:[#allocation14 + $0x1e]]
        %v2785 = vstv %s2784
        %v2786 = vmul.f32 %v2762, %v2785
        %v2787 = vmul.f32 %v2763, %v2785
        %2790 = vrot.lane.b32.xlu0 %v2786, 122
        %v2791 = vpop.permute.xlu0 %2790
        %2792 = vrot.lane.b32.xlu0 %v2787, 122
        %v2793 = vpop.permute.xlu0 %2792
        %v2796 = vadd.f32 %v2782, %v2791
        %v2797 = vadd.f32 %v2783, %v2793
        %s2798 = sld [smem:[#allocation14 + $0x1f]]
        %v2799 = vstv %s2798
        %v2800 = vmul.f32 %v2762, %v2799
        %v2801 = vmul.f32 %v2763, %v2799
        %2804 = vrot.lane.b32.xlu0 %v2800, 119
        %v2805 = vpop.permute.xlu0 %2804
        %2806 = vrot.lane.b32.xlu0 %v2801, 119
        %v2807 = vpop.permute.xlu0 %2806
        %v2810 = vadd.f32 %v2796, %v2805
        %v2811 = vadd.f32 %v2797, %v2807
        %s2812 = sld [smem:[#allocation14 + $0x20]]
        %v2813 = vstv %s2812
        %v2814 = vmul.f32 %v2762, %v2813
        %v2815 = vmul.f32 %v2763, %v2813
        %2818 = vrot.lane.b32.xlu0 %v2814, 116
        %v2819 = vpop.permute.xlu0 %2818
        %2820 = vrot.lane.b32.xlu0 %v2815, 116
        %v2821 = vpop.permute.xlu0 %2820
        %v2824 = vadd.f32 %v2810, %v2819
        %v2825 = vadd.f32 %v2811, %v2821
        %s2826 = sld [smem:[#allocation14 + $0x21]]
        %v2827 = vstv %s2826
        %v2828 = vmul.f32 %v2762, %v2827
        %v2829 = vmul.f32 %v2763, %v2827
        %2832 = vrot.lane.b32.xlu0 %v2828, 113
        %v2833 = vpop.permute.xlu0 %2832
        %2834 = vrot.lane.b32.xlu0 %v2829, 113
        %v2835 = vpop.permute.xlu0 %2834
        %v2838 = vadd.f32 %v2824, %v2833
        %v2839 = vadd.f32 %v2825, %v2835
        %s2840 = sld [smem:[#allocation14 + $0x22]]
        %v2841 = vstv %s2840
        %v2842 = vmul.f32 %v2762, %v2841
        %v2843 = vmul.f32 %v2763, %v2841
        %2846 = vrot.lane.b32.xlu0 %v2842, 110
        %v2847 = vpop.permute.xlu0 %2846
        %2848 = vrot.lane.b32.xlu0 %v2843, 110
        %v2849 = vpop.permute.xlu0 %2848
        %v2852 = vadd.f32 %v2838, %v2847
        %v2853 = vadd.f32 %v2839, %v2849
        %v2854 = vld [vmem:[#allocation3 + $0xf] sm:$0xff]
        %v2855 = vld [vmem:[#allocation3 + $0x17] sm:$0xff]
        %s2856 = sld [smem:[#allocation14 + $0x23]]
        %v2857 = vstv %s2856
        %v2858 = vmul.f32 %v2854, %v2857
        %v2859 = vmul.f32 %v2855, %v2857
        %v2860 = vadd.f32 %v2852, %v2858
        %v2861 = vadd.f32 %v2853, %v2859
        %s2862 = sld [smem:[#allocation14 + $0x24]]
        %v2863 = vstv %s2862
        %v2864 = vmul.f32 %v2854, %v2863
        %v2865 = vmul.f32 %v2855, %v2863
        %2868 = vrot.lane.b32.xlu0 %v2864, 125
        %v2869 = vpop.permute.xlu0 %2868
        %2870 = vrot.lane.b32.xlu0 %v2865, 125
        %v2871 = vpop.permute.xlu0 %2870
        %v2874 = vadd.f32 %v2860, %v2869
        %v2875 = vadd.f32 %v2861, %v2871
        %s2876 = sld [smem:[#allocation14 + $0x25]]
        %v2877 = vstv %s2876
        %v2878 = vmul.f32 %v2854, %v2877
        %v2879 = vmul.f32 %v2855, %v2877
        %2882 = vrot.lane.b32.xlu0 %v2878, 122
        %v2883 = vpop.permute.xlu0 %2882
        %2884 = vrot.lane.b32.xlu0 %v2879, 122
        %v2885 = vpop.permute.xlu0 %2884
        %v2888 = vadd.f32 %v2874, %v2883
        %v2889 = vadd.f32 %v2875, %v2885
        %s2890 = sld [smem:[#allocation14 + $0x26]]
        %v2891 = vstv %s2890
        %v2892 = vmul.f32 %v2854, %v2891
        %v2893 = vmul.f32 %v2855, %v2891
        %2896 = vrot.lane.b32.xlu0 %v2892, 119
        %v2897 = vpop.permute.xlu0 %2896
        %2898 = vrot.lane.b32.xlu0 %v2893, 119
        %v2899 = vpop.permute.xlu0 %2898
        %v2902 = vadd.f32 %v2888, %v2897
        %v2903 = vadd.f32 %v2889, %v2899
        %s2904 = sld [smem:[#allocation14 + $0x27]]
        %v2905 = vstv %s2904
        %v2906 = vmul.f32 %v2854, %v2905
        %v2907 = vmul.f32 %v2855, %v2905
        %2910 = vrot.lane.b32.xlu0 %v2906, 116
        %v2911 = vpop.permute.xlu0 %2910
        %2912 = vrot.lane.b32.xlu0 %v2907, 116
        %v2913 = vpop.permute.xlu0 %2912
        %v2916 = vadd.f32 %v2902, %v2911
        %v2917 = vadd.f32 %v2903, %v2913
        %s2918 = sld [smem:[#allocation14 + $0x28]]
        %v2919 = vstv %s2918
        %v2920 = vmul.f32 %v2854, %v2919
        %v2921 = vmul.f32 %v2855, %v2919
        %2924 = vrot.lane.b32.xlu0 %v2920, 113
        %v2925 = vpop.permute.xlu0 %2924
        %2926 = vrot.lane.b32.xlu0 %v2921, 113
        %v2927 = vpop.permute.xlu0 %2926
        %v2930 = vadd.f32 %v2916, %v2925
        %v2931 = vadd.f32 %v2917, %v2927
        %s2932 = sld [smem:[#allocation14 + $0x29]]
        %v2933 = vstv %s2932
        %v2934 = vmul.f32 %v2854, %v2933
        %v2935 = vmul.f32 %v2855, %v2933
        %2938 = vrot.lane.b32.xlu0 %v2934, 110
        %v2939 = vpop.permute.xlu0 %2938
        %2940 = vrot.lane.b32.xlu0 %v2935, 110
        %v2941 = vpop.permute.xlu0 %2940
        %v2944 = vadd.f32 %v2930, %v2939
        %v2945 = vadd.f32 %v2931, %v2941
        %v2946 = vld [vmem:[#allocation3 + $0x12] sm:$0xff]
        %v2947 = vld [vmem:[#allocation3 + $0x1a] sm:$0xff]
        %s2948 = sld [smem:[#allocation14 + $0x2a]]
        %v2949 = vstv %s2948
        %v2950 = vmul.f32 %v2946, %v2949
        %v2951 = vmul.f32 %v2947, %v2949
        %v2952 = vadd.f32 %v2944, %v2950
        %v2953 = vadd.f32 %v2945, %v2951
        %s2954 = sld [smem:[#allocation14 + $0x2b]]
        %v2955 = vstv %s2954
        %v2956 = vmul.f32 %v2946, %v2955
        %v2957 = vmul.f32 %v2947, %v2955
        %2960 = vrot.lane.b32.xlu0 %v2956, 125
        %v2961 = vpop.permute.xlu0 %2960
        %2962 = vrot.lane.b32.xlu0 %v2957, 125
        %v2963 = vpop.permute.xlu0 %2962
        %v2966 = vadd.f32 %v2952, %v2961
        %v2967 = vadd.f32 %v2953, %v2963
        %s2968 = sld [smem:[#allocation14 + $0x2c]]
        %v2969 = vstv %s2968
        %v2970 = vmul.f32 %v2946, %v2969
        %v2971 = vmul.f32 %v2947, %v2969
        %2974 = vrot.lane.b32.xlu0 %v2970, 122
        %v2975 = vpop.permute.xlu0 %2974
        %2976 = vrot.lane.b32.xlu0 %v2971, 122
        %v2977 = vpop.permute.xlu0 %2976
        %v2980 = vadd.f32 %v2966, %v2975
        %v2981 = vadd.f32 %v2967, %v2977
        %s2982 = sld [smem:[#allocation14 + $0x2d]]
        %v2983 = vstv %s2982
        %v2984 = vmul.f32 %v2946, %v2983
        %v2985 = vmul.f32 %v2947, %v2983
        %2988 = vrot.lane.b32.xlu0 %v2984, 119
        %v2989 = vpop.permute.xlu0 %2988
        %2990 = vrot.lane.b32.xlu0 %v2985, 119
        %v2991 = vpop.permute.xlu0 %2990
        %v2994 = vadd.f32 %v2980, %v2989
        %v2995 = vadd.f32 %v2981, %v2991
        %s2996 = sld [smem:[#allocation14 + $0x2e]]
        %v2997 = vstv %s2996
        %v2998 = vmul.f32 %v2946, %v2997
        %v2999 = vmul.f32 %v2947, %v2997
        %3002 = vrot.lane.b32.xlu0 %v2998, 116
        %v3003 = vpop.permute.xlu0 %3002
        %3004 = vrot.lane.b32.xlu0 %v2999, 116
        %v3005 = vpop.permute.xlu0 %3004
        %v3008 = vadd.f32 %v2994, %v3003
        %v3009 = vadd.f32 %v2995, %v3005
        %s3010 = sld [smem:[#allocation14 + $0x2f]]
        %v3011 = vstv %s3010
        %v3012 = vmul.f32 %v2946, %v3011
        %v3013 = vmul.f32 %v2947, %v3011
        %3016 = vrot.lane.b32.xlu0 %v3012, 113
        %v3017 = vpop.permute.xlu0 %3016
        %3018 = vrot.lane.b32.xlu0 %v3013, 113
        %v3019 = vpop.permute.xlu0 %3018
        %v3022 = vadd.f32 %v3008, %v3017
        %v3023 = vadd.f32 %v3009, %v3019
        %s3024 = sld [smem:[#allocation14 + $0x30]]
        %v3025 = vstv %s3024
        %v3026 = vmul.f32 %v2946, %v3025
        %v3027 = vmul.f32 %v2947, %v3025
        %3030 = vrot.lane.b32.xlu0 %v3026, 110
        %v3031 = vpop.permute.xlu0 %3030
        %3032 = vrot.lane.b32.xlu0 %v3027, 110
        %v3033 = vpop.permute.xlu0 %3032
        %v3036 = vadd.f32 %v3022, %v3031
        %v3037 = vadd.f32 %v3023, %v3033
        %s3038 = sld [smem:[#allocation16]]
        %v3039 = vstv %s3038
        %v3040 = vadd.f32 %v3036, %v3039
        %v3041 = vadd.f32 %v3037, %v3039
        %v3042 = vld [vmem:[%s1721] sm:$0xff]
        %v3043 = vld [vmem:[%s1721 + $0x8] sm:$0xff]
        %s3044 = sld [smem:[#allocation14 + $0x80]]
        %v3045 = vstv %s3044
        %v3046 = vmul.f32 %v3042, %v3045
        %v3047 = vmul.f32 %v3043, %v3045
        %v3048 = vadd.f32 %v3046, 0.0
        %v3049 = vadd.f32 %v3047, 0.0
        %s3050 = sld [smem:[#allocation14 + $0x81]]
        %v3051 = vstv %s3050
        %v3052 = vmul.f32 %v3042, %v3051
        %v3053 = vmul.f32 %v3043, %v3051
        %3056 = vrot.lane.b32.xlu0 %v3052, 125
        %v3057 = vpop.permute.xlu0 %3056
        %3058 = vrot.lane.b32.xlu0 %v3053, 125
        %v3059 = vpop.permute.xlu0 %3058
        %v3062 = vadd.f32 %v3048, %v3057
        %v3063 = vadd.f32 %v3049, %v3059
        %s3064 = sld [smem:[#allocation14 + $0x82]]
        %v3065 = vstv %s3064
        %v3066 = vmul.f32 %v3042, %v3065
        %v3067 = vmul.f32 %v3043, %v3065
        %3070 = vrot.lane.b32.xlu0 %v3066, 122
        %v3071 = vpop.permute.xlu0 %3070
        %3072 = vrot.lane.b32.xlu0 %v3067, 122
        %v3073 = vpop.permute.xlu0 %3072
        %v3076 = vadd.f32 %v3062, %v3071
        %v3077 = vadd.f32 %v3063, %v3073
        %s3078 = sld [smem:[#allocation14 + $0x83]]
        %v3079 = vstv %s3078
        %v3080 = vmul.f32 %v3042, %v3079
        %v3081 = vmul.f32 %v3043, %v3079
        %3084 = vrot.lane.b32.xlu0 %v3080, 119
        %v3085 = vpop.permute.xlu0 %3084
        %3086 = vrot.lane.b32.xlu0 %v3081, 119
        %v3087 = vpop.permute.xlu0 %3086
        %v3090 = vadd.f32 %v3076, %v3085
        %v3091 = vadd.f32 %v3077, %v3087
        %s3092 = sld [smem:[#allocation14 + $0x84]]
        %v3093 = vstv %s3092
        %v3094 = vmul.f32 %v3042, %v3093
        %v3095 = vmul.f32 %v3043, %v3093
        %3098 = vrot.lane.b32.xlu0 %v3094, 116
        %v3099 = vpop.permute.xlu0 %3098
        %3100 = vrot.lane.b32.xlu0 %v3095, 116
        %v3101 = vpop.permute.xlu0 %3100
        %v3104 = vadd.f32 %v3090, %v3099
        %v3105 = vadd.f32 %v3091, %v3101
        %s3106 = sld [smem:[#allocation14 + $0x85]]
        %v3107 = vstv %s3106
        %v3108 = vmul.f32 %v3042, %v3107
        %v3109 = vmul.f32 %v3043, %v3107
        %3112 = vrot.lane.b32.xlu0 %v3108, 113
        %v3113 = vpop.permute.xlu0 %3112
        %3114 = vrot.lane.b32.xlu0 %v3109, 113
        %v3115 = vpop.permute.xlu0 %3114
        %v3118 = vadd.f32 %v3104, %v3113
        %v3119 = vadd.f32 %v3105, %v3115
        %s3120 = sld [smem:[#allocation14 + $0x86]]
        %v3121 = vstv %s3120
        %v3122 = vmul.f32 %v3042, %v3121
        %v3123 = vmul.f32 %v3043, %v3121
        %3126 = vrot.lane.b32.xlu0 %v3122, 110
        %v3127 = vpop.permute.xlu0 %3126
        %3128 = vrot.lane.b32.xlu0 %v3123, 110
        %v3129 = vpop.permute.xlu0 %3128
        %v3132 = vadd.f32 %v3118, %v3127
        %v3133 = vadd.f32 %v3119, %v3129
        %v3134 = vld [vmem:[%s1721 + $0x3] sm:$0xff]
        %v3135 = vld [vmem:[%s1721 + $0xb] sm:$0xff]
        %s3136 = sld [smem:[#allocation14 + $0x87]]
        %v3137 = vstv %s3136
        %v3138 = vmul.f32 %v3134, %v3137
        %v3139 = vmul.f32 %v3135, %v3137
        %v3140 = vadd.f32 %v3132, %v3138
        %v3141 = vadd.f32 %v3133, %v3139
        %s3142 = sld [smem:[#allocation14 + $0x88]]
        %v3143 = vstv %s3142
        %v3144 = vmul.f32 %v3134, %v3143
        %v3145 = vmul.f32 %v3135, %v3143
        %3148 = vrot.lane.b32.xlu0 %v3144, 125
        %v3149 = vpop.permute.xlu0 %3148
        %3150 = vrot.lane.b32.xlu0 %v3145, 125
        %v3151 = vpop.permute.xlu0 %3150
        %v3154 = vadd.f32 %v3140, %v3149
        %v3155 = vadd.f32 %v3141, %v3151
        %s3156 = sld [smem:[#allocation14 + $0x89]]
        %v3157 = vstv %s3156
        %v3158 = vmul.f32 %v3134, %v3157
        %v3159 = vmul.f32 %v3135, %v3157
        %3162 = vrot.lane.b32.xlu0 %v3158, 122
        %v3163 = vpop.permute.xlu0 %3162
        %3164 = vrot.lane.b32.xlu0 %v3159, 122
        %v3165 = vpop.permute.xlu0 %3164
        %v3168 = vadd.f32 %v3154, %v3163
        %v3169 = vadd.f32 %v3155, %v3165
        %s3170 = sld [smem:[#allocation14 + $0x8a]]
        %v3171 = vstv %s3170
        %v3172 = vmul.f32 %v3134, %v3171
        %v3173 = vmul.f32 %v3135, %v3171
        %3176 = vrot.lane.b32.xlu0 %v3172, 119
        %v3177 = vpop.permute.xlu0 %3176
        %3178 = vrot.lane.b32.xlu0 %v3173, 119
        %v3179 = vpop.permute.xlu0 %3178
        %v3182 = vadd.f32 %v3168, %v3177
        %v3183 = vadd.f32 %v3169, %v3179
        %s3184 = sld [smem:[#allocation14 + $0x8b]]
        %v3185 = vstv %s3184
        %v3186 = vmul.f32 %v3134, %v3185
        %v3187 = vmul.f32 %v3135, %v3185
        %3190 = vrot.lane.b32.xlu0 %v3186, 116
        %v3191 = vpop.permute.xlu0 %3190
        %3192 = vrot.lane.b32.xlu0 %v3187, 116
        %v3193 = vpop.permute.xlu0 %3192
        %v3196 = vadd.f32 %v3182, %v3191
        %v3197 = vadd.f32 %v3183, %v3193
        %s3198 = sld [smem:[#allocation14 + $0x8c]]
        %v3199 = vstv %s3198
        %v3200 = vmul.f32 %v3134, %v3199
        %v3201 = vmul.f32 %v3135, %v3199
        %3204 = vrot.lane.b32.xlu0 %v3200, 113
        %v3205 = vpop.permute.xlu0 %3204
        %3206 = vrot.lane.b32.xlu0 %v3201, 113
        %v3207 = vpop.permute.xlu0 %3206
        %v3210 = vadd.f32 %v3196, %v3205
        %v3211 = vadd.f32 %v3197, %v3207
        %s3212 = sld [smem:[#allocation14 + $0x8d]]
        %v3213 = vstv %s3212
        %v3214 = vmul.f32 %v3134, %v3213
        %v3215 = vmul.f32 %v3135, %v3213
        %3218 = vrot.lane.b32.xlu0 %v3214, 110
        %v3219 = vpop.permute.xlu0 %3218
        %3220 = vrot.lane.b32.xlu0 %v3215, 110
        %v3221 = vpop.permute.xlu0 %3220
        %v3224 = vadd.f32 %v3210, %v3219
        %v3225 = vadd.f32 %v3211, %v3221
        %v3226 = vld [vmem:[%s1721 + $0x6] sm:$0xff]
        %v3227 = vld [vmem:[%s1721 + $0xe] sm:$0xff]
        %s3228 = sld [smem:[#allocation14 + $0x8e]]
        %v3229 = vstv %s3228
        %v3230 = vmul.f32 %v3226, %v3229
        %v3231 = vmul.f32 %v3227, %v3229
        %v3232 = vadd.f32 %v3224, %v3230
        %v3233 = vadd.f32 %v3225, %v3231
        %s3234 = sld [smem:[#allocation14 + $0x8f]]
        %v3235 = vstv %s3234
        %v3236 = vmul.f32 %v3226, %v3235
        %v3237 = vmul.f32 %v3227, %v3235
        %3240 = vrot.lane.b32.xlu0 %v3236, 125
        %v3241 = vpop.permute.xlu0 %3240
        %3242 = vrot.lane.b32.xlu0 %v3237, 125
        %v3243 = vpop.permute.xlu0 %3242
        %v3246 = vadd.f32 %v3232, %v3241
        %v3247 = vadd.f32 %v3233, %v3243
        %s3248 = sld [smem:[#allocation14 + $0x90]]
        %v3249 = vstv %s3248
        %v3250 = vmul.f32 %v3226, %v3249
        %v3251 = vmul.f32 %v3227, %v3249
        %3254 = vrot.lane.b32.xlu0 %v3250, 122
        %v3255 = vpop.permute.xlu0 %3254
        %3256 = vrot.lane.b32.xlu0 %v3251, 122
        %v3257 = vpop.permute.xlu0 %3256
        %v3260 = vadd.f32 %v3246, %v3255
        %v3261 = vadd.f32 %v3247, %v3257
        %s3262 = sld [smem:[#allocation14 + $0x91]]
        %v3263 = vstv %s3262
        %v3264 = vmul.f32 %v3226, %v3263
        %v3265 = vmul.f32 %v3227, %v3263
        %3268 = vrot.lane.b32.xlu0 %v3264, 119
        %v3269 = vpop.permute.xlu0 %3268
        %3270 = vrot.lane.b32.xlu0 %v3265, 119
        %v3271 = vpop.permute.xlu0 %3270
        %v3274 = vadd.f32 %v3260, %v3269
        %v3275 = vadd.f32 %v3261, %v3271
        %s3276 = sld [smem:[#allocation14 + $0x92]]
        %v3277 = vstv %s3276
        %v3278 = vmul.f32 %v3226, %v3277
        %v3279 = vmul.f32 %v3227, %v3277
        %3282 = vrot.lane.b32.xlu0 %v3278, 116
        %v3283 = vpop.permute.xlu0 %3282
        %3284 = vrot.lane.b32.xlu0 %v3279, 116
        %v3285 = vpop.permute.xlu0 %3284
        %v3288 = vadd.f32 %v3274, %v3283
        %v3289 = vadd.f32 %v3275, %v3285
        %s3290 = sld [smem:[#allocation14 + $0x93]]
        %v3291 = vstv %s3290
        %v3292 = vmul.f32 %v3226, %v3291
        %v3293 = vmul.f32 %v3227, %v3291
        %3296 = vrot.lane.b32.xlu0 %v3292, 113
        %v3297 = vpop.permute.xlu0 %3296
        %3298 = vrot.lane.b32.xlu0 %v3293, 113
        %v3299 = vpop.permute.xlu0 %3298
        %v3302 = vadd.f32 %v3288, %v3297
        %v3303 = vadd.f32 %v3289, %v3299
        %s3304 = sld [smem:[#allocation14 + $0x94]]
        %v3305 = vstv %s3304
        %v3306 = vmul.f32 %v3226, %v3305
        %v3307 = vmul.f32 %v3227, %v3305
        %3310 = vrot.lane.b32.xlu0 %v3306, 110
        %v3311 = vpop.permute.xlu0 %3310
        %3312 = vrot.lane.b32.xlu0 %v3307, 110
        %v3313 = vpop.permute.xlu0 %3312
        %v3316 = vadd.f32 %v3302, %v3311
        %v3317 = vadd.f32 %v3303, %v3313
        %v3318 = vld [vmem:[%s1721 + $0x9] sm:$0xff]
        %v3319 = vld [vmem:[%s1721 + $0x11] sm:$0xff]
        %s3320 = sld [smem:[#allocation14 + $0x95]]
        %v3321 = vstv %s3320
        %v3322 = vmul.f32 %v3318, %v3321
        %v3323 = vmul.f32 %v3319, %v3321
        %v3324 = vadd.f32 %v3316, %v3322
        %v3325 = vadd.f32 %v3317, %v3323
        %s3326 = sld [smem:[#allocation14 + $0x96]]
        %v3327 = vstv %s3326
        %v3328 = vmul.f32 %v3318, %v3327
        %v3329 = vmul.f32 %v3319, %v3327
        %3332 = vrot.lane.b32.xlu0 %v3328, 125
        %v3333 = vpop.permute.xlu0 %3332
        %3334 = vrot.lane.b32.xlu0 %v3329, 125
        %v3335 = vpop.permute.xlu0 %3334
        %v3338 = vadd.f32 %v3324, %v3333
        %v3339 = vadd.f32 %v3325, %v3335
        %s3340 = sld [smem:[#allocation14 + $0x97]]
        %v3341 = vstv %s3340
        %v3342 = vmul.f32 %v3318, %v3341
        %v3343 = vmul.f32 %v3319, %v3341
        %3346 = vrot.lane.b32.xlu0 %v3342, 122
        %v3347 = vpop.permute.xlu0 %3346
        %3348 = vrot.lane.b32.xlu0 %v3343, 122
        %v3349 = vpop.permute.xlu0 %3348
        %v3352 = vadd.f32 %v3338, %v3347
        %v3353 = vadd.f32 %v3339, %v3349
        %s3354 = sld [smem:[#allocation14 + $0x98]]
        %v3355 = vstv %s3354
        %v3356 = vmul.f32 %v3318, %v3355
        %v3357 = vmul.f32 %v3319, %v3355
        %3360 = vrot.lane.b32.xlu0 %v3356, 119
        %v3361 = vpop.permute.xlu0 %3360
        %3362 = vrot.lane.b32.xlu0 %v3357, 119
        %v3363 = vpop.permute.xlu0 %3362
        %v3366 = vadd.f32 %v3352, %v3361
        %v3367 = vadd.f32 %v3353, %v3363
        %s3368 = sld [smem:[#allocation14 + $0x99]]
        %v3369 = vstv %s3368
        %v3370 = vmul.f32 %v3318, %v3369
        %v3371 = vmul.f32 %v3319, %v3369
        %3374 = vrot.lane.b32.xlu0 %v3370, 116
        %v3375 = vpop.permute.xlu0 %3374
        %3376 = vrot.lane.b32.xlu0 %v3371, 116
        %v3377 = vpop.permute.xlu0 %3376
        %v3380 = vadd.f32 %v3366, %v3375
        %v3381 = vadd.f32 %v3367, %v3377
        %s3382 = sld [smem:[#allocation14 + $0x9a]]
        %v3383 = vstv %s3382
        %v3384 = vmul.f32 %v3318, %v3383
        %v3385 = vmul.f32 %v3319, %v3383
        %3388 = vrot.lane.b32.xlu0 %v3384, 113
        %v3389 = vpop.permute.xlu0 %3388
        %3390 = vrot.lane.b32.xlu0 %v3385, 113
        %v3391 = vpop.permute.xlu0 %3390
        %v3394 = vadd.f32 %v3380, %v3389
        %v3395 = vadd.f32 %v3381, %v3391
        %s3396 = sld [smem:[#allocation14 + $0x9b]]
        %v3397 = vstv %s3396
        %v3398 = vmul.f32 %v3318, %v3397
        %v3399 = vmul.f32 %v3319, %v3397
        %3402 = vrot.lane.b32.xlu0 %v3398, 110
        %v3403 = vpop.permute.xlu0 %3402
        %3404 = vrot.lane.b32.xlu0 %v3399, 110
        %v3405 = vpop.permute.xlu0 %3404
        %v3408 = vadd.f32 %v3394, %v3403
        %v3409 = vadd.f32 %v3395, %v3405
        %v3410 = vld [vmem:[%s1721 + $0xc] sm:$0xff]
        %v3411 = vld [vmem:[%s1721 + $0x14] sm:$0xff]
        %s3412 = sld [smem:[#allocation14 + $0x9c]]
        %v3413 = vstv %s3412
        %v3414 = vmul.f32 %v3410, %v3413
        %v3415 = vmul.f32 %v3411, %v3413
        %v3416 = vadd.f32 %v3408, %v3414
        %v3417 = vadd.f32 %v3409, %v3415
        %s3418 = sld [smem:[#allocation14 + $0x9d]]
        %v3419 = vstv %s3418
        %v3420 = vmul.f32 %v3410, %v3419
        %v3421 = vmul.f32 %v3411, %v3419
        %3424 = vrot.lane.b32.xlu0 %v3420, 125
        %v3425 = vpop.permute.xlu0 %3424
        %3426 = vrot.lane.b32.xlu0 %v3421, 125
        %v3427 = vpop.permute.xlu0 %3426
        %v3430 = vadd.f32 %v3416, %v3425
        %v3431 = vadd.f32 %v3417, %v3427
        %s3432 = sld [smem:[#allocation14 + $0x9e]]
        %v3433 = vstv %s3432
        %v3434 = vmul.f32 %v3410, %v3433
        %v3435 = vmul.f32 %v3411, %v3433
        %3438 = vrot.lane.b32.xlu0 %v3434, 122
        %v3439 = vpop.permute.xlu0 %3438
        %3440 = vrot.lane.b32.xlu0 %v3435, 122
        %v3441 = vpop.permute.xlu0 %3440
        %v3444 = vadd.f32 %v3430, %v3439
        %v3445 = vadd.f32 %v3431, %v3441
        %s3446 = sld [smem:[#allocation14 + $0x9f]]
        %v3447 = vstv %s3446
        %v3448 = vmul.f32 %v3410, %v3447
        %v3449 = vmul.f32 %v3411, %v3447
        %3452 = vrot.lane.b32.xlu0 %v3448, 119
        %v3453 = vpop.permute.xlu0 %3452
        %3454 = vrot.lane.b32.xlu0 %v3449, 119
        %v3455 = vpop.permute.xlu0 %3454
        %v3458 = vadd.f32 %v3444, %v3453
        %v3459 = vadd.f32 %v3445, %v3455
        %s3460 = sld [smem:[#allocation14 + $0xa0]]
        %v3461 = vstv %s3460
        %v3462 = vmul.f32 %v3410, %v3461
        %v3463 = vmul.f32 %v3411, %v3461
        %3466 = vrot.lane.b32.xlu0 %v3462, 116
        %v3467 = vpop.permute.xlu0 %3466
        %3468 = vrot.lane.b32.xlu0 %v3463, 116
        %v3469 = vpop.permute.xlu0 %3468
        %v3472 = vadd.f32 %v3458, %v3467
        %v3473 = vadd.f32 %v3459, %v3469
        %s3474 = sld [smem:[#allocation14 + $0xa1]]
        %v3475 = vstv %s3474
        %v3476 = vmul.f32 %v3410, %v3475
        %v3477 = vmul.f32 %v3411, %v3475
        %3480 = vrot.lane.b32.xlu0 %v3476, 113
        %v3481 = vpop.permute.xlu0 %3480
        %3482 = vrot.lane.b32.xlu0 %v3477, 113
        %v3483 = vpop.permute.xlu0 %3482
        %v3486 = vadd.f32 %v3472, %v3481
        %v3487 = vadd.f32 %v3473, %v3483
        %s3488 = sld [smem:[#allocation14 + $0xa2]]
        %v3489 = vstv %s3488
        %v3490 = vmul.f32 %v3410, %v3489
        %v3491 = vmul.f32 %v3411, %v3489
        %3494 = vrot.lane.b32.xlu0 %v3490, 110
        %v3495 = vpop.permute.xlu0 %3494
        %3496 = vrot.lane.b32.xlu0 %v3491, 110
        %v3497 = vpop.permute.xlu0 %3496
        %v3500 = vadd.f32 %v3486, %v3495
        %v3501 = vadd.f32 %v3487, %v3497
        %v3502 = vld [vmem:[%s1721 + $0xf] sm:$0xff]
        %v3503 = vld [vmem:[%s1721 + $0x17] sm:$0xff]
        %s3504 = sld [smem:[#allocation14 + $0xa3]]
        %v3505 = vstv %s3504
        %v3506 = vmul.f32 %v3502, %v3505
        %v3507 = vmul.f32 %v3503, %v3505
        %v3508 = vadd.f32 %v3500, %v3506
        %v3509 = vadd.f32 %v3501, %v3507
        %s3510 = sld [smem:[#allocation14 + $0xa4]]
        %v3511 = vstv %s3510
        %v3512 = vmul.f32 %v3502, %v3511
        %v3513 = vmul.f32 %v3503, %v3511
        %3516 = vrot.lane.b32.xlu0 %v3512, 125
        %v3517 = vpop.permute.xlu0 %3516
        %3518 = vrot.lane.b32.xlu0 %v3513, 125
        %v3519 = vpop.permute.xlu0 %3518
        %v3522 = vadd.f32 %v3508, %v3517
        %v3523 = vadd.f32 %v3509, %v3519
        %s3524 = sld [smem:[#allocation14 + $0xa5]]
        %v3525 = vstv %s3524
        %v3526 = vmul.f32 %v3502, %v3525
        %v3527 = vmul.f32 %v3503, %v3525
        %3530 = vrot.lane.b32.xlu0 %v3526, 122
        %v3531 = vpop.permute.xlu0 %3530
        %3532 = vrot.lane.b32.xlu0 %v3527, 122
        %v3533 = vpop.permute.xlu0 %3532
        %v3536 = vadd.f32 %v3522, %v3531
        %v3537 = vadd.f32 %v3523, %v3533
        %s3538 = sld [smem:[#allocation14 + $0xa6]]
        %v3539 = vstv %s3538
        %v3540 = vmul.f32 %v3502, %v3539
        %v3541 = vmul.f32 %v3503, %v3539
        %3544 = vrot.lane.b32.xlu0 %v3540, 119
        %v3545 = vpop.permute.xlu0 %3544
        %3546 = vrot.lane.b32.xlu0 %v3541, 119
        %v3547 = vpop.permute.xlu0 %3546
        %v3550 = vadd.f32 %v3536, %v3545
        %v3551 = vadd.f32 %v3537, %v3547
        %s3552 = sld [smem:[#allocation14 + $0xa7]]
        %v3553 = vstv %s3552
        %v3554 = vmul.f32 %v3502, %v3553
        %v3555 = vmul.f32 %v3503, %v3553
        %3558 = vrot.lane.b32.xlu0 %v3554, 116
        %v3559 = vpop.permute.xlu0 %3558
        %3560 = vrot.lane.b32.xlu0 %v3555, 116
        %v3561 = vpop.permute.xlu0 %3560
        %v3564 = vadd.f32 %v3550, %v3559
        %v3565 = vadd.f32 %v3551, %v3561
        %s3566 = sld [smem:[#allocation14 + $0xa8]]
        %v3567 = vstv %s3566
        %v3568 = vmul.f32 %v3502, %v3567
        %v3569 = vmul.f32 %v3503, %v3567
        %3572 = vrot.lane.b32.xlu0 %v3568, 113
        %v3573 = vpop.permute.xlu0 %3572
        %3574 = vrot.lane.b32.xlu0 %v3569, 113
        %v3575 = vpop.permute.xlu0 %3574
        %v3578 = vadd.f32 %v3564, %v3573
        %v3579 = vadd.f32 %v3565, %v3575
        %s3580 = sld [smem:[#allocation14 + $0xa9]]
        %v3581 = vstv %s3580
        %v3582 = vmul.f32 %v3502, %v3581
        %v3583 = vmul.f32 %v3503, %v3581
        %3586 = vrot.lane.b32.xlu0 %v3582, 110
        %v3587 = vpop.permute.xlu0 %3586
        %3588 = vrot.lane.b32.xlu0 %v3583, 110
        %v3589 = vpop.permute.xlu0 %3588
        %v3592 = vadd.f32 %v3578, %v3587
        %v3593 = vadd.f32 %v3579, %v3589
        %v3594 = vld [vmem:[%s1721 + $0x12] sm:$0xff]
        %v3595 = vld [vmem:[%s1721 + $0x1a] sm:$0xff]
        %s3596 = sld [smem:[#allocation14 + $0xaa]]
        %v3597 = vstv %s3596
        %v3598 = vmul.f32 %v3594, %v3597
        %v3599 = vmul.f32 %v3595, %v3597
        %v3600 = vadd.f32 %v3592, %v3598
        %v3601 = vadd.f32 %v3593, %v3599
        %s3602 = sld [smem:[#allocation14 + $0xab]]
        %v3603 = vstv %s3602
        %v3604 = vmul.f32 %v3594, %v3603
        %v3605 = vmul.f32 %v3595, %v3603
        %3608 = vrot.lane.b32.xlu0 %v3604, 125
        %v3609 = vpop.permute.xlu0 %3608
        %3610 = vrot.lane.b32.xlu0 %v3605, 125
        %v3611 = vpop.permute.xlu0 %3610
        %v3614 = vadd.f32 %v3600, %v3609
        %v3615 = vadd.f32 %v3601, %v3611
        %s3616 = sld [smem:[#allocation14 + $0xac]]
        %v3617 = vstv %s3616
        %v3618 = vmul.f32 %v3594, %v3617
        %v3619 = vmul.f32 %v3595, %v3617
        %3622 = vrot.lane.b32.xlu0 %v3618, 122
        %v3623 = vpop.permute.xlu0 %3622
        %3624 = vrot.lane.b32.xlu0 %v3619, 122
        %v3625 = vpop.permute.xlu0 %3624
        %v3628 = vadd.f32 %v3614, %v3623
        %v3629 = vadd.f32 %v3615, %v3625
        %s3630 = sld [smem:[#allocation14 + $0xad]]
        %v3631 = vstv %s3630
        %v3632 = vmul.f32 %v3594, %v3631
        %v3633 = vmul.f32 %v3595, %v3631
        %3636 = vrot.lane.b32.xlu0 %v3632, 119
        %v3637 = vpop.permute.xlu0 %3636
        %3638 = vrot.lane.b32.xlu0 %v3633, 119
        %v3639 = vpop.permute.xlu0 %3638
        %v3642 = vadd.f32 %v3628, %v3637
        %v3643 = vadd.f32 %v3629, %v3639
        %s3644 = sld [smem:[#allocation14 + $0xae]]
        %v3645 = vstv %s3644
        %v3646 = vmul.f32 %v3594, %v3645
        %v3647 = vmul.f32 %v3595, %v3645
        %3650 = vrot.lane.b32.xlu0 %v3646, 116
        %v3651 = vpop.permute.xlu0 %3650
        %3652 = vrot.lane.b32.xlu0 %v3647, 116
        %v3653 = vpop.permute.xlu0 %3652
        %v3656 = vadd.f32 %v3642, %v3651
        %v3657 = vadd.f32 %v3643, %v3653
        %s3658 = sld [smem:[#allocation14 + $0xaf]]
        %v3659 = vstv %s3658
        %v3660 = vmul.f32 %v3594, %v3659
        %v3661 = vmul.f32 %v3595, %v3659
        %3664 = vrot.lane.b32.xlu0 %v3660, 113
        %v3665 = vpop.permute.xlu0 %3664
        %3666 = vrot.lane.b32.xlu0 %v3661, 113
        %v3667 = vpop.permute.xlu0 %3666
        %v3670 = vadd.f32 %v3656, %v3665
        %v3671 = vadd.f32 %v3657, %v3667
        %s3672 = sld [smem:[#allocation14 + $0xb0]]
        %v3673 = vstv %s3672
        %v3674 = vmul.f32 %v3594, %v3673
        %v3675 = vmul.f32 %v3595, %v3673
        %3678 = vrot.lane.b32.xlu0 %v3674, 110
        %v3679 = vpop.permute.xlu0 %3678
        %3680 = vrot.lane.b32.xlu0 %v3675, 110
        %v3681 = vpop.permute.xlu0 %3680
        %v3684 = vadd.f32 %v3670, %v3679
        %v3685 = vadd.f32 %v3671, %v3681
        %s3686 = sld [smem:[#allocation16 + $0x1]]
        %v3687 = vstv %s3686
        %v3688 = vadd.f32 %v3684, %v3687
        %v3689 = vadd.f32 %v3685, %v3687
        %v3690 = vld [vmem:[%s2056] sm:$0xff]
        %v3691 = vld [vmem:[%s2056 + $0x8] sm:$0xff]
        %s3692 = sld [smem:[#allocation14 + $0x100]]
        %v3693 = vstv %s3692
        %v3694 = vmul.f32 %v3690, %v3693
        %v3695 = vmul.f32 %v3691, %v3693
        %v3696 = vadd.f32 %v3694, 0.0
        %v3697 = vadd.f32 %v3695, 0.0
        %s3698 = sld [smem:[#allocation14 + $0x101]]
        %v3699 = vstv %s3698
        %v3700 = vmul.f32 %v3690, %v3699
        %v3701 = vmul.f32 %v3691, %v3699
        %3704 = vrot.lane.b32.xlu0 %v3700, 125
        %v3705 = vpop.permute.xlu0 %3704
        %3706 = vrot.lane.b32.xlu0 %v3701, 125
        %v3707 = vpop.permute.xlu0 %3706
        %v3710 = vadd.f32 %v3696, %v3705
        %v3711 = vadd.f32 %v3697, %v3707
        %s3712 = sld [smem:[#allocation14 + $0x102]]
        %v3713 = vstv %s3712
        %v3714 = vmul.f32 %v3690, %v3713
        %v3715 = vmul.f32 %v3691, %v3713
        %3718 = vrot.lane.b32.xlu0 %v3714, 122
        %v3719 = vpop.permute.xlu0 %3718
        %3720 = vrot.lane.b32.xlu0 %v3715, 122
        %v3721 = vpop.permute.xlu0 %3720
        %v3724 = vadd.f32 %v3710, %v3719
        %v3725 = vadd.f32 %v3711, %v3721
        %s3726 = sld [smem:[#allocation14 + $0x103]]
        %v3727 = vstv %s3726
        %v3728 = vmul.f32 %v3690, %v3727
        %v3729 = vmul.f32 %v3691, %v3727
        %3732 = vrot.lane.b32.xlu0 %v3728, 119
        %v3733 = vpop.permute.xlu0 %3732
        %3734 = vrot.lane.b32.xlu0 %v3729, 119
        %v3735 = vpop.permute.xlu0 %3734
        %v3738 = vadd.f32 %v3724, %v3733
        %v3739 = vadd.f32 %v3725, %v3735
        %s3740 = sld [smem:[#allocation14 + $0x104]]
        %v3741 = vstv %s3740
        %v3742 = vmul.f32 %v3690, %v3741
        %v3743 = vmul.f32 %v3691, %v3741
        %3746 = vrot.lane.b32.xlu0 %v3742, 116
        %v3747 = vpop.permute.xlu0 %3746
        %3748 = vrot.lane.b32.xlu0 %v3743, 116
        %v3749 = vpop.permute.xlu0 %3748
        %v3752 = vadd.f32 %v3738, %v3747
        %v3753 = vadd.f32 %v3739, %v3749
        %s3754 = sld [smem:[#allocation14 + $0x105]]
        %v3755 = vstv %s3754
        %v3756 = vmul.f32 %v3690, %v3755
        %v3757 = vmul.f32 %v3691, %v3755
        %3760 = vrot.lane.b32.xlu0 %v3756, 113
        %v3761 = vpop.permute.xlu0 %3760
        %3762 = vrot.lane.b32.xlu0 %v3757, 113
        %v3763 = vpop.permute.xlu0 %3762
        %v3766 = vadd.f32 %v3752, %v3761
        %v3767 = vadd.f32 %v3753, %v3763
        %s3768 = sld [smem:[#allocation14 + $0x106]]
        %v3769 = vstv %s3768
        %v3770 = vmul.f32 %v3690, %v3769
        %v3771 = vmul.f32 %v3691, %v3769
        %3774 = vrot.lane.b32.xlu0 %v3770, 110
        %v3775 = vpop.permute.xlu0 %3774
        %3776 = vrot.lane.b32.xlu0 %v3771, 110
        %v3777 = vpop.permute.xlu0 %3776
        %v3780 = vadd.f32 %v3766, %v3775
        %v3781 = vadd.f32 %v3767, %v3777
        %v3782 = vld [vmem:[%s2056 + $0x3] sm:$0xff]
        %v3783 = vld [vmem:[%s2056 + $0xb] sm:$0xff]
        %s3784 = sld [smem:[#allocation14 + $0x107]]
        %v3785 = vstv %s3784
        %v3786 = vmul.f32 %v3782, %v3785
        %v3787 = vmul.f32 %v3783, %v3785
        %v3788 = vadd.f32 %v3780, %v3786
        %v3789 = vadd.f32 %v3781, %v3787
        %s3790 = sld [smem:[#allocation14 + $0x108]]
        %v3791 = vstv %s3790
        %v3792 = vmul.f32 %v3782, %v3791
        %v3793 = vmul.f32 %v3783, %v3791
        %3796 = vrot.lane.b32.xlu0 %v3792, 125
        %v3797 = vpop.permute.xlu0 %3796
        %3798 = vrot.lane.b32.xlu0 %v3793, 125
        %v3799 = vpop.permute.xlu0 %3798
        %v3802 = vadd.f32 %v3788, %v3797
        %v3803 = vadd.f32 %v3789, %v3799
        %s3804 = sld [smem:[#allocation14 + $0x109]]
        %v3805 = vstv %s3804
        %v3806 = vmul.f32 %v3782, %v3805
        %v3807 = vmul.f32 %v3783, %v3805
        %3810 = vrot.lane.b32.xlu0 %v3806, 122
        %v3811 = vpop.permute.xlu0 %3810
        %3812 = vrot.lane.b32.xlu0 %v3807, 122
        %v3813 = vpop.permute.xlu0 %3812
        %v3816 = vadd.f32 %v3802, %v3811
        %v3817 = vadd.f32 %v3803, %v3813
        %s3818 = sld [smem:[#allocation14 + $0x10a]]
        %v3819 = vstv %s3818
        %v3820 = vmul.f32 %v3782, %v3819
        %v3821 = vmul.f32 %v3783, %v3819
        %3824 = vrot.lane.b32.xlu0 %v3820, 119
        %v3825 = vpop.permute.xlu0 %3824
        %3826 = vrot.lane.b32.xlu0 %v3821, 119
        %v3827 = vpop.permute.xlu0 %3826
        %v3830 = vadd.f32 %v3816, %v3825
        %v3831 = vadd.f32 %v3817, %v3827
        %s3832 = sld [smem:[#allocation14 + $0x10b]]
        %v3833 = vstv %s3832
        %v3834 = vmul.f32 %v3782, %v3833
        %v3835 = vmul.f32 %v3783, %v3833
        %3838 = vrot.lane.b32.xlu0 %v3834, 116
        %v3839 = vpop.permute.xlu0 %3838
        %3840 = vrot.lane.b32.xlu0 %v3835, 116
        %v3841 = vpop.permute.xlu0 %3840
        %v3844 = vadd.f32 %v3830, %v3839
        %v3845 = vadd.f32 %v3831, %v3841
        %s3846 = sld [smem:[#allocation14 + $0x10c]]
        %v3847 = vstv %s3846
        %v3848 = vmul.f32 %v3782, %v3847
        %v3849 = vmul.f32 %v3783, %v3847
        %3852 = vrot.lane.b32.xlu0 %v3848, 113
        %v3853 = vpop.permute.xlu0 %3852
        %3854 = vrot.lane.b32.xlu0 %v3849, 113
        %v3855 = vpop.permute.xlu0 %3854
        %v3858 = vadd.f32 %v3844, %v3853
        %v3859 = vadd.f32 %v3845, %v3855
        %s3860 = sld [smem:[#allocation14 + $0x10d]]
        %v3861 = vstv %s3860
        %v3862 = vmul.f32 %v3782, %v3861
        %v3863 = vmul.f32 %v3783, %v3861
        %3866 = vrot.lane.b32.xlu0 %v3862, 110
        %v3867 = vpop.permute.xlu0 %3866
        %3868 = vrot.lane.b32.xlu0 %v3863, 110
        %v3869 = vpop.permute.xlu0 %3868
        %v3872 = vadd.f32 %v3858, %v3867
        %v3873 = vadd.f32 %v3859, %v3869
        %v3874 = vld [vmem:[%s2056 + $0x6] sm:$0xff]
        %v3875 = vld [vmem:[%s2056 + $0xe] sm:$0xff]
        %s3876 = sld [smem:[#allocation14 + $0x10e]]
        %v3877 = vstv %s3876
        %v3878 = vmul.f32 %v3874, %v3877
        %v3879 = vmul.f32 %v3875, %v3877
        %v3880 = vadd.f32 %v3872, %v3878
        %v3881 = vadd.f32 %v3873, %v3879
        %s3882 = sld [smem:[#allocation14 + $0x10f]]
        %v3883 = vstv %s3882
        %v3884 = vmul.f32 %v3874, %v3883
        %v3885 = vmul.f32 %v3875, %v3883
        %3888 = vrot.lane.b32.xlu0 %v3884, 125
        %v3889 = vpop.permute.xlu0 %3888
        %3890 = vrot.lane.b32.xlu0 %v3885, 125
        %v3891 = vpop.permute.xlu0 %3890
        %v3894 = vadd.f32 %v3880, %v3889
        %v3895 = vadd.f32 %v3881, %v3891
        %s3896 = sld [smem:[#allocation14 + $0x110]]
        %v3897 = vstv %s3896
        %v3898 = vmul.f32 %v3874, %v3897
        %v3899 = vmul.f32 %v3875, %v3897
        %3902 = vrot.lane.b32.xlu0 %v3898, 122
        %v3903 = vpop.permute.xlu0 %3902
        %3904 = vrot.lane.b32.xlu0 %v3899, 122
        %v3905 = vpop.permute.xlu0 %3904
        %v3908 = vadd.f32 %v3894, %v3903
        %v3909 = vadd.f32 %v3895, %v3905
        %s3910 = sld [smem:[#allocation14 + $0x111]]
        %v3911 = vstv %s3910
        %v3912 = vmul.f32 %v3874, %v3911
        %v3913 = vmul.f32 %v3875, %v3911
        %3916 = vrot.lane.b32.xlu0 %v3912, 119
        %v3917 = vpop.permute.xlu0 %3916
        %3918 = vrot.lane.b32.xlu0 %v3913, 119
        %v3919 = vpop.permute.xlu0 %3918
        %v3922 = vadd.f32 %v3908, %v3917
        %v3923 = vadd.f32 %v3909, %v3919
        %s3924 = sld [smem:[#allocation14 + $0x112]]
        %v3925 = vstv %s3924
        %v3926 = vmul.f32 %v3874, %v3925
        %v3927 = vmul.f32 %v3875, %v3925
        %3930 = vrot.lane.b32.xlu0 %v3926, 116
        %v3931 = vpop.permute.xlu0 %3930
        %3932 = vrot.lane.b32.xlu0 %v3927, 116
        %v3933 = vpop.permute.xlu0 %3932
        %v3936 = vadd.f32 %v3922, %v3931
        %v3937 = vadd.f32 %v3923, %v3933
        %s3938 = sld [smem:[#allocation14 + $0x113]]
        %v3939 = vstv %s3938
        %v3940 = vmul.f32 %v3874, %v3939
        %v3941 = vmul.f32 %v3875, %v3939
        %3944 = vrot.lane.b32.xlu0 %v3940, 113
        %v3945 = vpop.permute.xlu0 %3944
        %3946 = vrot.lane.b32.xlu0 %v3941, 113
        %v3947 = vpop.permute.xlu0 %3946
        %v3950 = vadd.f32 %v3936, %v3945
        %v3951 = vadd.f32 %v3937, %v3947
        %s3952 = sld [smem:[#allocation14 + $0x114]]
        %v3953 = vstv %s3952
        %v3954 = vmul.f32 %v3874, %v3953
        %v3955 = vmul.f32 %v3875, %v3953
        %3958 = vrot.lane.b32.xlu0 %v3954, 110
        %v3959 = vpop.permute.xlu0 %3958
        %3960 = vrot.lane.b32.xlu0 %v3955, 110
        %v3961 = vpop.permute.xlu0 %3960
        %v3964 = vadd.f32 %v3950, %v3959
        %v3965 = vadd.f32 %v3951, %v3961
        %v3966 = vld [vmem:[%s2056 + $0x9] sm:$0xff]
        %v3967 = vld [vmem:[%s2056 + $0x11] sm:$0xff]
        %s3968 = sld [smem:[#allocation14 + $0x115]]
        %v3969 = vstv %s3968
        %v3970 = vmul.f32 %v3966, %v3969
        %v3971 = vmul.f32 %v3967, %v3969
        %v3972 = vadd.f32 %v3964, %v3970
        %v3973 = vadd.f32 %v3965, %v3971
        %s3974 = sld [smem:[#allocation14 + $0x116]]
        %v3975 = vstv %s3974
        %v3976 = vmul.f32 %v3966, %v3975
        %v3977 = vmul.f32 %v3967, %v3975
        %3980 = vrot.lane.b32.xlu0 %v3976, 125
        %v3981 = vpop.permute.xlu0 %3980
        %3982 = vrot.lane.b32.xlu0 %v3977, 125
        %v3983 = vpop.permute.xlu0 %3982
        %v3986 = vadd.f32 %v3972, %v3981
        %v3987 = vadd.f32 %v3973, %v3983
        %s3988 = sld [smem:[#allocation14 + $0x117]]
        %v3989 = vstv %s3988
        %v3990 = vmul.f32 %v3966, %v3989
        %v3991 = vmul.f32 %v3967, %v3989
        %3994 = vrot.lane.b32.xlu0 %v3990, 122
        %v3995 = vpop.permute.xlu0 %3994
        %3996 = vrot.lane.b32.xlu0 %v3991, 122
        %v3997 = vpop.permute.xlu0 %3996
        %v4000 = vadd.f32 %v3986, %v3995
        %v4001 = vadd.f32 %v3987, %v3997
        %s4002 = sld [smem:[#allocation14 + $0x118]]
        %v4003 = vstv %s4002
        %v4004 = vmul.f32 %v3966, %v4003
        %v4005 = vmul.f32 %v3967, %v4003
        %4008 = vrot.lane.b32.xlu0 %v4004, 119
        %v4009 = vpop.permute.xlu0 %4008
        %4010 = vrot.lane.b32.xlu0 %v4005, 119
        %v4011 = vpop.permute.xlu0 %4010
        %v4014 = vadd.f32 %v4000, %v4009
        %v4015 = vadd.f32 %v4001, %v4011
        %s4016 = sld [smem:[#allocation14 + $0x119]]
        %v4017 = vstv %s4016
        %v4018 = vmul.f32 %v3966, %v4017
        %v4019 = vmul.f32 %v3967, %v4017
        %4022 = vrot.lane.b32.xlu0 %v4018, 116
        %v4023 = vpop.permute.xlu0 %4022
        %4024 = vrot.lane.b32.xlu0 %v4019, 116
        %v4025 = vpop.permute.xlu0 %4024
        %v4028 = vadd.f32 %v4014, %v4023
        %v4029 = vadd.f32 %v4015, %v4025
        %s4030 = sld [smem:[#allocation14 + $0x11a]]
        %v4031 = vstv %s4030
        %v4032 = vmul.f32 %v3966, %v4031
        %v4033 = vmul.f32 %v3967, %v4031
        %4036 = vrot.lane.b32.xlu0 %v4032, 113
        %v4037 = vpop.permute.xlu0 %4036
        %4038 = vrot.lane.b32.xlu0 %v4033, 113
        %v4039 = vpop.permute.xlu0 %4038
        %v4042 = vadd.f32 %v4028, %v4037
        %v4043 = vadd.f32 %v4029, %v4039
        %s4044 = sld [smem:[#allocation14 + $0x11b]]
        %v4045 = vstv %s4044
        %v4046 = vmul.f32 %v3966, %v4045
        %v4047 = vmul.f32 %v3967, %v4045
        %4050 = vrot.lane.b32.xlu0 %v4046, 110
        %v4051 = vpop.permute.xlu0 %4050
        %4052 = vrot.lane.b32.xlu0 %v4047, 110
        %v4053 = vpop.permute.xlu0 %4052
        %v4056 = vadd.f32 %v4042, %v4051
        %v4057 = vadd.f32 %v4043, %v4053
        %v4058 = vld [vmem:[%s2056 + $0xc] sm:$0xff]
        %v4059 = vld [vmem:[%s2056 + $0x14] sm:$0xff]
        %s4060 = sld [smem:[#allocation14 + $0x11c]]
        %v4061 = vstv %s4060
        %v4062 = vmul.f32 %v4058, %v4061
        %v4063 = vmul.f32 %v4059, %v4061
        %v4064 = vadd.f32 %v4056, %v4062
        %v4065 = vadd.f32 %v4057, %v4063
        %s4066 = sld [smem:[#allocation14 + $0x11d]]
        %v4067 = vstv %s4066
        %v4068 = vmul.f32 %v4058, %v4067
        %v4069 = vmul.f32 %v4059, %v4067
        %4072 = vrot.lane.b32.xlu0 %v4068, 125
        %v4073 = vpop.permute.xlu0 %4072
        %4074 = vrot.lane.b32.xlu0 %v4069, 125
        %v4075 = vpop.permute.xlu0 %4074
        %v4078 = vadd.f32 %v4064, %v4073
        %v4079 = vadd.f32 %v4065, %v4075
        %s4080 = sld [smem:[#allocation14 + $0x11e]]
        %v4081 = vstv %s4080
        %v4082 = vmul.f32 %v4058, %v4081
        %v4083 = vmul.f32 %v4059, %v4081
        %4086 = vrot.lane.b32.xlu0 %v4082, 122
        %v4087 = vpop.permute.xlu0 %4086
        %4088 = vrot.lane.b32.xlu0 %v4083, 122
        %v4089 = vpop.permute.xlu0 %4088
        %v4092 = vadd.f32 %v4078, %v4087
        %v4093 = vadd.f32 %v4079, %v4089
        %s4094 = sld [smem:[#allocation14 + $0x11f]]
        %v4095 = vstv %s4094
        %v4096 = vmul.f32 %v4058, %v4095
        %v4097 = vmul.f32 %v4059, %v4095
        %4100 = vrot.lane.b32.xlu0 %v4096, 119
        %v4101 = vpop.permute.xlu0 %4100
        %4102 = vrot.lane.b32.xlu0 %v4097, 119
        %v4103 = vpop.permute.xlu0 %4102
        %v4106 = vadd.f32 %v4092, %v4101
        %v4107 = vadd.f32 %v4093, %v4103
        %s4108 = sld [smem:[#allocation14 + $0x120]]
        %v4109 = vstv %s4108
        %v4110 = vmul.f32 %v4058, %v4109
        %v4111 = vmul.f32 %v4059, %v4109
        %4114 = vrot.lane.b32.xlu0 %v4110, 116
        %v4115 = vpop.permute.xlu0 %4114
        %4116 = vrot.lane.b32.xlu0 %v4111, 116
        %v4117 = vpop.permute.xlu0 %4116
        %v4120 = vadd.f32 %v4106, %v4115
        %v4121 = vadd.f32 %v4107, %v4117
        %s4122 = sld [smem:[#allocation14 + $0x121]]
        %v4123 = vstv %s4122
        %v4124 = vmul.f32 %v4058, %v4123
        %v4125 = vmul.f32 %v4059, %v4123
        %4128 = vrot.lane.b32.xlu0 %v4124, 113
        %v4129 = vpop.permute.xlu0 %4128
        %4130 = vrot.lane.b32.xlu0 %v4125, 113
        %v4131 = vpop.permute.xlu0 %4130
        %v4134 = vadd.f32 %v4120, %v4129
        %v4135 = vadd.f32 %v4121, %v4131
        %s4136 = sld [smem:[#allocation14 + $0x122]]
        %v4137 = vstv %s4136
        %v4138 = vmul.f32 %v4058, %v4137
        %v4139 = vmul.f32 %v4059, %v4137
        %4142 = vrot.lane.b32.xlu0 %v4138, 110
        %v4143 = vpop.permute.xlu0 %4142
        %4144 = vrot.lane.b32.xlu0 %v4139, 110
        %v4145 = vpop.permute.xlu0 %4144
        %v4148 = vadd.f32 %v4134, %v4143
        %v4149 = vadd.f32 %v4135, %v4145
        %v4150 = vld [vmem:[%s2056 + $0xf] sm:$0xff]
        %v4151 = vld [vmem:[%s2056 + $0x17] sm:$0xff]
        %s4152 = sld [smem:[#allocation14 + $0x123]]
        %v4153 = vstv %s4152
        %v4154 = vmul.f32 %v4150, %v4153
        %v4155 = vmul.f32 %v4151, %v4153
        %v4156 = vadd.f32 %v4148, %v4154
        %v4157 = vadd.f32 %v4149, %v4155
        %s4158 = sld [smem:[#allocation14 + $0x124]]
        %v4159 = vstv %s4158
        %v4160 = vmul.f32 %v4150, %v4159
        %v4161 = vmul.f32 %v4151, %v4159
        %4164 = vrot.lane.b32.xlu0 %v4160, 125
        %v4165 = vpop.permute.xlu0 %4164
        %4166 = vrot.lane.b32.xlu0 %v4161, 125
        %v4167 = vpop.permute.xlu0 %4166
        %v4170 = vadd.f32 %v4156, %v4165
        %v4171 = vadd.f32 %v4157, %v4167
        %s4172 = sld [smem:[#allocation14 + $0x125]]
        %v4173 = vstv %s4172
        %v4174 = vmul.f32 %v4150, %v4173
        %v4175 = vmul.f32 %v4151, %v4173
        %4178 = vrot.lane.b32.xlu0 %v4174, 122
        %v4179 = vpop.permute.xlu0 %4178
        %4180 = vrot.lane.b32.xlu0 %v4175, 122
        %v4181 = vpop.permute.xlu0 %4180
        %v4184 = vadd.f32 %v4170, %v4179
        %v4185 = vadd.f32 %v4171, %v4181
        %s4186 = sld [smem:[#allocation14 + $0x126]]
        %v4187 = vstv %s4186
        %v4188 = vmul.f32 %v4150, %v4187
        %v4189 = vmul.f32 %v4151, %v4187
        %4192 = vrot.lane.b32.xlu0 %v4188, 119
        %v4193 = vpop.permute.xlu0 %4192
        %4194 = vrot.lane.b32.xlu0 %v4189, 119
        %v4195 = vpop.permute.xlu0 %4194
        %v4198 = vadd.f32 %v4184, %v4193
        %v4199 = vadd.f32 %v4185, %v4195
        %s4200 = sld [smem:[#allocation14 + $0x127]]
        %v4201 = vstv %s4200
        %v4202 = vmul.f32 %v4150, %v4201
        %v4203 = vmul.f32 %v4151, %v4201
        %4206 = vrot.lane.b32.xlu0 %v4202, 116
        %v4207 = vpop.permute.xlu0 %4206
        %4208 = vrot.lane.b32.xlu0 %v4203, 116
        %v4209 = vpop.permute.xlu0 %4208
        %v4212 = vadd.f32 %v4198, %v4207
        %v4213 = vadd.f32 %v4199, %v4209
        %s4214 = sld [smem:[#allocation14 + $0x128]]
        %v4215 = vstv %s4214
        %v4216 = vmul.f32 %v4150, %v4215
        %v4217 = vmul.f32 %v4151, %v4215
        %4220 = vrot.lane.b32.xlu0 %v4216, 113
        %v4221 = vpop.permute.xlu0 %4220
        %4222 = vrot.lane.b32.xlu0 %v4217, 113
        %v4223 = vpop.permute.xlu0 %4222
        %v4226 = vadd.f32 %v4212, %v4221
        %v4227 = vadd.f32 %v4213, %v4223
        %s4228 = sld [smem:[#allocation14 + $0x129]]
        %v4229 = vstv %s4228
        %v4230 = vmul.f32 %v4150, %v4229
        %v4231 = vmul.f32 %v4151, %v4229
        %4234 = vrot.lane.b32.xlu0 %v4230, 110
        %v4235 = vpop.permute.xlu0 %4234
        %4236 = vrot.lane.b32.xlu0 %v4231, 110
        %v4237 = vpop.permute.xlu0 %4236
        %v4240 = vadd.f32 %v4226, %v4235
        %v4241 = vadd.f32 %v4227, %v4237
        %v4242 = vld [vmem:[%s2056 + $0x12] sm:$0xff]
        %v4243 = vld [vmem:[%s2056 + $0x1a] sm:$0xff]
        %s4244 = sld [smem:[#allocation14 + $0x12a]]
        %v4245 = vstv %s4244
        %v4246 = vmul.f32 %v4242, %v4245
        %v4247 = vmul.f32 %v4243, %v4245
        %v4248 = vadd.f32 %v4240, %v4246
        %v4249 = vadd.f32 %v4241, %v4247
        %s4250 = sld [smem:[#allocation14 + $0x12b]]
        %v4251 = vstv %s4250
        %v4252 = vmul.f32 %v4242, %v4251
        %v4253 = vmul.f32 %v4243, %v4251
        %4256 = vrot.lane.b32.xlu0 %v4252, 125
        %v4257 = vpop.permute.xlu0 %4256
        %4258 = vrot.lane.b32.xlu0 %v4253, 125
        %v4259 = vpop.permute.xlu0 %4258
        %v4262 = vadd.f32 %v4248, %v4257
        %v4263 = vadd.f32 %v4249, %v4259
        %s4264 = sld [smem:[#allocation14 + $0x12c]]
        %v4265 = vstv %s4264
        %v4266 = vmul.f32 %v4242, %v4265
        %v4267 = vmul.f32 %v4243, %v4265
        %4270 = vrot.lane.b32.xlu0 %v4266, 122
        %v4271 = vpop.permute.xlu0 %4270
        %4272 = vrot.lane.b32.xlu0 %v4267, 122
        %v4273 = vpop.permute.xlu0 %4272
        %v4276 = vadd.f32 %v4262, %v4271
        %v4277 = vadd.f32 %v4263, %v4273
        %s4278 = sld [smem:[#allocation14 + $0x12d]]
        %v4279 = vstv %s4278
        %v4280 = vmul.f32 %v4242, %v4279
        %v4281 = vmul.f32 %v4243, %v4279
        %4284 = vrot.lane.b32.xlu0 %v4280, 119
        %v4285 = vpop.permute.xlu0 %4284
        %4286 = vrot.lane.b32.xlu0 %v4281, 119
        %v4287 = vpop.permute.xlu0 %4286
        %v4290 = vadd.f32 %v4276, %v4285
        %v4291 = vadd.f32 %v4277, %v4287
        %s4292 = sld [smem:[#allocation14 + $0x12e]]
        %v4293 = vstv %s4292
        %v4294 = vmul.f32 %v4242, %v4293
        %v4295 = vmul.f32 %v4243, %v4293
        %4298 = vrot.lane.b32.xlu0 %v4294, 116
        %v4299 = vpop.permute.xlu0 %4298
        %4300 = vrot.lane.b32.xlu0 %v4295, 116
        %v4301 = vpop.permute.xlu0 %4300
        %v4304 = vadd.f32 %v4290, %v4299
        %v4305 = vadd.f32 %v4291, %v4301
        %s4306 = sld [smem:[#allocation14 + $0x12f]]
        %v4307 = vstv %s4306
        %v4308 = vmul.f32 %v4242, %v4307
        %v4309 = vmul.f32 %v4243, %v4307
        %4312 = vrot.lane.b32.xlu0 %v4308, 113
        %v4313 = vpop.permute.xlu0 %4312
        %4314 = vrot.lane.b32.xlu0 %v4309, 113
        %v4315 = vpop.permute.xlu0 %4314
        %v4318 = vadd.f32 %v4304, %v4313
        %v4319 = vadd.f32 %v4305, %v4315
        %s4320 = sld [smem:[#allocation14 + $0x130]]
        %v4321 = vstv %s4320
        %v4322 = vmul.f32 %v4242, %v4321
        %v4323 = vmul.f32 %v4243, %v4321
        %4326 = vrot.lane.b32.xlu0 %v4322, 110
        %v4327 = vpop.permute.xlu0 %4326
        %4328 = vrot.lane.b32.xlu0 %v4323, 110
        %v4329 = vpop.permute.xlu0 %4328
        %v4332 = vadd.f32 %v4318, %v4327
        %v4333 = vadd.f32 %v4319, %v4329
        %s4334 = sld [smem:[#allocation16 + $0x2]]
        %v4335 = vstv %s4334
        %v4336 = vadd.f32 %v4332, %v4335
        %v4337 = vadd.f32 %v4333, %v4335
        %v4338 = vld [vmem:[%s2391] sm:$0xff]
        %v4339 = vld [vmem:[%s2391 + $0x8] sm:$0xff]
        %s4340 = sld [smem:[#allocation14 + $0x180]]
        %v4341 = vstv %s4340
        %v4342 = vmul.f32 %v4338, %v4341
        %v4343 = vmul.f32 %v4339, %v4341
        %v4344 = vadd.f32 %v4342, 0.0
        %v4345 = vadd.f32 %v4343, 0.0
        %s4346 = sld [smem:[#allocation14 + $0x181]]
        %v4347 = vstv %s4346
        %v4348 = vmul.f32 %v4338, %v4347
        %v4349 = vmul.f32 %v4339, %v4347
        %4352 = vrot.lane.b32.xlu0 %v4348, 125
        %v4353 = vpop.permute.xlu0 %4352
        %4354 = vrot.lane.b32.xlu0 %v4349, 125
        %v4355 = vpop.permute.xlu0 %4354
        %v4358 = vadd.f32 %v4344, %v4353
        %v4359 = vadd.f32 %v4345, %v4355
        %s4360 = sld [smem:[#allocation14 + $0x182]]
        %v4361 = vstv %s4360
        %v4362 = vmul.f32 %v4338, %v4361
        %v4363 = vmul.f32 %v4339, %v4361
        %4366 = vrot.lane.b32.xlu0 %v4362, 122
        %v4367 = vpop.permute.xlu0 %4366
        %4368 = vrot.lane.b32.xlu0 %v4363, 122
        %v4369 = vpop.permute.xlu0 %4368
        %v4372 = vadd.f32 %v4358, %v4367
        %v4373 = vadd.f32 %v4359, %v4369
        %s4374 = sld [smem:[#allocation14 + $0x183]]
        %v4375 = vstv %s4374
        %v4376 = vmul.f32 %v4338, %v4375
        %v4377 = vmul.f32 %v4339, %v4375
        %4380 = vrot.lane.b32.xlu0 %v4376, 119
        %v4381 = vpop.permute.xlu0 %4380
        %4382 = vrot.lane.b32.xlu0 %v4377, 119
        %v4383 = vpop.permute.xlu0 %4382
        %v4386 = vadd.f32 %v4372, %v4381
        %v4387 = vadd.f32 %v4373, %v4383
        %s4388 = sld [smem:[#allocation14 + $0x184]]
        %v4389 = vstv %s4388
        %v4390 = vmul.f32 %v4338, %v4389
        %v4391 = vmul.f32 %v4339, %v4389
        %4394 = vrot.lane.b32.xlu0 %v4390, 116
        %v4395 = vpop.permute.xlu0 %4394
        %4396 = vrot.lane.b32.xlu0 %v4391, 116
        %v4397 = vpop.permute.xlu0 %4396
        %v4400 = vadd.f32 %v4386, %v4395
        %v4401 = vadd.f32 %v4387, %v4397
        %s4402 = sld [smem:[#allocation14 + $0x185]]
        %v4403 = vstv %s4402
        %v4404 = vmul.f32 %v4338, %v4403
        %v4405 = vmul.f32 %v4339, %v4403
        %4408 = vrot.lane.b32.xlu0 %v4404, 113
        %v4409 = vpop.permute.xlu0 %4408
        %4410 = vrot.lane.b32.xlu0 %v4405, 113
        %v4411 = vpop.permute.xlu0 %4410
        %v4414 = vadd.f32 %v4400, %v4409
        %v4415 = vadd.f32 %v4401, %v4411
        %s4416 = sld [smem:[#allocation14 + $0x186]]
        %v4417 = vstv %s4416
        %v4418 = vmul.f32 %v4338, %v4417
        %v4419 = vmul.f32 %v4339, %v4417
        %4422 = vrot.lane.b32.xlu0 %v4418, 110
        %v4423 = vpop.permute.xlu0 %4422
        %4424 = vrot.lane.b32.xlu0 %v4419, 110
        %v4425 = vpop.permute.xlu0 %4424
        %v4428 = vadd.f32 %v4414, %v4423
        %v4429 = vadd.f32 %v4415, %v4425
        %v4430 = vld [vmem:[%s2391 + $0x3] sm:$0xff]
        %v4431 = vld [vmem:[%s2391 + $0xb] sm:$0xff]
        %s4432 = sld [smem:[#allocation14 + $0x187]]
        %v4433 = vstv %s4432
        %v4434 = vmul.f32 %v4430, %v4433
        %v4435 = vmul.f32 %v4431, %v4433
        %v4436 = vadd.f32 %v4428, %v4434
        %v4437 = vadd.f32 %v4429, %v4435
        %s4438 = sld [smem:[#allocation14 + $0x188]]
        %v4439 = vstv %s4438
        %v4440 = vmul.f32 %v4430, %v4439
        %v4441 = vmul.f32 %v4431, %v4439
        %4444 = vrot.lane.b32.xlu0 %v4440, 125
        %v4445 = vpop.permute.xlu0 %4444
        %4446 = vrot.lane.b32.xlu0 %v4441, 125
        %v4447 = vpop.permute.xlu0 %4446
        %v4450 = vadd.f32 %v4436, %v4445
        %v4451 = vadd.f32 %v4437, %v4447
        %s4452 = sld [smem:[#allocation14 + $0x189]]
        %v4453 = vstv %s4452
        %v4454 = vmul.f32 %v4430, %v4453
        %v4455 = vmul.f32 %v4431, %v4453
        %4458 = vrot.lane.b32.xlu0 %v4454, 122
        %v4459 = vpop.permute.xlu0 %4458
        %4460 = vrot.lane.b32.xlu0 %v4455, 122
        %v4461 = vpop.permute.xlu0 %4460
        %v4464 = vadd.f32 %v4450, %v4459
        %v4465 = vadd.f32 %v4451, %v4461
        %s4466 = sld [smem:[#allocation14 + $0x18a]]
        %v4467 = vstv %s4466
        %v4468 = vmul.f32 %v4430, %v4467
        %v4469 = vmul.f32 %v4431, %v4467
        %4472 = vrot.lane.b32.xlu0 %v4468, 119
        %v4473 = vpop.permute.xlu0 %4472
        %4474 = vrot.lane.b32.xlu0 %v4469, 119
        %v4475 = vpop.permute.xlu0 %4474
        %v4478 = vadd.f32 %v4464, %v4473
        %v4479 = vadd.f32 %v4465, %v4475
        %s4480 = sld [smem:[#allocation14 + $0x18b]]
        %v4481 = vstv %s4480
        %v4482 = vmul.f32 %v4430, %v4481
        %v4483 = vmul.f32 %v4431, %v4481
        %4486 = vrot.lane.b32.xlu0 %v4482, 116
        %v4487 = vpop.permute.xlu0 %4486
        %4488 = vrot.lane.b32.xlu0 %v4483, 116
        %v4489 = vpop.permute.xlu0 %4488
        %v4492 = vadd.f32 %v4478, %v4487
        %v4493 = vadd.f32 %v4479, %v4489
        %s4494 = sld [smem:[#allocation14 + $0x18c]]
        %v4495 = vstv %s4494
        %v4496 = vmul.f32 %v4430, %v4495
        %v4497 = vmul.f32 %v4431, %v4495
        %4500 = vrot.lane.b32.xlu0 %v4496, 113
        %v4501 = vpop.permute.xlu0 %4500
        %4502 = vrot.lane.b32.xlu0 %v4497, 113
        %v4503 = vpop.permute.xlu0 %4502
        %v4506 = vadd.f32 %v4492, %v4501
        %v4507 = vadd.f32 %v4493, %v4503
        %s4508 = sld [smem:[#allocation14 + $0x18d]]
        %v4509 = vstv %s4508
        %v4510 = vmul.f32 %v4430, %v4509
        %v4511 = vmul.f32 %v4431, %v4509
        %4514 = vrot.lane.b32.xlu0 %v4510, 110
        %v4515 = vpop.permute.xlu0 %4514
        %4516 = vrot.lane.b32.xlu0 %v4511, 110
        %v4517 = vpop.permute.xlu0 %4516
        %v4520 = vadd.f32 %v4506, %v4515
        %v4521 = vadd.f32 %v4507, %v4517
        %v4522 = vld [vmem:[%s2391 + $0x6] sm:$0xff]
        %v4523 = vld [vmem:[%s2391 + $0xe] sm:$0xff]
        %s4524 = sld [smem:[#allocation14 + $0x18e]]
        %v4525 = vstv %s4524
        %v4526 = vmul.f32 %v4522, %v4525
        %v4527 = vmul.f32 %v4523, %v4525
        %v4528 = vadd.f32 %v4520, %v4526
        %v4529 = vadd.f32 %v4521, %v4527
        %s4530 = sld [smem:[#allocation14 + $0x18f]]
        %v4531 = vstv %s4530
        %v4532 = vmul.f32 %v4522, %v4531
        %v4533 = vmul.f32 %v4523, %v4531
        %4536 = vrot.lane.b32.xlu0 %v4532, 125
        %v4537 = vpop.permute.xlu0 %4536
        %4538 = vrot.lane.b32.xlu0 %v4533, 125
        %v4539 = vpop.permute.xlu0 %4538
        %v4542 = vadd.f32 %v4528, %v4537
        %v4543 = vadd.f32 %v4529, %v4539
        %s4544 = sld [smem:[#allocation14 + $0x190]]
        %v4545 = vstv %s4544
        %v4546 = vmul.f32 %v4522, %v4545
        %v4547 = vmul.f32 %v4523, %v4545
        %4550 = vrot.lane.b32.xlu0 %v4546, 122
        %v4551 = vpop.permute.xlu0 %4550
        %4552 = vrot.lane.b32.xlu0 %v4547, 122
        %v4553 = vpop.permute.xlu0 %4552
        %v4556 = vadd.f32 %v4542, %v4551
        %v4557 = vadd.f32 %v4543, %v4553
        %s4558 = sld [smem:[#allocation14 + $0x191]]
        %v4559 = vstv %s4558
        %v4560 = vmul.f32 %v4522, %v4559
        %v4561 = vmul.f32 %v4523, %v4559
        %4564 = vrot.lane.b32.xlu0 %v4560, 119
        %v4565 = vpop.permute.xlu0 %4564
        %4566 = vrot.lane.b32.xlu0 %v4561, 119
        %v4567 = vpop.permute.xlu0 %4566
        %v4570 = vadd.f32 %v4556, %v4565
        %v4571 = vadd.f32 %v4557, %v4567
        %s4572 = sld [smem:[#allocation14 + $0x192]]
        %v4573 = vstv %s4572
        %v4574 = vmul.f32 %v4522, %v4573
        %v4575 = vmul.f32 %v4523, %v4573
        %4578 = vrot.lane.b32.xlu0 %v4574, 116
        %v4579 = vpop.permute.xlu0 %4578
        %4580 = vrot.lane.b32.xlu0 %v4575, 116
        %v4581 = vpop.permute.xlu0 %4580
        %v4584 = vadd.f32 %v4570, %v4579
        %v4585 = vadd.f32 %v4571, %v4581
        %s4586 = sld [smem:[#allocation14 + $0x193]]
        %v4587 = vstv %s4586
        %v4588 = vmul.f32 %v4522, %v4587
        %v4589 = vmul.f32 %v4523, %v4587
        %4592 = vrot.lane.b32.xlu0 %v4588, 113
        %v4593 = vpop.permute.xlu0 %4592
        %4594 = vrot.lane.b32.xlu0 %v4589, 113
        %v4595 = vpop.permute.xlu0 %4594
        %v4598 = vadd.f32 %v4584, %v4593
        %v4599 = vadd.f32 %v4585, %v4595
        %s4600 = sld [smem:[#allocation14 + $0x194]]
        %v4601 = vstv %s4600
        %v4602 = vmul.f32 %v4522, %v4601
        %v4603 = vmul.f32 %v4523, %v4601
        %4606 = vrot.lane.b32.xlu0 %v4602, 110
        %v4607 = vpop.permute.xlu0 %4606
        %4608 = vrot.lane.b32.xlu0 %v4603, 110
        %v4609 = vpop.permute.xlu0 %4608
        %v4612 = vadd.f32 %v4598, %v4607
        %v4613 = vadd.f32 %v4599, %v4609
        %v4614 = vld [vmem:[%s2391 + $0x9] sm:$0xff]
        %v4615 = vld [vmem:[%s2391 + $0x11] sm:$0xff]
        %s4616 = sld [smem:[#allocation14 + $0x195]]
        %v4617 = vstv %s4616
        %v4618 = vmul.f32 %v4614, %v4617
        %v4619 = vmul.f32 %v4615, %v4617
        %v4620 = vadd.f32 %v4612, %v4618
        %v4621 = vadd.f32 %v4613, %v4619
        %s4622 = sld [smem:[#allocation14 + $0x196]]
        %v4623 = vstv %s4622
        %v4624 = vmul.f32 %v4614, %v4623
        %v4625 = vmul.f32 %v4615, %v4623
        %4628 = vrot.lane.b32.xlu0 %v4624, 125
        %v4629 = vpop.permute.xlu0 %4628
        %4630 = vrot.lane.b32.xlu0 %v4625, 125
        %v4631 = vpop.permute.xlu0 %4630
        %v4634 = vadd.f32 %v4620, %v4629
        %v4635 = vadd.f32 %v4621, %v4631
        %s4636 = sld [smem:[#allocation14 + $0x197]]
        %v4637 = vstv %s4636
        %v4638 = vmul.f32 %v4614, %v4637
        %v4639 = vmul.f32 %v4615, %v4637
        %4642 = vrot.lane.b32.xlu0 %v4638, 122
        %v4643 = vpop.permute.xlu0 %4642
        %4644 = vrot.lane.b32.xlu0 %v4639, 122
        %v4645 = vpop.permute.xlu0 %4644
        %v4648 = vadd.f32 %v4634, %v4643
        %v4649 = vadd.f32 %v4635, %v4645
        %s4650 = sld [smem:[#allocation14 + $0x198]]
        %v4651 = vstv %s4650
        %v4652 = vmul.f32 %v4614, %v4651
        %v4653 = vmul.f32 %v4615, %v4651
        %4656 = vrot.lane.b32.xlu0 %v4652, 119
        %v4657 = vpop.permute.xlu0 %4656
        %4658 = vrot.lane.b32.xlu0 %v4653, 119
        %v4659 = vpop.permute.xlu0 %4658
        %v4662 = vadd.f32 %v4648, %v4657
        %v4663 = vadd.f32 %v4649, %v4659
        %s4664 = sld [smem:[#allocation14 + $0x199]]
        %v4665 = vstv %s4664
        %v4666 = vmul.f32 %v4614, %v4665
        %v4667 = vmul.f32 %v4615, %v4665
        %4670 = vrot.lane.b32.xlu0 %v4666, 116
        %v4671 = vpop.permute.xlu0 %4670
        %4672 = vrot.lane.b32.xlu0 %v4667, 116
        %v4673 = vpop.permute.xlu0 %4672
        %v4676 = vadd.f32 %v4662, %v4671
        %v4677 = vadd.f32 %v4663, %v4673
        %s4678 = sld [smem:[#allocation14 + $0x19a]]
        %v4679 = vstv %s4678
        %v4680 = vmul.f32 %v4614, %v4679
        %v4681 = vmul.f32 %v4615, %v4679
        %4684 = vrot.lane.b32.xlu0 %v4680, 113
        %v4685 = vpop.permute.xlu0 %4684
        %4686 = vrot.lane.b32.xlu0 %v4681, 113
        %v4687 = vpop.permute.xlu0 %4686
        %v4690 = vadd.f32 %v4676, %v4685
        %v4691 = vadd.f32 %v4677, %v4687
        %s4692 = sld [smem:[#allocation14 + $0x19b]]
        %v4693 = vstv %s4692
        %v4694 = vmul.f32 %v4614, %v4693
        %v4695 = vmul.f32 %v4615, %v4693
        %4698 = vrot.lane.b32.xlu0 %v4694, 110
        %v4699 = vpop.permute.xlu0 %4698
        %4700 = vrot.lane.b32.xlu0 %v4695, 110
        %v4701 = vpop.permute.xlu0 %4700
        %v4704 = vadd.f32 %v4690, %v4699
        %v4705 = vadd.f32 %v4691, %v4701
        %v4706 = vld [vmem:[%s2391 + $0xc] sm:$0xff]
        %v4707 = vld [vmem:[%s2391 + $0x14] sm:$0xff]
        %s4708 = sld [smem:[#allocation14 + $0x19c]]
        %v4709 = vstv %s4708
        %v4710 = vmul.f32 %v4706, %v4709
        %v4711 = vmul.f32 %v4707, %v4709
        %v4712 = vadd.f32 %v4704, %v4710
        %v4713 = vadd.f32 %v4705, %v4711
        %s4714 = sld [smem:[#allocation14 + $0x19d]]
        %v4715 = vstv %s4714
        %v4716 = vmul.f32 %v4706, %v4715
        %v4717 = vmul.f32 %v4707, %v4715
        %4720 = vrot.lane.b32.xlu0 %v4716, 125
        %v4721 = vpop.permute.xlu0 %4720
        %4722 = vrot.lane.b32.xlu0 %v4717, 125
        %v4723 = vpop.permute.xlu0 %4722
        %v4726 = vadd.f32 %v4712, %v4721
        %v4727 = vadd.f32 %v4713, %v4723
        %s4728 = sld [smem:[#allocation14 + $0x19e]]
        %v4729 = vstv %s4728
        %v4730 = vmul.f32 %v4706, %v4729
        %v4731 = vmul.f32 %v4707, %v4729
        %4734 = vrot.lane.b32.xlu0 %v4730, 122
        %v4735 = vpop.permute.xlu0 %4734
        %4736 = vrot.lane.b32.xlu0 %v4731, 122
        %v4737 = vpop.permute.xlu0 %4736
        %v4740 = vadd.f32 %v4726, %v4735
        %v4741 = vadd.f32 %v4727, %v4737
        %s4742 = sld [smem:[#allocation14 + $0x19f]]
        %v4743 = vstv %s4742
        %v4744 = vmul.f32 %v4706, %v4743
        %v4745 = vmul.f32 %v4707, %v4743
        %4748 = vrot.lane.b32.xlu0 %v4744, 119
        %v4749 = vpop.permute.xlu0 %4748
        %4750 = vrot.lane.b32.xlu0 %v4745, 119
        %v4751 = vpop.permute.xlu0 %4750
        %v4754 = vadd.f32 %v4740, %v4749
        %v4755 = vadd.f32 %v4741, %v4751
        %s4756 = sld [smem:[#allocation14 + $0x1a0]]
        %v4757 = vstv %s4756
        %v4758 = vmul.f32 %v4706, %v4757
        %v4759 = vmul.f32 %v4707, %v4757
        %4762 = vrot.lane.b32.xlu0 %v4758, 116
        %v4763 = vpop.permute.xlu0 %4762
        %4764 = vrot.lane.b32.xlu0 %v4759, 116
        %v4765 = vpop.permute.xlu0 %4764
        %v4768 = vadd.f32 %v4754, %v4763
        %v4769 = vadd.f32 %v4755, %v4765
        %s4770 = sld [smem:[#allocation14 + $0x1a1]]
        %v4771 = vstv %s4770
        %v4772 = vmul.f32 %v4706, %v4771
        %v4773 = vmul.f32 %v4707, %v4771
        %4776 = vrot.lane.b32.xlu0 %v4772, 113
        %v4777 = vpop.permute.xlu0 %4776
        %4778 = vrot.lane.b32.xlu0 %v4773, 113
        %v4779 = vpop.permute.xlu0 %4778
        %v4782 = vadd.f32 %v4768, %v4777
        %v4783 = vadd.f32 %v4769, %v4779
        %s4784 = sld [smem:[#allocation14 + $0x1a2]]
        %v4785 = vstv %s4784
        %v4786 = vmul.f32 %v4706, %v4785
        %v4787 = vmul.f32 %v4707, %v4785
        %4790 = vrot.lane.b32.xlu0 %v4786, 110
        %v4791 = vpop.permute.xlu0 %4790
        %4792 = vrot.lane.b32.xlu0 %v4787, 110
        %v4793 = vpop.permute.xlu0 %4792
        %v4796 = vadd.f32 %v4782, %v4791
        %v4797 = vadd.f32 %v4783, %v4793
        %v4798 = vld [vmem:[%s2391 + $0xf] sm:$0xff]
        %v4799 = vld [vmem:[%s2391 + $0x17] sm:$0xff]
        %s4800 = sld [smem:[#allocation14 + $0x1a3]]
        %v4801 = vstv %s4800
        %v4802 = vmul.f32 %v4798, %v4801
        %v4803 = vmul.f32 %v4799, %v4801
        %v4804 = vadd.f32 %v4796, %v4802
        %v4805 = vadd.f32 %v4797, %v4803
        %s4806 = sld [smem:[#allocation14 + $0x1a4]]
        %v4807 = vstv %s4806
        %v4808 = vmul.f32 %v4798, %v4807
        %v4809 = vmul.f32 %v4799, %v4807
        %4812 = vrot.lane.b32.xlu0 %v4808, 125
        %v4813 = vpop.permute.xlu0 %4812
        %4814 = vrot.lane.b32.xlu0 %v4809, 125
        %v4815 = vpop.permute.xlu0 %4814
        %v4818 = vadd.f32 %v4804, %v4813
        %v4819 = vadd.f32 %v4805, %v4815
        %s4820 = sld [smem:[#allocation14 + $0x1a5]]
        %v4821 = vstv %s4820
        %v4822 = vmul.f32 %v4798, %v4821
        %v4823 = vmul.f32 %v4799, %v4821
        %4826 = vrot.lane.b32.xlu0 %v4822, 122
        %v4827 = vpop.permute.xlu0 %4826
        %4828 = vrot.lane.b32.xlu0 %v4823, 122
        %v4829 = vpop.permute.xlu0 %4828
        %v4832 = vadd.f32 %v4818, %v4827
        %v4833 = vadd.f32 %v4819, %v4829
        %s4834 = sld [smem:[#allocation14 + $0x1a6]]
        %v4835 = vstv %s4834
        %v4836 = vmul.f32 %v4798, %v4835
        %v4837 = vmul.f32 %v4799, %v4835
        %4840 = vrot.lane.b32.xlu0 %v4836, 119
        %v4841 = vpop.permute.xlu0 %4840
        %4842 = vrot.lane.b32.xlu0 %v4837, 119
        %v4843 = vpop.permute.xlu0 %4842
        %v4846 = vadd.f32 %v4832, %v4841
        %v4847 = vadd.f32 %v4833, %v4843
        %s4848 = sld [smem:[#allocation14 + $0x1a7]]
        %v4849 = vstv %s4848
        %v4850 = vmul.f32 %v4798, %v4849
        %v4851 = vmul.f32 %v4799, %v4849
        %4854 = vrot.lane.b32.xlu0 %v4850, 116
        %v4855 = vpop.permute.xlu0 %4854
        %4856 = vrot.lane.b32.xlu0 %v4851, 116
        %v4857 = vpop.permute.xlu0 %4856
        %v4860 = vadd.f32 %v4846, %v4855
        %v4861 = vadd.f32 %v4847, %v4857
        %s4862 = sld [smem:[#allocation14 + $0x1a8]]
        %v4863 = vstv %s4862
        %v4864 = vmul.f32 %v4798, %v4863
        %v4865 = vmul.f32 %v4799, %v4863
        %4868 = vrot.lane.b32.xlu0 %v4864, 113
        %v4869 = vpop.permute.xlu0 %4868
        %4870 = vrot.lane.b32.xlu0 %v4865, 113
        %v4871 = vpop.permute.xlu0 %4870
        %v4874 = vadd.f32 %v4860, %v4869
        %v4875 = vadd.f32 %v4861, %v4871
        %s4876 = sld [smem:[#allocation14 + $0x1a9]]
        %v4877 = vstv %s4876
        %v4878 = vmul.f32 %v4798, %v4877
        %v4879 = vmul.f32 %v4799, %v4877
        %4882 = vrot.lane.b32.xlu0 %v4878, 110
        %v4883 = vpop.permute.xlu0 %4882
        %4884 = vrot.lane.b32.xlu0 %v4879, 110
        %v4885 = vpop.permute.xlu0 %4884
        %v4888 = vadd.f32 %v4874, %v4883
        %v4889 = vadd.f32 %v4875, %v4885
        %v4890 = vld [vmem:[%s2391 + $0x12] sm:$0xff]
        %v4891 = vld [vmem:[%s2391 + $0x1a] sm:$0xff]
        %s4892 = sld [smem:[#allocation14 + $0x1aa]]
        %v4893 = vstv %s4892
        %v4894 = vmul.f32 %v4890, %v4893
        %v4895 = vmul.f32 %v4891, %v4893
        %v4896 = vadd.f32 %v4888, %v4894
        %v4897 = vadd.f32 %v4889, %v4895
        %s4898 = sld [smem:[#allocation14 + $0x1ab]]
        %v4899 = vstv %s4898
        %v4900 = vmul.f32 %v4890, %v4899
        %v4901 = vmul.f32 %v4891, %v4899
        %4904 = vrot.lane.b32.xlu0 %v4900, 125
        %v4905 = vpop.permute.xlu0 %4904
        %4906 = vrot.lane.b32.xlu0 %v4901, 125
        %v4907 = vpop.permute.xlu0 %4906
        %v4910 = vadd.f32 %v4896, %v4905
        %v4911 = vadd.f32 %v4897, %v4907
        %s4912 = sld [smem:[#allocation14 + $0x1ac]]
        %v4913 = vstv %s4912
        %v4914 = vmul.f32 %v4890, %v4913
        %v4915 = vmul.f32 %v4891, %v4913
        %4918 = vrot.lane.b32.xlu0 %v4914, 122
        %v4919 = vpop.permute.xlu0 %4918
        %4920 = vrot.lane.b32.xlu0 %v4915, 122
        %v4921 = vpop.permute.xlu0 %4920
        %v4924 = vadd.f32 %v4910, %v4919
        %v4925 = vadd.f32 %v4911, %v4921
        %s4926 = sld [smem:[#allocation14 + $0x1ad]]
        %v4927 = vstv %s4926
        %v4928 = vmul.f32 %v4890, %v4927
        %v4929 = vmul.f32 %v4891, %v4927
        %4932 = vrot.lane.b32.xlu0 %v4928, 119
        %v4933 = vpop.permute.xlu0 %4932
        %4934 = vrot.lane.b32.xlu0 %v4929, 119
        %v4935 = vpop.permute.xlu0 %4934
        %v4938 = vadd.f32 %v4924, %v4933
        %v4939 = vadd.f32 %v4925, %v4935
        %s4940 = sld [smem:[#allocation14 + $0x1ae]]
        %v4941 = vstv %s4940
        %v4942 = vmul.f32 %v4890, %v4941
        %v4943 = vmul.f32 %v4891, %v4941
        %4946 = vrot.lane.b32.xlu0 %v4942, 116
        %v4947 = vpop.permute.xlu0 %4946
        %4948 = vrot.lane.b32.xlu0 %v4943, 116
        %v4949 = vpop.permute.xlu0 %4948
        %v4952 = vadd.f32 %v4938, %v4947
        %v4953 = vadd.f32 %v4939, %v4949
        %s4954 = sld [smem:[#allocation14 + $0x1af]]
        %v4955 = vstv %s4954
        %v4956 = vmul.f32 %v4890, %v4955
        %v4957 = vmul.f32 %v4891, %v4955
        %4960 = vrot.lane.b32.xlu0 %v4956, 113
        %v4961 = vpop.permute.xlu0 %4960
        %4962 = vrot.lane.b32.xlu0 %v4957, 113
        %v4963 = vpop.permute.xlu0 %4962
        %v4966 = vadd.f32 %v4952, %v4961
        %v4967 = vadd.f32 %v4953, %v4963
        %s4968 = sld [smem:[#allocation14 + $0x1b0]]
        %v4969 = vstv %s4968
        %v4970 = vmul.f32 %v4890, %v4969
        %v4971 = vmul.f32 %v4891, %v4969
        %4974 = vrot.lane.b32.xlu0 %v4970, 110
        %v4975 = vpop.permute.xlu0 %4974
        %4976 = vrot.lane.b32.xlu0 %v4971, 110
        %v4977 = vpop.permute.xlu0 %4976
        %v4980 = vadd.f32 %v4966, %v4975
        %v4981 = vadd.f32 %v4967, %v4977
        %s4982 = sld [smem:[#allocation16 + $0x3]]
        %v4983 = vstv %s4982
        %v4984 = vadd.f32 %v4980, %v4983
        %v4985 = vadd.f32 %v4981, %v4983
        %s4986 = sld [smem:[#allocation18]]
        %v4987 = vstv %s4986
        %v4988 = vmul.f32 %v3040, %v4987
        %v4989 = vmul.f32 %v3041, %v4987
        %s4990 = sld [smem:[#allocation20]]
        %v4991 = vstv %s4990
        %v4992 = vmul.f32 %v3040, %v4991
        %v4993 = vmul.f32 %v3041, %v4991
        %s4994 = sld [smem:[#allocation18 + $0x1]]
        %v4995 = vstv %s4994
        %v4996 = vmul.f32 %v3688, %v4995
        %v4997 = vmul.f32 %v3689, %v4995
        %v4998 = vadd.f32 %v4988, %v4996
        %v4999 = vadd.f32 %v4989, %v4997
        %s5000 = sld [smem:[#allocation20 + $0x1]]
        %v5001 = vstv %s5000
        %v5002 = vmul.f32 %v3688, %v5001
        %v5003 = vmul.f32 %v3689, %v5001
        %v5004 = vadd.f32 %v4992, %v5002
        %v5005 = vadd.f32 %v4993, %v5003
        %s5006 = sld [smem:[#allocation18 + $0x2]]
        %v5007 = vstv %s5006
        %v5008 = vmul.f32 %v4336, %v5007
        %v5009 = vmul.f32 %v4337, %v5007
        %v5010 = vadd.f32 %v4998, %v5008
        %v5011 = vadd.f32 %v4999, %v5009
        %s5012 = sld [smem:[#allocation20 + $0x2]]
        %v5013 = vstv %s5012
        %v5014 = vmul.f32 %v4336, %v5013
        %v5015 = vmul.f32 %v4337, %v5013
        %v5016 = vadd.f32 %v5004, %v5014
        %v5017 = vadd.f32 %v5005, %v5015
        %s5018 = sld [smem:[#allocation18 + $0x3]]
        %v5019 = vstv %s5018
        %v5020 = vmul.f32 %v4984, %v5019
        %v5021 = vmul.f32 %v4985, %v5019
        %v5022 = vadd.f32 %v5010, %v5020
        %v5023 = vadd.f32 %v5011, %v5021
        %s5024 = sld [smem:[#allocation20 + $0x3]]
        %v5025 = vstv %s5024
        %v5026 = vmul.f32 %v4984, %v5025
        %v5027 = vmul.f32 %v4985, %v5025
        %v5028 = vadd.f32 %v5016, %v5026
        %v5029 = vadd.f32 %v5017, %v5027
        %s5030 = sld [smem:[#allocation19]]
        %v5031 = vstv %s5030
        %v5032 = vadd.f32 %v5022, %v5031
        %v5033 = vadd.f32 %v5023, %v5031
        %s5034 = sld [smem:[#allocation22]]
        %v5035 = vstv %s5034
        %v5036 = vadd.f32 %v5028, %v5035
        %v5037 = vadd.f32 %v5029, %v5035
        %v5038 = vmul.f32 %v5036, 0.5
        %v5039 = vmul.f32 %v5037, 0.5
        %v5040 = vtanh.pop %v5038
        %v5041 = vtanh.pop %v5039
        %v5042 = vmul.f32 %v5040, 0.5
        %v5043 = vmul.f32 %v5041, 0.5
        %v5044 = vadd.f32 %v5042, 0.5
        %v5045 = vadd.f32 %v5043, 0.5
        %v5046 = vmul.f32 %v5032, %v5044
        %v5047 = vmul.f32 %v5033, %v5045
        %s5048 = sld [smem:[#allocation18 + $0x80]]
        %v5049 = vstv %s5048
        %v5050 = vmul.f32 %v3040, %v5049
        %v5051 = vmul.f32 %v3041, %v5049
        %s5052 = sld [smem:[#allocation20 + $0x80]]
        %v5053 = vstv %s5052
        %v5054 = vmul.f32 %v3040, %v5053
        %v5055 = vmul.f32 %v3041, %v5053
        %s5056 = sld [smem:[#allocation18 + $0x81]]
        %v5057 = vstv %s5056
        %v5058 = vmul.f32 %v3688, %v5057
        %v5059 = vmul.f32 %v3689, %v5057
        %v5060 = vadd.f32 %v5050, %v5058
        %v5061 = vadd.f32 %v5051, %v5059
        %s5062 = sld [smem:[#allocation20 + $0x81]]
        %v5063 = vstv %s5062
        %v5064 = vmul.f32 %v3688, %v5063
        %v5065 = vmul.f32 %v3689, %v5063
        %v5066 = vadd.f32 %v5054, %v5064
        %v5067 = vadd.f32 %v5055, %v5065
        %s5068 = sld [smem:[#allocation18 + $0x82]]
        %v5069 = vstv %s5068
        %v5070 = vmul.f32 %v4336, %v5069
        %v5071 = vmul.f32 %v4337, %v5069
        %v5072 = vadd.f32 %v5060, %v5070
        %v5073 = vadd.f32 %v5061, %v5071
        %s5074 = sld [smem:[#allocation20 + $0x82]]
        %v5075 = vstv %s5074
        %v5076 = vmul.f32 %v4336, %v5075
        %v5077 = vmul.f32 %v4337, %v5075
        %v5078 = vadd.f32 %v5066, %v5076
        %v5079 = vadd.f32 %v5067, %v5077
        %s5080 = sld [smem:[#allocation18 + $0x83]]
        %v5081 = vstv %s5080
        %v5082 = vmul.f32 %v4984, %v5081
        %v5083 = vmul.f32 %v4985, %v5081
        %v5084 = vadd.f32 %v5072, %v5082
        %v5085 = vadd.f32 %v5073, %v5083
        %s5086 = sld [smem:[#allocation20 + $0x83]]
        %v5087 = vstv %s5086
        %v5088 = vmul.f32 %v4984, %v5087
        %v5089 = vmul.f32 %v4985, %v5087
        %v5090 = vadd.f32 %v5078, %v5088
        %v5091 = vadd.f32 %v5079, %v5089
        %s5092 = sld [smem:[#allocation19 + $0x1]]
        %v5093 = vstv %s5092
        %v5094 = vadd.f32 %v5084, %v5093
        %v5095 = vadd.f32 %v5085, %v5093
        %s5096 = sld [smem:[#allocation22 + $0x1]]
        %v5097 = vstv %s5096
        %v5098 = vadd.f32 %v5090, %v5097
        %v5099 = vadd.f32 %v5091, %v5097
        %v5100 = vmul.f32 %v5098, 0.5
        %v5101 = vmul.f32 %v5099, 0.5
        %v5102 = vtanh.pop %v5100
        %v5103 = vtanh.pop %v5101
        %v5104 = vmul.f32 %v5102, 0.5
        %v5105 = vmul.f32 %v5103, 0.5
        %v5106 = vadd.f32 %v5104, 0.5
        %v5107 = vadd.f32 %v5105, 0.5
        %v5108 = vmul.f32 %v5094, %v5106
        %v5109 = vmul.f32 %v5095, %v5107
        %s5110 = sld [smem:[#allocation18 + $0x100]]
        %v5111 = vstv %s5110
        %v5112 = vmul.f32 %v3040, %v5111
        %v5113 = vmul.f32 %v3041, %v5111
        %s5114 = sld [smem:[#allocation20 + $0x100]]
        %v5115 = vstv %s5114
        %v5116 = vmul.f32 %v3040, %v5115
        %v5117 = vmul.f32 %v3041, %v5115
        %s5118 = sld [smem:[#allocation18 + $0x101]]
        %v5119 = vstv %s5118
        %v5120 = vmul.f32 %v3688, %v5119
        %v5121 = vmul.f32 %v3689, %v5119
        %v5122 = vadd.f32 %v5112, %v5120
        %v5123 = vadd.f32 %v5113, %v5121
        %s5124 = sld [smem:[#allocation20 + $0x101]]
        %v5125 = vstv %s5124
        %v5126 = vmul.f32 %v3688, %v5125
        %v5127 = vmul.f32 %v3689, %v5125
        %v5128 = vadd.f32 %v5116, %v5126
        %v5129 = vadd.f32 %v5117, %v5127
        %s5130 = sld [smem:[#allocation18 + $0x102]]
        %v5131 = vstv %s5130
        %v5132 = vmul.f32 %v4336, %v5131
        %v5133 = vmul.f32 %v4337, %v5131
        %v5134 = vadd.f32 %v5122, %v5132
        %v5135 = vadd.f32 %v5123, %v5133
        %s5136 = sld [smem:[#allocation20 + $0x102]]
        %v5137 = vstv %s5136
        %v5138 = vmul.f32 %v4336, %v5137
        %v5139 = vmul.f32 %v4337, %v5137
        %v5140 = vadd.f32 %v5128, %v5138
        %v5141 = vadd.f32 %v5129, %v5139
        %s5142 = sld [smem:[#allocation18 + $0x103]]
        %v5143 = vstv %s5142
        %v5144 = vmul.f32 %v4984, %v5143
        %v5145 = vmul.f32 %v4985, %v5143
        %v5146 = vadd.f32 %v5134, %v5144
        %v5147 = vadd.f32 %v5135, %v5145
        %s5148 = sld [smem:[#allocation20 + $0x103]]
        %v5149 = vstv %s5148
        %v5150 = vmul.f32 %v4984, %v5149
        %v5151 = vmul.f32 %v4985, %v5149
        %v5152 = vadd.f32 %v5140, %v5150
        %v5153 = vadd.f32 %v5141, %v5151
        %s5154 = sld [smem:[#allocation19 + $0x2]]
        %v5155 = vstv %s5154
        %v5156 = vadd.f32 %v5146, %v5155
        %v5157 = vadd.f32 %v5147, %v5155
        %s5158 = sld [smem:[#allocation22 + $0x2]]
        %v5159 = vstv %s5158
        %v5160 = vadd.f32 %v5152, %v5159
        %v5161 = vadd.f32 %v5153, %v5159
        %v5162 = vmul.f32 %v5160, 0.5
        %v5163 = vmul.f32 %v5161, 0.5
        %v5164 = vtanh.pop %v5162
        %v5165 = vtanh.pop %v5163
        %v5166 = vmul.f32 %v5164, 0.5
        %v5167 = vmul.f32 %v5165, 0.5
        %v5168 = vadd.f32 %v5166, 0.5
        %v5169 = vadd.f32 %v5167, 0.5
        %v5170 = vmul.f32 %v5156, %v5168
        %v5171 = vmul.f32 %v5157, %v5169
        %s5172 = sld [smem:[#allocation18 + $0x180]]
        %v5173 = vstv %s5172
        %v5174 = vmul.f32 %v3040, %v5173
        %v5175 = vmul.f32 %v3041, %v5173
        %s5176 = sld [smem:[#allocation20 + $0x180]]
        %v5177 = vstv %s5176
        %v5178 = vmul.f32 %v3040, %v5177
        %v5179 = vmul.f32 %v3041, %v5177
        %s5180 = sld [smem:[#allocation18 + $0x181]]
        %v5181 = vstv %s5180
        %v5182 = vmul.f32 %v3688, %v5181
        %v5183 = vmul.f32 %v3689, %v5181
        %v5184 = vadd.f32 %v5174, %v5182
        %v5185 = vadd.f32 %v5175, %v5183
        %s5186 = sld [smem:[#allocation20 + $0x181]]
        %v5187 = vstv %s5186
        %v5188 = vmul.f32 %v3688, %v5187
        %v5189 = vmul.f32 %v3689, %v5187
        %v5190 = vadd.f32 %v5178, %v5188
        %v5191 = vadd.f32 %v5179, %v5189
        %s5192 = sld [smem:[#allocation18 + $0x182]]
        %v5193 = vstv %s5192
        %v5194 = vmul.f32 %v4336, %v5193
        %v5195 = vmul.f32 %v4337, %v5193
        %v5196 = vadd.f32 %v5184, %v5194
        %v5197 = vadd.f32 %v5185, %v5195
        %s5198 = sld [smem:[#allocation20 + $0x182]]
        %v5199 = vstv %s5198
        %v5200 = vmul.f32 %v4336, %v5199
        %v5201 = vmul.f32 %v4337, %v5199
        %v5202 = vadd.f32 %v5190, %v5200
        %v5203 = vadd.f32 %v5191, %v5201
        %s5204 = sld [smem:[#allocation18 + $0x183]]
        %v5205 = vstv %s5204
        %v5206 = vmul.f32 %v4984, %v5205
        %v5207 = vmul.f32 %v4985, %v5205
        %v5208 = vadd.f32 %v5196, %v5206
        %v5209 = vadd.f32 %v5197, %v5207
        %s5210 = sld [smem:[#allocation20 + $0x183]]
        %v5211 = vstv %s5210
        %v5212 = vmul.f32 %v4984, %v5211
        %v5213 = vmul.f32 %v4985, %v5211
        %v5214 = vadd.f32 %v5202, %v5212
        %v5215 = vadd.f32 %v5203, %v5213
        %s5216 = sld [smem:[#allocation19 + $0x3]]
        %v5217 = vstv %s5216
        %v5218 = vadd.f32 %v5208, %v5217
        %v5219 = vadd.f32 %v5209, %v5217
        %s5220 = sld [smem:[#allocation22 + $0x3]]
        %v5221 = vstv %s5220
        %v5222 = vadd.f32 %v5214, %v5221
        %v5223 = vadd.f32 %v5215, %v5221
        %v5224 = vmul.f32 %v5222, 0.5
        %v5225 = vmul.f32 %v5223, 0.5
        %v5226 = vtanh.pop %v5224
        %v5227 = vtanh.pop %v5225
        %v5228 = vmul.f32 %v5226, 0.5
        %v5229 = vmul.f32 %v5227, 0.5
        %v5230 = vadd.f32 %v5228, 0.5
        %v5231 = vadd.f32 %v5229, 0.5
        %v5232 = vmul.f32 %v5218, %v5230
        %v5233 = vmul.f32 %v5219, %v5231
        %s5234 = sld [smem:[#allocation24]]
        %v5235 = vstv %s5234
        %v5236 = vmul.f32 %v5046, %v5235
        %v5237 = vmul.f32 %v5047, %v5235
        %s5238 = sld [smem:[#allocation24 + $0x1]]
        %v5239 = vstv %s5238
        %v5240 = vmul.f32 %v5108, %v5239
        %v5241 = vmul.f32 %v5109, %v5239
        %v5242 = vadd.f32 %v5236, %v5240
        %v5243 = vadd.f32 %v5237, %v5241
        %s5244 = sld [smem:[#allocation24 + $0x2]]
        %v5245 = vstv %s5244
        %v5246 = vmul.f32 %v5170, %v5245
        %v5247 = vmul.f32 %v5171, %v5245
        %v5248 = vadd.f32 %v5242, %v5246
        %v5249 = vadd.f32 %v5243, %v5247
        %s5250 = sld [smem:[#allocation24 + $0x3]]
        %v5251 = vstv %s5250
        %v5252 = vmul.f32 %v5232, %v5251
        %v5253 = vmul.f32 %v5233, %v5251
        %v5254 = vadd.f32 %v5248, %v5252
        %v5255 = vadd.f32 %v5249, %v5253
        %s5256 = sld [smem:[#allocation25]]
        %v5257 = vstv %s5256
        %v5258 = vadd.f32 %v5254, %v5257
        %v5259 = vadd.f32 %v5255, %v5257
        %v5260 = vld [vmem:[%s508] sm:$0xff]
        %v5261 = vld [vmem:[%s508 + $0x8] sm:$0xff]
        %v5262 = vadd.f32 %v5258, %v5260
        %v5263 = vadd.f32 %v5259, %v5261
        %vm5264 = vcmask 130048
        %5265 = vst.msk [vmem:[%s599] sm:$0xff] %vm5264, %v5262
        %5266 = vst.msk [vmem:[%s599 + $0x8] sm:$0xff] %vm5264, %v5263
        %s5267 = sld [smem:[#allocation24 + $0x80]]
        %v5268 = vstv %s5267
        %v5269 = vmul.f32 %v5046, %v5268
        %v5270 = vmul.f32 %v5047, %v5268
        %s5271 = sld [smem:[#allocation24 + $0x81]]
        %v5272 = vstv %s5271
        %v5273 = vmul.f32 %v5108, %v5272
        %v5274 = vmul.f32 %v5109, %v5272
        %v5275 = vadd.f32 %v5269, %v5273
        %v5276 = vadd.f32 %v5270, %v5274
        %s5277 = sld [smem:[#allocation24 + $0x82]]
        %v5278 = vstv %s5277
        %v5279 = vmul.f32 %v5170, %v5278
        %v5280 = vmul.f32 %v5171, %v5278
        %v5281 = vadd.f32 %v5275, %v5279
        %v5282 = vadd.f32 %v5276, %v5280
        %s5283 = sld [smem:[#allocation24 + $0x83]]
        %v5284 = vstv %s5283
        %v5285 = vmul.f32 %v5232, %v5284
        %v5286 = vmul.f32 %v5233, %v5284
        %v5287 = vadd.f32 %v5281, %v5285
        %v5288 = vadd.f32 %v5282, %v5286
        %s5289 = sld [smem:[#allocation25 + $0x1]]
        %v5290 = vstv %s5289
        %v5291 = vadd.f32 %v5287, %v5290
        %v5292 = vadd.f32 %v5288, %v5290
        %v5293 = vld [vmem:[%s665] sm:$0xff]
        %v5294 = vld [vmem:[%s665 + $0x8] sm:$0xff]
        %v5295 = vadd.f32 %v5291, %v5293
        %v5296 = vadd.f32 %v5292, %v5294
        %s5297 = scalar_lea.vmem %s599, 16 [#allocation27]
        %5298 = vst.msk [vmem:[%s5297] sm:$0xff] %vm5264, %v5295
        %5299 = vst.msk [vmem:[%s5297 + $0x8] sm:$0xff] %vm5264, %v5296
        %s5300 = sld [smem:[#allocation24 + $0x100]]
        %v5301 = vstv %s5300
        %v5302 = vmul.f32 %v5046, %v5301
        %v5303 = vmul.f32 %v5047, %v5301
        %s5304 = sld [smem:[#allocation24 + $0x101]]
        %v5305 = vstv %s5304
        %v5306 = vmul.f32 %v5108, %v5305
        %v5307 = vmul.f32 %v5109, %v5305
        %v5308 = vadd.f32 %v5302, %v5306
        %v5309 = vadd.f32 %v5303, %v5307
        %s5310 = sld [smem:[#allocation24 + $0x102]]
        %v5311 = vstv %s5310
        %v5312 = vmul.f32 %v5170, %v5311
        %v5313 = vmul.f32 %v5171, %v5311
        %v5314 = vadd.f32 %v5308, %v5312
        %v5315 = vadd.f32 %v5309, %v5313
        %s5316 = sld [smem:[#allocation24 + $0x103]]
        %v5317 = vstv %s5316
        %v5318 = vmul.f32 %v5232, %v5317
        %v5319 = vmul.f32 %v5233, %v5317
        %v5320 = vadd.f32 %v5314, %v5318
        %v5321 = vadd.f32 %v5315, %v5319
        %s5322 = sld [smem:[#allocation25 + $0x2]]
        %v5323 = vstv %s5322
        %v5324 = vadd.f32 %v5320, %v5323
        %v5325 = vadd.f32 %v5321, %v5323
        %v5326 = vld [vmem:[%s668] sm:$0xff]
        %v5327 = vld [vmem:[%s668 + $0x8] sm:$0xff]
        %v5328 = vadd.f32 %v5324, %v5326
        %v5329 = vadd.f32 %v5325, %v5327
        %s5330 = scalar_lea.vmem %s599, 32 [#allocation27]
        %5331 = vst.msk [vmem:[%s5330] sm:$0xff] %vm5264, %v5328
        %5332 = vst.msk [vmem:[%s5330 + $0x8] sm:$0xff] %vm5264, %v5329
        %s5333 = sld [smem:[#allocation24 + $0x180]]
        %v5334 = vstv %s5333
        %v5335 = vmul.f32 %v5046, %v5334
        %v5336 = vmul.f32 %v5047, %v5334
        %s5337 = sld [smem:[#allocation24 + $0x181]]
        %v5338 = vstv %s5337
        %v5339 = vmul.f32 %v5108, %v5338
        %v5340 = vmul.f32 %v5109, %v5338
        %v5341 = vadd.f32 %v5335, %v5339
        %v5342 = vadd.f32 %v5336, %v5340
        %s5343 = sld [smem:[#allocation24 + $0x182]]
        %v5344 = vstv %s5343
        %v5345 = vmul.f32 %v5170, %v5344
        %v5346 = vmul.f32 %v5171, %v5344
        %v5347 = vadd.f32 %v5341, %v5345
        %v5348 = vadd.f32 %v5342, %v5346
        %s5349 = sld [smem:[#allocation24 + $0x183]]
        %v5350 = vstv %s5349
        %v5351 = vmul.f32 %v5232, %v5350
        %v5352 = vmul.f32 %v5233, %v5350
        %v5353 = vadd.f32 %v5347, %v5351
        %v5354 = vadd.f32 %v5348, %v5352
        %s5355 = sld [smem:[#allocation25 + $0x3]]
        %v5356 = vstv %s5355
        %v5357 = vadd.f32 %v5353, %v5356
        %v5358 = vadd.f32 %v5354, %v5356
        %v5359 = vld [vmem:[%s671] sm:$0xff]
        %v5360 = vld [vmem:[%s671 + $0x8] sm:$0xff]
        %v5361 = vadd.f32 %v5357, %v5359
        %v5362 = vadd.f32 %v5358, %v5360
        %s5363 = scalar_lea.vmem %s599, 48 [#allocation27]
        %5364 = vst.msk [vmem:[%s5363] sm:$0xff] %vm5264, %v5361
        %5365 = vst.msk [vmem:[%s5363 + $0x8] sm:$0xff] %vm5264, %v5362
        %s5366 = sand.u32 %s324, 1
        %s5367 = scalar_lea.sflag [#allocation6], %s5366
        %s5368 = sand.u32 %s324, 1
        %s5369 = smul.addr %s5368, 64
        %s5370 = scalar_lea.vmem [#allocation27], %s5369
        // Predicated region
        $region125: #{tpu_custom_call.1} parent=71 // pred_check
          %p5371 = pneg %p334
        $region126: #{tpu_custom_call.1} parent=71 // pred_check_branch
          %5373 = sbr.rel (%p5371) target = $region128
        $region127: #{tpu_custom_call.1} parent=71 // pred_region
          %s5375 = ssub.s32 1024, 1024
          %5376 = vsyncadd %s5367, %s5375
          %s5377 = smul.addr %s38, 8
          %s5378 = smul.addr %s5377, 128
          %s5379 = scalar_lea.hbm %s13, %s5378
          %s5380 = sshll.u32 %s5370, 4
          %s5381 = int_to_ptr.vmem [resolvable:$true] %s5380
          %5386 = dma.vmem_to_hbm [thread:$0]  %s5381, 1024, %s5379, %s5367, 128, 128, 8
        $region128: #{tpu_custom_call.1} parent=71 // pred_fallthru
          _
      $region72: #{tpu_custom_call.1} parent=5 // pred_fallthru
        _
      %p5387 = scmp.le.s32.totalorder 2, %s33
      // Predicated region
      $region129: #{tpu_custom_call.1} parent=5 // pred_check
        %p5388 = pneg %p5387
      $region130: #{tpu_custom_call.1} parent=5 // pred_check_branch
        %5390 = sbr.rel (%p5388) target = $region132
      $region131: #{tpu_custom_call.1} parent=5 // pred_region
        %s5391 = ssub.s32 %s33, 2
        // Predicated region
        $region133: #{tpu_custom_call.1} parent=131 // pred_check
          %p5392 = pneg %p340
        $region134: #{tpu_custom_call.1} parent=131 // pred_check_branch
          %5394 = sbr.rel (%p5392) target = $region136
        $region135: #{tpu_custom_call.1} parent=131 // pred_region
          %s5395 = sand.u32 %s325, 1
          %s5396 = scalar_lea.sflag [#allocation6], %s5395
          %s5397 = sand.u32 %s325, 1
          %s5398 = smul.addr %s5397, 64
          %s5399 = scalar_lea.vmem [#allocation27], %s5398
          %5400 = dma.done %s5396, 1024
        $region136: #{tpu_custom_call.1} parent=131 // pred_fallthru
          _
      $region132: #{tpu_custom_call.1} parent=5 // pred_fallthru
        _
    $region6: #{tpu_custom_call.1} parent=1 // loop_footer
      %s37 = sadd.s32 1, %s33
    $region7: #{tpu_custom_call.1} parent=1 // loop_footer_branch
      %32 = sbr.rel target = $region3
    $region8: #{tpu_custom_call.1} parent=1 // loop_exit
      _
    %5401 = vsyncpa [#allocation5], 1
    %s5402 = scalar_lea.sflag [#allocation5], 1
    %5403 = vsyncpa %s5402, 1
    %5404 = vsyncpa [#allocation6], 1
    %s5405 = scalar_lea.sflag [#allocation6], 1
    %5406 = vsyncpa %s5405, 1
    %5407 = vsyncpa [#allocation7], 1
    %s5408 = scalar_lea.sflag [#allocation7], 1
    %5409 = vsyncpa %s5408, 1
    %5410 = vsyncpa [#allocation11], 1
    %5411 = vsyncpa [#allocation17], 1
    %5412 = vsyncpa [#allocation23], 1
    %5413 = vsyncpa [#allocation8], 1
    %s5414 = scalar_lea.sflag [#allocation8], 1
    %5415 = vsyncpa %s5414, 1
    %5416 = vsyncpa [#allocation15], 1
    %5417 = vsyncpa [#allocation21], 1
    %5418 = vsyncpa [#allocation26], 1

</llo_original>
